<compile_context>
chip_gen: v7x
topology: tpu7x:2x2x1
jax: 0.10.0
libtpu: 0.0.40
codegen_flags: <defaults>
</compile_context>

<pallas_src>
import jax
import jax.numpy as jnp
from jax.experimental import pallas as pl
from jax.experimental.pallas import tpu as pltpu


def stam_head_kernel(x_ref, pool_ref, w1_ref, b1_ref, w2_ref, b2_ref,
                     wf_ref, bf_ref, out_ref):
    # x_ref block: (BB, C*HW) bf16 -- stays bf16, no f32 tile materialization.

    # ---- per-channel global average pool on the MXU (f32 accumulation) ----
    # pool[c*HW + h, c] = 1/HW, so y[b, c] = mean_hw(x[b, c, :]).
    y = jnp.dot(x_ref[...], pool_ref[...],
                preferred_element_type=jnp.float32)                    # (BB, C) f32

    # ---- SEBlock squeeze-excite MLP: fc1 -> relu -> fc2 -> sigmoid ----
    h = jnp.dot(y, w1_ref[...], preferred_element_type=jnp.float32) + b1_ref[...]
    h = jnp.maximum(h, 0.0)                                            # (BB, hid)
    s = jax.nn.sigmoid(
        jnp.dot(h, w2_ref[...], preferred_element_type=jnp.float32) + b2_ref[...]
    )                                                                  # (BB, C)

    # ---- mean_hw(x * s) == mean_hw(x) * s  (s constant over HW) ----
    pooled = y * s                                                     # (BB, C)

    # ---- classifier (dropout = identity at eval); lane-dense padded store ----
    logits = jnp.dot(pooled, wf_ref[...],
                     preferred_element_type=jnp.float32) + bf_ref[...]
    out_ref[...] = logits.astype(out_ref.dtype)                        # (BB, nc_pad)


def _choose_block_batch(batch, max_bb=128):
    """Largest multiple-of-8 block dividing the 8-padded batch, capped at
    max_bb; prefer >= 2 grid steps so both v7x TensorCores get sharded work."""
    b8 = ((batch + 7) // 8) * 8
    cap = min(max_bb, b8)
    bb = 8
    for cand in range(8, cap + 1, 8):
        if b8 % cand == 0:
            bb = cand
    if b8 // bb < 2 and b8 >= 16:
        for cand in range(bb, 7, -8):
            if b8 % cand == 0 and b8 // cand >= 2:
                bb = cand
                break
    return bb, b8


def mobilenet_stam_head(x_nchw, w1, b1, w2, b2, wf, bf, *, max_block_batch=128):
    """x_nchw: (B, C=160, H, W) feature map (bf16 preferred).
    Weights (in, out) layout: w1 (C, hid), b1 (1, hid), w2 (hid, C), b2 (1, C),
    wf (C, nc), bf (1, nc).  Returns (B, nc) float32 logits."""
    B, C, H, W = x_nchw.shape
    HW = H * W
    hid = w1.shape[1]
    nc = wf.shape[1]

    nc_pad = ((nc + 127) // 128) * 128          # lane-dense padded output width
    BB, B_pad = _choose_block_batch(B, max_block_batch)

    # NCHW -> lane-dense (B, C*HW): pure reshape, no HBM transpose/copy.
    x = x_nchw.reshape(B, C * HW)
    if x.dtype != jnp.bfloat16:
        x = x.astype(jnp.bfloat16)
    if B_pad != B:                              # pad at most 7 rows
        x = jnp.pad(x, ((0, B_pad - B), (0, 0)))

    # Constant pooling matrix: pool[c*HW + h, c] = 1/HW (1/HW exact in bf16 for
    # power-of-two HW; tiny rounding otherwise, accumulation stays f32).
    pool = (jnp.repeat(jnp.eye(C, dtype=jnp.float32), HW, axis=0) / HW
            ).astype(jnp.bfloat16)

    # Zero-pad classifier weight/bias to the lane-dense output width.
    wf_p = jnp.zeros((C, nc_pad), jnp.float32).at[:, :nc].set(wf)
    bf_p = jnp.zeros((1, nc_pad), jnp.float32).at[:, :nc].set(bf)

    out = pl.pallas_call(
        stam_head_kernel,
        out_shape=jax.ShapeDtypeStruct((B_pad, nc_pad), jnp.float32),
        grid_spec=pltpu.PrefetchScalarGridSpec(
            num_scalar_prefetch=0,
            grid=(B_pad // BB,),
            in_specs=[
                pl.BlockSpec((BB, C * HW), lambda i: (i, 0)),   # bf16 feature slab
                pl.BlockSpec((C * HW, C), lambda i: (0, 0)),    # pooling matrix (const)
                pl.BlockSpec((C, hid), lambda i: (0, 0)),       # fc1 weight (in, out)
                pl.BlockSpec((1, hid), lambda i: (0, 0)),       # fc1 bias
                pl.BlockSpec((hid, C), lambda i: (0, 0)),       # fc2 weight (in, out)
                pl.BlockSpec((1, C), lambda i: (0, 0)),         # fc2 bias
                pl.BlockSpec((C, nc_pad), lambda i: (0, 0)),    # classifier weight (padded)
                pl.BlockSpec((1, nc_pad), lambda i: (0, 0)),    # classifier bias (padded)
            ],
            out_specs=pl.BlockSpec((BB, nc_pad), lambda i: (i, 0)),
        ),
        compiler_params=pltpu.CompilerParams(
            dimension_semantics=("parallel",),
            vmem_limit_bytes=48 * 1024 * 1024,   # headroom for large BB; < v7x 64 MiB
        ),
    )(x, pool, w1, b1, w2, b2, wf_p, bf_p)

    return out[:B, :nc]


def reference_head(x_nchw, w1, b1, w2, b2, wf, bf):
    """Pure-JAX reference mirroring the PyTorch forward (eval mode)."""
    x = x_nchw.astype(jnp.float32)
    y = jnp.mean(x, axis=(2, 3))                              # global avg pool -> (B, C)
    h = jnp.maximum(y @ w1 + b1, 0.0)
    s = jax.nn.sigmoid(h @ w2 + b2)
    x = x * s[:, :, None, None]                               # SE scaling
    pooled = jnp.mean(x, axis=(2, 3))                         # x.mean([2, 3])
    return pooled @ wf + bf                                   # dropout = identity at eval


if __name__ == "__main__":
    B, C, H, W = 16, 160, 8, 8      # 160 channels: mobilenet.features output, last layer = Identity
    reduction = 16
    hid = C // reduction            # 10
    num_classes = 10

    key = jax.random.PRNGKey(0)
    kx, k1, k2, k3, k4, k5, k6 = jax.random.split(key, 7)

    # Synthetic 160-channel feature map (stand-in for mobilenet.features output),
    # fed to the kernel in bf16 to halve HBM->VMEM bytes.
    x = jax.random.normal(kx, (B, C, H, W), dtype=jnp.float32).astype(jnp.bfloat16)

    # Parameter init (PyTorch Linear stores (out, in); kept as (in, out) here).
    w1 = jax.random.normal(k1, (C, hid), dtype=jnp.float32) * 0.05
    b1 = jax.random.normal(k2, (1, hid), dtype=jnp.float32) * 0.05
    w2 = jax.random.normal(k3, (hid, C), dtype=jnp.float32) * 0.05
    b2 = jax.random.normal(k4, (1, C), dtype=jnp.float32) * 0.05
    wf = jax.random.normal(k5, (C, num_classes), dtype=jnp.float32) * 0.05
    bf = jax.random.normal(k6, (1, num_classes), dtype=jnp.float32) * 0.05

    out = mobilenet_stam_head(x, w1, b1, w2, b2, wf, bf, max_block_batch=128)
    out = jax.block_until_ready(out)

    ref = reference_head(x, w1, b1[0], w2, b2[0], wf, bf[0])
    assert out.shape == (B, num_classes)
    assert jnp.allclose(out, ref, atol=2e-3, rtol=2e-3), "kernel/reference mismatch"

    print("KERNEL_OK")
</pallas_src>

<mosaic_0001>
module attributes {stable_mosaic.version = 11 : i64} {
  func.func @stam_head_kernel(%arg0: i32, %arg1: memref<8x10240xbf16, #tpu.memory_space<vmem>>, %arg2: memref<10240x160xbf16, #tpu.memory_space<vmem>>, %arg3: memref<160x10xf32, #tpu.memory_space<vmem>>, %arg4: memref<1x10xf32, #tpu.memory_space<vmem>>, %arg5: memref<10x160xf32, #tpu.memory_space<vmem>>, %arg6: memref<1x160xf32, #tpu.memory_space<vmem>>, %arg7: memref<160x128xf32, #tpu.memory_space<vmem>>, %arg8: memref<1x128xf32, #tpu.memory_space<vmem>>, %arg9: memref<8x128xf32, #tpu.memory_space<vmem>>) attributes {dimension_semantics = [#tpu.dimension_semantics<parallel>], iteration_bounds = array<i64: 2>, scalar_prefetch = 0 : i64, scratch_operands = 0 : i64, tpu.core_type = #tpu.core_type<tc>, window_params = [{transform_indices = @transform_0, window_bounds = array<i64: 8, 10240>}, {pipeline_mode = #tpu.pipeline_mode<synchronous>, transform_indices = @transform_1, window_bounds = array<i64: 10240, 160>}, {pipeline_mode = #tpu.pipeline_mode<synchronous>, transform_indices = @transform_2, window_bounds = array<i64: 160, 10>}, {pipeline_mode = #tpu.pipeline_mode<synchronous>, transform_indices = @transform_3, window_bounds = array<i64: 1, 10>}, {pipeline_mode = #tpu.pipeline_mode<synchronous>, transform_indices = @transform_4, window_bounds = array<i64: 10, 160>}, {pipeline_mode = #tpu.pipeline_mode<synchronous>, transform_indices = @transform_5, window_bounds = array<i64: 1, 160>}, {pipeline_mode = #tpu.pipeline_mode<synchronous>, transform_indices = @transform_6, window_bounds = array<i64: 160, 128>}, {pipeline_mode = #tpu.pipeline_mode<synchronous>, transform_indices = @transform_7, window_bounds = array<i64: 1, 128>}, {transform_indices = @transform_8, window_bounds = array<i64: 8, 128>}]} {
    %c0 = arith.constant 0 : index
    %c0_0 = arith.constant 0 : index
    %0 = vector.load %arg1[%c0, %c0_0] : memref<8x10240xbf16, #tpu.memory_space<vmem>>, vector<8x10240xbf16>
    %c0_1 = arith.constant 0 : index
    %c0_2 = arith.constant 0 : index
    %1 = vector.load %arg2[%c0_1, %c0_2] : memref<10240x160xbf16, #tpu.memory_space<vmem>>, vector<10240x160xbf16>
    %cst = arith.constant dense<0.000000e+00> : vector<8x160xf32>
    %2 = tpu.matmul %0, %1, %cst {dimension_numbers = #tpu.dot_dimension_numbers<[1], [0], [0], [1], [0, 0, 1, 1], [], []>} : vector<8x10240xbf16>, vector<10240x160xbf16>, vector<8x160xf32> -> vector<8x160xf32>
    %c0_3 = arith.constant 0 : index
    %c0_4 = arith.constant 0 : index
    %3 = vector.load %arg3[%c0_3, %c0_4] : memref<160x10xf32, #tpu.memory_space<vmem>>, vector<160x10xf32>
    %cst_5 = arith.constant dense<0.000000e+00> : vector<8x10xf32>
    %4 = tpu.matmul %2, %3, %cst_5 {dimension_numbers = #tpu.dot_dimension_numbers<[1], [0], [0], [1], [0, 0, 1, 1], [], []>} : vector<8x160xf32>, vector<160x10xf32>, vector<8x10xf32> -> vector<8x10xf32>
    %c0_6 = arith.constant 0 : index
    %c0_7 = arith.constant 0 : index
    %5 = vector.load %arg4[%c0_6, %c0_7] : memref<1x10xf32, #tpu.memory_space<vmem>>, vector<1x10xf32>
    %6 = vector.broadcast %5 : vector<1x10xf32> to vector<8x10xf32>
    %7 = arith.addf %4, %6 : vector<8x10xf32>
    %cst_8 = arith.constant 0.000000e+00 : f32
    %8 = vector.broadcast %cst_8 : f32 to vector<8x10xf32>
    %9 = arith.maximumf %7, %8 : vector<8x10xf32>
    %c0_9 = arith.constant 0 : index
    %c0_10 = arith.constant 0 : index
    %10 = vector.load %arg5[%c0_9, %c0_10] : memref<10x160xf32, #tpu.memory_space<vmem>>, vector<10x160xf32>
    %cst_11 = arith.constant dense<0.000000e+00> : vector<8x160xf32>
    %11 = tpu.matmul %9, %10, %cst_11 {dimension_numbers = #tpu.dot_dimension_numbers<[1], [0], [0], [1], [0, 0, 1, 1], [], []>} : vector<8x10xf32>, vector<10x160xf32>, vector<8x160xf32> -> vector<8x160xf32>
    %c0_12 = arith.constant 0 : index
    %c0_13 = arith.constant 0 : index
    %12 = vector.load %arg6[%c0_12, %c0_13] : memref<1x160xf32, #tpu.memory_space<vmem>>, vector<1x160xf32>
    %13 = vector.broadcast %12 : vector<1x160xf32> to vector<8x160xf32>
    %14 = arith.addf %11, %13 : vector<8x160xf32>
    %15 = arith.negf %14 : vector<8x160xf32>
    %16 = math.exp %15 : vector<8x160xf32>
    %cst_14 = arith.constant 1.000000e+00 : f32
    %17 = vector.broadcast %cst_14 : f32 to vector<8x160xf32>
    %18 = arith.addf %17, %16 : vector<8x160xf32>
    %19 = arith.divf %17, %18 : vector<8x160xf32>
    %20 = arith.mulf %2, %19 : vector<8x160xf32>
    %c0_15 = arith.constant 0 : index
    %c0_16 = arith.constant 0 : index
    %21 = vector.load %arg7[%c0_15, %c0_16] : memref<160x128xf32, #tpu.memory_space<vmem>>, vector<160x128xf32>
    %cst_17 = arith.constant dense<0.000000e+00> : vector<8x128xf32>
    %22 = tpu.matmul %20, %21, %cst_17 {dimension_numbers = #tpu.dot_dimension_numbers<[1], [0], [0], [1], [0, 0, 1, 1], [], []>} : vector<8x160xf32>, vector<160x128xf32>, vector<8x128xf32> -> vector<8x128xf32>
    %c0_18 = arith.constant 0 : index
    %c0_19 = arith.constant 0 : index
    %23 = vector.load %arg8[%c0_18, %c0_19] : memref<1x128xf32, #tpu.memory_space<vmem>>, vector<1x128xf32>
    %24 = vector.broadcast %23 : vector<1x128xf32> to vector<8x128xf32>
    %25 = arith.addf %22, %24 : vector<8x128xf32>
    %c0_20 = arith.constant 0 : index
    %c0_21 = arith.constant 0 : index
    %26 = vector.load %arg9[%c0_20, %c0_21] : memref<8x128xf32, #tpu.memory_space<vmem>>, vector<8x128xf32>
    tpu.vector_store %arg9[%c0_20, %c0_21], %25 {strides = array<i32>} : memref<8x128xf32, #tpu.memory_space<vmem>>, vector<8x128xf32>,
    return
  }
  func.func @transform_0(%arg0: i32) -> (i32, i32) {
    %c0_i32 = arith.constant 0 : i32
    %c0_i32_0 = arith.constant 0 : i32
    return %arg0, %c0_i32 : i32, i32
  }
  func.func @transform_1(%arg0: i32) -> (i32, i32) {
    %c0_i32 = arith.constant 0 : i32
    %c0_i32_0 = arith.constant 0 : i32
    %c0_i32_1 = arith.constant 0 : i32
    return %c0_i32, %c0_i32_0 : i32, i32
  }
  func.func @transform_2(%arg0: i32) -> (i32, i32) {
    %c0_i32 = arith.constant 0 : i32
    %c0_i32_0 = arith.constant 0 : i32
    %c0_i32_1 = arith.constant 0 : i32
    return %c0_i32, %c0_i32_0 : i32, i32
  }
  func.func @transform_3(%arg0: i32) -> (i32, i32) {
    %c0_i32 = arith.constant 0 : i32
    %c0_i32_0 = arith.constant 0 : i32
    %c0_i32_1 = arith.constant 0 : i32
    return %c0_i32, %c0_i32_0 : i32, i32
  }
  func.func @transform_4(%arg0: i32) -> (i32, i32) {
    %c0_i32 = arith.constant 0 : i32
    %c0_i32_0 = arith.constant 0 : i32
    %c0_i32_1 = arith.constant 0 : i32
    return %c0_i32, %c0_i32_0 : i32, i32
  }
  func.func @transform_5(%arg0: i32) -> (i32, i32) {
    %c0_i32 = arith.constant 0 : i32
    %c0_i32_0 = arith.constant 0 : i32
    %c0_i32_1 = arith.constant 0 : i32
    return %c0_i32, %c0_i32_0 : i32, i32
  }
  func.func @transform_6(%arg0: i32) -> (i32, i32) {
    %c0_i32 = arith.constant 0 : i32
    %c0_i32_0 = arith.constant 0 : i32
    %c0_i32_1 = arith.constant 0 : i32
    return %c0_i32, %c0_i32_0 : i32, i32
  }
  func.func @transform_7(%arg0: i32) -> (i32, i32) {
    %c0_i32 = arith.constant 0 : i32
    %c0_i32_0 = arith.constant 0 : i32
    %c0_i32_1 = arith.constant 0 : i32
    return %c0_i32, %c0_i32_0 : i32, i32
  }
  func.func @transform_8(%arg0: i32) -> (i32, i32) {
    %c0_i32 = arith.constant 0 : i32
    %c0_i32_0 = arith.constant 0 : i32
    return %arg0, %c0_i32 : i32, i32
  }
}

</mosaic_0001>

<llo_original>
// kernel: tpu_custom_call.1
$region0: #{tpu_custom_call.1}
  #allocation0 [shape = 'u32[]', space=smem, size = 0x4, offset = 0x4, fixed_abs, tag = 'smem constant byte address 0x4 - core index']
  #allocation1 [shape = 'u32[144,128]{1,0:T(1,128)}', space=vmem, size = 0x12000, scoped, tag = 'internal scratch']
  %s0 = inlined_call_operand.vmem [shape: bf16[16,10240], index: 0, kind: input, shape index: {}]
  %s1 = inlined_call_operand.vmem [shape: bf16[10240,160], index: 1, kind: input, shape index: {}]
  %s2 = inlined_call_operand.vmem [shape: f32[160,10], index: 2, kind: input, shape index: {}]
  %s3 = inlined_call_operand.vmem [shape: f32[1,10], index: 3, kind: input, shape index: {}]
  %s4 = inlined_call_operand.vmem [shape: f32[10,160], index: 4, kind: input, shape index: {}]
  %s5 = inlined_call_operand.vmem [shape: f32[1,160], index: 5, kind: input, shape index: {}]
  %s6 = inlined_call_operand.vmem [shape: f32[160,128], index: 6, kind: input, shape index: {}]
  %s7 = inlined_call_operand.vmem [shape: f32[1,128], index: 7, kind: input, shape index: {}]
  %s8 = inlined_call_operand.hbm [shape: f32[16,128], index: 8, kind: output, shape index: {}]
  %s9 = sld [smem:[#allocation0]]
  $region65: #{tpu_custom_call.1} parent=0
    _
  %s11 = ssub.s32 1, %s9
  %s12 = scalar_select 0, %s11, %s9
  $region1: #{tpu_custom_call.1} parent=0
    #allocation2 [shape = 'u8[8192]{0}', space=vmem, size = 0x2000, scoped, tag = 'output window, operand 0']
    #allocation3 [shape = 's32[2]{0}', space=sflag, size = 0x8, scoped, tag = 'scoped memory for tpu_custom_call.1']
    %13 = vsyncpa [#allocation3], 0
    %s14 = scalar_lea.sflag [#allocation3], 1
    %15 = vsyncpa %s14, 0
    loop: start=0, step=1, limit=4
    $region2: #{tpu_custom_call.1} parent=1 // loop_pre_header
      _
    $region3: #{tpu_custom_call.1} parent=1 // loop_header
      %s17 = sphi 0, %s21
      %p18 = scmp.ge.s32.totalorder %s17, 4
      %s27 = sphi 0, %s29
      %s30 = sphi 0, %s27
      %s31 = sphi 0, %s30
      %s47 = sphi 0, %s31
      %s51 = sphi 0, %s51
      %s53 = sphi 0, %s51
      %s54 = sphi 0, %s53
      %s68 = sphi 0, %s54
      %s72 = sphi 0, %s72
      %s74 = sphi 0, %s72
      %s75 = sphi 0, %s74
      %s89 = sphi 0, %s75
      %s93 = sphi 0, %s93
      %s95 = sphi 0, %s93
      %s96 = sphi 0, %s95
      %s110 = sphi 0, %s96
      %s114 = sphi 0, %s114
      %s116 = sphi 0, %s114
      %s117 = sphi 0, %s116
      %s131 = sphi 0, %s117
      %s135 = sphi 0, %s135
      %s137 = sphi 0, %s135
      %s138 = sphi 0, %s137
      %s152 = sphi 0, %s138
      %s156 = sphi 0, %s156
      %s158 = sphi 0, %s156
      %s159 = sphi 0, %s158
      %s173 = sphi 0, %s159
      %s177 = sphi 0, %s177
      %s179 = sphi 0, %s177
      %s180 = sphi 0, %s179
      %s194 = sphi 0, %s180
      %s200 = sphi 0, %s202
      %s203 = sphi 0, %s200
      %s204 = sphi 0, %s203
      %s220 = sphi 0, %s204
    $region4: #{tpu_custom_call.1} parent=1 // loop_header_branch
      %20 = sbr.rel (%p18) target = $region8
    $region5: #{tpu_custom_call.1} parent=1 // loop_body
      %s22 = ssub.s32 %s17, 1
      %s23 = ssub.s32 %s17, 2
      %s24 = sadd.s32 %s17, 1
      %s25 = ssub.s32 %s17, %s24
      %p26 = scmp.eq.s32.totalorder %s25, 0
      %s28 = sadd.s32 %s27, 1
      %s29 = scalar_select %p26, %s27, %s28
      %p32 = pneg %p26
      %p33 = scmp.eq.s32.totalorder %s17, 1
      %p34 = por %p32, %p33
      %p35 = scmp.ne.s32.totalorder %s27, %s30
      %p36 = scmp.eq.s32.totalorder %s17, 0
      %p37 = por %p35, %p36
      %p38 = scmp.ne.s32.totalorder %s27, %s30
      %p39 = scmp.eq.s32.totalorder %s22, 1
      %p40 = por %p38, %p39
      %p41 = scmp.ne.s32.totalorder %s30, %s31
      %p42 = scmp.eq.s32.totalorder %s22, 0
      %p43 = por %p41, %p42
      %p44 = scmp.ne.s32.totalorder %s30, %s31
      %p45 = scmp.eq.s32.totalorder %s23, 1
      %p46 = por %p44, %p45
      %p48 = scmp.ne.s32.totalorder %s31, %s47
      %p49 = scmp.eq.s32.totalorder %s23, 0
      %p50 = por %p48, %p49
      %s52 = sadd.s32 %s51, 1
      %p55 = scmp.eq.s32.totalorder %s17, 1
      %p56 = scmp.ne.s32.totalorder %s51, %s53
      %p57 = scmp.eq.s32.totalorder %s17, 0
      %p58 = por %p56, %p57
      %p59 = scmp.ne.s32.totalorder %s51, %s53
      %p60 = scmp.eq.s32.totalorder %s22, 1
      %p61 = por %p59, %p60
      %p62 = scmp.ne.s32.totalorder %s53, %s54
      %p63 = scmp.eq.s32.totalorder %s22, 0
      %p64 = por %p62, %p63
      %p65 = scmp.ne.s32.totalorder %s53, %s54
      %p66 = scmp.eq.s32.totalorder %s23, 1
      %p67 = por %p65, %p66
      %p69 = scmp.ne.s32.totalorder %s54, %s68
      %p70 = scmp.eq.s32.totalorder %s23, 0
      %p71 = por %p69, %p70
      %s73 = sadd.s32 %s72, 1
      %p76 = scmp.eq.s32.totalorder %s17, 1
      %p77 = scmp.ne.s32.totalorder %s72, %s74
      %p78 = scmp.eq.s32.totalorder %s17, 0
      %p79 = por %p77, %p78
      %p80 = scmp.ne.s32.totalorder %s72, %s74
      %p81 = scmp.eq.s32.totalorder %s22, 1
      %p82 = por %p80, %p81
      %p83 = scmp.ne.s32.totalorder %s74, %s75
      %p84 = scmp.eq.s32.totalorder %s22, 0
      %p85 = por %p83, %p84
      %p86 = scmp.ne.s32.totalorder %s74, %s75
      %p87 = scmp.eq.s32.totalorder %s23, 1
      %p88 = por %p86, %p87
      %p90 = scmp.ne.s32.totalorder %s75, %s89
      %p91 = scmp.eq.s32.totalorder %s23, 0
      %p92 = por %p90, %p91
      %s94 = sadd.s32 %s93, 1
      %p97 = scmp.eq.s32.totalorder %s17, 1
      %p98 = scmp.ne.s32.totalorder %s93, %s95
      %p99 = scmp.eq.s32.totalorder %s17, 0
      %p100 = por %p98, %p99
      %p101 = scmp.ne.s32.totalorder %s93, %s95
      %p102 = scmp.eq.s32.totalorder %s22, 1
      %p103 = por %p101, %p102
      %p104 = scmp.ne.s32.totalorder %s95, %s96
      %p105 = scmp.eq.s32.totalorder %s22, 0
      %p106 = por %p104, %p105
      %p107 = scmp.ne.s32.totalorder %s95, %s96
      %p108 = scmp.eq.s32.totalorder %s23, 1
      %p109 = por %p107, %p108
      %p111 = scmp.ne.s32.totalorder %s96, %s110
      %p112 = scmp.eq.s32.totalorder %s23, 0
      %p113 = por %p111, %p112
      %s115 = sadd.s32 %s114, 1
      %p118 = scmp.eq.s32.totalorder %s17, 1
      %p119 = scmp.ne.s32.totalorder %s114, %s116
      %p120 = scmp.eq.s32.totalorder %s17, 0
      %p121 = por %p119, %p120
      %p122 = scmp.ne.s32.totalorder %s114, %s116
      %p123 = scmp.eq.s32.totalorder %s22, 1
      %p124 = por %p122, %p123
      %p125 = scmp.ne.s32.totalorder %s116, %s117
      %p126 = scmp.eq.s32.totalorder %s22, 0
      %p127 = por %p125, %p126
      %p128 = scmp.ne.s32.totalorder %s116, %s117
      %p129 = scmp.eq.s32.totalorder %s23, 1
      %p130 = por %p128, %p129
      %p132 = scmp.ne.s32.totalorder %s117, %s131
      %p133 = scmp.eq.s32.totalorder %s23, 0
      %p134 = por %p132, %p133
      %s136 = sadd.s32 %s135, 1
      %p139 = scmp.eq.s32.totalorder %s17, 1
      %p140 = scmp.ne.s32.totalorder %s135, %s137
      %p141 = scmp.eq.s32.totalorder %s17, 0
      %p142 = por %p140, %p141
      %p143 = scmp.ne.s32.totalorder %s135, %s137
      %p144 = scmp.eq.s32.totalorder %s22, 1
      %p145 = por %p143, %p144
      %p146 = scmp.ne.s32.totalorder %s137, %s138
      %p147 = scmp.eq.s32.totalorder %s22, 0
      %p148 = por %p146, %p147
      %p149 = scmp.ne.s32.totalorder %s137, %s138
      %p150 = scmp.eq.s32.totalorder %s23, 1
      %p151 = por %p149, %p150
      %p153 = scmp.ne.s32.totalorder %s138, %s152
      %p154 = scmp.eq.s32.totalorder %s23, 0
      %p155 = por %p153, %p154
      %s157 = sadd.s32 %s156, 1
      %p160 = scmp.eq.s32.totalorder %s17, 1
      %p161 = scmp.ne.s32.totalorder %s156, %s158
      %p162 = scmp.eq.s32.totalorder %s17, 0
      %p163 = por %p161, %p162
      %p164 = scmp.ne.s32.totalorder %s156, %s158
      %p165 = scmp.eq.s32.totalorder %s22, 1
      %p166 = por %p164, %p165
      %p167 = scmp.ne.s32.totalorder %s158, %s159
      %p168 = scmp.eq.s32.totalorder %s22, 0
      %p169 = por %p167, %p168
      %p170 = scmp.ne.s32.totalorder %s158, %s159
      %p171 = scmp.eq.s32.totalorder %s23, 1
      %p172 = por %p170, %p171
      %p174 = scmp.ne.s32.totalorder %s159, %s173
      %p175 = scmp.eq.s32.totalorder %s23, 0
      %p176 = por %p174, %p175
      %s178 = sadd.s32 %s177, 1
      %p181 = scmp.eq.s32.totalorder %s17, 1
      %p182 = scmp.ne.s32.totalorder %s177, %s179
      %p183 = scmp.eq.s32.totalorder %s17, 0
      %p184 = por %p182, %p183
      %p185 = scmp.ne.s32.totalorder %s177, %s179
      %p186 = scmp.eq.s32.totalorder %s22, 1
      %p187 = por %p185, %p186
      %p188 = scmp.ne.s32.totalorder %s179, %s180
      %p189 = scmp.eq.s32.totalorder %s22, 0
      %p190 = por %p188, %p189
      %p191 = scmp.ne.s32.totalorder %s179, %s180
      %p192 = scmp.eq.s32.totalorder %s23, 1
      %p193 = por %p191, %p192
      %p195 = scmp.ne.s32.totalorder %s180, %s194
      %p196 = scmp.eq.s32.totalorder %s23, 0
      %p197 = por %p195, %p196
      %s198 = ssub.s32 %s17, %s24
      %p199 = scmp.eq.s32.totalorder %s198, 0
      %s201 = sadd.s32 %s200, 1
      %s202 = scalar_select %p199, %s200, %s201
      %p205 = pneg %p199
      %p206 = scmp.eq.s32.totalorder %s17, 1
      %p207 = por %p205, %p206
      %p208 = scmp.ne.s32.totalorder %s200, %s203
      %p209 = scmp.eq.s32.totalorder %s17, 0
      %p210 = por %p208, %p209
      %p211 = scmp.ne.s32.totalorder %s200, %s203
      %p212 = scmp.eq.s32.totalorder %s22, 1
      %p213 = por %p211, %p212
      %p214 = scmp.ne.s32.totalorder %s203, %s204
      %p215 = scmp.eq.s32.totalorder %s22, 0
      %p216 = por %p214, %p215
      %p217 = scmp.ne.s32.totalorder %s203, %s204
      %p218 = scmp.eq.s32.totalorder %s23, 1
      %p219 = por %p217, %p218
      %p221 = scmp.ne.s32.totalorder %s204, %s220
      %p222 = scmp.eq.s32.totalorder %s23, 0
      %p223 = por %p221, %p222
      %p224 = scmp.le.s32.totalorder 1, %s17
      %p225 = scmp.lt.s32.totalorder %s17, 3
      %p226 = pnand %p224, %p225
      %p227 = pneg %p226
      // Predicated region
      $region9: #{tpu_custom_call.1} parent=5 // pred_check
        _
      $region10: #{tpu_custom_call.1} parent=5 // pred_check_branch
        %229 = sbr.rel (%p226) target = $region12
      $region11: #{tpu_custom_call.1} parent=5 // pred_region
        %s230 = ssub.s32 %s17, 1
        // Predicated region
        $region13: #{tpu_custom_call.1} parent=11 // pred_check
          %p231 = pneg %p64
        $region14: #{tpu_custom_call.1} parent=11 // pred_check_branch
          %233 = sbr.rel (%p231) target = $region16
        $region15: #{tpu_custom_call.1} parent=11 // pred_region
          _
        $region16: #{tpu_custom_call.1} parent=11 // pred_fallthru
          _
        // Predicated region
        $region17: #{tpu_custom_call.1} parent=11 // pred_check
          %p234 = pneg %p85
        $region18: #{tpu_custom_call.1} parent=11 // pred_check_branch
          %236 = sbr.rel (%p234) target = $region20
        $region19: #{tpu_custom_call.1} parent=11 // pred_region
          _
        $region20: #{tpu_custom_call.1} parent=11 // pred_fallthru
          _
        // Predicated region
        $region21: #{tpu_custom_call.1} parent=11 // pred_check
          %p237 = pneg %p106
        $region22: #{tpu_custom_call.1} parent=11 // pred_check_branch
          %239 = sbr.rel (%p237) target = $region24
        $region23: #{tpu_custom_call.1} parent=11 // pred_region
          _
        $region24: #{tpu_custom_call.1} parent=11 // pred_fallthru
          _
        // Predicated region
        $region25: #{tpu_custom_call.1} parent=11 // pred_check
          %p240 = pneg %p127
        $region26: #{tpu_custom_call.1} parent=11 // pred_check_branch
          %242 = sbr.rel (%p240) target = $region28
        $region27: #{tpu_custom_call.1} parent=11 // pred_region
          _
        $region28: #{tpu_custom_call.1} parent=11 // pred_fallthru
          _
        // Predicated region
        $region29: #{tpu_custom_call.1} parent=11 // pred_check
          %p243 = pneg %p148
        $region30: #{tpu_custom_call.1} parent=11 // pred_check_branch
          %245 = sbr.rel (%p243) target = $region32
        $region31: #{tpu_custom_call.1} parent=11 // pred_region
          _
        $region32: #{tpu_custom_call.1} parent=11 // pred_fallthru
          _
        // Predicated region
        $region33: #{tpu_custom_call.1} parent=11 // pred_check
          %p246 = pneg %p169
        $region34: #{tpu_custom_call.1} parent=11 // pred_check_branch
          %248 = sbr.rel (%p246) target = $region36
        $region35: #{tpu_custom_call.1} parent=11 // pred_region
          _
        $region36: #{tpu_custom_call.1} parent=11 // pred_fallthru
          _
        // Predicated region
        $region37: #{tpu_custom_call.1} parent=11 // pred_check
          %p249 = pneg %p190
        $region38: #{tpu_custom_call.1} parent=11 // pred_check_branch
          %251 = sbr.rel (%p249) target = $region40
        $region39: #{tpu_custom_call.1} parent=11 // pred_region
          _
        $region40: #{tpu_custom_call.1} parent=11 // pred_fallthru
          _
      $region12: #{tpu_custom_call.1} parent=5 // pred_fallthru
        _
      %p252 = scmp.lt.s32.totalorder %s17, 2
      // Predicated region
      $region41: #{tpu_custom_call.1} parent=5 // pred_check
        %p253 = pneg %p252
      $region42: #{tpu_custom_call.1} parent=5 // pred_check_branch
        %255 = sbr.rel (%p253) target = $region44
      $region43: #{tpu_custom_call.1} parent=5 // pred_region
        // Predicated region
        $region45: #{tpu_custom_call.1} parent=43 // pred_check
          %p256 = pneg %p37
        $region46: #{tpu_custom_call.1} parent=43 // pred_check_branch
          %258 = sbr.rel (%p256) target = $region48
        $region47: #{tpu_custom_call.1} parent=43 // pred_region
          %p259 = scmp.lt.s32.totalorder %s17, 1
          %s260 = scalar_select %p259, %s17, 1
          %s261 = smul.addr %s260, 80
          %s262 = smul.addr %s261, 4
          %s263 = scalar_lea.vmem %s0, %s262
        $region48: #{tpu_custom_call.1} parent=43 // pred_fallthru
          _
      $region44: #{tpu_custom_call.1} parent=5 // pred_fallthru
        _
      %p264 = scmp.le.s32.totalorder 1, %s17
      %p265 = scmp.lt.s32.totalorder %s17, 3
      %p266 = pnand %p264, %p265
      %p267 = pneg %p266
      // Predicated region
      $region49: #{tpu_custom_call.1} parent=5 // pred_check
        _
      $region50: #{tpu_custom_call.1} parent=5 // pred_check_branch
        %269 = sbr.rel (%p266) target = $region52
      $region51: #{tpu_custom_call.1} parent=5 // pred_region
        %s270 = ssub.s32 %s17, 1
        %p271 = scmp.lt.s32.totalorder %s22, 1
        %s272 = scalar_select %p271, %s22, 1
        %s273 = smul.addr %s272, 80
        %s274 = smul.addr %s273, 4
        %s275 = scalar_lea.vmem %s0, %s274
        %p276 = pneg %p43
        %p277 = pneg %p40
        %p278 = pneg %p64
        %p279 = pneg %p61
        %p280 = pneg %p85
        %p281 = pneg %p82
        %p282 = pneg %p106
        %p283 = pneg %p103
        %p284 = pneg %p127
        %p285 = pneg %p124
        %p286 = pneg %p148
        %p287 = pneg %p145
        %p288 = pneg %p169
        %p289 = pneg %p166
        %p290 = pneg %p190
        %p291 = pneg %p187
        %p292 = pneg %p216
        %p293 = pneg %p213
        %s294 = sand.u32 %s203, 1
        %s295 = scalar_lea.sflag [#allocation3], %s294
        %s296 = sand.u32 %s203, 1
        %s297 = smul.addr %s296, 8
        %s298 = scalar_lea.vmem [#allocation2], %s297
        %p299 = scmp.lt.s32.totalorder %s22, 1
        %s300 = scalar_select %p299, %s22, 1
        %s301 = smul.addr %s300, 80
        %s302 = smul.addr %s301, 4
        %s303 = scalar_lea.vmem %s0, %s302
        %v304 = vld [vmem:[%s303] sm:$0xff]
        %v305 = vld [vmem:[%s303 + $0x8] sm:$0xff]
        %v306 = vld [vmem:[%s303 + $0x10] sm:$0xff]
        %v307 = vld [vmem:[%s303 + $0x18] sm:$0xff]
        %v308 = vld [vmem:[%s303 + $0x20] sm:$0xff]
        %v309 = vld [vmem:[%s303 + $0x28] sm:$0xff]
        %v310 = vld [vmem:[%s303 + $0x30] sm:$0xff]
        %v311 = vld [vmem:[%s303 + $0x38] sm:$0xff]
        %v312 = vld [vmem:[%s303 + $0x40] sm:$0xff]
        %v313 = vld [vmem:[%s303 + $0x48] sm:$0xff]
        %v314 = vld [vmem:[%s303 + $0x50] sm:$0xff]
        %v315 = vld [vmem:[%s303 + $0x58] sm:$0xff]
        %v316 = vld [vmem:[%s303 + $0x60] sm:$0xff]
        %v317 = vld [vmem:[%s303 + $0x68] sm:$0xff]
        %v318 = vld [vmem:[%s303 + $0x70] sm:$0xff]
        %v319 = vld [vmem:[%s303 + $0x78] sm:$0xff]
        %v320 = vld [vmem:[%s303 + $0x80] sm:$0xff]
        %v321 = vld [vmem:[%s303 + $0x88] sm:$0xff]
        %v322 = vld [vmem:[%s303 + $0x90] sm:$0xff]
        %v323 = vld [vmem:[%s303 + $0x98] sm:$0xff]
        %v324 = vld [vmem:[%s303 + $0xa0] sm:$0xff]
        %v325 = vld [vmem:[%s303 + $0xa8] sm:$0xff]
        %v326 = vld [vmem:[%s303 + $0xb0] sm:$0xff]
        %v327 = vld [vmem:[%s303 + $0xb8] sm:$0xff]
        %v328 = vld [vmem:[%s303 + $0xc0] sm:$0xff]
        %v329 = vld [vmem:[%s303 + $0xc8] sm:$0xff]
        %v330 = vld [vmem:[%s303 + $0xd0] sm:$0xff]
        %v331 = vld [vmem:[%s303 + $0xd8] sm:$0xff]
        %v332 = vld [vmem:[%s303 + $0xe0] sm:$0xff]
        %v333 = vld [vmem:[%s303 + $0xe8] sm:$0xff]
        %v334 = vld [vmem:[%s303 + $0xf0] sm:$0xff]
        %v335 = vld [vmem:[%s303 + $0xf8] sm:$0xff]
        %v336 = vld [vmem:[%s303 + $0x100] sm:$0xff]
        %v337 = vld [vmem:[%s303 + $0x108] sm:$0xff]
        %v338 = vld [vmem:[%s303 + $0x110] sm:$0xff]
        %v339 = vld [vmem:[%s303 + $0x118] sm:$0xff]
        %v340 = vld [vmem:[%s303 + $0x120] sm:$0xff]
        %v341 = vld [vmem:[%s303 + $0x128] sm:$0xff]
        %v342 = vld [vmem:[%s303 + $0x130] sm:$0xff]
        %v343 = vld [vmem:[%s303 + $0x138] sm:$0xff]
        %v344 = vld [vmem:[%s1] sm:$0xff]
        %v345 = vld [vmem:[%s1 + $0x8] sm:$0xff]
        %v346 = vld [vmem:[%s1 + $0x10] sm:$0xff]
        %v347 = vld [vmem:[%s1 + $0x18] sm:$0xff]
        %v348 = vld [vmem:[%s1 + $0x20] sm:$0xff]
        %v349 = vld [vmem:[%s1 + $0x28] sm:$0xff]
        %v350 = vld [vmem:[%s1 + $0x30] sm:$0xff]
        %v351 = vld [vmem:[%s1 + $0x38] sm:$0xff]
        %v352 = vld [vmem:[%s1 + $0x40] sm:$0xff]
        %v353 = vld [vmem:[%s1 + $0x48] sm:$0xff]
        %v354 = vld [vmem:[%s1 + $0x50] sm:$0xff]
        %v355 = vld [vmem:[%s1 + $0x58] sm:$0xff]
        %v356 = vld [vmem:[%s1 + $0x60] sm:$0xff]
        %v357 = vld [vmem:[%s1 + $0x68] sm:$0xff]
        %v358 = vld [vmem:[%s1 + $0x70] sm:$0xff]
        %v359 = vld [vmem:[%s1 + $0x78] sm:$0xff]
        %v360 = vld [vmem:[%s1 + $0x80] sm:$0xff]
        %v361 = vld [vmem:[%s1 + $0x88] sm:$0xff]
        %v362 = vld [vmem:[%s1 + $0x90] sm:$0xff]
        %v363 = vld [vmem:[%s1 + $0x98] sm:$0xff]
        %v364 = vld [vmem:[%s1 + $0xa0] sm:$0xff]
        %v365 = vld [vmem:[%s1 + $0xa8] sm:$0xff]
        %v366 = vld [vmem:[%s1 + $0xb0] sm:$0xff]
        %v367 = vld [vmem:[%s1 + $0xb8] sm:$0xff]
        %v368 = vld [vmem:[%s1 + $0xc0] sm:$0xff]
        %v369 = vld [vmem:[%s1 + $0xc8] sm:$0xff]
        %v370 = vld [vmem:[%s1 + $0xd0] sm:$0xff]
        %v371 = vld [vmem:[%s1 + $0xd8] sm:$0xff]
        %v372 = vld [vmem:[%s1 + $0xe0] sm:$0xff]
        %v373 = vld [vmem:[%s1 + $0xe8] sm:$0xff]
        %v374 = vld [vmem:[%s1 + $0xf0] sm:$0xff]
        %v375 = vld [vmem:[%s1 + $0xf8] sm:$0xff]
        %v376 = vld [vmem:[%s1 + $0x100] sm:$0xff]
        %v377 = vld [vmem:[%s1 + $0x108] sm:$0xff]
        %v378 = vld [vmem:[%s1 + $0x110] sm:$0xff]
        %v379 = vld [vmem:[%s1 + $0x118] sm:$0xff]
        %v380 = vld [vmem:[%s1 + $0x120] sm:$0xff]
        %v381 = vld [vmem:[%s1 + $0x128] sm:$0xff]
        %v382 = vld [vmem:[%s1 + $0x130] sm:$0xff]
        %v383 = vld [vmem:[%s1 + $0x138] sm:$0xff]
        %v384 = vld [vmem:[%s1 + $0x140] sm:$0xff]
        %v385 = vld [vmem:[%s1 + $0x148] sm:$0xff]
        %v386 = vld [vmem:[%s1 + $0x150] sm:$0xff]
        %v387 = vld [vmem:[%s1 + $0x158] sm:$0xff]
        %v388 = vld [vmem:[%s1 + $0x160] sm:$0xff]
        %v389 = vld [vmem:[%s1 + $0x168] sm:$0xff]
        %v390 = vld [vmem:[%s1 + $0x170] sm:$0xff]
        %v391 = vld [vmem:[%s1 + $0x178] sm:$0xff]
        %v392 = vld [vmem:[%s1 + $0x180] sm:$0xff]
        %v393 = vld [vmem:[%s1 + $0x188] sm:$0xff]
        %v394 = vld [vmem:[%s1 + $0x190] sm:$0xff]
        %v395 = vld [vmem:[%s1 + $0x198] sm:$0xff]
        %v396 = vld [vmem:[%s1 + $0x1a0] sm:$0xff]
        %v397 = vld [vmem:[%s1 + $0x1a8] sm:$0xff]
        %v398 = vld [vmem:[%s1 + $0x1b0] sm:$0xff]
        %v399 = vld [vmem:[%s1 + $0x1b8] sm:$0xff]
        %v400 = vld [vmem:[%s1 + $0x1c0] sm:$0xff]
        %v401 = vld [vmem:[%s1 + $0x1c8] sm:$0xff]
        %v402 = vld [vmem:[%s1 + $0x1d0] sm:$0xff]
        %v403 = vld [vmem:[%s1 + $0x1d8] sm:$0xff]
        %v404 = vld [vmem:[%s1 + $0x1e0] sm:$0xff]
        %v405 = vld [vmem:[%s1 + $0x1e8] sm:$0xff]
        %v406 = vld [vmem:[%s1 + $0x1f0] sm:$0xff]
        %v407 = vld [vmem:[%s1 + $0x1f8] sm:$0xff]
        %v408 = vld [vmem:[%s1 + $0x200] sm:$0xff]
        %v409 = vld [vmem:[%s1 + $0x208] sm:$0xff]
        %v410 = vld [vmem:[%s1 + $0x210] sm:$0xff]
        %v411 = vld [vmem:[%s1 + $0x218] sm:$0xff]
        %v412 = vld [vmem:[%s1 + $0x220] sm:$0xff]
        %v413 = vld [vmem:[%s1 + $0x228] sm:$0xff]
        %v414 = vld [vmem:[%s1 + $0x230] sm:$0xff]
        %v415 = vld [vmem:[%s1 + $0x238] sm:$0xff]
        %v416 = vld [vmem:[%s1 + $0x240] sm:$0xff]
        %v417 = vld [vmem:[%s1 + $0x248] sm:$0xff]
        %v418 = vld [vmem:[%s1 + $0x250] sm:$0xff]
        %v419 = vld [vmem:[%s1 + $0x258] sm:$0xff]
        %v420 = vld [vmem:[%s1 + $0x260] sm:$0xff]
        %v421 = vld [vmem:[%s1 + $0x268] sm:$0xff]
        %v422 = vld [vmem:[%s1 + $0x270] sm:$0xff]
        %v423 = vld [vmem:[%s1 + $0x278] sm:$0xff]
        %v424 = vld [vmem:[%s1 + $0x280] sm:$0xff]
        %v425 = vld [vmem:[%s1 + $0x288] sm:$0xff]
        %v426 = vld [vmem:[%s1 + $0x290] sm:$0xff]
        %v427 = vld [vmem:[%s1 + $0x298] sm:$0xff]
        %v428 = vld [vmem:[%s1 + $0x2a0] sm:$0xff]
        %v429 = vld [vmem:[%s1 + $0x2a8] sm:$0xff]
        %v430 = vld [vmem:[%s1 + $0x2b0] sm:$0xff]
        %v431 = vld [vmem:[%s1 + $0x2b8] sm:$0xff]
        %v432 = vld [vmem:[%s1 + $0x2c0] sm:$0xff]
        %v433 = vld [vmem:[%s1 + $0x2c8] sm:$0xff]
        %v434 = vld [vmem:[%s1 + $0x2d0] sm:$0xff]
        %v435 = vld [vmem:[%s1 + $0x2d8] sm:$0xff]
        %v436 = vld [vmem:[%s1 + $0x2e0] sm:$0xff]
        %v437 = vld [vmem:[%s1 + $0x2e8] sm:$0xff]
        %v438 = vld [vmem:[%s1 + $0x2f0] sm:$0xff]
        %v439 = vld [vmem:[%s1 + $0x2f8] sm:$0xff]
        %v440 = vld [vmem:[%s1 + $0x300] sm:$0xff]
        %v441 = vld [vmem:[%s1 + $0x308] sm:$0xff]
        %v442 = vld [vmem:[%s1 + $0x310] sm:$0xff]
        %v443 = vld [vmem:[%s1 + $0x318] sm:$0xff]
        %v444 = vld [vmem:[%s1 + $0x320] sm:$0xff]
        %v445 = vld [vmem:[%s1 + $0x328] sm:$0xff]
        %v446 = vld [vmem:[%s1 + $0x330] sm:$0xff]
        %v447 = vld [vmem:[%s1 + $0x338] sm:$0xff]
        %v448 = vld [vmem:[%s1 + $0x340] sm:$0xff]
        %v449 = vld [vmem:[%s1 + $0x348] sm:$0xff]
        %v450 = vld [vmem:[%s1 + $0x350] sm:$0xff]
        %v451 = vld [vmem:[%s1 + $0x358] sm:$0xff]
        %v452 = vld [vmem:[%s1 + $0x360] sm:$0xff]
        %v453 = vld [vmem:[%s1 + $0x368] sm:$0xff]
        %v454 = vld [vmem:[%s1 + $0x370] sm:$0xff]
        %v455 = vld [vmem:[%s1 + $0x378] sm:$0xff]
        %v456 = vld [vmem:[%s1 + $0x380] sm:$0xff]
        %v457 = vld [vmem:[%s1 + $0x388] sm:$0xff]
        %v458 = vld [vmem:[%s1 + $0x390] sm:$0xff]
        %v459 = vld [vmem:[%s1 + $0x398] sm:$0xff]
        %v460 = vld [vmem:[%s1 + $0x3a0] sm:$0xff]
        %v461 = vld [vmem:[%s1 + $0x3a8] sm:$0xff]
        %v462 = vld [vmem:[%s1 + $0x3b0] sm:$0xff]
        %v463 = vld [vmem:[%s1 + $0x3b8] sm:$0xff]
        %v464 = vld [vmem:[%s1 + $0x3c0] sm:$0xff]
        %v465 = vld [vmem:[%s1 + $0x3c8] sm:$0xff]
        %v466 = vld [vmem:[%s1 + $0x3d0] sm:$0xff]
        %v467 = vld [vmem:[%s1 + $0x3d8] sm:$0xff]
        %v468 = vld [vmem:[%s1 + $0x3e0] sm:$0xff]
        %v469 = vld [vmem:[%s1 + $0x3e8] sm:$0xff]
        %v470 = vld [vmem:[%s1 + $0x3f0] sm:$0xff]
        %v471 = vld [vmem:[%s1 + $0x3f8] sm:$0xff]
        %v472 = vld [vmem:[%s1 + $0x400] sm:$0xff]
        %v473 = vld [vmem:[%s1 + $0x408] sm:$0xff]
        %v474 = vld [vmem:[%s1 + $0x410] sm:$0xff]
        %v475 = vld [vmem:[%s1 + $0x418] sm:$0xff]
        %v476 = vld [vmem:[%s1 + $0x420] sm:$0xff]
        %v477 = vld [vmem:[%s1 + $0x428] sm:$0xff]
        %v478 = vld [vmem:[%s1 + $0x430] sm:$0xff]
        %v479 = vld [vmem:[%s1 + $0x438] sm:$0xff]
        %v480 = vld [vmem:[%s1 + $0x440] sm:$0xff]
        %v481 = vld [vmem:[%s1 + $0x448] sm:$0xff]
        %v482 = vld [vmem:[%s1 + $0x450] sm:$0xff]
        %v483 = vld [vmem:[%s1 + $0x458] sm:$0xff]
        %v484 = vld [vmem:[%s1 + $0x460] sm:$0xff]
        %v485 = vld [vmem:[%s1 + $0x468] sm:$0xff]
        %v486 = vld [vmem:[%s1 + $0x470] sm:$0xff]
        %v487 = vld [vmem:[%s1 + $0x478] sm:$0xff]
        %v488 = vld [vmem:[%s1 + $0x480] sm:$0xff]
        %v489 = vld [vmem:[%s1 + $0x488] sm:$0xff]
        %v490 = vld [vmem:[%s1 + $0x490] sm:$0xff]
        %v491 = vld [vmem:[%s1 + $0x498] sm:$0xff]
        %v492 = vld [vmem:[%s1 + $0x4a0] sm:$0xff]
        %v493 = vld [vmem:[%s1 + $0x4a8] sm:$0xff]
        %v494 = vld [vmem:[%s1 + $0x4b0] sm:$0xff]
        %v495 = vld [vmem:[%s1 + $0x4b8] sm:$0xff]
        %v496 = vld [vmem:[%s1 + $0x4c0] sm:$0xff]
        %v497 = vld [vmem:[%s1 + $0x4c8] sm:$0xff]
        %v498 = vld [vmem:[%s1 + $0x4d0] sm:$0xff]
        %v499 = vld [vmem:[%s1 + $0x4d8] sm:$0xff]
        %v500 = vld [vmem:[%s1 + $0x4e0] sm:$0xff]
        %v501 = vld [vmem:[%s1 + $0x4e8] sm:$0xff]
        %v502 = vld [vmem:[%s1 + $0x4f0] sm:$0xff]
        %v503 = vld [vmem:[%s1 + $0x4f8] sm:$0xff]
        %v504 = vld [vmem:[%s1 + $0x500] sm:$0xff]
        %v505 = vld [vmem:[%s1 + $0x508] sm:$0xff]
        %v506 = vld [vmem:[%s1 + $0x510] sm:$0xff]
        %v507 = vld [vmem:[%s1 + $0x518] sm:$0xff]
        %v508 = vld [vmem:[%s1 + $0x520] sm:$0xff]
        %v509 = vld [vmem:[%s1 + $0x528] sm:$0xff]
        %v510 = vld [vmem:[%s1 + $0x530] sm:$0xff]
        %v511 = vld [vmem:[%s1 + $0x538] sm:$0xff]
        %v512 = vld [vmem:[%s1 + $0x540] sm:$0xff]
        %v513 = vld [vmem:[%s1 + $0x548] sm:$0xff]
        %v514 = vld [vmem:[%s1 + $0x550] sm:$0xff]
        %v515 = vld [vmem:[%s1 + $0x558] sm:$0xff]
        %v516 = vld [vmem:[%s1 + $0x560] sm:$0xff]
        %v517 = vld [vmem:[%s1 + $0x568] sm:$0xff]
        %v518 = vld [vmem:[%s1 + $0x570] sm:$0xff]
        %v519 = vld [vmem:[%s1 + $0x578] sm:$0xff]
        %v520 = vld [vmem:[%s1 + $0x580] sm:$0xff]
        %v521 = vld [vmem:[%s1 + $0x588] sm:$0xff]
        %v522 = vld [vmem:[%s1 + $0x590] sm:$0xff]
        %v523 = vld [vmem:[%s1 + $0x598] sm:$0xff]
        %v524 = vld [vmem:[%s1 + $0x5a0] sm:$0xff]
        %v525 = vld [vmem:[%s1 + $0x5a8] sm:$0xff]
        %v526 = vld [vmem:[%s1 + $0x5b0] sm:$0xff]
        %v527 = vld [vmem:[%s1 + $0x5b8] sm:$0xff]
        %v528 = vld [vmem:[%s1 + $0x5c0] sm:$0xff]
        %v529 = vld [vmem:[%s1 + $0x5c8] sm:$0xff]
        %v530 = vld [vmem:[%s1 + $0x5d0] sm:$0xff]
        %v531 = vld [vmem:[%s1 + $0x5d8] sm:$0xff]
        %v532 = vld [vmem:[%s1 + $0x5e0] sm:$0xff]
        %v533 = vld [vmem:[%s1 + $0x5e8] sm:$0xff]
        %v534 = vld [vmem:[%s1 + $0x5f0] sm:$0xff]
        %v535 = vld [vmem:[%s1 + $0x5f8] sm:$0xff]
        %v536 = vld [vmem:[%s1 + $0x600] sm:$0xff]
        %v537 = vld [vmem:[%s1 + $0x608] sm:$0xff]
        %v538 = vld [vmem:[%s1 + $0x610] sm:$0xff]
        %v539 = vld [vmem:[%s1 + $0x618] sm:$0xff]
        %v540 = vld [vmem:[%s1 + $0x620] sm:$0xff]
        %v541 = vld [vmem:[%s1 + $0x628] sm:$0xff]
        %v542 = vld [vmem:[%s1 + $0x630] sm:$0xff]
        %v543 = vld [vmem:[%s1 + $0x638] sm:$0xff]
        %v544 = vld [vmem:[%s1 + $0x640] sm:$0xff]
        %v545 = vld [vmem:[%s1 + $0x648] sm:$0xff]
        %v546 = vld [vmem:[%s1 + $0x650] sm:$0xff]
        %v547 = vld [vmem:[%s1 + $0x658] sm:$0xff]
        %v548 = vld [vmem:[%s1 + $0x660] sm:$0xff]
        %v549 = vld [vmem:[%s1 + $0x668] sm:$0xff]
        %v550 = vld [vmem:[%s1 + $0x670] sm:$0xff]
        %v551 = vld [vmem:[%s1 + $0x678] sm:$0xff]
        %v552 = vld [vmem:[%s1 + $0x680] sm:$0xff]
        %v553 = vld [vmem:[%s1 + $0x688] sm:$0xff]
        %v554 = vld [vmem:[%s1 + $0x690] sm:$0xff]
        %v555 = vld [vmem:[%s1 + $0x698] sm:$0xff]
        %v556 = vld [vmem:[%s1 + $0x6a0] sm:$0xff]
        %v557 = vld [vmem:[%s1 + $0x6a8] sm:$0xff]
        %v558 = vld [vmem:[%s1 + $0x6b0] sm:$0xff]
        %v559 = vld [vmem:[%s1 + $0x6b8] sm:$0xff]
        %v560 = vld [vmem:[%s1 + $0x6c0] sm:$0xff]
        %v561 = vld [vmem:[%s1 + $0x6c8] sm:$0xff]
        %v562 = vld [vmem:[%s1 + $0x6d0] sm:$0xff]
        %v563 = vld [vmem:[%s1 + $0x6d8] sm:$0xff]
        %v564 = vld [vmem:[%s1 + $0x6e0] sm:$0xff]
        %v565 = vld [vmem:[%s1 + $0x6e8] sm:$0xff]
        %v566 = vld [vmem:[%s1 + $0x6f0] sm:$0xff]
        %v567 = vld [vmem:[%s1 + $0x6f8] sm:$0xff]
        %v568 = vld [vmem:[%s1 + $0x700] sm:$0xff]
        %v569 = vld [vmem:[%s1 + $0x708] sm:$0xff]
        %v570 = vld [vmem:[%s1 + $0x710] sm:$0xff]
        %v571 = vld [vmem:[%s1 + $0x718] sm:$0xff]
        %v572 = vld [vmem:[%s1 + $0x720] sm:$0xff]
        %v573 = vld [vmem:[%s1 + $0x728] sm:$0xff]
        %v574 = vld [vmem:[%s1 + $0x730] sm:$0xff]
        %v575 = vld [vmem:[%s1 + $0x738] sm:$0xff]
        %v576 = vld [vmem:[%s1 + $0x740] sm:$0xff]
        %v577 = vld [vmem:[%s1 + $0x748] sm:$0xff]
        %v578 = vld [vmem:[%s1 + $0x750] sm:$0xff]
        %v579 = vld [vmem:[%s1 + $0x758] sm:$0xff]
        %v580 = vld [vmem:[%s1 + $0x760] sm:$0xff]
        %v581 = vld [vmem:[%s1 + $0x768] sm:$0xff]
        %v582 = vld [vmem:[%s1 + $0x770] sm:$0xff]
        %v583 = vld [vmem:[%s1 + $0x778] sm:$0xff]
        %v584 = vld [vmem:[%s1 + $0x780] sm:$0xff]
        %v585 = vld [vmem:[%s1 + $0x788] sm:$0xff]
        %v586 = vld [vmem:[%s1 + $0x790] sm:$0xff]
        %v587 = vld [vmem:[%s1 + $0x798] sm:$0xff]
        %v588 = vld [vmem:[%s1 + $0x7a0] sm:$0xff]
        %v589 = vld [vmem:[%s1 + $0x7a8] sm:$0xff]
        %v590 = vld [vmem:[%s1 + $0x7b0] sm:$0xff]
        %v591 = vld [vmem:[%s1 + $0x7b8] sm:$0xff]
        %v592 = vld [vmem:[%s1 + $0x7c0] sm:$0xff]
        %v593 = vld [vmem:[%s1 + $0x7c8] sm:$0xff]
        %v594 = vld [vmem:[%s1 + $0x7d0] sm:$0xff]
        %v595 = vld [vmem:[%s1 + $0x7d8] sm:$0xff]
        %v596 = vld [vmem:[%s1 + $0x7e0] sm:$0xff]
        %v597 = vld [vmem:[%s1 + $0x7e8] sm:$0xff]
        %v598 = vld [vmem:[%s1 + $0x7f0] sm:$0xff]
        %v599 = vld [vmem:[%s1 + $0x7f8] sm:$0xff]
        %v600 = vld [vmem:[%s1 + $0x800] sm:$0xff]
        %v601 = vld [vmem:[%s1 + $0x808] sm:$0xff]
        %v602 = vld [vmem:[%s1 + $0x810] sm:$0xff]
        %v603 = vld [vmem:[%s1 + $0x818] sm:$0xff]
        %v604 = vld [vmem:[%s1 + $0x820] sm:$0xff]
        %v605 = vld [vmem:[%s1 + $0x828] sm:$0xff]
        %v606 = vld [vmem:[%s1 + $0x830] sm:$0xff]
        %v607 = vld [vmem:[%s1 + $0x838] sm:$0xff]
        %v608 = vld [vmem:[%s1 + $0x840] sm:$0xff]
        %v609 = vld [vmem:[%s1 + $0x848] sm:$0xff]
        %v610 = vld [vmem:[%s1 + $0x850] sm:$0xff]
        %v611 = vld [vmem:[%s1 + $0x858] sm:$0xff]
        %v612 = vld [vmem:[%s1 + $0x860] sm:$0xff]
        %v613 = vld [vmem:[%s1 + $0x868] sm:$0xff]
        %v614 = vld [vmem:[%s1 + $0x870] sm:$0xff]
        %v615 = vld [vmem:[%s1 + $0x878] sm:$0xff]
        %v616 = vld [vmem:[%s1 + $0x880] sm:$0xff]
        %v617 = vld [vmem:[%s1 + $0x888] sm:$0xff]
        %v618 = vld [vmem:[%s1 + $0x890] sm:$0xff]
        %v619 = vld [vmem:[%s1 + $0x898] sm:$0xff]
        %v620 = vld [vmem:[%s1 + $0x8a0] sm:$0xff]
        %v621 = vld [vmem:[%s1 + $0x8a8] sm:$0xff]
        %v622 = vld [vmem:[%s1 + $0x8b0] sm:$0xff]
        %v623 = vld [vmem:[%s1 + $0x8b8] sm:$0xff]
        %v624 = vld [vmem:[%s1 + $0x8c0] sm:$0xff]
        %v625 = vld [vmem:[%s1 + $0x8c8] sm:$0xff]
        %v626 = vld [vmem:[%s1 + $0x8d0] sm:$0xff]
        %v627 = vld [vmem:[%s1 + $0x8d8] sm:$0xff]
        %v628 = vld [vmem:[%s1 + $0x8e0] sm:$0xff]
        %v629 = vld [vmem:[%s1 + $0x8e8] sm:$0xff]
        %v630 = vld [vmem:[%s1 + $0x8f0] sm:$0xff]
        %v631 = vld [vmem:[%s1 + $0x8f8] sm:$0xff]
        %v632 = vld [vmem:[%s1 + $0x900] sm:$0xff]
        %v633 = vld [vmem:[%s1 + $0x908] sm:$0xff]
        %v634 = vld [vmem:[%s1 + $0x910] sm:$0xff]
        %v635 = vld [vmem:[%s1 + $0x918] sm:$0xff]
        %v636 = vld [vmem:[%s1 + $0x920] sm:$0xff]
        %v637 = vld [vmem:[%s1 + $0x928] sm:$0xff]
        %v638 = vld [vmem:[%s1 + $0x930] sm:$0xff]
        %v639 = vld [vmem:[%s1 + $0x938] sm:$0xff]
        %v640 = vld [vmem:[%s1 + $0x940] sm:$0xff]
        %v641 = vld [vmem:[%s1 + $0x948] sm:$0xff]
        %v642 = vld [vmem:[%s1 + $0x950] sm:$0xff]
        %v643 = vld [vmem:[%s1 + $0x958] sm:$0xff]
        %v644 = vld [vmem:[%s1 + $0x960] sm:$0xff]
        %v645 = vld [vmem:[%s1 + $0x968] sm:$0xff]
        %v646 = vld [vmem:[%s1 + $0x970] sm:$0xff]
        %v647 = vld [vmem:[%s1 + $0x978] sm:$0xff]
        %v648 = vld [vmem:[%s1 + $0x980] sm:$0xff]
        %v649 = vld [vmem:[%s1 + $0x988] sm:$0xff]
        %v650 = vld [vmem:[%s1 + $0x990] sm:$0xff]
        %v651 = vld [vmem:[%s1 + $0x998] sm:$0xff]
        %v652 = vld [vmem:[%s1 + $0x9a0] sm:$0xff]
        %v653 = vld [vmem:[%s1 + $0x9a8] sm:$0xff]
        %v654 = vld [vmem:[%s1 + $0x9b0] sm:$0xff]
        %v655 = vld [vmem:[%s1 + $0x9b8] sm:$0xff]
        %v656 = vld [vmem:[%s1 + $0x9c0] sm:$0xff]
        %v657 = vld [vmem:[%s1 + $0x9c8] sm:$0xff]
        %v658 = vld [vmem:[%s1 + $0x9d0] sm:$0xff]
        %v659 = vld [vmem:[%s1 + $0x9d8] sm:$0xff]
        %v660 = vld [vmem:[%s1 + $0x9e0] sm:$0xff]
        %v661 = vld [vmem:[%s1 + $0x9e8] sm:$0xff]
        %v662 = vld [vmem:[%s1 + $0x9f0] sm:$0xff]
        %v663 = vld [vmem:[%s1 + $0x9f8] sm:$0xff]
        %v664 = vld [vmem:[%s1 + $0xa00] sm:$0xff]
        %v665 = vld [vmem:[%s1 + $0xa08] sm:$0xff]
        %v666 = vld [vmem:[%s1 + $0xa10] sm:$0xff]
        %v667 = vld [vmem:[%s1 + $0xa18] sm:$0xff]
        %v668 = vld [vmem:[%s1 + $0xa20] sm:$0xff]
        %v669 = vld [vmem:[%s1 + $0xa28] sm:$0xff]
        %v670 = vld [vmem:[%s1 + $0xa30] sm:$0xff]
        %v671 = vld [vmem:[%s1 + $0xa38] sm:$0xff]
        %v672 = vld [vmem:[%s1 + $0xa40] sm:$0xff]
        %v673 = vld [vmem:[%s1 + $0xa48] sm:$0xff]
        %v674 = vld [vmem:[%s1 + $0xa50] sm:$0xff]
        %v675 = vld [vmem:[%s1 + $0xa58] sm:$0xff]
        %v676 = vld [vmem:[%s1 + $0xa60] sm:$0xff]
        %v677 = vld [vmem:[%s1 + $0xa68] sm:$0xff]
        %v678 = vld [vmem:[%s1 + $0xa70] sm:$0xff]
        %v679 = vld [vmem:[%s1 + $0xa78] sm:$0xff]
        %v680 = vld [vmem:[%s1 + $0xa80] sm:$0xff]
        %v681 = vld [vmem:[%s1 + $0xa88] sm:$0xff]
        %v682 = vld [vmem:[%s1 + $0xa90] sm:$0xff]
        %v683 = vld [vmem:[%s1 + $0xa98] sm:$0xff]
        %v684 = vld [vmem:[%s1 + $0xaa0] sm:$0xff]
        %v685 = vld [vmem:[%s1 + $0xaa8] sm:$0xff]
        %v686 = vld [vmem:[%s1 + $0xab0] sm:$0xff]
        %v687 = vld [vmem:[%s1 + $0xab8] sm:$0xff]
        %v688 = vld [vmem:[%s1 + $0xac0] sm:$0xff]
        %v689 = vld [vmem:[%s1 + $0xac8] sm:$0xff]
        %v690 = vld [vmem:[%s1 + $0xad0] sm:$0xff]
        %v691 = vld [vmem:[%s1 + $0xad8] sm:$0xff]
        %v692 = vld [vmem:[%s1 + $0xae0] sm:$0xff]
        %v693 = vld [vmem:[%s1 + $0xae8] sm:$0xff]
        %v694 = vld [vmem:[%s1 + $0xaf0] sm:$0xff]
        %v695 = vld [vmem:[%s1 + $0xaf8] sm:$0xff]
        %v696 = vld [vmem:[%s1 + $0xb00] sm:$0xff]
        %v697 = vld [vmem:[%s1 + $0xb08] sm:$0xff]
        %v698 = vld [vmem:[%s1 + $0xb10] sm:$0xff]
        %v699 = vld [vmem:[%s1 + $0xb18] sm:$0xff]
        %v700 = vld [vmem:[%s1 + $0xb20] sm:$0xff]
        %v701 = vld [vmem:[%s1 + $0xb28] sm:$0xff]
        %v702 = vld [vmem:[%s1 + $0xb30] sm:$0xff]
        %v703 = vld [vmem:[%s1 + $0xb38] sm:$0xff]
        %v704 = vld [vmem:[%s1 + $0xb40] sm:$0xff]
        %v705 = vld [vmem:[%s1 + $0xb48] sm:$0xff]
        %v706 = vld [vmem:[%s1 + $0xb50] sm:$0xff]
        %v707 = vld [vmem:[%s1 + $0xb58] sm:$0xff]
        %v708 = vld [vmem:[%s1 + $0xb60] sm:$0xff]
        %v709 = vld [vmem:[%s1 + $0xb68] sm:$0xff]
        %v710 = vld [vmem:[%s1 + $0xb70] sm:$0xff]
        %v711 = vld [vmem:[%s1 + $0xb78] sm:$0xff]
        %v712 = vld [vmem:[%s1 + $0xb80] sm:$0xff]
        %v713 = vld [vmem:[%s1 + $0xb88] sm:$0xff]
        %v714 = vld [vmem:[%s1 + $0xb90] sm:$0xff]
        %v715 = vld [vmem:[%s1 + $0xb98] sm:$0xff]
        %v716 = vld [vmem:[%s1 + $0xba0] sm:$0xff]
        %v717 = vld [vmem:[%s1 + $0xba8] sm:$0xff]
        %v718 = vld [vmem:[%s1 + $0xbb0] sm:$0xff]
        %v719 = vld [vmem:[%s1 + $0xbb8] sm:$0xff]
        %v720 = vld [vmem:[%s1 + $0xbc0] sm:$0xff]
        %v721 = vld [vmem:[%s1 + $0xbc8] sm:$0xff]
        %v722 = vld [vmem:[%s1 + $0xbd0] sm:$0xff]
        %v723 = vld [vmem:[%s1 + $0xbd8] sm:$0xff]
        %v724 = vld [vmem:[%s1 + $0xbe0] sm:$0xff]
        %v725 = vld [vmem:[%s1 + $0xbe8] sm:$0xff]
        %v726 = vld [vmem:[%s1 + $0xbf0] sm:$0xff]
        %v727 = vld [vmem:[%s1 + $0xbf8] sm:$0xff]
        %v728 = vld [vmem:[%s1 + $0xc00] sm:$0xff]
        %v729 = vld [vmem:[%s1 + $0xc08] sm:$0xff]
        %v730 = vld [vmem:[%s1 + $0xc10] sm:$0xff]
        %v731 = vld [vmem:[%s1 + $0xc18] sm:$0xff]
        %v732 = vld [vmem:[%s1 + $0xc20] sm:$0xff]
        %v733 = vld [vmem:[%s1 + $0xc28] sm:$0xff]
        %v734 = vld [vmem:[%s1 + $0xc30] sm:$0xff]
        %v735 = vld [vmem:[%s1 + $0xc38] sm:$0xff]
        %v736 = vld [vmem:[%s1 + $0xc40] sm:$0xff]
        %v737 = vld [vmem:[%s1 + $0xc48] sm:$0xff]
        %v738 = vld [vmem:[%s1 + $0xc50] sm:$0xff]
        %v739 = vld [vmem:[%s1 + $0xc58] sm:$0xff]
        %v740 = vld [vmem:[%s1 + $0xc60] sm:$0xff]
        %v741 = vld [vmem:[%s1 + $0xc68] sm:$0xff]
        %v742 = vld [vmem:[%s1 + $0xc70] sm:$0xff]
        %v743 = vld [vmem:[%s1 + $0xc78] sm:$0xff]
        %v744 = vld [vmem:[%s1 + $0xc80] sm:$0xff]
        %v745 = vld [vmem:[%s1 + $0xc88] sm:$0xff]
        %v746 = vld [vmem:[%s1 + $0xc90] sm:$0xff]
        %v747 = vld [vmem:[%s1 + $0xc98] sm:$0xff]
        %v748 = vld [vmem:[%s1 + $0xca0] sm:$0xff]
        %v749 = vld [vmem:[%s1 + $0xca8] sm:$0xff]
        %v750 = vld [vmem:[%s1 + $0xcb0] sm:$0xff]
        %v751 = vld [vmem:[%s1 + $0xcb8] sm:$0xff]
        %v752 = vld [vmem:[%s1 + $0xcc0] sm:$0xff]
        %v753 = vld [vmem:[%s1 + $0xcc8] sm:$0xff]
        %v754 = vld [vmem:[%s1 + $0xcd0] sm:$0xff]
        %v755 = vld [vmem:[%s1 + $0xcd8] sm:$0xff]
        %v756 = vld [vmem:[%s1 + $0xce0] sm:$0xff]
        %v757 = vld [vmem:[%s1 + $0xce8] sm:$0xff]
        %v758 = vld [vmem:[%s1 + $0xcf0] sm:$0xff]
        %v759 = vld [vmem:[%s1 + $0xcf8] sm:$0xff]
        %v760 = vld [vmem:[%s1 + $0xd00] sm:$0xff]
        %v761 = vld [vmem:[%s1 + $0xd08] sm:$0xff]
        %v762 = vld [vmem:[%s1 + $0xd10] sm:$0xff]
        %v763 = vld [vmem:[%s1 + $0xd18] sm:$0xff]
        %v764 = vld [vmem:[%s1 + $0xd20] sm:$0xff]
        %v765 = vld [vmem:[%s1 + $0xd28] sm:$0xff]
        %v766 = vld [vmem:[%s1 + $0xd30] sm:$0xff]
        %v767 = vld [vmem:[%s1 + $0xd38] sm:$0xff]
        %v768 = vld [vmem:[%s1 + $0xd40] sm:$0xff]
        %v769 = vld [vmem:[%s1 + $0xd48] sm:$0xff]
        %v770 = vld [vmem:[%s1 + $0xd50] sm:$0xff]
        %v771 = vld [vmem:[%s1 + $0xd58] sm:$0xff]
        %v772 = vld [vmem:[%s1 + $0xd60] sm:$0xff]
        %v773 = vld [vmem:[%s1 + $0xd68] sm:$0xff]
        %v774 = vld [vmem:[%s1 + $0xd70] sm:$0xff]
        %v775 = vld [vmem:[%s1 + $0xd78] sm:$0xff]
        %v776 = vld [vmem:[%s1 + $0xd80] sm:$0xff]
        %v777 = vld [vmem:[%s1 + $0xd88] sm:$0xff]
        %v778 = vld [vmem:[%s1 + $0xd90] sm:$0xff]
        %v779 = vld [vmem:[%s1 + $0xd98] sm:$0xff]
        %v780 = vld [vmem:[%s1 + $0xda0] sm:$0xff]
        %v781 = vld [vmem:[%s1 + $0xda8] sm:$0xff]
        %v782 = vld [vmem:[%s1 + $0xdb0] sm:$0xff]
        %v783 = vld [vmem:[%s1 + $0xdb8] sm:$0xff]
        %v784 = vld [vmem:[%s1 + $0xdc0] sm:$0xff]
        %v785 = vld [vmem:[%s1 + $0xdc8] sm:$0xff]
        %v786 = vld [vmem:[%s1 + $0xdd0] sm:$0xff]
        %v787 = vld [vmem:[%s1 + $0xdd8] sm:$0xff]
        %v788 = vld [vmem:[%s1 + $0xde0] sm:$0xff]
        %v789 = vld [vmem:[%s1 + $0xde8] sm:$0xff]
        %v790 = vld [vmem:[%s1 + $0xdf0] sm:$0xff]
        %v791 = vld [vmem:[%s1 + $0xdf8] sm:$0xff]
        %v792 = vld [vmem:[%s1 + $0xe00] sm:$0xff]
        %v793 = vld [vmem:[%s1 + $0xe08] sm:$0xff]
        %v794 = vld [vmem:[%s1 + $0xe10] sm:$0xff]
        %v795 = vld [vmem:[%s1 + $0xe18] sm:$0xff]
        %v796 = vld [vmem:[%s1 + $0xe20] sm:$0xff]
        %v797 = vld [vmem:[%s1 + $0xe28] sm:$0xff]
        %v798 = vld [vmem:[%s1 + $0xe30] sm:$0xff]
        %v799 = vld [vmem:[%s1 + $0xe38] sm:$0xff]
        %v800 = vld [vmem:[%s1 + $0xe40] sm:$0xff]
        %v801 = vld [vmem:[%s1 + $0xe48] sm:$0xff]
        %v802 = vld [vmem:[%s1 + $0xe50] sm:$0xff]
        %v803 = vld [vmem:[%s1 + $0xe58] sm:$0xff]
        %v804 = vld [vmem:[%s1 + $0xe60] sm:$0xff]
        %v805 = vld [vmem:[%s1 + $0xe68] sm:$0xff]
        %v806 = vld [vmem:[%s1 + $0xe70] sm:$0xff]
        %v807 = vld [vmem:[%s1 + $0xe78] sm:$0xff]
        %v808 = vld [vmem:[%s1 + $0xe80] sm:$0xff]
        %v809 = vld [vmem:[%s1 + $0xe88] sm:$0xff]
        %v810 = vld [vmem:[%s1 + $0xe90] sm:$0xff]
        %v811 = vld [vmem:[%s1 + $0xe98] sm:$0xff]
        %v812 = vld [vmem:[%s1 + $0xea0] sm:$0xff]
        %v813 = vld [vmem:[%s1 + $0xea8] sm:$0xff]
        %v814 = vld [vmem:[%s1 + $0xeb0] sm:$0xff]
        %v815 = vld [vmem:[%s1 + $0xeb8] sm:$0xff]
        %v816 = vld [vmem:[%s1 + $0xec0] sm:$0xff]
        %v817 = vld [vmem:[%s1 + $0xec8] sm:$0xff]
        %v818 = vld [vmem:[%s1 + $0xed0] sm:$0xff]
        %v819 = vld [vmem:[%s1 + $0xed8] sm:$0xff]
        %v820 = vld [vmem:[%s1 + $0xee0] sm:$0xff]
        %v821 = vld [vmem:[%s1 + $0xee8] sm:$0xff]
        %v822 = vld [vmem:[%s1 + $0xef0] sm:$0xff]
        %v823 = vld [vmem:[%s1 + $0xef8] sm:$0xff]
        %v824 = vld [vmem:[%s1 + $0xf00] sm:$0xff]
        %v825 = vld [vmem:[%s1 + $0xf08] sm:$0xff]
        %v826 = vld [vmem:[%s1 + $0xf10] sm:$0xff]
        %v827 = vld [vmem:[%s1 + $0xf18] sm:$0xff]
        %v828 = vld [vmem:[%s1 + $0xf20] sm:$0xff]
        %v829 = vld [vmem:[%s1 + $0xf28] sm:$0xff]
        %v830 = vld [vmem:[%s1 + $0xf30] sm:$0xff]
        %v831 = vld [vmem:[%s1 + $0xf38] sm:$0xff]
        %v832 = vld [vmem:[%s1 + $0xf40] sm:$0xff]
        %v833 = vld [vmem:[%s1 + $0xf48] sm:$0xff]
        %v834 = vld [vmem:[%s1 + $0xf50] sm:$0xff]
        %v835 = vld [vmem:[%s1 + $0xf58] sm:$0xff]
        %v836 = vld [vmem:[%s1 + $0xf60] sm:$0xff]
        %v837 = vld [vmem:[%s1 + $0xf68] sm:$0xff]
        %v838 = vld [vmem:[%s1 + $0xf70] sm:$0xff]
        %v839 = vld [vmem:[%s1 + $0xf78] sm:$0xff]
        %v840 = vld [vmem:[%s1 + $0xf80] sm:$0xff]
        %v841 = vld [vmem:[%s1 + $0xf88] sm:$0xff]
        %v842 = vld [vmem:[%s1 + $0xf90] sm:$0xff]
        %v843 = vld [vmem:[%s1 + $0xf98] sm:$0xff]
        %v844 = vld [vmem:[%s1 + $0xfa0] sm:$0xff]
        %v845 = vld [vmem:[%s1 + $0xfa8] sm:$0xff]
        %v846 = vld [vmem:[%s1 + $0xfb0] sm:$0xff]
        %v847 = vld [vmem:[%s1 + $0xfb8] sm:$0xff]
        %v848 = vld [vmem:[%s1 + $0xfc0] sm:$0xff]
        %v849 = vld [vmem:[%s1 + $0xfc8] sm:$0xff]
        %v850 = vld [vmem:[%s1 + $0xfd0] sm:$0xff]
        %v851 = vld [vmem:[%s1 + $0xfd8] sm:$0xff]
        %v852 = vld [vmem:[%s1 + $0xfe0] sm:$0xff]
        %v853 = vld [vmem:[%s1 + $0xfe8] sm:$0xff]
        %v854 = vld [vmem:[%s1 + $0xff0] sm:$0xff]
        %v855 = vld [vmem:[%s1 + $0xff8] sm:$0xff]
        %v856 = vld [vmem:[%s1 + $0x1000] sm:$0xff]
        %v857 = vld [vmem:[%s1 + $0x1008] sm:$0xff]
        %v858 = vld [vmem:[%s1 + $0x1010] sm:$0xff]
        %v859 = vld [vmem:[%s1 + $0x1018] sm:$0xff]
        %v860 = vld [vmem:[%s1 + $0x1020] sm:$0xff]
        %v861 = vld [vmem:[%s1 + $0x1028] sm:$0xff]
        %v862 = vld [vmem:[%s1 + $0x1030] sm:$0xff]
        %v863 = vld [vmem:[%s1 + $0x1038] sm:$0xff]
        %v864 = vld [vmem:[%s1 + $0x1040] sm:$0xff]
        %v865 = vld [vmem:[%s1 + $0x1048] sm:$0xff]
        %v866 = vld [vmem:[%s1 + $0x1050] sm:$0xff]
        %v867 = vld [vmem:[%s1 + $0x1058] sm:$0xff]
        %v868 = vld [vmem:[%s1 + $0x1060] sm:$0xff]
        %v869 = vld [vmem:[%s1 + $0x1068] sm:$0xff]
        %v870 = vld [vmem:[%s1 + $0x1070] sm:$0xff]
        %v871 = vld [vmem:[%s1 + $0x1078] sm:$0xff]
        %v872 = vld [vmem:[%s1 + $0x1080] sm:$0xff]
        %v873 = vld [vmem:[%s1 + $0x1088] sm:$0xff]
        %v874 = vld [vmem:[%s1 + $0x1090] sm:$0xff]
        %v875 = vld [vmem:[%s1 + $0x1098] sm:$0xff]
        %v876 = vld [vmem:[%s1 + $0x10a0] sm:$0xff]
        %v877 = vld [vmem:[%s1 + $0x10a8] sm:$0xff]
        %v878 = vld [vmem:[%s1 + $0x10b0] sm:$0xff]
        %v879 = vld [vmem:[%s1 + $0x10b8] sm:$0xff]
        %v880 = vld [vmem:[%s1 + $0x10c0] sm:$0xff]
        %v881 = vld [vmem:[%s1 + $0x10c8] sm:$0xff]
        %v882 = vld [vmem:[%s1 + $0x10d0] sm:$0xff]
        %v883 = vld [vmem:[%s1 + $0x10d8] sm:$0xff]
        %v884 = vld [vmem:[%s1 + $0x10e0] sm:$0xff]
        %v885 = vld [vmem:[%s1 + $0x10e8] sm:$0xff]
        %v886 = vld [vmem:[%s1 + $0x10f0] sm:$0xff]
        %v887 = vld [vmem:[%s1 + $0x10f8] sm:$0xff]
        %v888 = vld [vmem:[%s1 + $0x1100] sm:$0xff]
        %v889 = vld [vmem:[%s1 + $0x1108] sm:$0xff]
        %v890 = vld [vmem:[%s1 + $0x1110] sm:$0xff]
        %v891 = vld [vmem:[%s1 + $0x1118] sm:$0xff]
        %v892 = vld [vmem:[%s1 + $0x1120] sm:$0xff]
        %v893 = vld [vmem:[%s1 + $0x1128] sm:$0xff]
        %v894 = vld [vmem:[%s1 + $0x1130] sm:$0xff]
        %v895 = vld [vmem:[%s1 + $0x1138] sm:$0xff]
        %v896 = vld [vmem:[%s1 + $0x1140] sm:$0xff]
        %v897 = vld [vmem:[%s1 + $0x1148] sm:$0xff]
        %v898 = vld [vmem:[%s1 + $0x1150] sm:$0xff]
        %v899 = vld [vmem:[%s1 + $0x1158] sm:$0xff]
        %v900 = vld [vmem:[%s1 + $0x1160] sm:$0xff]
        %v901 = vld [vmem:[%s1 + $0x1168] sm:$0xff]
        %v902 = vld [vmem:[%s1 + $0x1170] sm:$0xff]
        %v903 = vld [vmem:[%s1 + $0x1178] sm:$0xff]
        %v904 = vld [vmem:[%s1 + $0x1180] sm:$0xff]
        %v905 = vld [vmem:[%s1 + $0x1188] sm:$0xff]
        %v906 = vld [vmem:[%s1 + $0x1190] sm:$0xff]
        %v907 = vld [vmem:[%s1 + $0x1198] sm:$0xff]
        %v908 = vld [vmem:[%s1 + $0x11a0] sm:$0xff]
        %v909 = vld [vmem:[%s1 + $0x11a8] sm:$0xff]
        %v910 = vld [vmem:[%s1 + $0x11b0] sm:$0xff]
        %v911 = vld [vmem:[%s1 + $0x11b8] sm:$0xff]
        %v912 = vld [vmem:[%s1 + $0x11c0] sm:$0xff]
        %v913 = vld [vmem:[%s1 + $0x11c8] sm:$0xff]
        %v914 = vld [vmem:[%s1 + $0x11d0] sm:$0xff]
        %v915 = vld [vmem:[%s1 + $0x11d8] sm:$0xff]
        %v916 = vld [vmem:[%s1 + $0x11e0] sm:$0xff]
        %v917 = vld [vmem:[%s1 + $0x11e8] sm:$0xff]
        %v918 = vld [vmem:[%s1 + $0x11f0] sm:$0xff]
        %v919 = vld [vmem:[%s1 + $0x11f8] sm:$0xff]
        %v920 = vld [vmem:[%s1 + $0x1200] sm:$0xff]
        %v921 = vld [vmem:[%s1 + $0x1208] sm:$0xff]
        %v922 = vld [vmem:[%s1 + $0x1210] sm:$0xff]
        %v923 = vld [vmem:[%s1 + $0x1218] sm:$0xff]
        %v924 = vld [vmem:[%s1 + $0x1220] sm:$0xff]
        %v925 = vld [vmem:[%s1 + $0x1228] sm:$0xff]
        %v926 = vld [vmem:[%s1 + $0x1230] sm:$0xff]
        %v927 = vld [vmem:[%s1 + $0x1238] sm:$0xff]
        %v928 = vld [vmem:[%s1 + $0x1240] sm:$0xff]
        %v929 = vld [vmem:[%s1 + $0x1248] sm:$0xff]
        %v930 = vld [vmem:[%s1 + $0x1250] sm:$0xff]
        %v931 = vld [vmem:[%s1 + $0x1258] sm:$0xff]
        %v932 = vld [vmem:[%s1 + $0x1260] sm:$0xff]
        %v933 = vld [vmem:[%s1 + $0x1268] sm:$0xff]
        %v934 = vld [vmem:[%s1 + $0x1270] sm:$0xff]
        %v935 = vld [vmem:[%s1 + $0x1278] sm:$0xff]
        %v936 = vld [vmem:[%s1 + $0x1280] sm:$0xff]
        %v937 = vld [vmem:[%s1 + $0x1288] sm:$0xff]
        %v938 = vld [vmem:[%s1 + $0x1290] sm:$0xff]
        %v939 = vld [vmem:[%s1 + $0x1298] sm:$0xff]
        %v940 = vld [vmem:[%s1 + $0x12a0] sm:$0xff]
        %v941 = vld [vmem:[%s1 + $0x12a8] sm:$0xff]
        %v942 = vld [vmem:[%s1 + $0x12b0] sm:$0xff]
        %v943 = vld [vmem:[%s1 + $0x12b8] sm:$0xff]
        %v944 = vld [vmem:[%s1 + $0x12c0] sm:$0xff]
        %v945 = vld [vmem:[%s1 + $0x12c8] sm:$0xff]
        %v946 = vld [vmem:[%s1 + $0x12d0] sm:$0xff]
        %v947 = vld [vmem:[%s1 + $0x12d8] sm:$0xff]
        %v948 = vld [vmem:[%s1 + $0x12e0] sm:$0xff]
        %v949 = vld [vmem:[%s1 + $0x12e8] sm:$0xff]
        %v950 = vld [vmem:[%s1 + $0x12f0] sm:$0xff]
        %v951 = vld [vmem:[%s1 + $0x12f8] sm:$0xff]
        %v952 = vld [vmem:[%s1 + $0x1300] sm:$0xff]
        %v953 = vld [vmem:[%s1 + $0x1308] sm:$0xff]
        %v954 = vld [vmem:[%s1 + $0x1310] sm:$0xff]
        %v955 = vld [vmem:[%s1 + $0x1318] sm:$0xff]
        %v956 = vld [vmem:[%s1 + $0x1320] sm:$0xff]
        %v957 = vld [vmem:[%s1 + $0x1328] sm:$0xff]
        %v958 = vld [vmem:[%s1 + $0x1330] sm:$0xff]
        %v959 = vld [vmem:[%s1 + $0x1338] sm:$0xff]
        %v960 = vld [vmem:[%s1 + $0x1340] sm:$0xff]
        %v961 = vld [vmem:[%s1 + $0x1348] sm:$0xff]
        %v962 = vld [vmem:[%s1 + $0x1350] sm:$0xff]
        %v963 = vld [vmem:[%s1 + $0x1358] sm:$0xff]
        %v964 = vld [vmem:[%s1 + $0x1360] sm:$0xff]
        %v965 = vld [vmem:[%s1 + $0x1368] sm:$0xff]
        %v966 = vld [vmem:[%s1 + $0x1370] sm:$0xff]
        %v967 = vld [vmem:[%s1 + $0x1378] sm:$0xff]
        %v968 = vld [vmem:[%s1 + $0x1380] sm:$0xff]
        %v969 = vld [vmem:[%s1 + $0x1388] sm:$0xff]
        %v970 = vld [vmem:[%s1 + $0x1390] sm:$0xff]
        %v971 = vld [vmem:[%s1 + $0x1398] sm:$0xff]
        %v972 = vld [vmem:[%s1 + $0x13a0] sm:$0xff]
        %v973 = vld [vmem:[%s1 + $0x13a8] sm:$0xff]
        %v974 = vld [vmem:[%s1 + $0x13b0] sm:$0xff]
        %v975 = vld [vmem:[%s1 + $0x13b8] sm:$0xff]
        %v976 = vld [vmem:[%s1 + $0x13c0] sm:$0xff]
        %v977 = vld [vmem:[%s1 + $0x13c8] sm:$0xff]
        %v978 = vld [vmem:[%s1 + $0x13d0] sm:$0xff]
        %v979 = vld [vmem:[%s1 + $0x13d8] sm:$0xff]
        %v980 = vld [vmem:[%s1 + $0x13e0] sm:$0xff]
        %v981 = vld [vmem:[%s1 + $0x13e8] sm:$0xff]
        %v982 = vld [vmem:[%s1 + $0x13f0] sm:$0xff]
        %v983 = vld [vmem:[%s1 + $0x13f8] sm:$0xff]
        %v984 = vld [vmem:[%s1 + $0x1400] sm:$0xff]
        %v985 = vld [vmem:[%s1 + $0x1408] sm:$0xff]
        %v986 = vld [vmem:[%s1 + $0x1410] sm:$0xff]
        %v987 = vld [vmem:[%s1 + $0x1418] sm:$0xff]
        %v988 = vld [vmem:[%s1 + $0x1420] sm:$0xff]
        %v989 = vld [vmem:[%s1 + $0x1428] sm:$0xff]
        %v990 = vld [vmem:[%s1 + $0x1430] sm:$0xff]
        %v991 = vld [vmem:[%s1 + $0x1438] sm:$0xff]
        %v992 = vld [vmem:[%s1 + $0x1440] sm:$0xff]
        %v993 = vld [vmem:[%s1 + $0x1448] sm:$0xff]
        %v994 = vld [vmem:[%s1 + $0x1450] sm:$0xff]
        %v995 = vld [vmem:[%s1 + $0x1458] sm:$0xff]
        %v996 = vld [vmem:[%s1 + $0x1460] sm:$0xff]
        %v997 = vld [vmem:[%s1 + $0x1468] sm:$0xff]
        %v998 = vld [vmem:[%s1 + $0x1470] sm:$0xff]
        %v999 = vld [vmem:[%s1 + $0x1478] sm:$0xff]
        %v1000 = vld [vmem:[%s1 + $0x1480] sm:$0xff]
        %v1001 = vld [vmem:[%s1 + $0x1488] sm:$0xff]
        %v1002 = vld [vmem:[%s1 + $0x1490] sm:$0xff]
        %v1003 = vld [vmem:[%s1 + $0x1498] sm:$0xff]
        %v1004 = vld [vmem:[%s1 + $0x14a0] sm:$0xff]
        %v1005 = vld [vmem:[%s1 + $0x14a8] sm:$0xff]
        %v1006 = vld [vmem:[%s1 + $0x14b0] sm:$0xff]
        %v1007 = vld [vmem:[%s1 + $0x14b8] sm:$0xff]
        %v1008 = vld [vmem:[%s1 + $0x14c0] sm:$0xff]
        %v1009 = vld [vmem:[%s1 + $0x14c8] sm:$0xff]
        %v1010 = vld [vmem:[%s1 + $0x14d0] sm:$0xff]
        %v1011 = vld [vmem:[%s1 + $0x14d8] sm:$0xff]
        %v1012 = vld [vmem:[%s1 + $0x14e0] sm:$0xff]
        %v1013 = vld [vmem:[%s1 + $0x14e8] sm:$0xff]
        %v1014 = vld [vmem:[%s1 + $0x14f0] sm:$0xff]
        %v1015 = vld [vmem:[%s1 + $0x14f8] sm:$0xff]
        %v1016 = vld [vmem:[%s1 + $0x1500] sm:$0xff]
        %v1017 = vld [vmem:[%s1 + $0x1508] sm:$0xff]
        %v1018 = vld [vmem:[%s1 + $0x1510] sm:$0xff]
        %v1019 = vld [vmem:[%s1 + $0x1518] sm:$0xff]
        %v1020 = vld [vmem:[%s1 + $0x1520] sm:$0xff]
        %v1021 = vld [vmem:[%s1 + $0x1528] sm:$0xff]
        %v1022 = vld [vmem:[%s1 + $0x1530] sm:$0xff]
        %v1023 = vld [vmem:[%s1 + $0x1538] sm:$0xff]
        %v1024 = vld [vmem:[%s1 + $0x1540] sm:$0xff]
        %v1025 = vld [vmem:[%s1 + $0x1548] sm:$0xff]
        %v1026 = vld [vmem:[%s1 + $0x1550] sm:$0xff]
        %v1027 = vld [vmem:[%s1 + $0x1558] sm:$0xff]
        %v1028 = vld [vmem:[%s1 + $0x1560] sm:$0xff]
        %v1029 = vld [vmem:[%s1 + $0x1568] sm:$0xff]
        %v1030 = vld [vmem:[%s1 + $0x1570] sm:$0xff]
        %v1031 = vld [vmem:[%s1 + $0x1578] sm:$0xff]
        %v1032 = vld [vmem:[%s1 + $0x1580] sm:$0xff]
        %v1033 = vld [vmem:[%s1 + $0x1588] sm:$0xff]
        %v1034 = vld [vmem:[%s1 + $0x1590] sm:$0xff]
        %v1035 = vld [vmem:[%s1 + $0x1598] sm:$0xff]
        %v1036 = vld [vmem:[%s1 + $0x15a0] sm:$0xff]
        %v1037 = vld [vmem:[%s1 + $0x15a8] sm:$0xff]
        %v1038 = vld [vmem:[%s1 + $0x15b0] sm:$0xff]
        %v1039 = vld [vmem:[%s1 + $0x15b8] sm:$0xff]
        %v1040 = vld [vmem:[%s1 + $0x15c0] sm:$0xff]
        %v1041 = vld [vmem:[%s1 + $0x15c8] sm:$0xff]
        %v1042 = vld [vmem:[%s1 + $0x15d0] sm:$0xff]
        %v1043 = vld [vmem:[%s1 + $0x15d8] sm:$0xff]
        %v1044 = vld [vmem:[%s1 + $0x15e0] sm:$0xff]
        %v1045 = vld [vmem:[%s1 + $0x15e8] sm:$0xff]
        %v1046 = vld [vmem:[%s1 + $0x15f0] sm:$0xff]
        %v1047 = vld [vmem:[%s1 + $0x15f8] sm:$0xff]
        %v1048 = vld [vmem:[%s1 + $0x1600] sm:$0xff]
        %v1049 = vld [vmem:[%s1 + $0x1608] sm:$0xff]
        %v1050 = vld [vmem:[%s1 + $0x1610] sm:$0xff]
        %v1051 = vld [vmem:[%s1 + $0x1618] sm:$0xff]
        %v1052 = vld [vmem:[%s1 + $0x1620] sm:$0xff]
        %v1053 = vld [vmem:[%s1 + $0x1628] sm:$0xff]
        %v1054 = vld [vmem:[%s1 + $0x1630] sm:$0xff]
        %v1055 = vld [vmem:[%s1 + $0x1638] sm:$0xff]
        %v1056 = vld [vmem:[%s1 + $0x1640] sm:$0xff]
        %v1057 = vld [vmem:[%s1 + $0x1648] sm:$0xff]
        %v1058 = vld [vmem:[%s1 + $0x1650] sm:$0xff]
        %v1059 = vld [vmem:[%s1 + $0x1658] sm:$0xff]
        %v1060 = vld [vmem:[%s1 + $0x1660] sm:$0xff]
        %v1061 = vld [vmem:[%s1 + $0x1668] sm:$0xff]
        %v1062 = vld [vmem:[%s1 + $0x1670] sm:$0xff]
        %v1063 = vld [vmem:[%s1 + $0x1678] sm:$0xff]
        %v1064 = vld [vmem:[%s1 + $0x1680] sm:$0xff]
        %v1065 = vld [vmem:[%s1 + $0x1688] sm:$0xff]
        %v1066 = vld [vmem:[%s1 + $0x1690] sm:$0xff]
        %v1067 = vld [vmem:[%s1 + $0x1698] sm:$0xff]
        %v1068 = vld [vmem:[%s1 + $0x16a0] sm:$0xff]
        %v1069 = vld [vmem:[%s1 + $0x16a8] sm:$0xff]
        %v1070 = vld [vmem:[%s1 + $0x16b0] sm:$0xff]
        %v1071 = vld [vmem:[%s1 + $0x16b8] sm:$0xff]
        %v1072 = vld [vmem:[%s1 + $0x16c0] sm:$0xff]
        %v1073 = vld [vmem:[%s1 + $0x16c8] sm:$0xff]
        %v1074 = vld [vmem:[%s1 + $0x16d0] sm:$0xff]
        %v1075 = vld [vmem:[%s1 + $0x16d8] sm:$0xff]
        %v1076 = vld [vmem:[%s1 + $0x16e0] sm:$0xff]
        %v1077 = vld [vmem:[%s1 + $0x16e8] sm:$0xff]
        %v1078 = vld [vmem:[%s1 + $0x16f0] sm:$0xff]
        %v1079 = vld [vmem:[%s1 + $0x16f8] sm:$0xff]
        %v1080 = vld [vmem:[%s1 + $0x1700] sm:$0xff]
        %v1081 = vld [vmem:[%s1 + $0x1708] sm:$0xff]
        %v1082 = vld [vmem:[%s1 + $0x1710] sm:$0xff]
        %v1083 = vld [vmem:[%s1 + $0x1718] sm:$0xff]
        %v1084 = vld [vmem:[%s1 + $0x1720] sm:$0xff]
        %v1085 = vld [vmem:[%s1 + $0x1728] sm:$0xff]
        %v1086 = vld [vmem:[%s1 + $0x1730] sm:$0xff]
        %v1087 = vld [vmem:[%s1 + $0x1738] sm:$0xff]
        %v1088 = vld [vmem:[%s1 + $0x1740] sm:$0xff]
        %v1089 = vld [vmem:[%s1 + $0x1748] sm:$0xff]
        %v1090 = vld [vmem:[%s1 + $0x1750] sm:$0xff]
        %v1091 = vld [vmem:[%s1 + $0x1758] sm:$0xff]
        %v1092 = vld [vmem:[%s1 + $0x1760] sm:$0xff]
        %v1093 = vld [vmem:[%s1 + $0x1768] sm:$0xff]
        %v1094 = vld [vmem:[%s1 + $0x1770] sm:$0xff]
        %v1095 = vld [vmem:[%s1 + $0x1778] sm:$0xff]
        %v1096 = vld [vmem:[%s1 + $0x1780] sm:$0xff]
        %v1097 = vld [vmem:[%s1 + $0x1788] sm:$0xff]
        %v1098 = vld [vmem:[%s1 + $0x1790] sm:$0xff]
        %v1099 = vld [vmem:[%s1 + $0x1798] sm:$0xff]
        %v1100 = vld [vmem:[%s1 + $0x17a0] sm:$0xff]
        %v1101 = vld [vmem:[%s1 + $0x17a8] sm:$0xff]
        %v1102 = vld [vmem:[%s1 + $0x17b0] sm:$0xff]
        %v1103 = vld [vmem:[%s1 + $0x17b8] sm:$0xff]
        %v1104 = vld [vmem:[%s1 + $0x17c0] sm:$0xff]
        %v1105 = vld [vmem:[%s1 + $0x17c8] sm:$0xff]
        %v1106 = vld [vmem:[%s1 + $0x17d0] sm:$0xff]
        %v1107 = vld [vmem:[%s1 + $0x17d8] sm:$0xff]
        %v1108 = vld [vmem:[%s1 + $0x17e0] sm:$0xff]
        %v1109 = vld [vmem:[%s1 + $0x17e8] sm:$0xff]
        %v1110 = vld [vmem:[%s1 + $0x17f0] sm:$0xff]
        %v1111 = vld [vmem:[%s1 + $0x17f8] sm:$0xff]
        %v1112 = vld [vmem:[%s1 + $0x1800] sm:$0xff]
        %v1113 = vld [vmem:[%s1 + $0x1808] sm:$0xff]
        %v1114 = vld [vmem:[%s1 + $0x1810] sm:$0xff]
        %v1115 = vld [vmem:[%s1 + $0x1818] sm:$0xff]
        %v1116 = vld [vmem:[%s1 + $0x1820] sm:$0xff]
        %v1117 = vld [vmem:[%s1 + $0x1828] sm:$0xff]
        %v1118 = vld [vmem:[%s1 + $0x1830] sm:$0xff]
        %v1119 = vld [vmem:[%s1 + $0x1838] sm:$0xff]
        %v1120 = vld [vmem:[%s1 + $0x1840] sm:$0xff]
        %v1121 = vld [vmem:[%s1 + $0x1848] sm:$0xff]
        %v1122 = vld [vmem:[%s1 + $0x1850] sm:$0xff]
        %v1123 = vld [vmem:[%s1 + $0x1858] sm:$0xff]
        %v1124 = vld [vmem:[%s1 + $0x1860] sm:$0xff]
        %v1125 = vld [vmem:[%s1 + $0x1868] sm:$0xff]
        %v1126 = vld [vmem:[%s1 + $0x1870] sm:$0xff]
        %v1127 = vld [vmem:[%s1 + $0x1878] sm:$0xff]
        %v1128 = vld [vmem:[%s1 + $0x1880] sm:$0xff]
        %v1129 = vld [vmem:[%s1 + $0x1888] sm:$0xff]
        %v1130 = vld [vmem:[%s1 + $0x1890] sm:$0xff]
        %v1131 = vld [vmem:[%s1 + $0x1898] sm:$0xff]
        %v1132 = vld [vmem:[%s1 + $0x18a0] sm:$0xff]
        %v1133 = vld [vmem:[%s1 + $0x18a8] sm:$0xff]
        %v1134 = vld [vmem:[%s1 + $0x18b0] sm:$0xff]
        %v1135 = vld [vmem:[%s1 + $0x18b8] sm:$0xff]
        %v1136 = vld [vmem:[%s1 + $0x18c0] sm:$0xff]
        %v1137 = vld [vmem:[%s1 + $0x18c8] sm:$0xff]
        %v1138 = vld [vmem:[%s1 + $0x18d0] sm:$0xff]
        %v1139 = vld [vmem:[%s1 + $0x18d8] sm:$0xff]
        %v1140 = vld [vmem:[%s1 + $0x18e0] sm:$0xff]
        %v1141 = vld [vmem:[%s1 + $0x18e8] sm:$0xff]
        %v1142 = vld [vmem:[%s1 + $0x18f0] sm:$0xff]
        %v1143 = vld [vmem:[%s1 + $0x18f8] sm:$0xff]
        %v1144 = vld [vmem:[%s1 + $0x1900] sm:$0xff]
        %v1145 = vld [vmem:[%s1 + $0x1908] sm:$0xff]
        %v1146 = vld [vmem:[%s1 + $0x1910] sm:$0xff]
        %v1147 = vld [vmem:[%s1 + $0x1918] sm:$0xff]
        %v1148 = vld [vmem:[%s1 + $0x1920] sm:$0xff]
        %v1149 = vld [vmem:[%s1 + $0x1928] sm:$0xff]
        %v1150 = vld [vmem:[%s1 + $0x1930] sm:$0xff]
        %v1151 = vld [vmem:[%s1 + $0x1938] sm:$0xff]
        %v1152 = vld [vmem:[%s1 + $0x1940] sm:$0xff]
        %v1153 = vld [vmem:[%s1 + $0x1948] sm:$0xff]
        %v1154 = vld [vmem:[%s1 + $0x1950] sm:$0xff]
        %v1155 = vld [vmem:[%s1 + $0x1958] sm:$0xff]
        %v1156 = vld [vmem:[%s1 + $0x1960] sm:$0xff]
        %v1157 = vld [vmem:[%s1 + $0x1968] sm:$0xff]
        %v1158 = vld [vmem:[%s1 + $0x1970] sm:$0xff]
        %v1159 = vld [vmem:[%s1 + $0x1978] sm:$0xff]
        %v1160 = vld [vmem:[%s1 + $0x1980] sm:$0xff]
        %v1161 = vld [vmem:[%s1 + $0x1988] sm:$0xff]
        %v1162 = vld [vmem:[%s1 + $0x1990] sm:$0xff]
        %v1163 = vld [vmem:[%s1 + $0x1998] sm:$0xff]
        %v1164 = vld [vmem:[%s1 + $0x19a0] sm:$0xff]
        %v1165 = vld [vmem:[%s1 + $0x19a8] sm:$0xff]
        %v1166 = vld [vmem:[%s1 + $0x19b0] sm:$0xff]
        %v1167 = vld [vmem:[%s1 + $0x19b8] sm:$0xff]
        %v1168 = vld [vmem:[%s1 + $0x19c0] sm:$0xff]
        %v1169 = vld [vmem:[%s1 + $0x19c8] sm:$0xff]
        %v1170 = vld [vmem:[%s1 + $0x19d0] sm:$0xff]
        %v1171 = vld [vmem:[%s1 + $0x19d8] sm:$0xff]
        %v1172 = vld [vmem:[%s1 + $0x19e0] sm:$0xff]
        %v1173 = vld [vmem:[%s1 + $0x19e8] sm:$0xff]
        %v1174 = vld [vmem:[%s1 + $0x19f0] sm:$0xff]
        %v1175 = vld [vmem:[%s1 + $0x19f8] sm:$0xff]
        %v1176 = vld [vmem:[%s1 + $0x1a00] sm:$0xff]
        %v1177 = vld [vmem:[%s1 + $0x1a08] sm:$0xff]
        %v1178 = vld [vmem:[%s1 + $0x1a10] sm:$0xff]
        %v1179 = vld [vmem:[%s1 + $0x1a18] sm:$0xff]
        %v1180 = vld [vmem:[%s1 + $0x1a20] sm:$0xff]
        %v1181 = vld [vmem:[%s1 + $0x1a28] sm:$0xff]
        %v1182 = vld [vmem:[%s1 + $0x1a30] sm:$0xff]
        %v1183 = vld [vmem:[%s1 + $0x1a38] sm:$0xff]
        %v1184 = vld [vmem:[%s1 + $0x1a40] sm:$0xff]
        %v1185 = vld [vmem:[%s1 + $0x1a48] sm:$0xff]
        %v1186 = vld [vmem:[%s1 + $0x1a50] sm:$0xff]
        %v1187 = vld [vmem:[%s1 + $0x1a58] sm:$0xff]
        %v1188 = vld [vmem:[%s1 + $0x1a60] sm:$0xff]
        %v1189 = vld [vmem:[%s1 + $0x1a68] sm:$0xff]
        %v1190 = vld [vmem:[%s1 + $0x1a70] sm:$0xff]
        %v1191 = vld [vmem:[%s1 + $0x1a78] sm:$0xff]
        %v1192 = vld [vmem:[%s1 + $0x1a80] sm:$0xff]
        %v1193 = vld [vmem:[%s1 + $0x1a88] sm:$0xff]
        %v1194 = vld [vmem:[%s1 + $0x1a90] sm:$0xff]
        %v1195 = vld [vmem:[%s1 + $0x1a98] sm:$0xff]
        %v1196 = vld [vmem:[%s1 + $0x1aa0] sm:$0xff]
        %v1197 = vld [vmem:[%s1 + $0x1aa8] sm:$0xff]
        %v1198 = vld [vmem:[%s1 + $0x1ab0] sm:$0xff]
        %v1199 = vld [vmem:[%s1 + $0x1ab8] sm:$0xff]
        %v1200 = vld [vmem:[%s1 + $0x1ac0] sm:$0xff]
        %v1201 = vld [vmem:[%s1 + $0x1ac8] sm:$0xff]
        %v1202 = vld [vmem:[%s1 + $0x1ad0] sm:$0xff]
        %v1203 = vld [vmem:[%s1 + $0x1ad8] sm:$0xff]
        %v1204 = vld [vmem:[%s1 + $0x1ae0] sm:$0xff]
        %v1205 = vld [vmem:[%s1 + $0x1ae8] sm:$0xff]
        %v1206 = vld [vmem:[%s1 + $0x1af0] sm:$0xff]
        %v1207 = vld [vmem:[%s1 + $0x1af8] sm:$0xff]
        %v1208 = vld [vmem:[%s1 + $0x1b00] sm:$0xff]
        %v1209 = vld [vmem:[%s1 + $0x1b08] sm:$0xff]
        %v1210 = vld [vmem:[%s1 + $0x1b10] sm:$0xff]
        %v1211 = vld [vmem:[%s1 + $0x1b18] sm:$0xff]
        %v1212 = vld [vmem:[%s1 + $0x1b20] sm:$0xff]
        %v1213 = vld [vmem:[%s1 + $0x1b28] sm:$0xff]
        %v1214 = vld [vmem:[%s1 + $0x1b30] sm:$0xff]
        %v1215 = vld [vmem:[%s1 + $0x1b38] sm:$0xff]
        %v1216 = vld [vmem:[%s1 + $0x1b40] sm:$0xff]
        %v1217 = vld [vmem:[%s1 + $0x1b48] sm:$0xff]
        %v1218 = vld [vmem:[%s1 + $0x1b50] sm:$0xff]
        %v1219 = vld [vmem:[%s1 + $0x1b58] sm:$0xff]
        %v1220 = vld [vmem:[%s1 + $0x1b60] sm:$0xff]
        %v1221 = vld [vmem:[%s1 + $0x1b68] sm:$0xff]
        %v1222 = vld [vmem:[%s1 + $0x1b70] sm:$0xff]
        %v1223 = vld [vmem:[%s1 + $0x1b78] sm:$0xff]
        %v1224 = vld [vmem:[%s1 + $0x1b80] sm:$0xff]
        %v1225 = vld [vmem:[%s1 + $0x1b88] sm:$0xff]
        %v1226 = vld [vmem:[%s1 + $0x1b90] sm:$0xff]
        %v1227 = vld [vmem:[%s1 + $0x1b98] sm:$0xff]
        %v1228 = vld [vmem:[%s1 + $0x1ba0] sm:$0xff]
        %v1229 = vld [vmem:[%s1 + $0x1ba8] sm:$0xff]
        %v1230 = vld [vmem:[%s1 + $0x1bb0] sm:$0xff]
        %v1231 = vld [vmem:[%s1 + $0x1bb8] sm:$0xff]
        %v1232 = vld [vmem:[%s1 + $0x1bc0] sm:$0xff]
        %v1233 = vld [vmem:[%s1 + $0x1bc8] sm:$0xff]
        %v1234 = vld [vmem:[%s1 + $0x1bd0] sm:$0xff]
        %v1235 = vld [vmem:[%s1 + $0x1bd8] sm:$0xff]
        %v1236 = vld [vmem:[%s1 + $0x1be0] sm:$0xff]
        %v1237 = vld [vmem:[%s1 + $0x1be8] sm:$0xff]
        %v1238 = vld [vmem:[%s1 + $0x1bf0] sm:$0xff]
        %v1239 = vld [vmem:[%s1 + $0x1bf8] sm:$0xff]
        %v1240 = vld [vmem:[%s1 + $0x1c00] sm:$0xff]
        %v1241 = vld [vmem:[%s1 + $0x1c08] sm:$0xff]
        %v1242 = vld [vmem:[%s1 + $0x1c10] sm:$0xff]
        %v1243 = vld [vmem:[%s1 + $0x1c18] sm:$0xff]
        %v1244 = vld [vmem:[%s1 + $0x1c20] sm:$0xff]
        %v1245 = vld [vmem:[%s1 + $0x1c28] sm:$0xff]
        %v1246 = vld [vmem:[%s1 + $0x1c30] sm:$0xff]
        %v1247 = vld [vmem:[%s1 + $0x1c38] sm:$0xff]
        %v1248 = vld [vmem:[%s1 + $0x1c40] sm:$0xff]
        %v1249 = vld [vmem:[%s1 + $0x1c48] sm:$0xff]
        %v1250 = vld [vmem:[%s1 + $0x1c50] sm:$0xff]
        %v1251 = vld [vmem:[%s1 + $0x1c58] sm:$0xff]
        %v1252 = vld [vmem:[%s1 + $0x1c60] sm:$0xff]
        %v1253 = vld [vmem:[%s1 + $0x1c68] sm:$0xff]
        %v1254 = vld [vmem:[%s1 + $0x1c70] sm:$0xff]
        %v1255 = vld [vmem:[%s1 + $0x1c78] sm:$0xff]
        %v1256 = vld [vmem:[%s1 + $0x1c80] sm:$0xff]
        %v1257 = vld [vmem:[%s1 + $0x1c88] sm:$0xff]
        %v1258 = vld [vmem:[%s1 + $0x1c90] sm:$0xff]
        %v1259 = vld [vmem:[%s1 + $0x1c98] sm:$0xff]
        %v1260 = vld [vmem:[%s1 + $0x1ca0] sm:$0xff]
        %v1261 = vld [vmem:[%s1 + $0x1ca8] sm:$0xff]
        %v1262 = vld [vmem:[%s1 + $0x1cb0] sm:$0xff]
        %v1263 = vld [vmem:[%s1 + $0x1cb8] sm:$0xff]
        %v1264 = vld [vmem:[%s1 + $0x1cc0] sm:$0xff]
        %v1265 = vld [vmem:[%s1 + $0x1cc8] sm:$0xff]
        %v1266 = vld [vmem:[%s1 + $0x1cd0] sm:$0xff]
        %v1267 = vld [vmem:[%s1 + $0x1cd8] sm:$0xff]
        %v1268 = vld [vmem:[%s1 + $0x1ce0] sm:$0xff]
        %v1269 = vld [vmem:[%s1 + $0x1ce8] sm:$0xff]
        %v1270 = vld [vmem:[%s1 + $0x1cf0] sm:$0xff]
        %v1271 = vld [vmem:[%s1 + $0x1cf8] sm:$0xff]
        %v1272 = vld [vmem:[%s1 + $0x1d00] sm:$0xff]
        %v1273 = vld [vmem:[%s1 + $0x1d08] sm:$0xff]
        %v1274 = vld [vmem:[%s1 + $0x1d10] sm:$0xff]
        %v1275 = vld [vmem:[%s1 + $0x1d18] sm:$0xff]
        %v1276 = vld [vmem:[%s1 + $0x1d20] sm:$0xff]
        %v1277 = vld [vmem:[%s1 + $0x1d28] sm:$0xff]
        %v1278 = vld [vmem:[%s1 + $0x1d30] sm:$0xff]
        %v1279 = vld [vmem:[%s1 + $0x1d38] sm:$0xff]
        %v1280 = vld [vmem:[%s1 + $0x1d40] sm:$0xff]
        %v1281 = vld [vmem:[%s1 + $0x1d48] sm:$0xff]
        %v1282 = vld [vmem:[%s1 + $0x1d50] sm:$0xff]
        %v1283 = vld [vmem:[%s1 + $0x1d58] sm:$0xff]
        %v1284 = vld [vmem:[%s1 + $0x1d60] sm:$0xff]
        %v1285 = vld [vmem:[%s1 + $0x1d68] sm:$0xff]
        %v1286 = vld [vmem:[%s1 + $0x1d70] sm:$0xff]
        %v1287 = vld [vmem:[%s1 + $0x1d78] sm:$0xff]
        %v1288 = vld [vmem:[%s1 + $0x1d80] sm:$0xff]
        %v1289 = vld [vmem:[%s1 + $0x1d88] sm:$0xff]
        %v1290 = vld [vmem:[%s1 + $0x1d90] sm:$0xff]
        %v1291 = vld [vmem:[%s1 + $0x1d98] sm:$0xff]
        %v1292 = vld [vmem:[%s1 + $0x1da0] sm:$0xff]
        %v1293 = vld [vmem:[%s1 + $0x1da8] sm:$0xff]
        %v1294 = vld [vmem:[%s1 + $0x1db0] sm:$0xff]
        %v1295 = vld [vmem:[%s1 + $0x1db8] sm:$0xff]
        %v1296 = vld [vmem:[%s1 + $0x1dc0] sm:$0xff]
        %v1297 = vld [vmem:[%s1 + $0x1dc8] sm:$0xff]
        %v1298 = vld [vmem:[%s1 + $0x1dd0] sm:$0xff]
        %v1299 = vld [vmem:[%s1 + $0x1dd8] sm:$0xff]
        %v1300 = vld [vmem:[%s1 + $0x1de0] sm:$0xff]
        %v1301 = vld [vmem:[%s1 + $0x1de8] sm:$0xff]
        %v1302 = vld [vmem:[%s1 + $0x1df0] sm:$0xff]
        %v1303 = vld [vmem:[%s1 + $0x1df8] sm:$0xff]
        %v1304 = vld [vmem:[%s1 + $0x1e00] sm:$0xff]
        %v1305 = vld [vmem:[%s1 + $0x1e08] sm:$0xff]
        %v1306 = vld [vmem:[%s1 + $0x1e10] sm:$0xff]
        %v1307 = vld [vmem:[%s1 + $0x1e18] sm:$0xff]
        %v1308 = vld [vmem:[%s1 + $0x1e20] sm:$0xff]
        %v1309 = vld [vmem:[%s1 + $0x1e28] sm:$0xff]
        %v1310 = vld [vmem:[%s1 + $0x1e30] sm:$0xff]
        %v1311 = vld [vmem:[%s1 + $0x1e38] sm:$0xff]
        %v1312 = vld [vmem:[%s1 + $0x1e40] sm:$0xff]
        %v1313 = vld [vmem:[%s1 + $0x1e48] sm:$0xff]
        %v1314 = vld [vmem:[%s1 + $0x1e50] sm:$0xff]
        %v1315 = vld [vmem:[%s1 + $0x1e58] sm:$0xff]
        %v1316 = vld [vmem:[%s1 + $0x1e60] sm:$0xff]
        %v1317 = vld [vmem:[%s1 + $0x1e68] sm:$0xff]
        %v1318 = vld [vmem:[%s1 + $0x1e70] sm:$0xff]
        %v1319 = vld [vmem:[%s1 + $0x1e78] sm:$0xff]
        %v1320 = vld [vmem:[%s1 + $0x1e80] sm:$0xff]
        %v1321 = vld [vmem:[%s1 + $0x1e88] sm:$0xff]
        %v1322 = vld [vmem:[%s1 + $0x1e90] sm:$0xff]
        %v1323 = vld [vmem:[%s1 + $0x1e98] sm:$0xff]
        %v1324 = vld [vmem:[%s1 + $0x1ea0] sm:$0xff]
        %v1325 = vld [vmem:[%s1 + $0x1ea8] sm:$0xff]
        %v1326 = vld [vmem:[%s1 + $0x1eb0] sm:$0xff]
        %v1327 = vld [vmem:[%s1 + $0x1eb8] sm:$0xff]
        %v1328 = vld [vmem:[%s1 + $0x1ec0] sm:$0xff]
        %v1329 = vld [vmem:[%s1 + $0x1ec8] sm:$0xff]
        %v1330 = vld [vmem:[%s1 + $0x1ed0] sm:$0xff]
        %v1331 = vld [vmem:[%s1 + $0x1ed8] sm:$0xff]
        %v1332 = vld [vmem:[%s1 + $0x1ee0] sm:$0xff]
        %v1333 = vld [vmem:[%s1 + $0x1ee8] sm:$0xff]
        %v1334 = vld [vmem:[%s1 + $0x1ef0] sm:$0xff]
        %v1335 = vld [vmem:[%s1 + $0x1ef8] sm:$0xff]
        %v1336 = vld [vmem:[%s1 + $0x1f00] sm:$0xff]
        %v1337 = vld [vmem:[%s1 + $0x1f08] sm:$0xff]
        %v1338 = vld [vmem:[%s1 + $0x1f10] sm:$0xff]
        %v1339 = vld [vmem:[%s1 + $0x1f18] sm:$0xff]
        %v1340 = vld [vmem:[%s1 + $0x1f20] sm:$0xff]
        %v1341 = vld [vmem:[%s1 + $0x1f28] sm:$0xff]
        %v1342 = vld [vmem:[%s1 + $0x1f30] sm:$0xff]
        %v1343 = vld [vmem:[%s1 + $0x1f38] sm:$0xff]
        %v1344 = vld [vmem:[%s1 + $0x1f40] sm:$0xff]
        %v1345 = vld [vmem:[%s1 + $0x1f48] sm:$0xff]
        %v1346 = vld [vmem:[%s1 + $0x1f50] sm:$0xff]
        %v1347 = vld [vmem:[%s1 + $0x1f58] sm:$0xff]
        %v1348 = vld [vmem:[%s1 + $0x1f60] sm:$0xff]
        %v1349 = vld [vmem:[%s1 + $0x1f68] sm:$0xff]
        %v1350 = vld [vmem:[%s1 + $0x1f70] sm:$0xff]
        %v1351 = vld [vmem:[%s1 + $0x1f78] sm:$0xff]
        %v1352 = vld [vmem:[%s1 + $0x1f80] sm:$0xff]
        %v1353 = vld [vmem:[%s1 + $0x1f88] sm:$0xff]
        %v1354 = vld [vmem:[%s1 + $0x1f90] sm:$0xff]
        %v1355 = vld [vmem:[%s1 + $0x1f98] sm:$0xff]
        %v1356 = vld [vmem:[%s1 + $0x1fa0] sm:$0xff]
        %v1357 = vld [vmem:[%s1 + $0x1fa8] sm:$0xff]
        %v1358 = vld [vmem:[%s1 + $0x1fb0] sm:$0xff]
        %v1359 = vld [vmem:[%s1 + $0x1fb8] sm:$0xff]
        %v1360 = vld [vmem:[%s1 + $0x1fc0] sm:$0xff]
        %v1361 = vld [vmem:[%s1 + $0x1fc8] sm:$0xff]
        %v1362 = vld [vmem:[%s1 + $0x1fd0] sm:$0xff]
        %v1363 = vld [vmem:[%s1 + $0x1fd8] sm:$0xff]
        %v1364 = vld [vmem:[%s1 + $0x1fe0] sm:$0xff]
        %v1365 = vld [vmem:[%s1 + $0x1fe8] sm:$0xff]
        %v1366 = vld [vmem:[%s1 + $0x1ff0] sm:$0xff]
        %v1367 = vld [vmem:[%s1 + $0x1ff8] sm:$0xff]
        %v1368 = vld [vmem:[%s1 + $0x2000] sm:$0xff]
        %v1369 = vld [vmem:[%s1 + $0x2008] sm:$0xff]
        %v1370 = vld [vmem:[%s1 + $0x2010] sm:$0xff]
        %v1371 = vld [vmem:[%s1 + $0x2018] sm:$0xff]
        %v1372 = vld [vmem:[%s1 + $0x2020] sm:$0xff]
        %v1373 = vld [vmem:[%s1 + $0x2028] sm:$0xff]
        %v1374 = vld [vmem:[%s1 + $0x2030] sm:$0xff]
        %v1375 = vld [vmem:[%s1 + $0x2038] sm:$0xff]
        %v1376 = vld [vmem:[%s1 + $0x2040] sm:$0xff]
        %v1377 = vld [vmem:[%s1 + $0x2048] sm:$0xff]
        %v1378 = vld [vmem:[%s1 + $0x2050] sm:$0xff]
        %v1379 = vld [vmem:[%s1 + $0x2058] sm:$0xff]
        %v1380 = vld [vmem:[%s1 + $0x2060] sm:$0xff]
        %v1381 = vld [vmem:[%s1 + $0x2068] sm:$0xff]
        %v1382 = vld [vmem:[%s1 + $0x2070] sm:$0xff]
        %v1383 = vld [vmem:[%s1 + $0x2078] sm:$0xff]
        %v1384 = vld [vmem:[%s1 + $0x2080] sm:$0xff]
        %v1385 = vld [vmem:[%s1 + $0x2088] sm:$0xff]
        %v1386 = vld [vmem:[%s1 + $0x2090] sm:$0xff]
        %v1387 = vld [vmem:[%s1 + $0x2098] sm:$0xff]
        %v1388 = vld [vmem:[%s1 + $0x20a0] sm:$0xff]
        %v1389 = vld [vmem:[%s1 + $0x20a8] sm:$0xff]
        %v1390 = vld [vmem:[%s1 + $0x20b0] sm:$0xff]
        %v1391 = vld [vmem:[%s1 + $0x20b8] sm:$0xff]
        %v1392 = vld [vmem:[%s1 + $0x20c0] sm:$0xff]
        %v1393 = vld [vmem:[%s1 + $0x20c8] sm:$0xff]
        %v1394 = vld [vmem:[%s1 + $0x20d0] sm:$0xff]
        %v1395 = vld [vmem:[%s1 + $0x20d8] sm:$0xff]
        %v1396 = vld [vmem:[%s1 + $0x20e0] sm:$0xff]
        %v1397 = vld [vmem:[%s1 + $0x20e8] sm:$0xff]
        %v1398 = vld [vmem:[%s1 + $0x20f0] sm:$0xff]
        %v1399 = vld [vmem:[%s1 + $0x20f8] sm:$0xff]
        %v1400 = vld [vmem:[%s1 + $0x2100] sm:$0xff]
        %v1401 = vld [vmem:[%s1 + $0x2108] sm:$0xff]
        %v1402 = vld [vmem:[%s1 + $0x2110] sm:$0xff]
        %v1403 = vld [vmem:[%s1 + $0x2118] sm:$0xff]
        %v1404 = vld [vmem:[%s1 + $0x2120] sm:$0xff]
        %v1405 = vld [vmem:[%s1 + $0x2128] sm:$0xff]
        %v1406 = vld [vmem:[%s1 + $0x2130] sm:$0xff]
        %v1407 = vld [vmem:[%s1 + $0x2138] sm:$0xff]
        %v1408 = vld [vmem:[%s1 + $0x2140] sm:$0xff]
        %v1409 = vld [vmem:[%s1 + $0x2148] sm:$0xff]
        %v1410 = vld [vmem:[%s1 + $0x2150] sm:$0xff]
        %v1411 = vld [vmem:[%s1 + $0x2158] sm:$0xff]
        %v1412 = vld [vmem:[%s1 + $0x2160] sm:$0xff]
        %v1413 = vld [vmem:[%s1 + $0x2168] sm:$0xff]
        %v1414 = vld [vmem:[%s1 + $0x2170] sm:$0xff]
        %v1415 = vld [vmem:[%s1 + $0x2178] sm:$0xff]
        %v1416 = vld [vmem:[%s1 + $0x2180] sm:$0xff]
        %v1417 = vld [vmem:[%s1 + $0x2188] sm:$0xff]
        %v1418 = vld [vmem:[%s1 + $0x2190] sm:$0xff]
        %v1419 = vld [vmem:[%s1 + $0x2198] sm:$0xff]
        %v1420 = vld [vmem:[%s1 + $0x21a0] sm:$0xff]
        %v1421 = vld [vmem:[%s1 + $0x21a8] sm:$0xff]
        %v1422 = vld [vmem:[%s1 + $0x21b0] sm:$0xff]
        %v1423 = vld [vmem:[%s1 + $0x21b8] sm:$0xff]
        %v1424 = vld [vmem:[%s1 + $0x21c0] sm:$0xff]
        %v1425 = vld [vmem:[%s1 + $0x21c8] sm:$0xff]
        %v1426 = vld [vmem:[%s1 + $0x21d0] sm:$0xff]
        %v1427 = vld [vmem:[%s1 + $0x21d8] sm:$0xff]
        %v1428 = vld [vmem:[%s1 + $0x21e0] sm:$0xff]
        %v1429 = vld [vmem:[%s1 + $0x21e8] sm:$0xff]
        %v1430 = vld [vmem:[%s1 + $0x21f0] sm:$0xff]
        %v1431 = vld [vmem:[%s1 + $0x21f8] sm:$0xff]
        %v1432 = vld [vmem:[%s1 + $0x2200] sm:$0xff]
        %v1433 = vld [vmem:[%s1 + $0x2208] sm:$0xff]
        %v1434 = vld [vmem:[%s1 + $0x2210] sm:$0xff]
        %v1435 = vld [vmem:[%s1 + $0x2218] sm:$0xff]
        %v1436 = vld [vmem:[%s1 + $0x2220] sm:$0xff]
        %v1437 = vld [vmem:[%s1 + $0x2228] sm:$0xff]
        %v1438 = vld [vmem:[%s1 + $0x2230] sm:$0xff]
        %v1439 = vld [vmem:[%s1 + $0x2238] sm:$0xff]
        %v1440 = vld [vmem:[%s1 + $0x2240] sm:$0xff]
        %v1441 = vld [vmem:[%s1 + $0x2248] sm:$0xff]
        %v1442 = vld [vmem:[%s1 + $0x2250] sm:$0xff]
        %v1443 = vld [vmem:[%s1 + $0x2258] sm:$0xff]
        %v1444 = vld [vmem:[%s1 + $0x2260] sm:$0xff]
        %v1445 = vld [vmem:[%s1 + $0x2268] sm:$0xff]
        %v1446 = vld [vmem:[%s1 + $0x2270] sm:$0xff]
        %v1447 = vld [vmem:[%s1 + $0x2278] sm:$0xff]
        %v1448 = vld [vmem:[%s1 + $0x2280] sm:$0xff]
        %v1449 = vld [vmem:[%s1 + $0x2288] sm:$0xff]
        %v1450 = vld [vmem:[%s1 + $0x2290] sm:$0xff]
        %v1451 = vld [vmem:[%s1 + $0x2298] sm:$0xff]
        %v1452 = vld [vmem:[%s1 + $0x22a0] sm:$0xff]
        %v1453 = vld [vmem:[%s1 + $0x22a8] sm:$0xff]
        %v1454 = vld [vmem:[%s1 + $0x22b0] sm:$0xff]
        %v1455 = vld [vmem:[%s1 + $0x22b8] sm:$0xff]
        %v1456 = vld [vmem:[%s1 + $0x22c0] sm:$0xff]
        %v1457 = vld [vmem:[%s1 + $0x22c8] sm:$0xff]
        %v1458 = vld [vmem:[%s1 + $0x22d0] sm:$0xff]
        %v1459 = vld [vmem:[%s1 + $0x22d8] sm:$0xff]
        %v1460 = vld [vmem:[%s1 + $0x22e0] sm:$0xff]
        %v1461 = vld [vmem:[%s1 + $0x22e8] sm:$0xff]
        %v1462 = vld [vmem:[%s1 + $0x22f0] sm:$0xff]
        %v1463 = vld [vmem:[%s1 + $0x22f8] sm:$0xff]
        %v1464 = vld [vmem:[%s1 + $0x2300] sm:$0xff]
        %v1465 = vld [vmem:[%s1 + $0x2308] sm:$0xff]
        %v1466 = vld [vmem:[%s1 + $0x2310] sm:$0xff]
        %v1467 = vld [vmem:[%s1 + $0x2318] sm:$0xff]
        %v1468 = vld [vmem:[%s1 + $0x2320] sm:$0xff]
        %v1469 = vld [vmem:[%s1 + $0x2328] sm:$0xff]
        %v1470 = vld [vmem:[%s1 + $0x2330] sm:$0xff]
        %v1471 = vld [vmem:[%s1 + $0x2338] sm:$0xff]
        %v1472 = vld [vmem:[%s1 + $0x2340] sm:$0xff]
        %v1473 = vld [vmem:[%s1 + $0x2348] sm:$0xff]
        %v1474 = vld [vmem:[%s1 + $0x2350] sm:$0xff]
        %v1475 = vld [vmem:[%s1 + $0x2358] sm:$0xff]
        %v1476 = vld [vmem:[%s1 + $0x2360] sm:$0xff]
        %v1477 = vld [vmem:[%s1 + $0x2368] sm:$0xff]
        %v1478 = vld [vmem:[%s1 + $0x2370] sm:$0xff]
        %v1479 = vld [vmem:[%s1 + $0x2378] sm:$0xff]
        %v1480 = vld [vmem:[%s1 + $0x2380] sm:$0xff]
        %v1481 = vld [vmem:[%s1 + $0x2388] sm:$0xff]
        %v1482 = vld [vmem:[%s1 + $0x2390] sm:$0xff]
        %v1483 = vld [vmem:[%s1 + $0x2398] sm:$0xff]
        %v1484 = vld [vmem:[%s1 + $0x23a0] sm:$0xff]
        %v1485 = vld [vmem:[%s1 + $0x23a8] sm:$0xff]
        %v1486 = vld [vmem:[%s1 + $0x23b0] sm:$0xff]
        %v1487 = vld [vmem:[%s1 + $0x23b8] sm:$0xff]
        %v1488 = vld [vmem:[%s1 + $0x23c0] sm:$0xff]
        %v1489 = vld [vmem:[%s1 + $0x23c8] sm:$0xff]
        %v1490 = vld [vmem:[%s1 + $0x23d0] sm:$0xff]
        %v1491 = vld [vmem:[%s1 + $0x23d8] sm:$0xff]
        %v1492 = vld [vmem:[%s1 + $0x23e0] sm:$0xff]
        %v1493 = vld [vmem:[%s1 + $0x23e8] sm:$0xff]
        %v1494 = vld [vmem:[%s1 + $0x23f0] sm:$0xff]
        %v1495 = vld [vmem:[%s1 + $0x23f8] sm:$0xff]
        %v1496 = vld [vmem:[%s1 + $0x2400] sm:$0xff]
        %v1497 = vld [vmem:[%s1 + $0x2408] sm:$0xff]
        %v1498 = vld [vmem:[%s1 + $0x2410] sm:$0xff]
        %v1499 = vld [vmem:[%s1 + $0x2418] sm:$0xff]
        %v1500 = vld [vmem:[%s1 + $0x2420] sm:$0xff]
        %v1501 = vld [vmem:[%s1 + $0x2428] sm:$0xff]
        %v1502 = vld [vmem:[%s1 + $0x2430] sm:$0xff]
        %v1503 = vld [vmem:[%s1 + $0x2438] sm:$0xff]
        %v1504 = vld [vmem:[%s1 + $0x2440] sm:$0xff]
        %v1505 = vld [vmem:[%s1 + $0x2448] sm:$0xff]
        %v1506 = vld [vmem:[%s1 + $0x2450] sm:$0xff]
        %v1507 = vld [vmem:[%s1 + $0x2458] sm:$0xff]
        %v1508 = vld [vmem:[%s1 + $0x2460] sm:$0xff]
        %v1509 = vld [vmem:[%s1 + $0x2468] sm:$0xff]
        %v1510 = vld [vmem:[%s1 + $0x2470] sm:$0xff]
        %v1511 = vld [vmem:[%s1 + $0x2478] sm:$0xff]
        %v1512 = vld [vmem:[%s1 + $0x2480] sm:$0xff]
        %v1513 = vld [vmem:[%s1 + $0x2488] sm:$0xff]
        %v1514 = vld [vmem:[%s1 + $0x2490] sm:$0xff]
        %v1515 = vld [vmem:[%s1 + $0x2498] sm:$0xff]
        %v1516 = vld [vmem:[%s1 + $0x24a0] sm:$0xff]
        %v1517 = vld [vmem:[%s1 + $0x24a8] sm:$0xff]
        %v1518 = vld [vmem:[%s1 + $0x24b0] sm:$0xff]
        %v1519 = vld [vmem:[%s1 + $0x24b8] sm:$0xff]
        %v1520 = vld [vmem:[%s1 + $0x24c0] sm:$0xff]
        %v1521 = vld [vmem:[%s1 + $0x24c8] sm:$0xff]
        %v1522 = vld [vmem:[%s1 + $0x24d0] sm:$0xff]
        %v1523 = vld [vmem:[%s1 + $0x24d8] sm:$0xff]
        %v1524 = vld [vmem:[%s1 + $0x24e0] sm:$0xff]
        %v1525 = vld [vmem:[%s1 + $0x24e8] sm:$0xff]
        %v1526 = vld [vmem:[%s1 + $0x24f0] sm:$0xff]
        %v1527 = vld [vmem:[%s1 + $0x24f8] sm:$0xff]
        %v1528 = vld [vmem:[%s1 + $0x2500] sm:$0xff]
        %v1529 = vld [vmem:[%s1 + $0x2508] sm:$0xff]
        %v1530 = vld [vmem:[%s1 + $0x2510] sm:$0xff]
        %v1531 = vld [vmem:[%s1 + $0x2518] sm:$0xff]
        %v1532 = vld [vmem:[%s1 + $0x2520] sm:$0xff]
        %v1533 = vld [vmem:[%s1 + $0x2528] sm:$0xff]
        %v1534 = vld [vmem:[%s1 + $0x2530] sm:$0xff]
        %v1535 = vld [vmem:[%s1 + $0x2538] sm:$0xff]
        %v1536 = vld [vmem:[%s1 + $0x2540] sm:$0xff]
        %v1537 = vld [vmem:[%s1 + $0x2548] sm:$0xff]
        %v1538 = vld [vmem:[%s1 + $0x2550] sm:$0xff]
        %v1539 = vld [vmem:[%s1 + $0x2558] sm:$0xff]
        %v1540 = vld [vmem:[%s1 + $0x2560] sm:$0xff]
        %v1541 = vld [vmem:[%s1 + $0x2568] sm:$0xff]
        %v1542 = vld [vmem:[%s1 + $0x2570] sm:$0xff]
        %v1543 = vld [vmem:[%s1 + $0x2578] sm:$0xff]
        %v1544 = vld [vmem:[%s1 + $0x2580] sm:$0xff]
        %v1545 = vld [vmem:[%s1 + $0x2588] sm:$0xff]
        %v1546 = vld [vmem:[%s1 + $0x2590] sm:$0xff]
        %v1547 = vld [vmem:[%s1 + $0x2598] sm:$0xff]
        %v1548 = vld [vmem:[%s1 + $0x25a0] sm:$0xff]
        %v1549 = vld [vmem:[%s1 + $0x25a8] sm:$0xff]
        %v1550 = vld [vmem:[%s1 + $0x25b0] sm:$0xff]
        %v1551 = vld [vmem:[%s1 + $0x25b8] sm:$0xff]
        %v1552 = vld [vmem:[%s1 + $0x25c0] sm:$0xff]
        %v1553 = vld [vmem:[%s1 + $0x25c8] sm:$0xff]
        %v1554 = vld [vmem:[%s1 + $0x25d0] sm:$0xff]
        %v1555 = vld [vmem:[%s1 + $0x25d8] sm:$0xff]
        %v1556 = vld [vmem:[%s1 + $0x25e0] sm:$0xff]
        %v1557 = vld [vmem:[%s1 + $0x25e8] sm:$0xff]
        %v1558 = vld [vmem:[%s1 + $0x25f0] sm:$0xff]
        %v1559 = vld [vmem:[%s1 + $0x25f8] sm:$0xff]
        %v1560 = vld [vmem:[%s1 + $0x2600] sm:$0xff]
        %v1561 = vld [vmem:[%s1 + $0x2608] sm:$0xff]
        %v1562 = vld [vmem:[%s1 + $0x2610] sm:$0xff]
        %v1563 = vld [vmem:[%s1 + $0x2618] sm:$0xff]
        %v1564 = vld [vmem:[%s1 + $0x2620] sm:$0xff]
        %v1565 = vld [vmem:[%s1 + $0x2628] sm:$0xff]
        %v1566 = vld [vmem:[%s1 + $0x2630] sm:$0xff]
        %v1567 = vld [vmem:[%s1 + $0x2638] sm:$0xff]
        %v1568 = vld [vmem:[%s1 + $0x2640] sm:$0xff]
        %v1569 = vld [vmem:[%s1 + $0x2648] sm:$0xff]
        %v1570 = vld [vmem:[%s1 + $0x2650] sm:$0xff]
        %v1571 = vld [vmem:[%s1 + $0x2658] sm:$0xff]
        %v1572 = vld [vmem:[%s1 + $0x2660] sm:$0xff]
        %v1573 = vld [vmem:[%s1 + $0x2668] sm:$0xff]
        %v1574 = vld [vmem:[%s1 + $0x2670] sm:$0xff]
        %v1575 = vld [vmem:[%s1 + $0x2678] sm:$0xff]
        %v1576 = vld [vmem:[%s1 + $0x2680] sm:$0xff]
        %v1577 = vld [vmem:[%s1 + $0x2688] sm:$0xff]
        %v1578 = vld [vmem:[%s1 + $0x2690] sm:$0xff]
        %v1579 = vld [vmem:[%s1 + $0x2698] sm:$0xff]
        %v1580 = vld [vmem:[%s1 + $0x26a0] sm:$0xff]
        %v1581 = vld [vmem:[%s1 + $0x26a8] sm:$0xff]
        %v1582 = vld [vmem:[%s1 + $0x26b0] sm:$0xff]
        %v1583 = vld [vmem:[%s1 + $0x26b8] sm:$0xff]
        %v1584 = vld [vmem:[%s1 + $0x26c0] sm:$0xff]
        %v1585 = vld [vmem:[%s1 + $0x26c8] sm:$0xff]
        %v1586 = vld [vmem:[%s1 + $0x26d0] sm:$0xff]
        %v1587 = vld [vmem:[%s1 + $0x26d8] sm:$0xff]
        %v1588 = vld [vmem:[%s1 + $0x26e0] sm:$0xff]
        %v1589 = vld [vmem:[%s1 + $0x26e8] sm:$0xff]
        %v1590 = vld [vmem:[%s1 + $0x26f0] sm:$0xff]
        %v1591 = vld [vmem:[%s1 + $0x26f8] sm:$0xff]
        %v1592 = vld [vmem:[%s1 + $0x2700] sm:$0xff]
        %v1593 = vld [vmem:[%s1 + $0x2708] sm:$0xff]
        %v1594 = vld [vmem:[%s1 + $0x2710] sm:$0xff]
        %v1595 = vld [vmem:[%s1 + $0x2718] sm:$0xff]
        %v1596 = vld [vmem:[%s1 + $0x2720] sm:$0xff]
        %v1597 = vld [vmem:[%s1 + $0x2728] sm:$0xff]
        %v1598 = vld [vmem:[%s1 + $0x2730] sm:$0xff]
        %v1599 = vld [vmem:[%s1 + $0x2738] sm:$0xff]
        %v1600 = vld [vmem:[%s1 + $0x2740] sm:$0xff]
        %v1601 = vld [vmem:[%s1 + $0x2748] sm:$0xff]
        %v1602 = vld [vmem:[%s1 + $0x2750] sm:$0xff]
        %v1603 = vld [vmem:[%s1 + $0x2758] sm:$0xff]
        %v1604 = vld [vmem:[%s1 + $0x2760] sm:$0xff]
        %v1605 = vld [vmem:[%s1 + $0x2768] sm:$0xff]
        %v1606 = vld [vmem:[%s1 + $0x2770] sm:$0xff]
        %v1607 = vld [vmem:[%s1 + $0x2778] sm:$0xff]
        %v1608 = vld [vmem:[%s1 + $0x2780] sm:$0xff]
        %v1609 = vld [vmem:[%s1 + $0x2788] sm:$0xff]
        %v1610 = vld [vmem:[%s1 + $0x2790] sm:$0xff]
        %v1611 = vld [vmem:[%s1 + $0x2798] sm:$0xff]
        %v1612 = vld [vmem:[%s1 + $0x27a0] sm:$0xff]
        %v1613 = vld [vmem:[%s1 + $0x27a8] sm:$0xff]
        %v1614 = vld [vmem:[%s1 + $0x27b0] sm:$0xff]
        %v1615 = vld [vmem:[%s1 + $0x27b8] sm:$0xff]
        %v1616 = vld [vmem:[%s1 + $0x27c0] sm:$0xff]
        %v1617 = vld [vmem:[%s1 + $0x27c8] sm:$0xff]
        %v1618 = vld [vmem:[%s1 + $0x27d0] sm:$0xff]
        %v1619 = vld [vmem:[%s1 + $0x27d8] sm:$0xff]
        %v1620 = vld [vmem:[%s1 + $0x27e0] sm:$0xff]
        %v1621 = vld [vmem:[%s1 + $0x27e8] sm:$0xff]
        %v1622 = vld [vmem:[%s1 + $0x27f0] sm:$0xff]
        %v1623 = vld [vmem:[%s1 + $0x27f8] sm:$0xff]
        %v1664 = vunpack.c.l.b16 %v304
        %v1665 = vunpack.c.h.b16 %v304
        %v1666 = vunpack.c.l.b16 %v305
        %v1667 = vunpack.c.h.b16 %v305
        %v1668 = vunpack.c.l.b16 %v306
        %v1669 = vunpack.c.h.b16 %v306
        %v1670 = vunpack.c.l.b16 %v307
        %v1671 = vunpack.c.h.b16 %v307
        %v1672 = vunpack.c.l.b16 %v308
        %v1673 = vunpack.c.h.b16 %v308
        %v1674 = vunpack.c.l.b16 %v309
        %v1675 = vunpack.c.h.b16 %v309
        %v1676 = vunpack.c.l.b16 %v310
        %v1677 = vunpack.c.h.b16 %v310
        %v1678 = vunpack.c.l.b16 %v311
        %v1679 = vunpack.c.h.b16 %v311
        %v1680 = vunpack.c.l.b16 %v312
        %v1681 = vunpack.c.h.b16 %v312
        %v1682 = vunpack.c.l.b16 %v313
        %v1683 = vunpack.c.h.b16 %v313
        %v1684 = vunpack.c.l.b16 %v314
        %v1685 = vunpack.c.h.b16 %v314
        %v1686 = vunpack.c.l.b16 %v315
        %v1687 = vunpack.c.h.b16 %v315
        %v1688 = vunpack.c.l.b16 %v316
        %v1689 = vunpack.c.h.b16 %v316
        %v1690 = vunpack.c.l.b16 %v317
        %v1691 = vunpack.c.h.b16 %v317
        %v1692 = vunpack.c.l.b16 %v318
        %v1693 = vunpack.c.h.b16 %v318
        %v1694 = vunpack.c.l.b16 %v319
        %v1695 = vunpack.c.h.b16 %v319
        %v1696 = vunpack.c.l.b16 %v320
        %v1697 = vunpack.c.h.b16 %v320
        %v1698 = vunpack.c.l.b16 %v321
        %v1699 = vunpack.c.h.b16 %v321
        %v1700 = vunpack.c.l.b16 %v322
        %v1701 = vunpack.c.h.b16 %v322
        %v1702 = vunpack.c.l.b16 %v323
        %v1703 = vunpack.c.h.b16 %v323
        %v1704 = vunpack.c.l.b16 %v324
        %v1705 = vunpack.c.h.b16 %v324
        %v1706 = vunpack.c.l.b16 %v325
        %v1707 = vunpack.c.h.b16 %v325
        %v1708 = vunpack.c.l.b16 %v326
        %v1709 = vunpack.c.h.b16 %v326
        %v1710 = vunpack.c.l.b16 %v327
        %v1711 = vunpack.c.h.b16 %v327
        %v1712 = vunpack.c.l.b16 %v328
        %v1713 = vunpack.c.h.b16 %v328
        %v1714 = vunpack.c.l.b16 %v329
        %v1715 = vunpack.c.h.b16 %v329
        %v1716 = vunpack.c.l.b16 %v330
        %v1717 = vunpack.c.h.b16 %v330
        %v1718 = vunpack.c.l.b16 %v331
        %v1719 = vunpack.c.h.b16 %v331
        %v1720 = vunpack.c.l.b16 %v332
        %v1721 = vunpack.c.h.b16 %v332
        %v1722 = vunpack.c.l.b16 %v333
        %v1723 = vunpack.c.h.b16 %v333
        %v1724 = vunpack.c.l.b16 %v334
        %v1725 = vunpack.c.h.b16 %v334
        %v1726 = vunpack.c.l.b16 %v335
        %v1727 = vunpack.c.h.b16 %v335
        %v1728 = vunpack.c.l.b16 %v336
        %v1729 = vunpack.c.h.b16 %v336
        %v1730 = vunpack.c.l.b16 %v337
        %v1731 = vunpack.c.h.b16 %v337
        %v1732 = vunpack.c.l.b16 %v338
        %v1733 = vunpack.c.h.b16 %v338
        %v1734 = vunpack.c.l.b16 %v339
        %v1735 = vunpack.c.h.b16 %v339
        %v1736 = vunpack.c.l.b16 %v340
        %v1737 = vunpack.c.h.b16 %v340
        %v1738 = vunpack.c.l.b16 %v341
        %v1739 = vunpack.c.h.b16 %v341
        %v1740 = vunpack.c.l.b16 %v342
        %v1741 = vunpack.c.h.b16 %v342
        %v1742 = vunpack.c.l.b16 %v343
        %v1743 = vunpack.c.h.b16 %v343
        %v1744 = vpack.c.b16 %v1664, %v1664
        %v1745 = vpack.c.b16 %v1665, %v1665
        %v1746 = vpack.c.b16 %v1666, %v1666
        %v1747 = vpack.c.b16 %v1667, %v1667
        %v1748 = vpack.c.b16 %v1668, %v1668
        %v1749 = vpack.c.b16 %v1669, %v1669
        %v1750 = vpack.c.b16 %v1670, %v1670
        %v1751 = vpack.c.b16 %v1671, %v1671
        %v1752 = vpack.c.b16 %v1672, %v1672
        %v1753 = vpack.c.b16 %v1673, %v1673
        %v1754 = vpack.c.b16 %v1674, %v1674
        %v1755 = vpack.c.b16 %v1675, %v1675
        %v1756 = vpack.c.b16 %v1676, %v1676
        %v1757 = vpack.c.b16 %v1677, %v1677
        %v1758 = vpack.c.b16 %v1678, %v1678
        %v1759 = vpack.c.b16 %v1679, %v1679
        %v1760 = vpack.c.b16 %v1680, %v1680
        %v1761 = vpack.c.b16 %v1681, %v1681
        %v1762 = vpack.c.b16 %v1682, %v1682
        %v1763 = vpack.c.b16 %v1683, %v1683
        %v1764 = vpack.c.b16 %v1684, %v1684
        %v1765 = vpack.c.b16 %v1685, %v1685
        %v1766 = vpack.c.b16 %v1686, %v1686
        %v1767 = vpack.c.b16 %v1687, %v1687
        %v1768 = vpack.c.b16 %v1688, %v1688
        %v1769 = vpack.c.b16 %v1689, %v1689
        %v1770 = vpack.c.b16 %v1690, %v1690
        %v1771 = vpack.c.b16 %v1691, %v1691
        %v1772 = vpack.c.b16 %v1692, %v1692
        %v1773 = vpack.c.b16 %v1693, %v1693
        %v1774 = vpack.c.b16 %v1694, %v1694
        %v1775 = vpack.c.b16 %v1695, %v1695
        %v1776 = vpack.c.b16 %v1696, %v1696
        %v1777 = vpack.c.b16 %v1697, %v1697
        %v1778 = vpack.c.b16 %v1698, %v1698
        %v1779 = vpack.c.b16 %v1699, %v1699
        %v1780 = vpack.c.b16 %v1700, %v1700
        %v1781 = vpack.c.b16 %v1701, %v1701
        %v1782 = vpack.c.b16 %v1702, %v1702
        %v1783 = vpack.c.b16 %v1703, %v1703
        %v1784 = vpack.c.b16 %v1704, %v1704
        %v1785 = vpack.c.b16 %v1705, %v1705
        %v1786 = vpack.c.b16 %v1706, %v1706
        %v1787 = vpack.c.b16 %v1707, %v1707
        %v1788 = vpack.c.b16 %v1708, %v1708
        %v1789 = vpack.c.b16 %v1709, %v1709
        %v1790 = vpack.c.b16 %v1710, %v1710
        %v1791 = vpack.c.b16 %v1711, %v1711
        %v1792 = vpack.c.b16 %v1712, %v1712
        %v1793 = vpack.c.b16 %v1713, %v1713
        %v1794 = vpack.c.b16 %v1714, %v1714
        %v1795 = vpack.c.b16 %v1715, %v1715
        %v1796 = vpack.c.b16 %v1716, %v1716
        %v1797 = vpack.c.b16 %v1717, %v1717
        %v1798 = vpack.c.b16 %v1718, %v1718
        %v1799 = vpack.c.b16 %v1719, %v1719
        %v1800 = vpack.c.b16 %v1720, %v1720
        %v1801 = vpack.c.b16 %v1721, %v1721
        %v1802 = vpack.c.b16 %v1722, %v1722
        %v1803 = vpack.c.b16 %v1723, %v1723
        %v1804 = vpack.c.b16 %v1724, %v1724
        %v1805 = vpack.c.b16 %v1725, %v1725
        %v1806 = vpack.c.b16 %v1726, %v1726
        %v1807 = vpack.c.b16 %v1727, %v1727
        %v1808 = vpack.c.b16 %v1728, %v1728
        %v1809 = vpack.c.b16 %v1729, %v1729
        %v1810 = vpack.c.b16 %v1730, %v1730
        %v1811 = vpack.c.b16 %v1731, %v1731
        %v1812 = vpack.c.b16 %v1732, %v1732
        %v1813 = vpack.c.b16 %v1733, %v1733
        %v1814 = vpack.c.b16 %v1734, %v1734
        %v1815 = vpack.c.b16 %v1735, %v1735
        %v1816 = vpack.c.b16 %v1736, %v1736
        %v1817 = vpack.c.b16 %v1737, %v1737
        %v1818 = vpack.c.b16 %v1738, %v1738
        %v1819 = vpack.c.b16 %v1739, %v1739
        %v1820 = vpack.c.b16 %v1740, %v1740
        %v1821 = vpack.c.b16 %v1741, %v1741
        %v1822 = vpack.c.b16 %v1742, %v1742
        %v1823 = vpack.c.b16 %v1743, %v1743
        %v3184 = vunpack.c.l.b16 %v344
        %v3185 = vunpack.c.h.b16 %v344
        %v3186 = vunpack.c.l.b16 %v345
        %v3187 = vunpack.c.h.b16 %v345
        %v3188 = vunpack.c.l.b16 %v346
        %v3189 = vunpack.c.h.b16 %v346
        %v3190 = vunpack.c.l.b16 %v347
        %v3191 = vunpack.c.h.b16 %v347
        %v3192 = vunpack.c.l.b16 %v348
        %v3193 = vunpack.c.h.b16 %v348
        %v3194 = vunpack.c.l.b16 %v349
        %v3195 = vunpack.c.h.b16 %v349
        %v3196 = vunpack.c.l.b16 %v350
        %v3197 = vunpack.c.h.b16 %v350
        %v3198 = vunpack.c.l.b16 %v351
        %v3199 = vunpack.c.h.b16 %v351
        %v3200 = vunpack.c.l.b16 %v352
        %v3201 = vunpack.c.h.b16 %v352
        %v3202 = vunpack.c.l.b16 %v353
        %v3203 = vunpack.c.h.b16 %v353
        %v3204 = vunpack.c.l.b16 %v354
        %v3205 = vunpack.c.h.b16 %v354
        %v3206 = vunpack.c.l.b16 %v355
        %v3207 = vunpack.c.h.b16 %v355
        %v3208 = vunpack.c.l.b16 %v356
        %v3209 = vunpack.c.h.b16 %v356
        %v3210 = vunpack.c.l.b16 %v357
        %v3211 = vunpack.c.h.b16 %v357
        %v3212 = vunpack.c.l.b16 %v358
        %v3213 = vunpack.c.h.b16 %v358
        %v3214 = vunpack.c.l.b16 %v359
        %v3215 = vunpack.c.h.b16 %v359
        %v3216 = vunpack.c.l.b16 %v360
        %v3217 = vunpack.c.h.b16 %v360
        %v3218 = vunpack.c.l.b16 %v361
        %v3219 = vunpack.c.h.b16 %v361
        %v3220 = vunpack.c.l.b16 %v362
        %v3221 = vunpack.c.h.b16 %v362
        %v3222 = vunpack.c.l.b16 %v363
        %v3223 = vunpack.c.h.b16 %v363
        %v3224 = vunpack.c.l.b16 %v364
        %v3225 = vunpack.c.h.b16 %v364
        %v3226 = vunpack.c.l.b16 %v365
        %v3227 = vunpack.c.h.b16 %v365
        %v3228 = vunpack.c.l.b16 %v366
        %v3229 = vunpack.c.h.b16 %v366
        %v3230 = vunpack.c.l.b16 %v367
        %v3231 = vunpack.c.h.b16 %v367
        %v3232 = vunpack.c.l.b16 %v368
        %v3233 = vunpack.c.h.b16 %v368
        %v3234 = vunpack.c.l.b16 %v369
        %v3235 = vunpack.c.h.b16 %v369
        %v3236 = vunpack.c.l.b16 %v370
        %v3237 = vunpack.c.h.b16 %v370
        %v3238 = vunpack.c.l.b16 %v371
        %v3239 = vunpack.c.h.b16 %v371
        %v3240 = vunpack.c.l.b16 %v372
        %v3241 = vunpack.c.h.b16 %v372
        %v3242 = vunpack.c.l.b16 %v373
        %v3243 = vunpack.c.h.b16 %v373
        %v3244 = vunpack.c.l.b16 %v374
        %v3245 = vunpack.c.h.b16 %v374
        %v3246 = vunpack.c.l.b16 %v375
        %v3247 = vunpack.c.h.b16 %v375
        %v3248 = vunpack.c.l.b16 %v376
        %v3249 = vunpack.c.h.b16 %v376
        %v3250 = vunpack.c.l.b16 %v377
        %v3251 = vunpack.c.h.b16 %v377
        %v3252 = vunpack.c.l.b16 %v378
        %v3253 = vunpack.c.h.b16 %v378
        %v3254 = vunpack.c.l.b16 %v379
        %v3255 = vunpack.c.h.b16 %v379
        %v3256 = vunpack.c.l.b16 %v380
        %v3257 = vunpack.c.h.b16 %v380
        %v3258 = vunpack.c.l.b16 %v381
        %v3259 = vunpack.c.h.b16 %v381
        %v3260 = vunpack.c.l.b16 %v382
        %v3261 = vunpack.c.h.b16 %v382
        %v3262 = vunpack.c.l.b16 %v383
        %v3263 = vunpack.c.h.b16 %v383
        %v3264 = vunpack.c.l.b16 %v384
        %v3265 = vunpack.c.h.b16 %v384
        %v3266 = vunpack.c.l.b16 %v385
        %v3267 = vunpack.c.h.b16 %v385
        %v3268 = vunpack.c.l.b16 %v386
        %v3269 = vunpack.c.h.b16 %v386
        %v3270 = vunpack.c.l.b16 %v387
        %v3271 = vunpack.c.h.b16 %v387
        %v3272 = vunpack.c.l.b16 %v388
        %v3273 = vunpack.c.h.b16 %v388
        %v3274 = vunpack.c.l.b16 %v389
        %v3275 = vunpack.c.h.b16 %v389
        %v3276 = vunpack.c.l.b16 %v390
        %v3277 = vunpack.c.h.b16 %v390
        %v3278 = vunpack.c.l.b16 %v391
        %v3279 = vunpack.c.h.b16 %v391
        %v3280 = vunpack.c.l.b16 %v392
        %v3281 = vunpack.c.h.b16 %v392
        %v3282 = vunpack.c.l.b16 %v393
        %v3283 = vunpack.c.h.b16 %v393
        %v3284 = vunpack.c.l.b16 %v394
        %v3285 = vunpack.c.h.b16 %v394
        %v3286 = vunpack.c.l.b16 %v395
        %v3287 = vunpack.c.h.b16 %v395
        %v3288 = vunpack.c.l.b16 %v396
        %v3289 = vunpack.c.h.b16 %v396
        %v3290 = vunpack.c.l.b16 %v397
        %v3291 = vunpack.c.h.b16 %v397
        %v3292 = vunpack.c.l.b16 %v398
        %v3293 = vunpack.c.h.b16 %v398
        %v3294 = vunpack.c.l.b16 %v399
        %v3295 = vunpack.c.h.b16 %v399
        %v3296 = vunpack.c.l.b16 %v400
        %v3297 = vunpack.c.h.b16 %v400
        %v3298 = vunpack.c.l.b16 %v401
        %v3299 = vunpack.c.h.b16 %v401
        %v3300 = vunpack.c.l.b16 %v402
        %v3301 = vunpack.c.h.b16 %v402
        %v3302 = vunpack.c.l.b16 %v403
        %v3303 = vunpack.c.h.b16 %v403
        %v3304 = vunpack.c.l.b16 %v404
        %v3305 = vunpack.c.h.b16 %v404
        %v3306 = vunpack.c.l.b16 %v405
        %v3307 = vunpack.c.h.b16 %v405
        %v3308 = vunpack.c.l.b16 %v406
        %v3309 = vunpack.c.h.b16 %v406
        %v3310 = vunpack.c.l.b16 %v407
        %v3311 = vunpack.c.h.b16 %v407
        %v3312 = vunpack.c.l.b16 %v408
        %v3313 = vunpack.c.h.b16 %v408
        %v3314 = vunpack.c.l.b16 %v409
        %v3315 = vunpack.c.h.b16 %v409
        %v3316 = vunpack.c.l.b16 %v410
        %v3317 = vunpack.c.h.b16 %v410
        %v3318 = vunpack.c.l.b16 %v411
        %v3319 = vunpack.c.h.b16 %v411
        %v3320 = vunpack.c.l.b16 %v412
        %v3321 = vunpack.c.h.b16 %v412
        %v3322 = vunpack.c.l.b16 %v413
        %v3323 = vunpack.c.h.b16 %v413
        %v3324 = vunpack.c.l.b16 %v414
        %v3325 = vunpack.c.h.b16 %v414
        %v3326 = vunpack.c.l.b16 %v415
        %v3327 = vunpack.c.h.b16 %v415
        %v3328 = vunpack.c.l.b16 %v416
        %v3329 = vunpack.c.h.b16 %v416
        %v3330 = vunpack.c.l.b16 %v417
        %v3331 = vunpack.c.h.b16 %v417
        %v3332 = vunpack.c.l.b16 %v418
        %v3333 = vunpack.c.h.b16 %v418
        %v3334 = vunpack.c.l.b16 %v419
        %v3335 = vunpack.c.h.b16 %v419
        %v3336 = vunpack.c.l.b16 %v420
        %v3337 = vunpack.c.h.b16 %v420
        %v3338 = vunpack.c.l.b16 %v421
        %v3339 = vunpack.c.h.b16 %v421
        %v3340 = vunpack.c.l.b16 %v422
        %v3341 = vunpack.c.h.b16 %v422
        %v3342 = vunpack.c.l.b16 %v423
        %v3343 = vunpack.c.h.b16 %v423
        %v3344 = vunpack.c.l.b16 %v424
        %v3345 = vunpack.c.h.b16 %v424
        %v3346 = vunpack.c.l.b16 %v425
        %v3347 = vunpack.c.h.b16 %v425
        %v3348 = vunpack.c.l.b16 %v426
        %v3349 = vunpack.c.h.b16 %v426
        %v3350 = vunpack.c.l.b16 %v427
        %v3351 = vunpack.c.h.b16 %v427
        %v3352 = vunpack.c.l.b16 %v428
        %v3353 = vunpack.c.h.b16 %v428
        %v3354 = vunpack.c.l.b16 %v429
        %v3355 = vunpack.c.h.b16 %v429
        %v3356 = vunpack.c.l.b16 %v430
        %v3357 = vunpack.c.h.b16 %v430
        %v3358 = vunpack.c.l.b16 %v431
        %v3359 = vunpack.c.h.b16 %v431
        %v3360 = vunpack.c.l.b16 %v432
        %v3361 = vunpack.c.h.b16 %v432
        %v3362 = vunpack.c.l.b16 %v433
        %v3363 = vunpack.c.h.b16 %v433
        %v3364 = vunpack.c.l.b16 %v434
        %v3365 = vunpack.c.h.b16 %v434
        %v3366 = vunpack.c.l.b16 %v435
        %v3367 = vunpack.c.h.b16 %v435
        %v3368 = vunpack.c.l.b16 %v436
        %v3369 = vunpack.c.h.b16 %v436
        %v3370 = vunpack.c.l.b16 %v437
        %v3371 = vunpack.c.h.b16 %v437
        %v3372 = vunpack.c.l.b16 %v438
        %v3373 = vunpack.c.h.b16 %v438
        %v3374 = vunpack.c.l.b16 %v439
        %v3375 = vunpack.c.h.b16 %v439
        %v3376 = vunpack.c.l.b16 %v440
        %v3377 = vunpack.c.h.b16 %v440
        %v3378 = vunpack.c.l.b16 %v441
        %v3379 = vunpack.c.h.b16 %v441
        %v3380 = vunpack.c.l.b16 %v442
        %v3381 = vunpack.c.h.b16 %v442
        %v3382 = vunpack.c.l.b16 %v443
        %v3383 = vunpack.c.h.b16 %v443
        %v3384 = vunpack.c.l.b16 %v444
        %v3385 = vunpack.c.h.b16 %v444
        %v3386 = vunpack.c.l.b16 %v445
        %v3387 = vunpack.c.h.b16 %v445
        %v3388 = vunpack.c.l.b16 %v446
        %v3389 = vunpack.c.h.b16 %v446
        %v3390 = vunpack.c.l.b16 %v447
        %v3391 = vunpack.c.h.b16 %v447
        %v3392 = vunpack.c.l.b16 %v448
        %v3393 = vunpack.c.h.b16 %v448
        %v3394 = vunpack.c.l.b16 %v449
        %v3395 = vunpack.c.h.b16 %v449
        %v3396 = vunpack.c.l.b16 %v450
        %v3397 = vunpack.c.h.b16 %v450
        %v3398 = vunpack.c.l.b16 %v451
        %v3399 = vunpack.c.h.b16 %v451
        %v3400 = vunpack.c.l.b16 %v452
        %v3401 = vunpack.c.h.b16 %v452
        %v3402 = vunpack.c.l.b16 %v453
        %v3403 = vunpack.c.h.b16 %v453
        %v3404 = vunpack.c.l.b16 %v454
        %v3405 = vunpack.c.h.b16 %v454
        %v3406 = vunpack.c.l.b16 %v455
        %v3407 = vunpack.c.h.b16 %v455
        %v3408 = vunpack.c.l.b16 %v456
        %v3409 = vunpack.c.h.b16 %v456
        %v3410 = vunpack.c.l.b16 %v457
        %v3411 = vunpack.c.h.b16 %v457
        %v3412 = vunpack.c.l.b16 %v458
        %v3413 = vunpack.c.h.b16 %v458
        %v3414 = vunpack.c.l.b16 %v459
        %v3415 = vunpack.c.h.b16 %v459
        %v3416 = vunpack.c.l.b16 %v460
        %v3417 = vunpack.c.h.b16 %v460
        %v3418 = vunpack.c.l.b16 %v461
        %v3419 = vunpack.c.h.b16 %v461
        %v3420 = vunpack.c.l.b16 %v462
        %v3421 = vunpack.c.h.b16 %v462
        %v3422 = vunpack.c.l.b16 %v463
        %v3423 = vunpack.c.h.b16 %v463
        %v3424 = vunpack.c.l.b16 %v464
        %v3425 = vunpack.c.h.b16 %v464
        %v3426 = vunpack.c.l.b16 %v465
        %v3427 = vunpack.c.h.b16 %v465
        %v3428 = vunpack.c.l.b16 %v466
        %v3429 = vunpack.c.h.b16 %v466
        %v3430 = vunpack.c.l.b16 %v467
        %v3431 = vunpack.c.h.b16 %v467
        %v3432 = vunpack.c.l.b16 %v468
        %v3433 = vunpack.c.h.b16 %v468
        %v3434 = vunpack.c.l.b16 %v469
        %v3435 = vunpack.c.h.b16 %v469
        %v3436 = vunpack.c.l.b16 %v470
        %v3437 = vunpack.c.h.b16 %v470
        %v3438 = vunpack.c.l.b16 %v471
        %v3439 = vunpack.c.h.b16 %v471
        %v3440 = vunpack.c.l.b16 %v472
        %v3441 = vunpack.c.h.b16 %v472
        %v3442 = vunpack.c.l.b16 %v473
        %v3443 = vunpack.c.h.b16 %v473
        %v3444 = vunpack.c.l.b16 %v474
        %v3445 = vunpack.c.h.b16 %v474
        %v3446 = vunpack.c.l.b16 %v475
        %v3447 = vunpack.c.h.b16 %v475
        %v3448 = vunpack.c.l.b16 %v476
        %v3449 = vunpack.c.h.b16 %v476
        %v3450 = vunpack.c.l.b16 %v477
        %v3451 = vunpack.c.h.b16 %v477
        %v3452 = vunpack.c.l.b16 %v478
        %v3453 = vunpack.c.h.b16 %v478
        %v3454 = vunpack.c.l.b16 %v479
        %v3455 = vunpack.c.h.b16 %v479
        %v3456 = vunpack.c.l.b16 %v480
        %v3457 = vunpack.c.h.b16 %v480
        %v3458 = vunpack.c.l.b16 %v481
        %v3459 = vunpack.c.h.b16 %v481
        %v3460 = vunpack.c.l.b16 %v482
        %v3461 = vunpack.c.h.b16 %v482
        %v3462 = vunpack.c.l.b16 %v483
        %v3463 = vunpack.c.h.b16 %v483
        %v3464 = vunpack.c.l.b16 %v484
        %v3465 = vunpack.c.h.b16 %v484
        %v3466 = vunpack.c.l.b16 %v485
        %v3467 = vunpack.c.h.b16 %v485
        %v3468 = vunpack.c.l.b16 %v486
        %v3469 = vunpack.c.h.b16 %v486
        %v3470 = vunpack.c.l.b16 %v487
        %v3471 = vunpack.c.h.b16 %v487
        %v3472 = vunpack.c.l.b16 %v488
        %v3473 = vunpack.c.h.b16 %v488
        %v3474 = vunpack.c.l.b16 %v489
        %v3475 = vunpack.c.h.b16 %v489
        %v3476 = vunpack.c.l.b16 %v490
        %v3477 = vunpack.c.h.b16 %v490
        %v3478 = vunpack.c.l.b16 %v491
        %v3479 = vunpack.c.h.b16 %v491
        %v3480 = vunpack.c.l.b16 %v492
        %v3481 = vunpack.c.h.b16 %v492
        %v3482 = vunpack.c.l.b16 %v493
        %v3483 = vunpack.c.h.b16 %v493
        %v3484 = vunpack.c.l.b16 %v494
        %v3485 = vunpack.c.h.b16 %v494
        %v3486 = vunpack.c.l.b16 %v495
        %v3487 = vunpack.c.h.b16 %v495
        %v3488 = vunpack.c.l.b16 %v496
        %v3489 = vunpack.c.h.b16 %v496
        %v3490 = vunpack.c.l.b16 %v497
        %v3491 = vunpack.c.h.b16 %v497
        %v3492 = vunpack.c.l.b16 %v498
        %v3493 = vunpack.c.h.b16 %v498
        %v3494 = vunpack.c.l.b16 %v499
        %v3495 = vunpack.c.h.b16 %v499
        %v3496 = vunpack.c.l.b16 %v500
        %v3497 = vunpack.c.h.b16 %v500
        %v3498 = vunpack.c.l.b16 %v501
        %v3499 = vunpack.c.h.b16 %v501
        %v3500 = vunpack.c.l.b16 %v502
        %v3501 = vunpack.c.h.b16 %v502
        %v3502 = vunpack.c.l.b16 %v503
        %v3503 = vunpack.c.h.b16 %v503
        %v3504 = vunpack.c.l.b16 %v504
        %v3505 = vunpack.c.h.b16 %v504
        %v3506 = vunpack.c.l.b16 %v505
        %v3507 = vunpack.c.h.b16 %v505
        %v3508 = vunpack.c.l.b16 %v506
        %v3509 = vunpack.c.h.b16 %v506
        %v3510 = vunpack.c.l.b16 %v507
        %v3511 = vunpack.c.h.b16 %v507
        %v3512 = vunpack.c.l.b16 %v508
        %v3513 = vunpack.c.h.b16 %v508
        %v3514 = vunpack.c.l.b16 %v509
        %v3515 = vunpack.c.h.b16 %v509
        %v3516 = vunpack.c.l.b16 %v510
        %v3517 = vunpack.c.h.b16 %v510
        %v3518 = vunpack.c.l.b16 %v511
        %v3519 = vunpack.c.h.b16 %v511
        %v3520 = vunpack.c.l.b16 %v512
        %v3521 = vunpack.c.h.b16 %v512
        %v3522 = vunpack.c.l.b16 %v513
        %v3523 = vunpack.c.h.b16 %v513
        %v3524 = vunpack.c.l.b16 %v514
        %v3525 = vunpack.c.h.b16 %v514
        %v3526 = vunpack.c.l.b16 %v515
        %v3527 = vunpack.c.h.b16 %v515
        %v3528 = vunpack.c.l.b16 %v516
        %v3529 = vunpack.c.h.b16 %v516
        %v3530 = vunpack.c.l.b16 %v517
        %v3531 = vunpack.c.h.b16 %v517
        %v3532 = vunpack.c.l.b16 %v518
        %v3533 = vunpack.c.h.b16 %v518
        %v3534 = vunpack.c.l.b16 %v519
        %v3535 = vunpack.c.h.b16 %v519
        %v3536 = vunpack.c.l.b16 %v520
        %v3537 = vunpack.c.h.b16 %v520
        %v3538 = vunpack.c.l.b16 %v521
        %v3539 = vunpack.c.h.b16 %v521
        %v3540 = vunpack.c.l.b16 %v522
        %v3541 = vunpack.c.h.b16 %v522
        %v3542 = vunpack.c.l.b16 %v523
        %v3543 = vunpack.c.h.b16 %v523
        %v3544 = vunpack.c.l.b16 %v524
        %v3545 = vunpack.c.h.b16 %v524
        %v3546 = vunpack.c.l.b16 %v525
        %v3547 = vunpack.c.h.b16 %v525
        %v3548 = vunpack.c.l.b16 %v526
        %v3549 = vunpack.c.h.b16 %v526
        %v3550 = vunpack.c.l.b16 %v527
        %v3551 = vunpack.c.h.b16 %v527
        %v3552 = vunpack.c.l.b16 %v528
        %v3553 = vunpack.c.h.b16 %v528
        %v3554 = vunpack.c.l.b16 %v529
        %v3555 = vunpack.c.h.b16 %v529
        %v3556 = vunpack.c.l.b16 %v530
        %v3557 = vunpack.c.h.b16 %v530
        %v3558 = vunpack.c.l.b16 %v531
        %v3559 = vunpack.c.h.b16 %v531
        %v3560 = vunpack.c.l.b16 %v532
        %v3561 = vunpack.c.h.b16 %v532
        %v3562 = vunpack.c.l.b16 %v533
        %v3563 = vunpack.c.h.b16 %v533
        %v3564 = vunpack.c.l.b16 %v534
        %v3565 = vunpack.c.h.b16 %v534
        %v3566 = vunpack.c.l.b16 %v535
        %v3567 = vunpack.c.h.b16 %v535
        %v3568 = vunpack.c.l.b16 %v536
        %v3569 = vunpack.c.h.b16 %v536
        %v3570 = vunpack.c.l.b16 %v537
        %v3571 = vunpack.c.h.b16 %v537
        %v3572 = vunpack.c.l.b16 %v538
        %v3573 = vunpack.c.h.b16 %v538
        %v3574 = vunpack.c.l.b16 %v539
        %v3575 = vunpack.c.h.b16 %v539
        %v3576 = vunpack.c.l.b16 %v540
        %v3577 = vunpack.c.h.b16 %v540
        %v3578 = vunpack.c.l.b16 %v541
        %v3579 = vunpack.c.h.b16 %v541
        %v3580 = vunpack.c.l.b16 %v542
        %v3581 = vunpack.c.h.b16 %v542
        %v3582 = vunpack.c.l.b16 %v543
        %v3583 = vunpack.c.h.b16 %v543
        %v3584 = vunpack.c.l.b16 %v544
        %v3585 = vunpack.c.h.b16 %v544
        %v3586 = vunpack.c.l.b16 %v545
        %v3587 = vunpack.c.h.b16 %v545
        %v3588 = vunpack.c.l.b16 %v546
        %v3589 = vunpack.c.h.b16 %v546
        %v3590 = vunpack.c.l.b16 %v547
        %v3591 = vunpack.c.h.b16 %v547
        %v3592 = vunpack.c.l.b16 %v548
        %v3593 = vunpack.c.h.b16 %v548
        %v3594 = vunpack.c.l.b16 %v549
        %v3595 = vunpack.c.h.b16 %v549
        %v3596 = vunpack.c.l.b16 %v550
        %v3597 = vunpack.c.h.b16 %v550
        %v3598 = vunpack.c.l.b16 %v551
        %v3599 = vunpack.c.h.b16 %v551
        %v3600 = vunpack.c.l.b16 %v552
        %v3601 = vunpack.c.h.b16 %v552
        %v3602 = vunpack.c.l.b16 %v553
        %v3603 = vunpack.c.h.b16 %v553
        %v3604 = vunpack.c.l.b16 %v554
        %v3605 = vunpack.c.h.b16 %v554
        %v3606 = vunpack.c.l.b16 %v555
        %v3607 = vunpack.c.h.b16 %v555
        %v3608 = vunpack.c.l.b16 %v556
        %v3609 = vunpack.c.h.b16 %v556
        %v3610 = vunpack.c.l.b16 %v557
        %v3611 = vunpack.c.h.b16 %v557
        %v3612 = vunpack.c.l.b16 %v558
        %v3613 = vunpack.c.h.b16 %v558
        %v3614 = vunpack.c.l.b16 %v559
        %v3615 = vunpack.c.h.b16 %v559
        %v3616 = vunpack.c.l.b16 %v560
        %v3617 = vunpack.c.h.b16 %v560
        %v3618 = vunpack.c.l.b16 %v561
        %v3619 = vunpack.c.h.b16 %v561
        %v3620 = vunpack.c.l.b16 %v562
        %v3621 = vunpack.c.h.b16 %v562
        %v3622 = vunpack.c.l.b16 %v563
        %v3623 = vunpack.c.h.b16 %v563
        %v3624 = vunpack.c.l.b16 %v564
        %v3625 = vunpack.c.h.b16 %v564
        %v3626 = vunpack.c.l.b16 %v565
        %v3627 = vunpack.c.h.b16 %v565
        %v3628 = vunpack.c.l.b16 %v566
        %v3629 = vunpack.c.h.b16 %v566
        %v3630 = vunpack.c.l.b16 %v567
        %v3631 = vunpack.c.h.b16 %v567
        %v3632 = vunpack.c.l.b16 %v568
        %v3633 = vunpack.c.h.b16 %v568
        %v3634 = vunpack.c.l.b16 %v569
        %v3635 = vunpack.c.h.b16 %v569
        %v3636 = vunpack.c.l.b16 %v570
        %v3637 = vunpack.c.h.b16 %v570
        %v3638 = vunpack.c.l.b16 %v571
        %v3639 = vunpack.c.h.b16 %v571
        %v3640 = vunpack.c.l.b16 %v572
        %v3641 = vunpack.c.h.b16 %v572
        %v3642 = vunpack.c.l.b16 %v573
        %v3643 = vunpack.c.h.b16 %v573
        %v3644 = vunpack.c.l.b16 %v574
        %v3645 = vunpack.c.h.b16 %v574
        %v3646 = vunpack.c.l.b16 %v575
        %v3647 = vunpack.c.h.b16 %v575
        %v3648 = vunpack.c.l.b16 %v576
        %v3649 = vunpack.c.h.b16 %v576
        %v3650 = vunpack.c.l.b16 %v577
        %v3651 = vunpack.c.h.b16 %v577
        %v3652 = vunpack.c.l.b16 %v578
        %v3653 = vunpack.c.h.b16 %v578
        %v3654 = vunpack.c.l.b16 %v579
        %v3655 = vunpack.c.h.b16 %v579
        %v3656 = vunpack.c.l.b16 %v580
        %v3657 = vunpack.c.h.b16 %v580
        %v3658 = vunpack.c.l.b16 %v581
        %v3659 = vunpack.c.h.b16 %v581
        %v3660 = vunpack.c.l.b16 %v582
        %v3661 = vunpack.c.h.b16 %v582
        %v3662 = vunpack.c.l.b16 %v583
        %v3663 = vunpack.c.h.b16 %v583
        %v3664 = vunpack.c.l.b16 %v584
        %v3665 = vunpack.c.h.b16 %v584
        %v3666 = vunpack.c.l.b16 %v585
        %v3667 = vunpack.c.h.b16 %v585
        %v3668 = vunpack.c.l.b16 %v586
        %v3669 = vunpack.c.h.b16 %v586
        %v3670 = vunpack.c.l.b16 %v587
        %v3671 = vunpack.c.h.b16 %v587
        %v3672 = vunpack.c.l.b16 %v588
        %v3673 = vunpack.c.h.b16 %v588
        %v3674 = vunpack.c.l.b16 %v589
        %v3675 = vunpack.c.h.b16 %v589
        %v3676 = vunpack.c.l.b16 %v590
        %v3677 = vunpack.c.h.b16 %v590
        %v3678 = vunpack.c.l.b16 %v591
        %v3679 = vunpack.c.h.b16 %v591
        %v3680 = vunpack.c.l.b16 %v592
        %v3681 = vunpack.c.h.b16 %v592
        %v3682 = vunpack.c.l.b16 %v593
        %v3683 = vunpack.c.h.b16 %v593
        %v3684 = vunpack.c.l.b16 %v594
        %v3685 = vunpack.c.h.b16 %v594
        %v3686 = vunpack.c.l.b16 %v595
        %v3687 = vunpack.c.h.b16 %v595
        %v3688 = vunpack.c.l.b16 %v596
        %v3689 = vunpack.c.h.b16 %v596
        %v3690 = vunpack.c.l.b16 %v597
        %v3691 = vunpack.c.h.b16 %v597
        %v3692 = vunpack.c.l.b16 %v598
        %v3693 = vunpack.c.h.b16 %v598
        %v3694 = vunpack.c.l.b16 %v599
        %v3695 = vunpack.c.h.b16 %v599
        %v3696 = vunpack.c.l.b16 %v600
        %v3697 = vunpack.c.h.b16 %v600
        %v3698 = vunpack.c.l.b16 %v601
        %v3699 = vunpack.c.h.b16 %v601
        %v3700 = vunpack.c.l.b16 %v602
        %v3701 = vunpack.c.h.b16 %v602
        %v3702 = vunpack.c.l.b16 %v603
        %v3703 = vunpack.c.h.b16 %v603
        %v3704 = vunpack.c.l.b16 %v604
        %v3705 = vunpack.c.h.b16 %v604
        %v3706 = vunpack.c.l.b16 %v605
        %v3707 = vunpack.c.h.b16 %v605
        %v3708 = vunpack.c.l.b16 %v606
        %v3709 = vunpack.c.h.b16 %v606
        %v3710 = vunpack.c.l.b16 %v607
        %v3711 = vunpack.c.h.b16 %v607
        %v3712 = vunpack.c.l.b16 %v608
        %v3713 = vunpack.c.h.b16 %v608
        %v3714 = vunpack.c.l.b16 %v609
        %v3715 = vunpack.c.h.b16 %v609
        %v3716 = vunpack.c.l.b16 %v610
        %v3717 = vunpack.c.h.b16 %v610
        %v3718 = vunpack.c.l.b16 %v611
        %v3719 = vunpack.c.h.b16 %v611
        %v3720 = vunpack.c.l.b16 %v612
        %v3721 = vunpack.c.h.b16 %v612
        %v3722 = vunpack.c.l.b16 %v613
        %v3723 = vunpack.c.h.b16 %v613
        %v3724 = vunpack.c.l.b16 %v614
        %v3725 = vunpack.c.h.b16 %v614
        %v3726 = vunpack.c.l.b16 %v615
        %v3727 = vunpack.c.h.b16 %v615
        %v3728 = vunpack.c.l.b16 %v616
        %v3729 = vunpack.c.h.b16 %v616
        %v3730 = vunpack.c.l.b16 %v617
        %v3731 = vunpack.c.h.b16 %v617
        %v3732 = vunpack.c.l.b16 %v618
        %v3733 = vunpack.c.h.b16 %v618
        %v3734 = vunpack.c.l.b16 %v619
        %v3735 = vunpack.c.h.b16 %v619
        %v3736 = vunpack.c.l.b16 %v620
        %v3737 = vunpack.c.h.b16 %v620
        %v3738 = vunpack.c.l.b16 %v621
        %v3739 = vunpack.c.h.b16 %v621
        %v3740 = vunpack.c.l.b16 %v622
        %v3741 = vunpack.c.h.b16 %v622
        %v3742 = vunpack.c.l.b16 %v623
        %v3743 = vunpack.c.h.b16 %v623
        %v3744 = vunpack.c.l.b16 %v624
        %v3745 = vunpack.c.h.b16 %v624
        %v3746 = vunpack.c.l.b16 %v625
        %v3747 = vunpack.c.h.b16 %v625
        %v3748 = vunpack.c.l.b16 %v626
        %v3749 = vunpack.c.h.b16 %v626
        %v3750 = vunpack.c.l.b16 %v627
        %v3751 = vunpack.c.h.b16 %v627
        %v3752 = vunpack.c.l.b16 %v628
        %v3753 = vunpack.c.h.b16 %v628
        %v3754 = vunpack.c.l.b16 %v629
        %v3755 = vunpack.c.h.b16 %v629
        %v3756 = vunpack.c.l.b16 %v630
        %v3757 = vunpack.c.h.b16 %v630
        %v3758 = vunpack.c.l.b16 %v631
        %v3759 = vunpack.c.h.b16 %v631
        %v3760 = vunpack.c.l.b16 %v632
        %v3761 = vunpack.c.h.b16 %v632
        %v3762 = vunpack.c.l.b16 %v633
        %v3763 = vunpack.c.h.b16 %v633
        %v3764 = vunpack.c.l.b16 %v634
        %v3765 = vunpack.c.h.b16 %v634
        %v3766 = vunpack.c.l.b16 %v635
        %v3767 = vunpack.c.h.b16 %v635
        %v3768 = vunpack.c.l.b16 %v636
        %v3769 = vunpack.c.h.b16 %v636
        %v3770 = vunpack.c.l.b16 %v637
        %v3771 = vunpack.c.h.b16 %v637
        %v3772 = vunpack.c.l.b16 %v638
        %v3773 = vunpack.c.h.b16 %v638
        %v3774 = vunpack.c.l.b16 %v639
        %v3775 = vunpack.c.h.b16 %v639
        %v3776 = vunpack.c.l.b16 %v640
        %v3777 = vunpack.c.h.b16 %v640
        %v3778 = vunpack.c.l.b16 %v641
        %v3779 = vunpack.c.h.b16 %v641
        %v3780 = vunpack.c.l.b16 %v642
        %v3781 = vunpack.c.h.b16 %v642
        %v3782 = vunpack.c.l.b16 %v643
        %v3783 = vunpack.c.h.b16 %v643
        %v3784 = vunpack.c.l.b16 %v644
        %v3785 = vunpack.c.h.b16 %v644
        %v3786 = vunpack.c.l.b16 %v645
        %v3787 = vunpack.c.h.b16 %v645
        %v3788 = vunpack.c.l.b16 %v646
        %v3789 = vunpack.c.h.b16 %v646
        %v3790 = vunpack.c.l.b16 %v647
        %v3791 = vunpack.c.h.b16 %v647
        %v3792 = vunpack.c.l.b16 %v648
        %v3793 = vunpack.c.h.b16 %v648
        %v3794 = vunpack.c.l.b16 %v649
        %v3795 = vunpack.c.h.b16 %v649
        %v3796 = vunpack.c.l.b16 %v650
        %v3797 = vunpack.c.h.b16 %v650
        %v3798 = vunpack.c.l.b16 %v651
        %v3799 = vunpack.c.h.b16 %v651
        %v3800 = vunpack.c.l.b16 %v652
        %v3801 = vunpack.c.h.b16 %v652
        %v3802 = vunpack.c.l.b16 %v653
        %v3803 = vunpack.c.h.b16 %v653
        %v3804 = vunpack.c.l.b16 %v654
        %v3805 = vunpack.c.h.b16 %v654
        %v3806 = vunpack.c.l.b16 %v655
        %v3807 = vunpack.c.h.b16 %v655
        %v3808 = vunpack.c.l.b16 %v656
        %v3809 = vunpack.c.h.b16 %v656
        %v3810 = vunpack.c.l.b16 %v657
        %v3811 = vunpack.c.h.b16 %v657
        %v3812 = vunpack.c.l.b16 %v658
        %v3813 = vunpack.c.h.b16 %v658
        %v3814 = vunpack.c.l.b16 %v659
        %v3815 = vunpack.c.h.b16 %v659
        %v3816 = vunpack.c.l.b16 %v660
        %v3817 = vunpack.c.h.b16 %v660
        %v3818 = vunpack.c.l.b16 %v661
        %v3819 = vunpack.c.h.b16 %v661
        %v3820 = vunpack.c.l.b16 %v662
        %v3821 = vunpack.c.h.b16 %v662
        %v3822 = vunpack.c.l.b16 %v663
        %v3823 = vunpack.c.h.b16 %v663
        %v3824 = vunpack.c.l.b16 %v664
        %v3825 = vunpack.c.h.b16 %v664
        %v3826 = vunpack.c.l.b16 %v665
        %v3827 = vunpack.c.h.b16 %v665
        %v3828 = vunpack.c.l.b16 %v666
        %v3829 = vunpack.c.h.b16 %v666
        %v3830 = vunpack.c.l.b16 %v667
        %v3831 = vunpack.c.h.b16 %v667
        %v3832 = vunpack.c.l.b16 %v668
        %v3833 = vunpack.c.h.b16 %v668
        %v3834 = vunpack.c.l.b16 %v669
        %v3835 = vunpack.c.h.b16 %v669
        %v3836 = vunpack.c.l.b16 %v670
        %v3837 = vunpack.c.h.b16 %v670
        %v3838 = vunpack.c.l.b16 %v671
        %v3839 = vunpack.c.h.b16 %v671
        %v3840 = vunpack.c.l.b16 %v672
        %v3841 = vunpack.c.h.b16 %v672
        %v3842 = vunpack.c.l.b16 %v673
        %v3843 = vunpack.c.h.b16 %v673
        %v3844 = vunpack.c.l.b16 %v674
        %v3845 = vunpack.c.h.b16 %v674
        %v3846 = vunpack.c.l.b16 %v675
        %v3847 = vunpack.c.h.b16 %v675
        %v3848 = vunpack.c.l.b16 %v676
        %v3849 = vunpack.c.h.b16 %v676
        %v3850 = vunpack.c.l.b16 %v677
        %v3851 = vunpack.c.h.b16 %v677
        %v3852 = vunpack.c.l.b16 %v678
        %v3853 = vunpack.c.h.b16 %v678
        %v3854 = vunpack.c.l.b16 %v679
        %v3855 = vunpack.c.h.b16 %v679
        %v3856 = vunpack.c.l.b16 %v680
        %v3857 = vunpack.c.h.b16 %v680
        %v3858 = vunpack.c.l.b16 %v681
        %v3859 = vunpack.c.h.b16 %v681
        %v3860 = vunpack.c.l.b16 %v682
        %v3861 = vunpack.c.h.b16 %v682
        %v3862 = vunpack.c.l.b16 %v683
        %v3863 = vunpack.c.h.b16 %v683
        %v3864 = vunpack.c.l.b16 %v684
        %v3865 = vunpack.c.h.b16 %v684
        %v3866 = vunpack.c.l.b16 %v685
        %v3867 = vunpack.c.h.b16 %v685
        %v3868 = vunpack.c.l.b16 %v686
        %v3869 = vunpack.c.h.b16 %v686
        %v3870 = vunpack.c.l.b16 %v687
        %v3871 = vunpack.c.h.b16 %v687
        %v3872 = vunpack.c.l.b16 %v688
        %v3873 = vunpack.c.h.b16 %v688
        %v3874 = vunpack.c.l.b16 %v689
        %v3875 = vunpack.c.h.b16 %v689
        %v3876 = vunpack.c.l.b16 %v690
        %v3877 = vunpack.c.h.b16 %v690
        %v3878 = vunpack.c.l.b16 %v691
        %v3879 = vunpack.c.h.b16 %v691
        %v3880 = vunpack.c.l.b16 %v692
        %v3881 = vunpack.c.h.b16 %v692
        %v3882 = vunpack.c.l.b16 %v693
        %v3883 = vunpack.c.h.b16 %v693
        %v3884 = vunpack.c.l.b16 %v694
        %v3885 = vunpack.c.h.b16 %v694
        %v3886 = vunpack.c.l.b16 %v695
        %v3887 = vunpack.c.h.b16 %v695
        %v3888 = vunpack.c.l.b16 %v696
        %v3889 = vunpack.c.h.b16 %v696
        %v3890 = vunpack.c.l.b16 %v697
        %v3891 = vunpack.c.h.b16 %v697
        %v3892 = vunpack.c.l.b16 %v698
        %v3893 = vunpack.c.h.b16 %v698
        %v3894 = vunpack.c.l.b16 %v699
        %v3895 = vunpack.c.h.b16 %v699
        %v3896 = vunpack.c.l.b16 %v700
        %v3897 = vunpack.c.h.b16 %v700
        %v3898 = vunpack.c.l.b16 %v701
        %v3899 = vunpack.c.h.b16 %v701
        %v3900 = vunpack.c.l.b16 %v702
        %v3901 = vunpack.c.h.b16 %v702
        %v3902 = vunpack.c.l.b16 %v703
        %v3903 = vunpack.c.h.b16 %v703
        %v3904 = vunpack.c.l.b16 %v704
        %v3905 = vunpack.c.h.b16 %v704
        %v3906 = vunpack.c.l.b16 %v705
        %v3907 = vunpack.c.h.b16 %v705
        %v3908 = vunpack.c.l.b16 %v706
        %v3909 = vunpack.c.h.b16 %v706
        %v3910 = vunpack.c.l.b16 %v707
        %v3911 = vunpack.c.h.b16 %v707
        %v3912 = vunpack.c.l.b16 %v708
        %v3913 = vunpack.c.h.b16 %v708
        %v3914 = vunpack.c.l.b16 %v709
        %v3915 = vunpack.c.h.b16 %v709
        %v3916 = vunpack.c.l.b16 %v710
        %v3917 = vunpack.c.h.b16 %v710
        %v3918 = vunpack.c.l.b16 %v711
        %v3919 = vunpack.c.h.b16 %v711
        %v3920 = vunpack.c.l.b16 %v712
        %v3921 = vunpack.c.h.b16 %v712
        %v3922 = vunpack.c.l.b16 %v713
        %v3923 = vunpack.c.h.b16 %v713
        %v3924 = vunpack.c.l.b16 %v714
        %v3925 = vunpack.c.h.b16 %v714
        %v3926 = vunpack.c.l.b16 %v715
        %v3927 = vunpack.c.h.b16 %v715
        %v3928 = vunpack.c.l.b16 %v716
        %v3929 = vunpack.c.h.b16 %v716
        %v3930 = vunpack.c.l.b16 %v717
        %v3931 = vunpack.c.h.b16 %v717
        %v3932 = vunpack.c.l.b16 %v718
        %v3933 = vunpack.c.h.b16 %v718
        %v3934 = vunpack.c.l.b16 %v719
        %v3935 = vunpack.c.h.b16 %v719
        %v3936 = vunpack.c.l.b16 %v720
        %v3937 = vunpack.c.h.b16 %v720
        %v3938 = vunpack.c.l.b16 %v721
        %v3939 = vunpack.c.h.b16 %v721
        %v3940 = vunpack.c.l.b16 %v722
        %v3941 = vunpack.c.h.b16 %v722
        %v3942 = vunpack.c.l.b16 %v723
        %v3943 = vunpack.c.h.b16 %v723
        %v3944 = vunpack.c.l.b16 %v724
        %v3945 = vunpack.c.h.b16 %v724
        %v3946 = vunpack.c.l.b16 %v725
        %v3947 = vunpack.c.h.b16 %v725
        %v3948 = vunpack.c.l.b16 %v726
        %v3949 = vunpack.c.h.b16 %v726
        %v3950 = vunpack.c.l.b16 %v727
        %v3951 = vunpack.c.h.b16 %v727
        %v3952 = vunpack.c.l.b16 %v728
        %v3953 = vunpack.c.h.b16 %v728
        %v3954 = vunpack.c.l.b16 %v729
        %v3955 = vunpack.c.h.b16 %v729
        %v3956 = vunpack.c.l.b16 %v730
        %v3957 = vunpack.c.h.b16 %v730
        %v3958 = vunpack.c.l.b16 %v731
        %v3959 = vunpack.c.h.b16 %v731
        %v3960 = vunpack.c.l.b16 %v732
        %v3961 = vunpack.c.h.b16 %v732
        %v3962 = vunpack.c.l.b16 %v733
        %v3963 = vunpack.c.h.b16 %v733
        %v3964 = vunpack.c.l.b16 %v734
        %v3965 = vunpack.c.h.b16 %v734
        %v3966 = vunpack.c.l.b16 %v735
        %v3967 = vunpack.c.h.b16 %v735
        %v3968 = vunpack.c.l.b16 %v736
        %v3969 = vunpack.c.h.b16 %v736
        %v3970 = vunpack.c.l.b16 %v737
        %v3971 = vunpack.c.h.b16 %v737
        %v3972 = vunpack.c.l.b16 %v738
        %v3973 = vunpack.c.h.b16 %v738
        %v3974 = vunpack.c.l.b16 %v739
        %v3975 = vunpack.c.h.b16 %v739
        %v3976 = vunpack.c.l.b16 %v740
        %v3977 = vunpack.c.h.b16 %v740
        %v3978 = vunpack.c.l.b16 %v741
        %v3979 = vunpack.c.h.b16 %v741
        %v3980 = vunpack.c.l.b16 %v742
        %v3981 = vunpack.c.h.b16 %v742
        %v3982 = vunpack.c.l.b16 %v743
        %v3983 = vunpack.c.h.b16 %v743
        %v3984 = vunpack.c.l.b16 %v744
        %v3985 = vunpack.c.h.b16 %v744
        %v3986 = vunpack.c.l.b16 %v745
        %v3987 = vunpack.c.h.b16 %v745
        %v3988 = vunpack.c.l.b16 %v746
        %v3989 = vunpack.c.h.b16 %v746
        %v3990 = vunpack.c.l.b16 %v747
        %v3991 = vunpack.c.h.b16 %v747
        %v3992 = vunpack.c.l.b16 %v748
        %v3993 = vunpack.c.h.b16 %v748
        %v3994 = vunpack.c.l.b16 %v749
        %v3995 = vunpack.c.h.b16 %v749
        %v3996 = vunpack.c.l.b16 %v750
        %v3997 = vunpack.c.h.b16 %v750
        %v3998 = vunpack.c.l.b16 %v751
        %v3999 = vunpack.c.h.b16 %v751
        %v4000 = vunpack.c.l.b16 %v752
        %v4001 = vunpack.c.h.b16 %v752
        %v4002 = vunpack.c.l.b16 %v753
        %v4003 = vunpack.c.h.b16 %v753
        %v4004 = vunpack.c.l.b16 %v754
        %v4005 = vunpack.c.h.b16 %v754
        %v4006 = vunpack.c.l.b16 %v755
        %v4007 = vunpack.c.h.b16 %v755
        %v4008 = vunpack.c.l.b16 %v756
        %v4009 = vunpack.c.h.b16 %v756
        %v4010 = vunpack.c.l.b16 %v757
        %v4011 = vunpack.c.h.b16 %v757
        %v4012 = vunpack.c.l.b16 %v758
        %v4013 = vunpack.c.h.b16 %v758
        %v4014 = vunpack.c.l.b16 %v759
        %v4015 = vunpack.c.h.b16 %v759
        %v4016 = vunpack.c.l.b16 %v760
        %v4017 = vunpack.c.h.b16 %v760
        %v4018 = vunpack.c.l.b16 %v761
        %v4019 = vunpack.c.h.b16 %v761
        %v4020 = vunpack.c.l.b16 %v762
        %v4021 = vunpack.c.h.b16 %v762
        %v4022 = vunpack.c.l.b16 %v763
        %v4023 = vunpack.c.h.b16 %v763
        %v4024 = vunpack.c.l.b16 %v764
        %v4025 = vunpack.c.h.b16 %v764
        %v4026 = vunpack.c.l.b16 %v765
        %v4027 = vunpack.c.h.b16 %v765
        %v4028 = vunpack.c.l.b16 %v766
        %v4029 = vunpack.c.h.b16 %v766
        %v4030 = vunpack.c.l.b16 %v767
        %v4031 = vunpack.c.h.b16 %v767
        %v4032 = vunpack.c.l.b16 %v768
        %v4033 = vunpack.c.h.b16 %v768
        %v4034 = vunpack.c.l.b16 %v769
        %v4035 = vunpack.c.h.b16 %v769
        %v4036 = vunpack.c.l.b16 %v770
        %v4037 = vunpack.c.h.b16 %v770
        %v4038 = vunpack.c.l.b16 %v771
        %v4039 = vunpack.c.h.b16 %v771
        %v4040 = vunpack.c.l.b16 %v772
        %v4041 = vunpack.c.h.b16 %v772
        %v4042 = vunpack.c.l.b16 %v773
        %v4043 = vunpack.c.h.b16 %v773
        %v4044 = vunpack.c.l.b16 %v774
        %v4045 = vunpack.c.h.b16 %v774
        %v4046 = vunpack.c.l.b16 %v775
        %v4047 = vunpack.c.h.b16 %v775
        %v4048 = vunpack.c.l.b16 %v776
        %v4049 = vunpack.c.h.b16 %v776
        %v4050 = vunpack.c.l.b16 %v777
        %v4051 = vunpack.c.h.b16 %v777
        %v4052 = vunpack.c.l.b16 %v778
        %v4053 = vunpack.c.h.b16 %v778
        %v4054 = vunpack.c.l.b16 %v779
        %v4055 = vunpack.c.h.b16 %v779
        %v4056 = vunpack.c.l.b16 %v780
        %v4057 = vunpack.c.h.b16 %v780
        %v4058 = vunpack.c.l.b16 %v781
        %v4059 = vunpack.c.h.b16 %v781
        %v4060 = vunpack.c.l.b16 %v782
        %v4061 = vunpack.c.h.b16 %v782
        %v4062 = vunpack.c.l.b16 %v783
        %v4063 = vunpack.c.h.b16 %v783
        %v4064 = vunpack.c.l.b16 %v784
        %v4065 = vunpack.c.h.b16 %v784
        %v4066 = vunpack.c.l.b16 %v785
        %v4067 = vunpack.c.h.b16 %v785
        %v4068 = vunpack.c.l.b16 %v786
        %v4069 = vunpack.c.h.b16 %v786
        %v4070 = vunpack.c.l.b16 %v787
        %v4071 = vunpack.c.h.b16 %v787
        %v4072 = vunpack.c.l.b16 %v788
        %v4073 = vunpack.c.h.b16 %v788
        %v4074 = vunpack.c.l.b16 %v789
        %v4075 = vunpack.c.h.b16 %v789
        %v4076 = vunpack.c.l.b16 %v790
        %v4077 = vunpack.c.h.b16 %v790
        %v4078 = vunpack.c.l.b16 %v791
        %v4079 = vunpack.c.h.b16 %v791
        %v4080 = vunpack.c.l.b16 %v792
        %v4081 = vunpack.c.h.b16 %v792
        %v4082 = vunpack.c.l.b16 %v793
        %v4083 = vunpack.c.h.b16 %v793
        %v4084 = vunpack.c.l.b16 %v794
        %v4085 = vunpack.c.h.b16 %v794
        %v4086 = vunpack.c.l.b16 %v795
        %v4087 = vunpack.c.h.b16 %v795
        %v4088 = vunpack.c.l.b16 %v796
        %v4089 = vunpack.c.h.b16 %v796
        %v4090 = vunpack.c.l.b16 %v797
        %v4091 = vunpack.c.h.b16 %v797
        %v4092 = vunpack.c.l.b16 %v798
        %v4093 = vunpack.c.h.b16 %v798
        %v4094 = vunpack.c.l.b16 %v799
        %v4095 = vunpack.c.h.b16 %v799
        %v4096 = vunpack.c.l.b16 %v800
        %v4097 = vunpack.c.h.b16 %v800
        %v4098 = vunpack.c.l.b16 %v801
        %v4099 = vunpack.c.h.b16 %v801
        %v4100 = vunpack.c.l.b16 %v802
        %v4101 = vunpack.c.h.b16 %v802
        %v4102 = vunpack.c.l.b16 %v803
        %v4103 = vunpack.c.h.b16 %v803
        %v4104 = vunpack.c.l.b16 %v804
        %v4105 = vunpack.c.h.b16 %v804
        %v4106 = vunpack.c.l.b16 %v805
        %v4107 = vunpack.c.h.b16 %v805
        %v4108 = vunpack.c.l.b16 %v806
        %v4109 = vunpack.c.h.b16 %v806
        %v4110 = vunpack.c.l.b16 %v807
        %v4111 = vunpack.c.h.b16 %v807
        %v4112 = vunpack.c.l.b16 %v808
        %v4113 = vunpack.c.h.b16 %v808
        %v4114 = vunpack.c.l.b16 %v809
        %v4115 = vunpack.c.h.b16 %v809
        %v4116 = vunpack.c.l.b16 %v810
        %v4117 = vunpack.c.h.b16 %v810
        %v4118 = vunpack.c.l.b16 %v811
        %v4119 = vunpack.c.h.b16 %v811
        %v4120 = vunpack.c.l.b16 %v812
        %v4121 = vunpack.c.h.b16 %v812
        %v4122 = vunpack.c.l.b16 %v813
        %v4123 = vunpack.c.h.b16 %v813
        %v4124 = vunpack.c.l.b16 %v814
        %v4125 = vunpack.c.h.b16 %v814
        %v4126 = vunpack.c.l.b16 %v815
        %v4127 = vunpack.c.h.b16 %v815
        %v4128 = vunpack.c.l.b16 %v816
        %v4129 = vunpack.c.h.b16 %v816
        %v4130 = vunpack.c.l.b16 %v817
        %v4131 = vunpack.c.h.b16 %v817
        %v4132 = vunpack.c.l.b16 %v818
        %v4133 = vunpack.c.h.b16 %v818
        %v4134 = vunpack.c.l.b16 %v819
        %v4135 = vunpack.c.h.b16 %v819
        %v4136 = vunpack.c.l.b16 %v820
        %v4137 = vunpack.c.h.b16 %v820
        %v4138 = vunpack.c.l.b16 %v821
        %v4139 = vunpack.c.h.b16 %v821
        %v4140 = vunpack.c.l.b16 %v822
        %v4141 = vunpack.c.h.b16 %v822
        %v4142 = vunpack.c.l.b16 %v823
        %v4143 = vunpack.c.h.b16 %v823
        %v4144 = vunpack.c.l.b16 %v824
        %v4145 = vunpack.c.h.b16 %v824
        %v4146 = vunpack.c.l.b16 %v825
        %v4147 = vunpack.c.h.b16 %v825
        %v4148 = vunpack.c.l.b16 %v826
        %v4149 = vunpack.c.h.b16 %v826
        %v4150 = vunpack.c.l.b16 %v827
        %v4151 = vunpack.c.h.b16 %v827
        %v4152 = vunpack.c.l.b16 %v828
        %v4153 = vunpack.c.h.b16 %v828
        %v4154 = vunpack.c.l.b16 %v829
        %v4155 = vunpack.c.h.b16 %v829
        %v4156 = vunpack.c.l.b16 %v830
        %v4157 = vunpack.c.h.b16 %v830
        %v4158 = vunpack.c.l.b16 %v831
        %v4159 = vunpack.c.h.b16 %v831
        %v4160 = vunpack.c.l.b16 %v832
        %v4161 = vunpack.c.h.b16 %v832
        %v4162 = vunpack.c.l.b16 %v833
        %v4163 = vunpack.c.h.b16 %v833
        %v4164 = vunpack.c.l.b16 %v834
        %v4165 = vunpack.c.h.b16 %v834
        %v4166 = vunpack.c.l.b16 %v835
        %v4167 = vunpack.c.h.b16 %v835
        %v4168 = vunpack.c.l.b16 %v836
        %v4169 = vunpack.c.h.b16 %v836
        %v4170 = vunpack.c.l.b16 %v837
        %v4171 = vunpack.c.h.b16 %v837
        %v4172 = vunpack.c.l.b16 %v838
        %v4173 = vunpack.c.h.b16 %v838
        %v4174 = vunpack.c.l.b16 %v839
        %v4175 = vunpack.c.h.b16 %v839
        %v4176 = vunpack.c.l.b16 %v840
        %v4177 = vunpack.c.h.b16 %v840
        %v4178 = vunpack.c.l.b16 %v841
        %v4179 = vunpack.c.h.b16 %v841
        %v4180 = vunpack.c.l.b16 %v842
        %v4181 = vunpack.c.h.b16 %v842
        %v4182 = vunpack.c.l.b16 %v843
        %v4183 = vunpack.c.h.b16 %v843
        %v4184 = vunpack.c.l.b16 %v844
        %v4185 = vunpack.c.h.b16 %v844
        %v4186 = vunpack.c.l.b16 %v845
        %v4187 = vunpack.c.h.b16 %v845
        %v4188 = vunpack.c.l.b16 %v846
        %v4189 = vunpack.c.h.b16 %v846
        %v4190 = vunpack.c.l.b16 %v847
        %v4191 = vunpack.c.h.b16 %v847
        %v4192 = vunpack.c.l.b16 %v848
        %v4193 = vunpack.c.h.b16 %v848
        %v4194 = vunpack.c.l.b16 %v849
        %v4195 = vunpack.c.h.b16 %v849
        %v4196 = vunpack.c.l.b16 %v850
        %v4197 = vunpack.c.h.b16 %v850
        %v4198 = vunpack.c.l.b16 %v851
        %v4199 = vunpack.c.h.b16 %v851
        %v4200 = vunpack.c.l.b16 %v852
        %v4201 = vunpack.c.h.b16 %v852
        %v4202 = vunpack.c.l.b16 %v853
        %v4203 = vunpack.c.h.b16 %v853
        %v4204 = vunpack.c.l.b16 %v854
        %v4205 = vunpack.c.h.b16 %v854
        %v4206 = vunpack.c.l.b16 %v855
        %v4207 = vunpack.c.h.b16 %v855
        %v4208 = vunpack.c.l.b16 %v856
        %v4209 = vunpack.c.h.b16 %v856
        %v4210 = vunpack.c.l.b16 %v857
        %v4211 = vunpack.c.h.b16 %v857
        %v4212 = vunpack.c.l.b16 %v858
        %v4213 = vunpack.c.h.b16 %v858
        %v4214 = vunpack.c.l.b16 %v859
        %v4215 = vunpack.c.h.b16 %v859
        %v4216 = vunpack.c.l.b16 %v860
        %v4217 = vunpack.c.h.b16 %v860
        %v4218 = vunpack.c.l.b16 %v861
        %v4219 = vunpack.c.h.b16 %v861
        %v4220 = vunpack.c.l.b16 %v862
        %v4221 = vunpack.c.h.b16 %v862
        %v4222 = vunpack.c.l.b16 %v863
        %v4223 = vunpack.c.h.b16 %v863
        %v4224 = vunpack.c.l.b16 %v864
        %v4225 = vunpack.c.h.b16 %v864
        %v4226 = vunpack.c.l.b16 %v865
        %v4227 = vunpack.c.h.b16 %v865
        %v4228 = vunpack.c.l.b16 %v866
        %v4229 = vunpack.c.h.b16 %v866
        %v4230 = vunpack.c.l.b16 %v867
        %v4231 = vunpack.c.h.b16 %v867
        %v4232 = vunpack.c.l.b16 %v868
        %v4233 = vunpack.c.h.b16 %v868
        %v4234 = vunpack.c.l.b16 %v869
        %v4235 = vunpack.c.h.b16 %v869
        %v4236 = vunpack.c.l.b16 %v870
        %v4237 = vunpack.c.h.b16 %v870
        %v4238 = vunpack.c.l.b16 %v871
        %v4239 = vunpack.c.h.b16 %v871
        %v4240 = vunpack.c.l.b16 %v872
        %v4241 = vunpack.c.h.b16 %v872
        %v4242 = vunpack.c.l.b16 %v873
        %v4243 = vunpack.c.h.b16 %v873
        %v4244 = vunpack.c.l.b16 %v874
        %v4245 = vunpack.c.h.b16 %v874
        %v4246 = vunpack.c.l.b16 %v875
        %v4247 = vunpack.c.h.b16 %v875
        %v4248 = vunpack.c.l.b16 %v876
        %v4249 = vunpack.c.h.b16 %v876
        %v4250 = vunpack.c.l.b16 %v877
        %v4251 = vunpack.c.h.b16 %v877
        %v4252 = vunpack.c.l.b16 %v878
        %v4253 = vunpack.c.h.b16 %v878
        %v4254 = vunpack.c.l.b16 %v879
        %v4255 = vunpack.c.h.b16 %v879
        %v4256 = vunpack.c.l.b16 %v880
        %v4257 = vunpack.c.h.b16 %v880
        %v4258 = vunpack.c.l.b16 %v881
        %v4259 = vunpack.c.h.b16 %v881
        %v4260 = vunpack.c.l.b16 %v882
        %v4261 = vunpack.c.h.b16 %v882
        %v4262 = vunpack.c.l.b16 %v883
        %v4263 = vunpack.c.h.b16 %v883
        %v4264 = vunpack.c.l.b16 %v884
        %v4265 = vunpack.c.h.b16 %v884
        %v4266 = vunpack.c.l.b16 %v885
        %v4267 = vunpack.c.h.b16 %v885
        %v4268 = vunpack.c.l.b16 %v886
        %v4269 = vunpack.c.h.b16 %v886
        %v4270 = vunpack.c.l.b16 %v887
        %v4271 = vunpack.c.h.b16 %v887
        %v4272 = vunpack.c.l.b16 %v888
        %v4273 = vunpack.c.h.b16 %v888
        %v4274 = vunpack.c.l.b16 %v889
        %v4275 = vunpack.c.h.b16 %v889
        %v4276 = vunpack.c.l.b16 %v890
        %v4277 = vunpack.c.h.b16 %v890
        %v4278 = vunpack.c.l.b16 %v891
        %v4279 = vunpack.c.h.b16 %v891
        %v4280 = vunpack.c.l.b16 %v892
        %v4281 = vunpack.c.h.b16 %v892
        %v4282 = vunpack.c.l.b16 %v893
        %v4283 = vunpack.c.h.b16 %v893
        %v4284 = vunpack.c.l.b16 %v894
        %v4285 = vunpack.c.h.b16 %v894
        %v4286 = vunpack.c.l.b16 %v895
        %v4287 = vunpack.c.h.b16 %v895
        %v4288 = vunpack.c.l.b16 %v896
        %v4289 = vunpack.c.h.b16 %v896
        %v4290 = vunpack.c.l.b16 %v897
        %v4291 = vunpack.c.h.b16 %v897
        %v4292 = vunpack.c.l.b16 %v898
        %v4293 = vunpack.c.h.b16 %v898
        %v4294 = vunpack.c.l.b16 %v899
        %v4295 = vunpack.c.h.b16 %v899
        %v4296 = vunpack.c.l.b16 %v900
        %v4297 = vunpack.c.h.b16 %v900
        %v4298 = vunpack.c.l.b16 %v901
        %v4299 = vunpack.c.h.b16 %v901
        %v4300 = vunpack.c.l.b16 %v902
        %v4301 = vunpack.c.h.b16 %v902
        %v4302 = vunpack.c.l.b16 %v903
        %v4303 = vunpack.c.h.b16 %v903
        %v4304 = vunpack.c.l.b16 %v904
        %v4305 = vunpack.c.h.b16 %v904
        %v4306 = vunpack.c.l.b16 %v905
        %v4307 = vunpack.c.h.b16 %v905
        %v4308 = vunpack.c.l.b16 %v906
        %v4309 = vunpack.c.h.b16 %v906
        %v4310 = vunpack.c.l.b16 %v907
        %v4311 = vunpack.c.h.b16 %v907
        %v4312 = vunpack.c.l.b16 %v908
        %v4313 = vunpack.c.h.b16 %v908
        %v4314 = vunpack.c.l.b16 %v909
        %v4315 = vunpack.c.h.b16 %v909
        %v4316 = vunpack.c.l.b16 %v910
        %v4317 = vunpack.c.h.b16 %v910
        %v4318 = vunpack.c.l.b16 %v911
        %v4319 = vunpack.c.h.b16 %v911
        %v4320 = vunpack.c.l.b16 %v912
        %v4321 = vunpack.c.h.b16 %v912
        %v4322 = vunpack.c.l.b16 %v913
        %v4323 = vunpack.c.h.b16 %v913
        %v4324 = vunpack.c.l.b16 %v914
        %v4325 = vunpack.c.h.b16 %v914
        %v4326 = vunpack.c.l.b16 %v915
        %v4327 = vunpack.c.h.b16 %v915
        %v4328 = vunpack.c.l.b16 %v916
        %v4329 = vunpack.c.h.b16 %v916
        %v4330 = vunpack.c.l.b16 %v917
        %v4331 = vunpack.c.h.b16 %v917
        %v4332 = vunpack.c.l.b16 %v918
        %v4333 = vunpack.c.h.b16 %v918
        %v4334 = vunpack.c.l.b16 %v919
        %v4335 = vunpack.c.h.b16 %v919
        %v4336 = vunpack.c.l.b16 %v920
        %v4337 = vunpack.c.h.b16 %v920
        %v4338 = vunpack.c.l.b16 %v921
        %v4339 = vunpack.c.h.b16 %v921
        %v4340 = vunpack.c.l.b16 %v922
        %v4341 = vunpack.c.h.b16 %v922
        %v4342 = vunpack.c.l.b16 %v923
        %v4343 = vunpack.c.h.b16 %v923
        %v4344 = vunpack.c.l.b16 %v924
        %v4345 = vunpack.c.h.b16 %v924
        %v4346 = vunpack.c.l.b16 %v925
        %v4347 = vunpack.c.h.b16 %v925
        %v4348 = vunpack.c.l.b16 %v926
        %v4349 = vunpack.c.h.b16 %v926
        %v4350 = vunpack.c.l.b16 %v927
        %v4351 = vunpack.c.h.b16 %v927
        %v4352 = vunpack.c.l.b16 %v928
        %v4353 = vunpack.c.h.b16 %v928
        %v4354 = vunpack.c.l.b16 %v929
        %v4355 = vunpack.c.h.b16 %v929
        %v4356 = vunpack.c.l.b16 %v930
        %v4357 = vunpack.c.h.b16 %v930
        %v4358 = vunpack.c.l.b16 %v931
        %v4359 = vunpack.c.h.b16 %v931
        %v4360 = vunpack.c.l.b16 %v932
        %v4361 = vunpack.c.h.b16 %v932
        %v4362 = vunpack.c.l.b16 %v933
        %v4363 = vunpack.c.h.b16 %v933
        %v4364 = vunpack.c.l.b16 %v934
        %v4365 = vunpack.c.h.b16 %v934
        %v4366 = vunpack.c.l.b16 %v935
        %v4367 = vunpack.c.h.b16 %v935
        %v4368 = vunpack.c.l.b16 %v936
        %v4369 = vunpack.c.h.b16 %v936
        %v4370 = vunpack.c.l.b16 %v937
        %v4371 = vunpack.c.h.b16 %v937
        %v4372 = vunpack.c.l.b16 %v938
        %v4373 = vunpack.c.h.b16 %v938
        %v4374 = vunpack.c.l.b16 %v939
        %v4375 = vunpack.c.h.b16 %v939
        %v4376 = vunpack.c.l.b16 %v940
        %v4377 = vunpack.c.h.b16 %v940
        %v4378 = vunpack.c.l.b16 %v941
        %v4379 = vunpack.c.h.b16 %v941
        %v4380 = vunpack.c.l.b16 %v942
        %v4381 = vunpack.c.h.b16 %v942
        %v4382 = vunpack.c.l.b16 %v943
        %v4383 = vunpack.c.h.b16 %v943
        %v4384 = vunpack.c.l.b16 %v944
        %v4385 = vunpack.c.h.b16 %v944
        %v4386 = vunpack.c.l.b16 %v945
        %v4387 = vunpack.c.h.b16 %v945
        %v4388 = vunpack.c.l.b16 %v946
        %v4389 = vunpack.c.h.b16 %v946
        %v4390 = vunpack.c.l.b16 %v947
        %v4391 = vunpack.c.h.b16 %v947
        %v4392 = vunpack.c.l.b16 %v948
        %v4393 = vunpack.c.h.b16 %v948
        %v4394 = vunpack.c.l.b16 %v949
        %v4395 = vunpack.c.h.b16 %v949
        %v4396 = vunpack.c.l.b16 %v950
        %v4397 = vunpack.c.h.b16 %v950
        %v4398 = vunpack.c.l.b16 %v951
        %v4399 = vunpack.c.h.b16 %v951
        %v4400 = vunpack.c.l.b16 %v952
        %v4401 = vunpack.c.h.b16 %v952
        %v4402 = vunpack.c.l.b16 %v953
        %v4403 = vunpack.c.h.b16 %v953
        %v4404 = vunpack.c.l.b16 %v954
        %v4405 = vunpack.c.h.b16 %v954
        %v4406 = vunpack.c.l.b16 %v955
        %v4407 = vunpack.c.h.b16 %v955
        %v4408 = vunpack.c.l.b16 %v956
        %v4409 = vunpack.c.h.b16 %v956
        %v4410 = vunpack.c.l.b16 %v957
        %v4411 = vunpack.c.h.b16 %v957
        %v4412 = vunpack.c.l.b16 %v958
        %v4413 = vunpack.c.h.b16 %v958
        %v4414 = vunpack.c.l.b16 %v959
        %v4415 = vunpack.c.h.b16 %v959
        %v4416 = vunpack.c.l.b16 %v960
        %v4417 = vunpack.c.h.b16 %v960
        %v4418 = vunpack.c.l.b16 %v961
        %v4419 = vunpack.c.h.b16 %v961
        %v4420 = vunpack.c.l.b16 %v962
        %v4421 = vunpack.c.h.b16 %v962
        %v4422 = vunpack.c.l.b16 %v963
        %v4423 = vunpack.c.h.b16 %v963
        %v4424 = vunpack.c.l.b16 %v964
        %v4425 = vunpack.c.h.b16 %v964
        %v4426 = vunpack.c.l.b16 %v965
        %v4427 = vunpack.c.h.b16 %v965
        %v4428 = vunpack.c.l.b16 %v966
        %v4429 = vunpack.c.h.b16 %v966
        %v4430 = vunpack.c.l.b16 %v967
        %v4431 = vunpack.c.h.b16 %v967
        %v4432 = vunpack.c.l.b16 %v968
        %v4433 = vunpack.c.h.b16 %v968
        %v4434 = vunpack.c.l.b16 %v969
        %v4435 = vunpack.c.h.b16 %v969
        %v4436 = vunpack.c.l.b16 %v970
        %v4437 = vunpack.c.h.b16 %v970
        %v4438 = vunpack.c.l.b16 %v971
        %v4439 = vunpack.c.h.b16 %v971
        %v4440 = vunpack.c.l.b16 %v972
        %v4441 = vunpack.c.h.b16 %v972
        %v4442 = vunpack.c.l.b16 %v973
        %v4443 = vunpack.c.h.b16 %v973
        %v4444 = vunpack.c.l.b16 %v974
        %v4445 = vunpack.c.h.b16 %v974
        %v4446 = vunpack.c.l.b16 %v975
        %v4447 = vunpack.c.h.b16 %v975
        %v4448 = vunpack.c.l.b16 %v976
        %v4449 = vunpack.c.h.b16 %v976
        %v4450 = vunpack.c.l.b16 %v977
        %v4451 = vunpack.c.h.b16 %v977
        %v4452 = vunpack.c.l.b16 %v978
        %v4453 = vunpack.c.h.b16 %v978
        %v4454 = vunpack.c.l.b16 %v979
        %v4455 = vunpack.c.h.b16 %v979
        %v4456 = vunpack.c.l.b16 %v980
        %v4457 = vunpack.c.h.b16 %v980
        %v4458 = vunpack.c.l.b16 %v981
        %v4459 = vunpack.c.h.b16 %v981
        %v4460 = vunpack.c.l.b16 %v982
        %v4461 = vunpack.c.h.b16 %v982
        %v4462 = vunpack.c.l.b16 %v983
        %v4463 = vunpack.c.h.b16 %v983
        %v4464 = vunpack.c.l.b16 %v984
        %v4465 = vunpack.c.h.b16 %v984
        %v4466 = vunpack.c.l.b16 %v985
        %v4467 = vunpack.c.h.b16 %v985
        %v4468 = vunpack.c.l.b16 %v986
        %v4469 = vunpack.c.h.b16 %v986
        %v4470 = vunpack.c.l.b16 %v987
        %v4471 = vunpack.c.h.b16 %v987
        %v4472 = vunpack.c.l.b16 %v988
        %v4473 = vunpack.c.h.b16 %v988
        %v4474 = vunpack.c.l.b16 %v989
        %v4475 = vunpack.c.h.b16 %v989
        %v4476 = vunpack.c.l.b16 %v990
        %v4477 = vunpack.c.h.b16 %v990
        %v4478 = vunpack.c.l.b16 %v991
        %v4479 = vunpack.c.h.b16 %v991
        %v4480 = vunpack.c.l.b16 %v992
        %v4481 = vunpack.c.h.b16 %v992
        %v4482 = vunpack.c.l.b16 %v993
        %v4483 = vunpack.c.h.b16 %v993
        %v4484 = vunpack.c.l.b16 %v994
        %v4485 = vunpack.c.h.b16 %v994
        %v4486 = vunpack.c.l.b16 %v995
        %v4487 = vunpack.c.h.b16 %v995
        %v4488 = vunpack.c.l.b16 %v996
        %v4489 = vunpack.c.h.b16 %v996
        %v4490 = vunpack.c.l.b16 %v997
        %v4491 = vunpack.c.h.b16 %v997
        %v4492 = vunpack.c.l.b16 %v998
        %v4493 = vunpack.c.h.b16 %v998
        %v4494 = vunpack.c.l.b16 %v999
        %v4495 = vunpack.c.h.b16 %v999
        %v4496 = vunpack.c.l.b16 %v1000
        %v4497 = vunpack.c.h.b16 %v1000
        %v4498 = vunpack.c.l.b16 %v1001
        %v4499 = vunpack.c.h.b16 %v1001
        %v4500 = vunpack.c.l.b16 %v1002
        %v4501 = vunpack.c.h.b16 %v1002
        %v4502 = vunpack.c.l.b16 %v1003
        %v4503 = vunpack.c.h.b16 %v1003
        %v4504 = vunpack.c.l.b16 %v1004
        %v4505 = vunpack.c.h.b16 %v1004
        %v4506 = vunpack.c.l.b16 %v1005
        %v4507 = vunpack.c.h.b16 %v1005
        %v4508 = vunpack.c.l.b16 %v1006
        %v4509 = vunpack.c.h.b16 %v1006
        %v4510 = vunpack.c.l.b16 %v1007
        %v4511 = vunpack.c.h.b16 %v1007
        %v4512 = vunpack.c.l.b16 %v1008
        %v4513 = vunpack.c.h.b16 %v1008
        %v4514 = vunpack.c.l.b16 %v1009
        %v4515 = vunpack.c.h.b16 %v1009
        %v4516 = vunpack.c.l.b16 %v1010
        %v4517 = vunpack.c.h.b16 %v1010
        %v4518 = vunpack.c.l.b16 %v1011
        %v4519 = vunpack.c.h.b16 %v1011
        %v4520 = vunpack.c.l.b16 %v1012
        %v4521 = vunpack.c.h.b16 %v1012
        %v4522 = vunpack.c.l.b16 %v1013
        %v4523 = vunpack.c.h.b16 %v1013
        %v4524 = vunpack.c.l.b16 %v1014
        %v4525 = vunpack.c.h.b16 %v1014
        %v4526 = vunpack.c.l.b16 %v1015
        %v4527 = vunpack.c.h.b16 %v1015
        %v4528 = vunpack.c.l.b16 %v1016
        %v4529 = vunpack.c.h.b16 %v1016
        %v4530 = vunpack.c.l.b16 %v1017
        %v4531 = vunpack.c.h.b16 %v1017
        %v4532 = vunpack.c.l.b16 %v1018
        %v4533 = vunpack.c.h.b16 %v1018
        %v4534 = vunpack.c.l.b16 %v1019
        %v4535 = vunpack.c.h.b16 %v1019
        %v4536 = vunpack.c.l.b16 %v1020
        %v4537 = vunpack.c.h.b16 %v1020
        %v4538 = vunpack.c.l.b16 %v1021
        %v4539 = vunpack.c.h.b16 %v1021
        %v4540 = vunpack.c.l.b16 %v1022
        %v4541 = vunpack.c.h.b16 %v1022
        %v4542 = vunpack.c.l.b16 %v1023
        %v4543 = vunpack.c.h.b16 %v1023
        %v4544 = vunpack.c.l.b16 %v1024
        %v4545 = vunpack.c.h.b16 %v1024
        %v4546 = vunpack.c.l.b16 %v1025
        %v4547 = vunpack.c.h.b16 %v1025
        %v4548 = vunpack.c.l.b16 %v1026
        %v4549 = vunpack.c.h.b16 %v1026
        %v4550 = vunpack.c.l.b16 %v1027
        %v4551 = vunpack.c.h.b16 %v1027
        %v4552 = vunpack.c.l.b16 %v1028
        %v4553 = vunpack.c.h.b16 %v1028
        %v4554 = vunpack.c.l.b16 %v1029
        %v4555 = vunpack.c.h.b16 %v1029
        %v4556 = vunpack.c.l.b16 %v1030
        %v4557 = vunpack.c.h.b16 %v1030
        %v4558 = vunpack.c.l.b16 %v1031
        %v4559 = vunpack.c.h.b16 %v1031
        %v4560 = vunpack.c.l.b16 %v1032
        %v4561 = vunpack.c.h.b16 %v1032
        %v4562 = vunpack.c.l.b16 %v1033
        %v4563 = vunpack.c.h.b16 %v1033
        %v4564 = vunpack.c.l.b16 %v1034
        %v4565 = vunpack.c.h.b16 %v1034
        %v4566 = vunpack.c.l.b16 %v1035
        %v4567 = vunpack.c.h.b16 %v1035
        %v4568 = vunpack.c.l.b16 %v1036
        %v4569 = vunpack.c.h.b16 %v1036
        %v4570 = vunpack.c.l.b16 %v1037
        %v4571 = vunpack.c.h.b16 %v1037
        %v4572 = vunpack.c.l.b16 %v1038
        %v4573 = vunpack.c.h.b16 %v1038
        %v4574 = vunpack.c.l.b16 %v1039
        %v4575 = vunpack.c.h.b16 %v1039
        %v4576 = vunpack.c.l.b16 %v1040
        %v4577 = vunpack.c.h.b16 %v1040
        %v4578 = vunpack.c.l.b16 %v1041
        %v4579 = vunpack.c.h.b16 %v1041
        %v4580 = vunpack.c.l.b16 %v1042
        %v4581 = vunpack.c.h.b16 %v1042
        %v4582 = vunpack.c.l.b16 %v1043
        %v4583 = vunpack.c.h.b16 %v1043
        %v4584 = vunpack.c.l.b16 %v1044
        %v4585 = vunpack.c.h.b16 %v1044
        %v4586 = vunpack.c.l.b16 %v1045
        %v4587 = vunpack.c.h.b16 %v1045
        %v4588 = vunpack.c.l.b16 %v1046
        %v4589 = vunpack.c.h.b16 %v1046
        %v4590 = vunpack.c.l.b16 %v1047
        %v4591 = vunpack.c.h.b16 %v1047
        %v4592 = vunpack.c.l.b16 %v1048
        %v4593 = vunpack.c.h.b16 %v1048
        %v4594 = vunpack.c.l.b16 %v1049
        %v4595 = vunpack.c.h.b16 %v1049
        %v4596 = vunpack.c.l.b16 %v1050
        %v4597 = vunpack.c.h.b16 %v1050
        %v4598 = vunpack.c.l.b16 %v1051
        %v4599 = vunpack.c.h.b16 %v1051
        %v4600 = vunpack.c.l.b16 %v1052
        %v4601 = vunpack.c.h.b16 %v1052
        %v4602 = vunpack.c.l.b16 %v1053
        %v4603 = vunpack.c.h.b16 %v1053
        %v4604 = vunpack.c.l.b16 %v1054
        %v4605 = vunpack.c.h.b16 %v1054
        %v4606 = vunpack.c.l.b16 %v1055
        %v4607 = vunpack.c.h.b16 %v1055
        %v4608 = vunpack.c.l.b16 %v1056
        %v4609 = vunpack.c.h.b16 %v1056
        %v4610 = vunpack.c.l.b16 %v1057
        %v4611 = vunpack.c.h.b16 %v1057
        %v4612 = vunpack.c.l.b16 %v1058
        %v4613 = vunpack.c.h.b16 %v1058
        %v4614 = vunpack.c.l.b16 %v1059
        %v4615 = vunpack.c.h.b16 %v1059
        %v4616 = vunpack.c.l.b16 %v1060
        %v4617 = vunpack.c.h.b16 %v1060
        %v4618 = vunpack.c.l.b16 %v1061
        %v4619 = vunpack.c.h.b16 %v1061
        %v4620 = vunpack.c.l.b16 %v1062
        %v4621 = vunpack.c.h.b16 %v1062
        %v4622 = vunpack.c.l.b16 %v1063
        %v4623 = vunpack.c.h.b16 %v1063
        %v4624 = vunpack.c.l.b16 %v1064
        %v4625 = vunpack.c.h.b16 %v1064
        %v4626 = vunpack.c.l.b16 %v1065
        %v4627 = vunpack.c.h.b16 %v1065
        %v4628 = vunpack.c.l.b16 %v1066
        %v4629 = vunpack.c.h.b16 %v1066
        %v4630 = vunpack.c.l.b16 %v1067
        %v4631 = vunpack.c.h.b16 %v1067
        %v4632 = vunpack.c.l.b16 %v1068
        %v4633 = vunpack.c.h.b16 %v1068
        %v4634 = vunpack.c.l.b16 %v1069
        %v4635 = vunpack.c.h.b16 %v1069
        %v4636 = vunpack.c.l.b16 %v1070
        %v4637 = vunpack.c.h.b16 %v1070
        %v4638 = vunpack.c.l.b16 %v1071
        %v4639 = vunpack.c.h.b16 %v1071
        %v4640 = vunpack.c.l.b16 %v1072
        %v4641 = vunpack.c.h.b16 %v1072
        %v4642 = vunpack.c.l.b16 %v1073
        %v4643 = vunpack.c.h.b16 %v1073
        %v4644 = vunpack.c.l.b16 %v1074
        %v4645 = vunpack.c.h.b16 %v1074
        %v4646 = vunpack.c.l.b16 %v1075
        %v4647 = vunpack.c.h.b16 %v1075
        %v4648 = vunpack.c.l.b16 %v1076
        %v4649 = vunpack.c.h.b16 %v1076
        %v4650 = vunpack.c.l.b16 %v1077
        %v4651 = vunpack.c.h.b16 %v1077
        %v4652 = vunpack.c.l.b16 %v1078
        %v4653 = vunpack.c.h.b16 %v1078
        %v4654 = vunpack.c.l.b16 %v1079
        %v4655 = vunpack.c.h.b16 %v1079
        %v4656 = vunpack.c.l.b16 %v1080
        %v4657 = vunpack.c.h.b16 %v1080
        %v4658 = vunpack.c.l.b16 %v1081
        %v4659 = vunpack.c.h.b16 %v1081
        %v4660 = vunpack.c.l.b16 %v1082
        %v4661 = vunpack.c.h.b16 %v1082
        %v4662 = vunpack.c.l.b16 %v1083
        %v4663 = vunpack.c.h.b16 %v1083
        %v4664 = vunpack.c.l.b16 %v1084
        %v4665 = vunpack.c.h.b16 %v1084
        %v4666 = vunpack.c.l.b16 %v1085
        %v4667 = vunpack.c.h.b16 %v1085
        %v4668 = vunpack.c.l.b16 %v1086
        %v4669 = vunpack.c.h.b16 %v1086
        %v4670 = vunpack.c.l.b16 %v1087
        %v4671 = vunpack.c.h.b16 %v1087
        %v4672 = vunpack.c.l.b16 %v1088
        %v4673 = vunpack.c.h.b16 %v1088
        %v4674 = vunpack.c.l.b16 %v1089
        %v4675 = vunpack.c.h.b16 %v1089
        %v4676 = vunpack.c.l.b16 %v1090
        %v4677 = vunpack.c.h.b16 %v1090
        %v4678 = vunpack.c.l.b16 %v1091
        %v4679 = vunpack.c.h.b16 %v1091
        %v4680 = vunpack.c.l.b16 %v1092
        %v4681 = vunpack.c.h.b16 %v1092
        %v4682 = vunpack.c.l.b16 %v1093
        %v4683 = vunpack.c.h.b16 %v1093
        %v4684 = vunpack.c.l.b16 %v1094
        %v4685 = vunpack.c.h.b16 %v1094
        %v4686 = vunpack.c.l.b16 %v1095
        %v4687 = vunpack.c.h.b16 %v1095
        %v4688 = vunpack.c.l.b16 %v1096
        %v4689 = vunpack.c.h.b16 %v1096
        %v4690 = vunpack.c.l.b16 %v1097
        %v4691 = vunpack.c.h.b16 %v1097
        %v4692 = vunpack.c.l.b16 %v1098
        %v4693 = vunpack.c.h.b16 %v1098
        %v4694 = vunpack.c.l.b16 %v1099
        %v4695 = vunpack.c.h.b16 %v1099
        %v4696 = vunpack.c.l.b16 %v1100
        %v4697 = vunpack.c.h.b16 %v1100
        %v4698 = vunpack.c.l.b16 %v1101
        %v4699 = vunpack.c.h.b16 %v1101
        %v4700 = vunpack.c.l.b16 %v1102
        %v4701 = vunpack.c.h.b16 %v1102
        %v4702 = vunpack.c.l.b16 %v1103
        %v4703 = vunpack.c.h.b16 %v1103
        %v4704 = vunpack.c.l.b16 %v1104
        %v4705 = vunpack.c.h.b16 %v1104
        %v4706 = vunpack.c.l.b16 %v1105
        %v4707 = vunpack.c.h.b16 %v1105
        %v4708 = vunpack.c.l.b16 %v1106
        %v4709 = vunpack.c.h.b16 %v1106
        %v4710 = vunpack.c.l.b16 %v1107
        %v4711 = vunpack.c.h.b16 %v1107
        %v4712 = vunpack.c.l.b16 %v1108
        %v4713 = vunpack.c.h.b16 %v1108
        %v4714 = vunpack.c.l.b16 %v1109
        %v4715 = vunpack.c.h.b16 %v1109
        %v4716 = vunpack.c.l.b16 %v1110
        %v4717 = vunpack.c.h.b16 %v1110
        %v4718 = vunpack.c.l.b16 %v1111
        %v4719 = vunpack.c.h.b16 %v1111
        %v4720 = vunpack.c.l.b16 %v1112
        %v4721 = vunpack.c.h.b16 %v1112
        %v4722 = vunpack.c.l.b16 %v1113
        %v4723 = vunpack.c.h.b16 %v1113
        %v4724 = vunpack.c.l.b16 %v1114
        %v4725 = vunpack.c.h.b16 %v1114
        %v4726 = vunpack.c.l.b16 %v1115
        %v4727 = vunpack.c.h.b16 %v1115
        %v4728 = vunpack.c.l.b16 %v1116
        %v4729 = vunpack.c.h.b16 %v1116
        %v4730 = vunpack.c.l.b16 %v1117
        %v4731 = vunpack.c.h.b16 %v1117
        %v4732 = vunpack.c.l.b16 %v1118
        %v4733 = vunpack.c.h.b16 %v1118
        %v4734 = vunpack.c.l.b16 %v1119
        %v4735 = vunpack.c.h.b16 %v1119
        %v4736 = vunpack.c.l.b16 %v1120
        %v4737 = vunpack.c.h.b16 %v1120
        %v4738 = vunpack.c.l.b16 %v1121
        %v4739 = vunpack.c.h.b16 %v1121
        %v4740 = vunpack.c.l.b16 %v1122
        %v4741 = vunpack.c.h.b16 %v1122
        %v4742 = vunpack.c.l.b16 %v1123
        %v4743 = vunpack.c.h.b16 %v1123
        %v4744 = vunpack.c.l.b16 %v1124
        %v4745 = vunpack.c.h.b16 %v1124
        %v4746 = vunpack.c.l.b16 %v1125
        %v4747 = vunpack.c.h.b16 %v1125
        %v4748 = vunpack.c.l.b16 %v1126
        %v4749 = vunpack.c.h.b16 %v1126
        %v4750 = vunpack.c.l.b16 %v1127
        %v4751 = vunpack.c.h.b16 %v1127
        %v4752 = vunpack.c.l.b16 %v1128
        %v4753 = vunpack.c.h.b16 %v1128
        %v4754 = vunpack.c.l.b16 %v1129
        %v4755 = vunpack.c.h.b16 %v1129
        %v4756 = vunpack.c.l.b16 %v1130
        %v4757 = vunpack.c.h.b16 %v1130
        %v4758 = vunpack.c.l.b16 %v1131
        %v4759 = vunpack.c.h.b16 %v1131
        %v4760 = vunpack.c.l.b16 %v1132
        %v4761 = vunpack.c.h.b16 %v1132
        %v4762 = vunpack.c.l.b16 %v1133
        %v4763 = vunpack.c.h.b16 %v1133
        %v4764 = vunpack.c.l.b16 %v1134
        %v4765 = vunpack.c.h.b16 %v1134
        %v4766 = vunpack.c.l.b16 %v1135
        %v4767 = vunpack.c.h.b16 %v1135
        %v4768 = vunpack.c.l.b16 %v1136
        %v4769 = vunpack.c.h.b16 %v1136
        %v4770 = vunpack.c.l.b16 %v1137
        %v4771 = vunpack.c.h.b16 %v1137
        %v4772 = vunpack.c.l.b16 %v1138
        %v4773 = vunpack.c.h.b16 %v1138
        %v4774 = vunpack.c.l.b16 %v1139
        %v4775 = vunpack.c.h.b16 %v1139
        %v4776 = vunpack.c.l.b16 %v1140
        %v4777 = vunpack.c.h.b16 %v1140
        %v4778 = vunpack.c.l.b16 %v1141
        %v4779 = vunpack.c.h.b16 %v1141
        %v4780 = vunpack.c.l.b16 %v1142
        %v4781 = vunpack.c.h.b16 %v1142
        %v4782 = vunpack.c.l.b16 %v1143
        %v4783 = vunpack.c.h.b16 %v1143
        %v4784 = vunpack.c.l.b16 %v1144
        %v4785 = vunpack.c.h.b16 %v1144
        %v4786 = vunpack.c.l.b16 %v1145
        %v4787 = vunpack.c.h.b16 %v1145
        %v4788 = vunpack.c.l.b16 %v1146
        %v4789 = vunpack.c.h.b16 %v1146
        %v4790 = vunpack.c.l.b16 %v1147
        %v4791 = vunpack.c.h.b16 %v1147
        %v4792 = vunpack.c.l.b16 %v1148
        %v4793 = vunpack.c.h.b16 %v1148
        %v4794 = vunpack.c.l.b16 %v1149
        %v4795 = vunpack.c.h.b16 %v1149
        %v4796 = vunpack.c.l.b16 %v1150
        %v4797 = vunpack.c.h.b16 %v1150
        %v4798 = vunpack.c.l.b16 %v1151
        %v4799 = vunpack.c.h.b16 %v1151
        %v4800 = vunpack.c.l.b16 %v1152
        %v4801 = vunpack.c.h.b16 %v1152
        %v4802 = vunpack.c.l.b16 %v1153
        %v4803 = vunpack.c.h.b16 %v1153
        %v4804 = vunpack.c.l.b16 %v1154
        %v4805 = vunpack.c.h.b16 %v1154
        %v4806 = vunpack.c.l.b16 %v1155
        %v4807 = vunpack.c.h.b16 %v1155
        %v4808 = vunpack.c.l.b16 %v1156
        %v4809 = vunpack.c.h.b16 %v1156
        %v4810 = vunpack.c.l.b16 %v1157
        %v4811 = vunpack.c.h.b16 %v1157
        %v4812 = vunpack.c.l.b16 %v1158
        %v4813 = vunpack.c.h.b16 %v1158
        %v4814 = vunpack.c.l.b16 %v1159
        %v4815 = vunpack.c.h.b16 %v1159
        %v4816 = vunpack.c.l.b16 %v1160
        %v4817 = vunpack.c.h.b16 %v1160
        %v4818 = vunpack.c.l.b16 %v1161
        %v4819 = vunpack.c.h.b16 %v1161
        %v4820 = vunpack.c.l.b16 %v1162
        %v4821 = vunpack.c.h.b16 %v1162
        %v4822 = vunpack.c.l.b16 %v1163
        %v4823 = vunpack.c.h.b16 %v1163
        %v4824 = vunpack.c.l.b16 %v1164
        %v4825 = vunpack.c.h.b16 %v1164
        %v4826 = vunpack.c.l.b16 %v1165
        %v4827 = vunpack.c.h.b16 %v1165
        %v4828 = vunpack.c.l.b16 %v1166
        %v4829 = vunpack.c.h.b16 %v1166
        %v4830 = vunpack.c.l.b16 %v1167
        %v4831 = vunpack.c.h.b16 %v1167
        %v4832 = vunpack.c.l.b16 %v1168
        %v4833 = vunpack.c.h.b16 %v1168
        %v4834 = vunpack.c.l.b16 %v1169
        %v4835 = vunpack.c.h.b16 %v1169
        %v4836 = vunpack.c.l.b16 %v1170
        %v4837 = vunpack.c.h.b16 %v1170
        %v4838 = vunpack.c.l.b16 %v1171
        %v4839 = vunpack.c.h.b16 %v1171
        %v4840 = vunpack.c.l.b16 %v1172
        %v4841 = vunpack.c.h.b16 %v1172
        %v4842 = vunpack.c.l.b16 %v1173
        %v4843 = vunpack.c.h.b16 %v1173
        %v4844 = vunpack.c.l.b16 %v1174
        %v4845 = vunpack.c.h.b16 %v1174
        %v4846 = vunpack.c.l.b16 %v1175
        %v4847 = vunpack.c.h.b16 %v1175
        %v4848 = vunpack.c.l.b16 %v1176
        %v4849 = vunpack.c.h.b16 %v1176
        %v4850 = vunpack.c.l.b16 %v1177
        %v4851 = vunpack.c.h.b16 %v1177
        %v4852 = vunpack.c.l.b16 %v1178
        %v4853 = vunpack.c.h.b16 %v1178
        %v4854 = vunpack.c.l.b16 %v1179
        %v4855 = vunpack.c.h.b16 %v1179
        %v4856 = vunpack.c.l.b16 %v1180
        %v4857 = vunpack.c.h.b16 %v1180
        %v4858 = vunpack.c.l.b16 %v1181
        %v4859 = vunpack.c.h.b16 %v1181
        %v4860 = vunpack.c.l.b16 %v1182
        %v4861 = vunpack.c.h.b16 %v1182
        %v4862 = vunpack.c.l.b16 %v1183
        %v4863 = vunpack.c.h.b16 %v1183
        %v4864 = vunpack.c.l.b16 %v1184
        %v4865 = vunpack.c.h.b16 %v1184
        %v4866 = vunpack.c.l.b16 %v1185
        %v4867 = vunpack.c.h.b16 %v1185
        %v4868 = vunpack.c.l.b16 %v1186
        %v4869 = vunpack.c.h.b16 %v1186
        %v4870 = vunpack.c.l.b16 %v1187
        %v4871 = vunpack.c.h.b16 %v1187
        %v4872 = vunpack.c.l.b16 %v1188
        %v4873 = vunpack.c.h.b16 %v1188
        %v4874 = vunpack.c.l.b16 %v1189
        %v4875 = vunpack.c.h.b16 %v1189
        %v4876 = vunpack.c.l.b16 %v1190
        %v4877 = vunpack.c.h.b16 %v1190
        %v4878 = vunpack.c.l.b16 %v1191
        %v4879 = vunpack.c.h.b16 %v1191
        %v4880 = vunpack.c.l.b16 %v1192
        %v4881 = vunpack.c.h.b16 %v1192
        %v4882 = vunpack.c.l.b16 %v1193
        %v4883 = vunpack.c.h.b16 %v1193
        %v4884 = vunpack.c.l.b16 %v1194
        %v4885 = vunpack.c.h.b16 %v1194
        %v4886 = vunpack.c.l.b16 %v1195
        %v4887 = vunpack.c.h.b16 %v1195
        %v4888 = vunpack.c.l.b16 %v1196
        %v4889 = vunpack.c.h.b16 %v1196
        %v4890 = vunpack.c.l.b16 %v1197
        %v4891 = vunpack.c.h.b16 %v1197
        %v4892 = vunpack.c.l.b16 %v1198
        %v4893 = vunpack.c.h.b16 %v1198
        %v4894 = vunpack.c.l.b16 %v1199
        %v4895 = vunpack.c.h.b16 %v1199
        %v4896 = vunpack.c.l.b16 %v1200
        %v4897 = vunpack.c.h.b16 %v1200
        %v4898 = vunpack.c.l.b16 %v1201
        %v4899 = vunpack.c.h.b16 %v1201
        %v4900 = vunpack.c.l.b16 %v1202
        %v4901 = vunpack.c.h.b16 %v1202
        %v4902 = vunpack.c.l.b16 %v1203
        %v4903 = vunpack.c.h.b16 %v1203
        %v4904 = vunpack.c.l.b16 %v1204
        %v4905 = vunpack.c.h.b16 %v1204
        %v4906 = vunpack.c.l.b16 %v1205
        %v4907 = vunpack.c.h.b16 %v1205
        %v4908 = vunpack.c.l.b16 %v1206
        %v4909 = vunpack.c.h.b16 %v1206
        %v4910 = vunpack.c.l.b16 %v1207
        %v4911 = vunpack.c.h.b16 %v1207
        %v4912 = vunpack.c.l.b16 %v1208
        %v4913 = vunpack.c.h.b16 %v1208
        %v4914 = vunpack.c.l.b16 %v1209
        %v4915 = vunpack.c.h.b16 %v1209
        %v4916 = vunpack.c.l.b16 %v1210
        %v4917 = vunpack.c.h.b16 %v1210
        %v4918 = vunpack.c.l.b16 %v1211
        %v4919 = vunpack.c.h.b16 %v1211
        %v4920 = vunpack.c.l.b16 %v1212
        %v4921 = vunpack.c.h.b16 %v1212
        %v4922 = vunpack.c.l.b16 %v1213
        %v4923 = vunpack.c.h.b16 %v1213
        %v4924 = vunpack.c.l.b16 %v1214
        %v4925 = vunpack.c.h.b16 %v1214
        %v4926 = vunpack.c.l.b16 %v1215
        %v4927 = vunpack.c.h.b16 %v1215
        %v4928 = vunpack.c.l.b16 %v1216
        %v4929 = vunpack.c.h.b16 %v1216
        %v4930 = vunpack.c.l.b16 %v1217
        %v4931 = vunpack.c.h.b16 %v1217
        %v4932 = vunpack.c.l.b16 %v1218
        %v4933 = vunpack.c.h.b16 %v1218
        %v4934 = vunpack.c.l.b16 %v1219
        %v4935 = vunpack.c.h.b16 %v1219
        %v4936 = vunpack.c.l.b16 %v1220
        %v4937 = vunpack.c.h.b16 %v1220
        %v4938 = vunpack.c.l.b16 %v1221
        %v4939 = vunpack.c.h.b16 %v1221
        %v4940 = vunpack.c.l.b16 %v1222
        %v4941 = vunpack.c.h.b16 %v1222
        %v4942 = vunpack.c.l.b16 %v1223
        %v4943 = vunpack.c.h.b16 %v1223
        %v4944 = vunpack.c.l.b16 %v1224
        %v4945 = vunpack.c.h.b16 %v1224
        %v4946 = vunpack.c.l.b16 %v1225
        %v4947 = vunpack.c.h.b16 %v1225
        %v4948 = vunpack.c.l.b16 %v1226
        %v4949 = vunpack.c.h.b16 %v1226
        %v4950 = vunpack.c.l.b16 %v1227
        %v4951 = vunpack.c.h.b16 %v1227
        %v4952 = vunpack.c.l.b16 %v1228
        %v4953 = vunpack.c.h.b16 %v1228
        %v4954 = vunpack.c.l.b16 %v1229
        %v4955 = vunpack.c.h.b16 %v1229
        %v4956 = vunpack.c.l.b16 %v1230
        %v4957 = vunpack.c.h.b16 %v1230
        %v4958 = vunpack.c.l.b16 %v1231
        %v4959 = vunpack.c.h.b16 %v1231
        %v4960 = vunpack.c.l.b16 %v1232
        %v4961 = vunpack.c.h.b16 %v1232
        %v4962 = vunpack.c.l.b16 %v1233
        %v4963 = vunpack.c.h.b16 %v1233
        %v4964 = vunpack.c.l.b16 %v1234
        %v4965 = vunpack.c.h.b16 %v1234
        %v4966 = vunpack.c.l.b16 %v1235
        %v4967 = vunpack.c.h.b16 %v1235
        %v4968 = vunpack.c.l.b16 %v1236
        %v4969 = vunpack.c.h.b16 %v1236
        %v4970 = vunpack.c.l.b16 %v1237
        %v4971 = vunpack.c.h.b16 %v1237
        %v4972 = vunpack.c.l.b16 %v1238
        %v4973 = vunpack.c.h.b16 %v1238
        %v4974 = vunpack.c.l.b16 %v1239
        %v4975 = vunpack.c.h.b16 %v1239
        %v4976 = vunpack.c.l.b16 %v1240
        %v4977 = vunpack.c.h.b16 %v1240
        %v4978 = vunpack.c.l.b16 %v1241
        %v4979 = vunpack.c.h.b16 %v1241
        %v4980 = vunpack.c.l.b16 %v1242
        %v4981 = vunpack.c.h.b16 %v1242
        %v4982 = vunpack.c.l.b16 %v1243
        %v4983 = vunpack.c.h.b16 %v1243
        %v4984 = vunpack.c.l.b16 %v1244
        %v4985 = vunpack.c.h.b16 %v1244
        %v4986 = vunpack.c.l.b16 %v1245
        %v4987 = vunpack.c.h.b16 %v1245
        %v4988 = vunpack.c.l.b16 %v1246
        %v4989 = vunpack.c.h.b16 %v1246
        %v4990 = vunpack.c.l.b16 %v1247
        %v4991 = vunpack.c.h.b16 %v1247
        %v4992 = vunpack.c.l.b16 %v1248
        %v4993 = vunpack.c.h.b16 %v1248
        %v4994 = vunpack.c.l.b16 %v1249
        %v4995 = vunpack.c.h.b16 %v1249
        %v4996 = vunpack.c.l.b16 %v1250
        %v4997 = vunpack.c.h.b16 %v1250
        %v4998 = vunpack.c.l.b16 %v1251
        %v4999 = vunpack.c.h.b16 %v1251
        %v5000 = vunpack.c.l.b16 %v1252
        %v5001 = vunpack.c.h.b16 %v1252
        %v5002 = vunpack.c.l.b16 %v1253
        %v5003 = vunpack.c.h.b16 %v1253
        %v5004 = vunpack.c.l.b16 %v1254
        %v5005 = vunpack.c.h.b16 %v1254
        %v5006 = vunpack.c.l.b16 %v1255
        %v5007 = vunpack.c.h.b16 %v1255
        %v5008 = vunpack.c.l.b16 %v1256
        %v5009 = vunpack.c.h.b16 %v1256
        %v5010 = vunpack.c.l.b16 %v1257
        %v5011 = vunpack.c.h.b16 %v1257
        %v5012 = vunpack.c.l.b16 %v1258
        %v5013 = vunpack.c.h.b16 %v1258
        %v5014 = vunpack.c.l.b16 %v1259
        %v5015 = vunpack.c.h.b16 %v1259
        %v5016 = vunpack.c.l.b16 %v1260
        %v5017 = vunpack.c.h.b16 %v1260
        %v5018 = vunpack.c.l.b16 %v1261
        %v5019 = vunpack.c.h.b16 %v1261
        %v5020 = vunpack.c.l.b16 %v1262
        %v5021 = vunpack.c.h.b16 %v1262
        %v5022 = vunpack.c.l.b16 %v1263
        %v5023 = vunpack.c.h.b16 %v1263
        %v5024 = vunpack.c.l.b16 %v1264
        %v5025 = vunpack.c.h.b16 %v1264
        %v5026 = vunpack.c.l.b16 %v1265
        %v5027 = vunpack.c.h.b16 %v1265
        %v5028 = vunpack.c.l.b16 %v1266
        %v5029 = vunpack.c.h.b16 %v1266
        %v5030 = vunpack.c.l.b16 %v1267
        %v5031 = vunpack.c.h.b16 %v1267
        %v5032 = vunpack.c.l.b16 %v1268
        %v5033 = vunpack.c.h.b16 %v1268
        %v5034 = vunpack.c.l.b16 %v1269
        %v5035 = vunpack.c.h.b16 %v1269
        %v5036 = vunpack.c.l.b16 %v1270
        %v5037 = vunpack.c.h.b16 %v1270
        %v5038 = vunpack.c.l.b16 %v1271
        %v5039 = vunpack.c.h.b16 %v1271
        %v5040 = vunpack.c.l.b16 %v1272
        %v5041 = vunpack.c.h.b16 %v1272
        %v5042 = vunpack.c.l.b16 %v1273
        %v5043 = vunpack.c.h.b16 %v1273
        %v5044 = vunpack.c.l.b16 %v1274
        %v5045 = vunpack.c.h.b16 %v1274
        %v5046 = vunpack.c.l.b16 %v1275
        %v5047 = vunpack.c.h.b16 %v1275
        %v5048 = vunpack.c.l.b16 %v1276
        %v5049 = vunpack.c.h.b16 %v1276
        %v5050 = vunpack.c.l.b16 %v1277
        %v5051 = vunpack.c.h.b16 %v1277
        %v5052 = vunpack.c.l.b16 %v1278
        %v5053 = vunpack.c.h.b16 %v1278
        %v5054 = vunpack.c.l.b16 %v1279
        %v5055 = vunpack.c.h.b16 %v1279
        %v5056 = vunpack.c.l.b16 %v1280
        %v5057 = vunpack.c.h.b16 %v1280
        %v5058 = vunpack.c.l.b16 %v1281
        %v5059 = vunpack.c.h.b16 %v1281
        %v5060 = vunpack.c.l.b16 %v1282
        %v5061 = vunpack.c.h.b16 %v1282
        %v5062 = vunpack.c.l.b16 %v1283
        %v5063 = vunpack.c.h.b16 %v1283
        %v5064 = vunpack.c.l.b16 %v1284
        %v5065 = vunpack.c.h.b16 %v1284
        %v5066 = vunpack.c.l.b16 %v1285
        %v5067 = vunpack.c.h.b16 %v1285
        %v5068 = vunpack.c.l.b16 %v1286
        %v5069 = vunpack.c.h.b16 %v1286
        %v5070 = vunpack.c.l.b16 %v1287
        %v5071 = vunpack.c.h.b16 %v1287
        %v5072 = vunpack.c.l.b16 %v1288
        %v5073 = vunpack.c.h.b16 %v1288
        %v5074 = vunpack.c.l.b16 %v1289
        %v5075 = vunpack.c.h.b16 %v1289
        %v5076 = vunpack.c.l.b16 %v1290
        %v5077 = vunpack.c.h.b16 %v1290
        %v5078 = vunpack.c.l.b16 %v1291
        %v5079 = vunpack.c.h.b16 %v1291
        %v5080 = vunpack.c.l.b16 %v1292
        %v5081 = vunpack.c.h.b16 %v1292
        %v5082 = vunpack.c.l.b16 %v1293
        %v5083 = vunpack.c.h.b16 %v1293
        %v5084 = vunpack.c.l.b16 %v1294
        %v5085 = vunpack.c.h.b16 %v1294
        %v5086 = vunpack.c.l.b16 %v1295
        %v5087 = vunpack.c.h.b16 %v1295
        %v5088 = vunpack.c.l.b16 %v1296
        %v5089 = vunpack.c.h.b16 %v1296
        %v5090 = vunpack.c.l.b16 %v1297
        %v5091 = vunpack.c.h.b16 %v1297
        %v5092 = vunpack.c.l.b16 %v1298
        %v5093 = vunpack.c.h.b16 %v1298
        %v5094 = vunpack.c.l.b16 %v1299
        %v5095 = vunpack.c.h.b16 %v1299
        %v5096 = vunpack.c.l.b16 %v1300
        %v5097 = vunpack.c.h.b16 %v1300
        %v5098 = vunpack.c.l.b16 %v1301
        %v5099 = vunpack.c.h.b16 %v1301
        %v5100 = vunpack.c.l.b16 %v1302
        %v5101 = vunpack.c.h.b16 %v1302
        %v5102 = vunpack.c.l.b16 %v1303
        %v5103 = vunpack.c.h.b16 %v1303
        %v5104 = vunpack.c.l.b16 %v1304
        %v5105 = vunpack.c.h.b16 %v1304
        %v5106 = vunpack.c.l.b16 %v1305
        %v5107 = vunpack.c.h.b16 %v1305
        %v5108 = vunpack.c.l.b16 %v1306
        %v5109 = vunpack.c.h.b16 %v1306
        %v5110 = vunpack.c.l.b16 %v1307
        %v5111 = vunpack.c.h.b16 %v1307
        %v5112 = vunpack.c.l.b16 %v1308
        %v5113 = vunpack.c.h.b16 %v1308
        %v5114 = vunpack.c.l.b16 %v1309
        %v5115 = vunpack.c.h.b16 %v1309
        %v5116 = vunpack.c.l.b16 %v1310
        %v5117 = vunpack.c.h.b16 %v1310
        %v5118 = vunpack.c.l.b16 %v1311
        %v5119 = vunpack.c.h.b16 %v1311
        %v5120 = vunpack.c.l.b16 %v1312
        %v5121 = vunpack.c.h.b16 %v1312
        %v5122 = vunpack.c.l.b16 %v1313
        %v5123 = vunpack.c.h.b16 %v1313
        %v5124 = vunpack.c.l.b16 %v1314
        %v5125 = vunpack.c.h.b16 %v1314
        %v5126 = vunpack.c.l.b16 %v1315
        %v5127 = vunpack.c.h.b16 %v1315
        %v5128 = vunpack.c.l.b16 %v1316
        %v5129 = vunpack.c.h.b16 %v1316
        %v5130 = vunpack.c.l.b16 %v1317
        %v5131 = vunpack.c.h.b16 %v1317
        %v5132 = vunpack.c.l.b16 %v1318
        %v5133 = vunpack.c.h.b16 %v1318
        %v5134 = vunpack.c.l.b16 %v1319
        %v5135 = vunpack.c.h.b16 %v1319
        %v5136 = vunpack.c.l.b16 %v1320
        %v5137 = vunpack.c.h.b16 %v1320
        %v5138 = vunpack.c.l.b16 %v1321
        %v5139 = vunpack.c.h.b16 %v1321
        %v5140 = vunpack.c.l.b16 %v1322
        %v5141 = vunpack.c.h.b16 %v1322
        %v5142 = vunpack.c.l.b16 %v1323
        %v5143 = vunpack.c.h.b16 %v1323
        %v5144 = vunpack.c.l.b16 %v1324
        %v5145 = vunpack.c.h.b16 %v1324
        %v5146 = vunpack.c.l.b16 %v1325
        %v5147 = vunpack.c.h.b16 %v1325
        %v5148 = vunpack.c.l.b16 %v1326
        %v5149 = vunpack.c.h.b16 %v1326
        %v5150 = vunpack.c.l.b16 %v1327
        %v5151 = vunpack.c.h.b16 %v1327
        %v5152 = vunpack.c.l.b16 %v1328
        %v5153 = vunpack.c.h.b16 %v1328
        %v5154 = vunpack.c.l.b16 %v1329
        %v5155 = vunpack.c.h.b16 %v1329
        %v5156 = vunpack.c.l.b16 %v1330
        %v5157 = vunpack.c.h.b16 %v1330
        %v5158 = vunpack.c.l.b16 %v1331
        %v5159 = vunpack.c.h.b16 %v1331
        %v5160 = vunpack.c.l.b16 %v1332
        %v5161 = vunpack.c.h.b16 %v1332
        %v5162 = vunpack.c.l.b16 %v1333
        %v5163 = vunpack.c.h.b16 %v1333
        %v5164 = vunpack.c.l.b16 %v1334
        %v5165 = vunpack.c.h.b16 %v1334
        %v5166 = vunpack.c.l.b16 %v1335
        %v5167 = vunpack.c.h.b16 %v1335
        %v5168 = vunpack.c.l.b16 %v1336
        %v5169 = vunpack.c.h.b16 %v1336
        %v5170 = vunpack.c.l.b16 %v1337
        %v5171 = vunpack.c.h.b16 %v1337
        %v5172 = vunpack.c.l.b16 %v1338
        %v5173 = vunpack.c.h.b16 %v1338
        %v5174 = vunpack.c.l.b16 %v1339
        %v5175 = vunpack.c.h.b16 %v1339
        %v5176 = vunpack.c.l.b16 %v1340
        %v5177 = vunpack.c.h.b16 %v1340
        %v5178 = vunpack.c.l.b16 %v1341
        %v5179 = vunpack.c.h.b16 %v1341
        %v5180 = vunpack.c.l.b16 %v1342
        %v5181 = vunpack.c.h.b16 %v1342
        %v5182 = vunpack.c.l.b16 %v1343
        %v5183 = vunpack.c.h.b16 %v1343
        %v5184 = vunpack.c.l.b16 %v1344
        %v5185 = vunpack.c.h.b16 %v1344
        %v5186 = vunpack.c.l.b16 %v1345
        %v5187 = vunpack.c.h.b16 %v1345
        %v5188 = vunpack.c.l.b16 %v1346
        %v5189 = vunpack.c.h.b16 %v1346
        %v5190 = vunpack.c.l.b16 %v1347
        %v5191 = vunpack.c.h.b16 %v1347
        %v5192 = vunpack.c.l.b16 %v1348
        %v5193 = vunpack.c.h.b16 %v1348
        %v5194 = vunpack.c.l.b16 %v1349
        %v5195 = vunpack.c.h.b16 %v1349
        %v5196 = vunpack.c.l.b16 %v1350
        %v5197 = vunpack.c.h.b16 %v1350
        %v5198 = vunpack.c.l.b16 %v1351
        %v5199 = vunpack.c.h.b16 %v1351
        %v5200 = vunpack.c.l.b16 %v1352
        %v5201 = vunpack.c.h.b16 %v1352
        %v5202 = vunpack.c.l.b16 %v1353
        %v5203 = vunpack.c.h.b16 %v1353
        %v5204 = vunpack.c.l.b16 %v1354
        %v5205 = vunpack.c.h.b16 %v1354
        %v5206 = vunpack.c.l.b16 %v1355
        %v5207 = vunpack.c.h.b16 %v1355
        %v5208 = vunpack.c.l.b16 %v1356
        %v5209 = vunpack.c.h.b16 %v1356
        %v5210 = vunpack.c.l.b16 %v1357
        %v5211 = vunpack.c.h.b16 %v1357
        %v5212 = vunpack.c.l.b16 %v1358
        %v5213 = vunpack.c.h.b16 %v1358
        %v5214 = vunpack.c.l.b16 %v1359
        %v5215 = vunpack.c.h.b16 %v1359
        %v5216 = vunpack.c.l.b16 %v1360
        %v5217 = vunpack.c.h.b16 %v1360
        %v5218 = vunpack.c.l.b16 %v1361
        %v5219 = vunpack.c.h.b16 %v1361
        %v5220 = vunpack.c.l.b16 %v1362
        %v5221 = vunpack.c.h.b16 %v1362
        %v5222 = vunpack.c.l.b16 %v1363
        %v5223 = vunpack.c.h.b16 %v1363
        %v5224 = vunpack.c.l.b16 %v1364
        %v5225 = vunpack.c.h.b16 %v1364
        %v5226 = vunpack.c.l.b16 %v1365
        %v5227 = vunpack.c.h.b16 %v1365
        %v5228 = vunpack.c.l.b16 %v1366
        %v5229 = vunpack.c.h.b16 %v1366
        %v5230 = vunpack.c.l.b16 %v1367
        %v5231 = vunpack.c.h.b16 %v1367
        %v5232 = vunpack.c.l.b16 %v1368
        %v5233 = vunpack.c.h.b16 %v1368
        %v5234 = vunpack.c.l.b16 %v1369
        %v5235 = vunpack.c.h.b16 %v1369
        %v5236 = vunpack.c.l.b16 %v1370
        %v5237 = vunpack.c.h.b16 %v1370
        %v5238 = vunpack.c.l.b16 %v1371
        %v5239 = vunpack.c.h.b16 %v1371
        %v5240 = vunpack.c.l.b16 %v1372
        %v5241 = vunpack.c.h.b16 %v1372
        %v5242 = vunpack.c.l.b16 %v1373
        %v5243 = vunpack.c.h.b16 %v1373
        %v5244 = vunpack.c.l.b16 %v1374
        %v5245 = vunpack.c.h.b16 %v1374
        %v5246 = vunpack.c.l.b16 %v1375
        %v5247 = vunpack.c.h.b16 %v1375
        %v5248 = vunpack.c.l.b16 %v1376
        %v5249 = vunpack.c.h.b16 %v1376
        %v5250 = vunpack.c.l.b16 %v1377
        %v5251 = vunpack.c.h.b16 %v1377
        %v5252 = vunpack.c.l.b16 %v1378
        %v5253 = vunpack.c.h.b16 %v1378
        %v5254 = vunpack.c.l.b16 %v1379
        %v5255 = vunpack.c.h.b16 %v1379
        %v5256 = vunpack.c.l.b16 %v1380
        %v5257 = vunpack.c.h.b16 %v1380
        %v5258 = vunpack.c.l.b16 %v1381
        %v5259 = vunpack.c.h.b16 %v1381
        %v5260 = vunpack.c.l.b16 %v1382
        %v5261 = vunpack.c.h.b16 %v1382
        %v5262 = vunpack.c.l.b16 %v1383
        %v5263 = vunpack.c.h.b16 %v1383
        %v5264 = vunpack.c.l.b16 %v1384
        %v5265 = vunpack.c.h.b16 %v1384
        %v5266 = vunpack.c.l.b16 %v1385
        %v5267 = vunpack.c.h.b16 %v1385
        %v5268 = vunpack.c.l.b16 %v1386
        %v5269 = vunpack.c.h.b16 %v1386
        %v5270 = vunpack.c.l.b16 %v1387
        %v5271 = vunpack.c.h.b16 %v1387
        %v5272 = vunpack.c.l.b16 %v1388
        %v5273 = vunpack.c.h.b16 %v1388
        %v5274 = vunpack.c.l.b16 %v1389
        %v5275 = vunpack.c.h.b16 %v1389
        %v5276 = vunpack.c.l.b16 %v1390
        %v5277 = vunpack.c.h.b16 %v1390
        %v5278 = vunpack.c.l.b16 %v1391
        %v5279 = vunpack.c.h.b16 %v1391
        %v5280 = vunpack.c.l.b16 %v1392
        %v5281 = vunpack.c.h.b16 %v1392
        %v5282 = vunpack.c.l.b16 %v1393
        %v5283 = vunpack.c.h.b16 %v1393
        %v5284 = vunpack.c.l.b16 %v1394
        %v5285 = vunpack.c.h.b16 %v1394
        %v5286 = vunpack.c.l.b16 %v1395
        %v5287 = vunpack.c.h.b16 %v1395
        %v5288 = vunpack.c.l.b16 %v1396
        %v5289 = vunpack.c.h.b16 %v1396
        %v5290 = vunpack.c.l.b16 %v1397
        %v5291 = vunpack.c.h.b16 %v1397
        %v5292 = vunpack.c.l.b16 %v1398
        %v5293 = vunpack.c.h.b16 %v1398
        %v5294 = vunpack.c.l.b16 %v1399
        %v5295 = vunpack.c.h.b16 %v1399
        %v5296 = vunpack.c.l.b16 %v1400
        %v5297 = vunpack.c.h.b16 %v1400
        %v5298 = vunpack.c.l.b16 %v1401
        %v5299 = vunpack.c.h.b16 %v1401
        %v5300 = vunpack.c.l.b16 %v1402
        %v5301 = vunpack.c.h.b16 %v1402
        %v5302 = vunpack.c.l.b16 %v1403
        %v5303 = vunpack.c.h.b16 %v1403
        %v5304 = vunpack.c.l.b16 %v1404
        %v5305 = vunpack.c.h.b16 %v1404
        %v5306 = vunpack.c.l.b16 %v1405
        %v5307 = vunpack.c.h.b16 %v1405
        %v5308 = vunpack.c.l.b16 %v1406
        %v5309 = vunpack.c.h.b16 %v1406
        %v5310 = vunpack.c.l.b16 %v1407
        %v5311 = vunpack.c.h.b16 %v1407
        %v5312 = vunpack.c.l.b16 %v1408
        %v5313 = vunpack.c.h.b16 %v1408
        %v5314 = vunpack.c.l.b16 %v1409
        %v5315 = vunpack.c.h.b16 %v1409
        %v5316 = vunpack.c.l.b16 %v1410
        %v5317 = vunpack.c.h.b16 %v1410
        %v5318 = vunpack.c.l.b16 %v1411
        %v5319 = vunpack.c.h.b16 %v1411
        %v5320 = vunpack.c.l.b16 %v1412
        %v5321 = vunpack.c.h.b16 %v1412
        %v5322 = vunpack.c.l.b16 %v1413
        %v5323 = vunpack.c.h.b16 %v1413
        %v5324 = vunpack.c.l.b16 %v1414
        %v5325 = vunpack.c.h.b16 %v1414
        %v5326 = vunpack.c.l.b16 %v1415
        %v5327 = vunpack.c.h.b16 %v1415
        %v5328 = vunpack.c.l.b16 %v1416
        %v5329 = vunpack.c.h.b16 %v1416
        %v5330 = vunpack.c.l.b16 %v1417
        %v5331 = vunpack.c.h.b16 %v1417
        %v5332 = vunpack.c.l.b16 %v1418
        %v5333 = vunpack.c.h.b16 %v1418
        %v5334 = vunpack.c.l.b16 %v1419
        %v5335 = vunpack.c.h.b16 %v1419
        %v5336 = vunpack.c.l.b16 %v1420
        %v5337 = vunpack.c.h.b16 %v1420
        %v5338 = vunpack.c.l.b16 %v1421
        %v5339 = vunpack.c.h.b16 %v1421
        %v5340 = vunpack.c.l.b16 %v1422
        %v5341 = vunpack.c.h.b16 %v1422
        %v5342 = vunpack.c.l.b16 %v1423
        %v5343 = vunpack.c.h.b16 %v1423
        %v5344 = vunpack.c.l.b16 %v1424
        %v5345 = vunpack.c.h.b16 %v1424
        %v5346 = vunpack.c.l.b16 %v1425
        %v5347 = vunpack.c.h.b16 %v1425
        %v5348 = vunpack.c.l.b16 %v1426
        %v5349 = vunpack.c.h.b16 %v1426
        %v5350 = vunpack.c.l.b16 %v1427
        %v5351 = vunpack.c.h.b16 %v1427
        %v5352 = vunpack.c.l.b16 %v1428
        %v5353 = vunpack.c.h.b16 %v1428
        %v5354 = vunpack.c.l.b16 %v1429
        %v5355 = vunpack.c.h.b16 %v1429
        %v5356 = vunpack.c.l.b16 %v1430
        %v5357 = vunpack.c.h.b16 %v1430
        %v5358 = vunpack.c.l.b16 %v1431
        %v5359 = vunpack.c.h.b16 %v1431
        %v5360 = vunpack.c.l.b16 %v1432
        %v5361 = vunpack.c.h.b16 %v1432
        %v5362 = vunpack.c.l.b16 %v1433
        %v5363 = vunpack.c.h.b16 %v1433
        %v5364 = vunpack.c.l.b16 %v1434
        %v5365 = vunpack.c.h.b16 %v1434
        %v5366 = vunpack.c.l.b16 %v1435
        %v5367 = vunpack.c.h.b16 %v1435
        %v5368 = vunpack.c.l.b16 %v1436
        %v5369 = vunpack.c.h.b16 %v1436
        %v5370 = vunpack.c.l.b16 %v1437
        %v5371 = vunpack.c.h.b16 %v1437
        %v5372 = vunpack.c.l.b16 %v1438
        %v5373 = vunpack.c.h.b16 %v1438
        %v5374 = vunpack.c.l.b16 %v1439
        %v5375 = vunpack.c.h.b16 %v1439
        %v5376 = vunpack.c.l.b16 %v1440
        %v5377 = vunpack.c.h.b16 %v1440
        %v5378 = vunpack.c.l.b16 %v1441
        %v5379 = vunpack.c.h.b16 %v1441
        %v5380 = vunpack.c.l.b16 %v1442
        %v5381 = vunpack.c.h.b16 %v1442
        %v5382 = vunpack.c.l.b16 %v1443
        %v5383 = vunpack.c.h.b16 %v1443
        %v5384 = vunpack.c.l.b16 %v1444
        %v5385 = vunpack.c.h.b16 %v1444
        %v5386 = vunpack.c.l.b16 %v1445
        %v5387 = vunpack.c.h.b16 %v1445
        %v5388 = vunpack.c.l.b16 %v1446
        %v5389 = vunpack.c.h.b16 %v1446
        %v5390 = vunpack.c.l.b16 %v1447
        %v5391 = vunpack.c.h.b16 %v1447
        %v5392 = vunpack.c.l.b16 %v1448
        %v5393 = vunpack.c.h.b16 %v1448
        %v5394 = vunpack.c.l.b16 %v1449
        %v5395 = vunpack.c.h.b16 %v1449
        %v5396 = vunpack.c.l.b16 %v1450
        %v5397 = vunpack.c.h.b16 %v1450
        %v5398 = vunpack.c.l.b16 %v1451
        %v5399 = vunpack.c.h.b16 %v1451
        %v5400 = vunpack.c.l.b16 %v1452
        %v5401 = vunpack.c.h.b16 %v1452
        %v5402 = vunpack.c.l.b16 %v1453
        %v5403 = vunpack.c.h.b16 %v1453
        %v5404 = vunpack.c.l.b16 %v1454
        %v5405 = vunpack.c.h.b16 %v1454
        %v5406 = vunpack.c.l.b16 %v1455
        %v5407 = vunpack.c.h.b16 %v1455
        %v5408 = vunpack.c.l.b16 %v1456
        %v5409 = vunpack.c.h.b16 %v1456
        %v5410 = vunpack.c.l.b16 %v1457
        %v5411 = vunpack.c.h.b16 %v1457
        %v5412 = vunpack.c.l.b16 %v1458
        %v5413 = vunpack.c.h.b16 %v1458
        %v5414 = vunpack.c.l.b16 %v1459
        %v5415 = vunpack.c.h.b16 %v1459
        %v5416 = vunpack.c.l.b16 %v1460
        %v5417 = vunpack.c.h.b16 %v1460
        %v5418 = vunpack.c.l.b16 %v1461
        %v5419 = vunpack.c.h.b16 %v1461
        %v5420 = vunpack.c.l.b16 %v1462
        %v5421 = vunpack.c.h.b16 %v1462
        %v5422 = vunpack.c.l.b16 %v1463
        %v5423 = vunpack.c.h.b16 %v1463
        %v5424 = vunpack.c.l.b16 %v1464
        %v5425 = vunpack.c.h.b16 %v1464
        %v5426 = vunpack.c.l.b16 %v1465
        %v5427 = vunpack.c.h.b16 %v1465
        %v5428 = vunpack.c.l.b16 %v1466
        %v5429 = vunpack.c.h.b16 %v1466
        %v5430 = vunpack.c.l.b16 %v1467
        %v5431 = vunpack.c.h.b16 %v1467
        %v5432 = vunpack.c.l.b16 %v1468
        %v5433 = vunpack.c.h.b16 %v1468
        %v5434 = vunpack.c.l.b16 %v1469
        %v5435 = vunpack.c.h.b16 %v1469
        %v5436 = vunpack.c.l.b16 %v1470
        %v5437 = vunpack.c.h.b16 %v1470
        %v5438 = vunpack.c.l.b16 %v1471
        %v5439 = vunpack.c.h.b16 %v1471
        %v5440 = vunpack.c.l.b16 %v1472
        %v5441 = vunpack.c.h.b16 %v1472
        %v5442 = vunpack.c.l.b16 %v1473
        %v5443 = vunpack.c.h.b16 %v1473
        %v5444 = vunpack.c.l.b16 %v1474
        %v5445 = vunpack.c.h.b16 %v1474
        %v5446 = vunpack.c.l.b16 %v1475
        %v5447 = vunpack.c.h.b16 %v1475
        %v5448 = vunpack.c.l.b16 %v1476
        %v5449 = vunpack.c.h.b16 %v1476
        %v5450 = vunpack.c.l.b16 %v1477
        %v5451 = vunpack.c.h.b16 %v1477
        %v5452 = vunpack.c.l.b16 %v1478
        %v5453 = vunpack.c.h.b16 %v1478
        %v5454 = vunpack.c.l.b16 %v1479
        %v5455 = vunpack.c.h.b16 %v1479
        %v5456 = vunpack.c.l.b16 %v1480
        %v5457 = vunpack.c.h.b16 %v1480
        %v5458 = vunpack.c.l.b16 %v1481
        %v5459 = vunpack.c.h.b16 %v1481
        %v5460 = vunpack.c.l.b16 %v1482
        %v5461 = vunpack.c.h.b16 %v1482
        %v5462 = vunpack.c.l.b16 %v1483
        %v5463 = vunpack.c.h.b16 %v1483
        %v5464 = vunpack.c.l.b16 %v1484
        %v5465 = vunpack.c.h.b16 %v1484
        %v5466 = vunpack.c.l.b16 %v1485
        %v5467 = vunpack.c.h.b16 %v1485
        %v5468 = vunpack.c.l.b16 %v1486
        %v5469 = vunpack.c.h.b16 %v1486
        %v5470 = vunpack.c.l.b16 %v1487
        %v5471 = vunpack.c.h.b16 %v1487
        %v5472 = vunpack.c.l.b16 %v1488
        %v5473 = vunpack.c.h.b16 %v1488
        %v5474 = vunpack.c.l.b16 %v1489
        %v5475 = vunpack.c.h.b16 %v1489
        %v5476 = vunpack.c.l.b16 %v1490
        %v5477 = vunpack.c.h.b16 %v1490
        %v5478 = vunpack.c.l.b16 %v1491
        %v5479 = vunpack.c.h.b16 %v1491
        %v5480 = vunpack.c.l.b16 %v1492
        %v5481 = vunpack.c.h.b16 %v1492
        %v5482 = vunpack.c.l.b16 %v1493
        %v5483 = vunpack.c.h.b16 %v1493
        %v5484 = vunpack.c.l.b16 %v1494
        %v5485 = vunpack.c.h.b16 %v1494
        %v5486 = vunpack.c.l.b16 %v1495
        %v5487 = vunpack.c.h.b16 %v1495
        %v5488 = vunpack.c.l.b16 %v1496
        %v5489 = vunpack.c.h.b16 %v1496
        %v5490 = vunpack.c.l.b16 %v1497
        %v5491 = vunpack.c.h.b16 %v1497
        %v5492 = vunpack.c.l.b16 %v1498
        %v5493 = vunpack.c.h.b16 %v1498
        %v5494 = vunpack.c.l.b16 %v1499
        %v5495 = vunpack.c.h.b16 %v1499
        %v5496 = vunpack.c.l.b16 %v1500
        %v5497 = vunpack.c.h.b16 %v1500
        %v5498 = vunpack.c.l.b16 %v1501
        %v5499 = vunpack.c.h.b16 %v1501
        %v5500 = vunpack.c.l.b16 %v1502
        %v5501 = vunpack.c.h.b16 %v1502
        %v5502 = vunpack.c.l.b16 %v1503
        %v5503 = vunpack.c.h.b16 %v1503
        %v5504 = vunpack.c.l.b16 %v1504
        %v5505 = vunpack.c.h.b16 %v1504
        %v5506 = vunpack.c.l.b16 %v1505
        %v5507 = vunpack.c.h.b16 %v1505
        %v5508 = vunpack.c.l.b16 %v1506
        %v5509 = vunpack.c.h.b16 %v1506
        %v5510 = vunpack.c.l.b16 %v1507
        %v5511 = vunpack.c.h.b16 %v1507
        %v5512 = vunpack.c.l.b16 %v1508
        %v5513 = vunpack.c.h.b16 %v1508
        %v5514 = vunpack.c.l.b16 %v1509
        %v5515 = vunpack.c.h.b16 %v1509
        %v5516 = vunpack.c.l.b16 %v1510
        %v5517 = vunpack.c.h.b16 %v1510
        %v5518 = vunpack.c.l.b16 %v1511
        %v5519 = vunpack.c.h.b16 %v1511
        %v5520 = vunpack.c.l.b16 %v1512
        %v5521 = vunpack.c.h.b16 %v1512
        %v5522 = vunpack.c.l.b16 %v1513
        %v5523 = vunpack.c.h.b16 %v1513
        %v5524 = vunpack.c.l.b16 %v1514
        %v5525 = vunpack.c.h.b16 %v1514
        %v5526 = vunpack.c.l.b16 %v1515
        %v5527 = vunpack.c.h.b16 %v1515
        %v5528 = vunpack.c.l.b16 %v1516
        %v5529 = vunpack.c.h.b16 %v1516
        %v5530 = vunpack.c.l.b16 %v1517
        %v5531 = vunpack.c.h.b16 %v1517
        %v5532 = vunpack.c.l.b16 %v1518
        %v5533 = vunpack.c.h.b16 %v1518
        %v5534 = vunpack.c.l.b16 %v1519
        %v5535 = vunpack.c.h.b16 %v1519
        %v5536 = vunpack.c.l.b16 %v1520
        %v5537 = vunpack.c.h.b16 %v1520
        %v5538 = vunpack.c.l.b16 %v1521
        %v5539 = vunpack.c.h.b16 %v1521
        %v5540 = vunpack.c.l.b16 %v1522
        %v5541 = vunpack.c.h.b16 %v1522
        %v5542 = vunpack.c.l.b16 %v1523
        %v5543 = vunpack.c.h.b16 %v1523
        %v5544 = vunpack.c.l.b16 %v1524
        %v5545 = vunpack.c.h.b16 %v1524
        %v5546 = vunpack.c.l.b16 %v1525
        %v5547 = vunpack.c.h.b16 %v1525
        %v5548 = vunpack.c.l.b16 %v1526
        %v5549 = vunpack.c.h.b16 %v1526
        %v5550 = vunpack.c.l.b16 %v1527
        %v5551 = vunpack.c.h.b16 %v1527
        %v5552 = vunpack.c.l.b16 %v1528
        %v5553 = vunpack.c.h.b16 %v1528
        %v5554 = vunpack.c.l.b16 %v1529
        %v5555 = vunpack.c.h.b16 %v1529
        %v5556 = vunpack.c.l.b16 %v1530
        %v5557 = vunpack.c.h.b16 %v1530
        %v5558 = vunpack.c.l.b16 %v1531
        %v5559 = vunpack.c.h.b16 %v1531
        %v5560 = vunpack.c.l.b16 %v1532
        %v5561 = vunpack.c.h.b16 %v1532
        %v5562 = vunpack.c.l.b16 %v1533
        %v5563 = vunpack.c.h.b16 %v1533
        %v5564 = vunpack.c.l.b16 %v1534
        %v5565 = vunpack.c.h.b16 %v1534
        %v5566 = vunpack.c.l.b16 %v1535
        %v5567 = vunpack.c.h.b16 %v1535
        %v5568 = vunpack.c.l.b16 %v1536
        %v5569 = vunpack.c.h.b16 %v1536
        %v5570 = vunpack.c.l.b16 %v1537
        %v5571 = vunpack.c.h.b16 %v1537
        %v5572 = vunpack.c.l.b16 %v1538
        %v5573 = vunpack.c.h.b16 %v1538
        %v5574 = vunpack.c.l.b16 %v1539
        %v5575 = vunpack.c.h.b16 %v1539
        %v5576 = vunpack.c.l.b16 %v1540
        %v5577 = vunpack.c.h.b16 %v1540
        %v5578 = vunpack.c.l.b16 %v1541
        %v5579 = vunpack.c.h.b16 %v1541
        %v5580 = vunpack.c.l.b16 %v1542
        %v5581 = vunpack.c.h.b16 %v1542
        %v5582 = vunpack.c.l.b16 %v1543
        %v5583 = vunpack.c.h.b16 %v1543
        %v5584 = vunpack.c.l.b16 %v1544
        %v5585 = vunpack.c.h.b16 %v1544
        %v5586 = vunpack.c.l.b16 %v1545
        %v5587 = vunpack.c.h.b16 %v1545
        %v5588 = vunpack.c.l.b16 %v1546
        %v5589 = vunpack.c.h.b16 %v1546
        %v5590 = vunpack.c.l.b16 %v1547
        %v5591 = vunpack.c.h.b16 %v1547
        %v5592 = vunpack.c.l.b16 %v1548
        %v5593 = vunpack.c.h.b16 %v1548
        %v5594 = vunpack.c.l.b16 %v1549
        %v5595 = vunpack.c.h.b16 %v1549
        %v5596 = vunpack.c.l.b16 %v1550
        %v5597 = vunpack.c.h.b16 %v1550
        %v5598 = vunpack.c.l.b16 %v1551
        %v5599 = vunpack.c.h.b16 %v1551
        %v5600 = vunpack.c.l.b16 %v1552
        %v5601 = vunpack.c.h.b16 %v1552
        %v5602 = vunpack.c.l.b16 %v1553
        %v5603 = vunpack.c.h.b16 %v1553
        %v5604 = vunpack.c.l.b16 %v1554
        %v5605 = vunpack.c.h.b16 %v1554
        %v5606 = vunpack.c.l.b16 %v1555
        %v5607 = vunpack.c.h.b16 %v1555
        %v5608 = vunpack.c.l.b16 %v1556
        %v5609 = vunpack.c.h.b16 %v1556
        %v5610 = vunpack.c.l.b16 %v1557
        %v5611 = vunpack.c.h.b16 %v1557
        %v5612 = vunpack.c.l.b16 %v1558
        %v5613 = vunpack.c.h.b16 %v1558
        %v5614 = vunpack.c.l.b16 %v1559
        %v5615 = vunpack.c.h.b16 %v1559
        %v5616 = vunpack.c.l.b16 %v1560
        %v5617 = vunpack.c.h.b16 %v1560
        %v5618 = vunpack.c.l.b16 %v1561
        %v5619 = vunpack.c.h.b16 %v1561
        %v5620 = vunpack.c.l.b16 %v1562
        %v5621 = vunpack.c.h.b16 %v1562
        %v5622 = vunpack.c.l.b16 %v1563
        %v5623 = vunpack.c.h.b16 %v1563
        %v5624 = vunpack.c.l.b16 %v1564
        %v5625 = vunpack.c.h.b16 %v1564
        %v5626 = vunpack.c.l.b16 %v1565
        %v5627 = vunpack.c.h.b16 %v1565
        %v5628 = vunpack.c.l.b16 %v1566
        %v5629 = vunpack.c.h.b16 %v1566
        %v5630 = vunpack.c.l.b16 %v1567
        %v5631 = vunpack.c.h.b16 %v1567
        %v5632 = vunpack.c.l.b16 %v1568
        %v5633 = vunpack.c.h.b16 %v1568
        %v5634 = vunpack.c.l.b16 %v1569
        %v5635 = vunpack.c.h.b16 %v1569
        %v5636 = vunpack.c.l.b16 %v1570
        %v5637 = vunpack.c.h.b16 %v1570
        %v5638 = vunpack.c.l.b16 %v1571
        %v5639 = vunpack.c.h.b16 %v1571
        %v5640 = vunpack.c.l.b16 %v1572
        %v5641 = vunpack.c.h.b16 %v1572
        %v5642 = vunpack.c.l.b16 %v1573
        %v5643 = vunpack.c.h.b16 %v1573
        %v5644 = vunpack.c.l.b16 %v1574
        %v5645 = vunpack.c.h.b16 %v1574
        %v5646 = vunpack.c.l.b16 %v1575
        %v5647 = vunpack.c.h.b16 %v1575
        %v5648 = vunpack.c.l.b16 %v1576
        %v5649 = vunpack.c.h.b16 %v1576
        %v5650 = vunpack.c.l.b16 %v1577
        %v5651 = vunpack.c.h.b16 %v1577
        %v5652 = vunpack.c.l.b16 %v1578
        %v5653 = vunpack.c.h.b16 %v1578
        %v5654 = vunpack.c.l.b16 %v1579
        %v5655 = vunpack.c.h.b16 %v1579
        %v5656 = vunpack.c.l.b16 %v1580
        %v5657 = vunpack.c.h.b16 %v1580
        %v5658 = vunpack.c.l.b16 %v1581
        %v5659 = vunpack.c.h.b16 %v1581
        %v5660 = vunpack.c.l.b16 %v1582
        %v5661 = vunpack.c.h.b16 %v1582
        %v5662 = vunpack.c.l.b16 %v1583
        %v5663 = vunpack.c.h.b16 %v1583
        %v5664 = vunpack.c.l.b16 %v1584
        %v5665 = vunpack.c.h.b16 %v1584
        %v5666 = vunpack.c.l.b16 %v1585
        %v5667 = vunpack.c.h.b16 %v1585
        %v5668 = vunpack.c.l.b16 %v1586
        %v5669 = vunpack.c.h.b16 %v1586
        %v5670 = vunpack.c.l.b16 %v1587
        %v5671 = vunpack.c.h.b16 %v1587
        %v5672 = vunpack.c.l.b16 %v1588
        %v5673 = vunpack.c.h.b16 %v1588
        %v5674 = vunpack.c.l.b16 %v1589
        %v5675 = vunpack.c.h.b16 %v1589
        %v5676 = vunpack.c.l.b16 %v1590
        %v5677 = vunpack.c.h.b16 %v1590
        %v5678 = vunpack.c.l.b16 %v1591
        %v5679 = vunpack.c.h.b16 %v1591
        %v5680 = vunpack.c.l.b16 %v1592
        %v5681 = vunpack.c.h.b16 %v1592
        %v5682 = vunpack.c.l.b16 %v1593
        %v5683 = vunpack.c.h.b16 %v1593
        %v5684 = vunpack.c.l.b16 %v1594
        %v5685 = vunpack.c.h.b16 %v1594
        %v5686 = vunpack.c.l.b16 %v1595
        %v5687 = vunpack.c.h.b16 %v1595
        %v5688 = vunpack.c.l.b16 %v1596
        %v5689 = vunpack.c.h.b16 %v1596
        %v5690 = vunpack.c.l.b16 %v1597
        %v5691 = vunpack.c.h.b16 %v1597
        %v5692 = vunpack.c.l.b16 %v1598
        %v5693 = vunpack.c.h.b16 %v1598
        %v5694 = vunpack.c.l.b16 %v1599
        %v5695 = vunpack.c.h.b16 %v1599
        %v5696 = vunpack.c.l.b16 %v1600
        %v5697 = vunpack.c.h.b16 %v1600
        %v5698 = vunpack.c.l.b16 %v1601
        %v5699 = vunpack.c.h.b16 %v1601
        %v5700 = vunpack.c.l.b16 %v1602
        %v5701 = vunpack.c.h.b16 %v1602
        %v5702 = vunpack.c.l.b16 %v1603
        %v5703 = vunpack.c.h.b16 %v1603
        %v5704 = vunpack.c.l.b16 %v1604
        %v5705 = vunpack.c.h.b16 %v1604
        %v5706 = vunpack.c.l.b16 %v1605
        %v5707 = vunpack.c.h.b16 %v1605
        %v5708 = vunpack.c.l.b16 %v1606
        %v5709 = vunpack.c.h.b16 %v1606
        %v5710 = vunpack.c.l.b16 %v1607
        %v5711 = vunpack.c.h.b16 %v1607
        %v5712 = vunpack.c.l.b16 %v1608
        %v5713 = vunpack.c.h.b16 %v1608
        %v5714 = vunpack.c.l.b16 %v1609
        %v5715 = vunpack.c.h.b16 %v1609
        %v5716 = vunpack.c.l.b16 %v1610
        %v5717 = vunpack.c.h.b16 %v1610
        %v5718 = vunpack.c.l.b16 %v1611
        %v5719 = vunpack.c.h.b16 %v1611
        %v5720 = vunpack.c.l.b16 %v1612
        %v5721 = vunpack.c.h.b16 %v1612
        %v5722 = vunpack.c.l.b16 %v1613
        %v5723 = vunpack.c.h.b16 %v1613
        %v5724 = vunpack.c.l.b16 %v1614
        %v5725 = vunpack.c.h.b16 %v1614
        %v5726 = vunpack.c.l.b16 %v1615
        %v5727 = vunpack.c.h.b16 %v1615
        %v5728 = vunpack.c.l.b16 %v1616
        %v5729 = vunpack.c.h.b16 %v1616
        %v5730 = vunpack.c.l.b16 %v1617
        %v5731 = vunpack.c.h.b16 %v1617
        %v5732 = vunpack.c.l.b16 %v1618
        %v5733 = vunpack.c.h.b16 %v1618
        %v5734 = vunpack.c.l.b16 %v1619
        %v5735 = vunpack.c.h.b16 %v1619
        %v5736 = vunpack.c.l.b16 %v1620
        %v5737 = vunpack.c.h.b16 %v1620
        %v5738 = vunpack.c.l.b16 %v1621
        %v5739 = vunpack.c.h.b16 %v1621
        %v5740 = vunpack.c.l.b16 %v1622
        %v5741 = vunpack.c.h.b16 %v1622
        %v5742 = vunpack.c.l.b16 %v1623
        %v5743 = vunpack.c.h.b16 %v1623
        %v5744 = vpack.c.b16 %v3186, %v3184
        %v5745 = vpack.c.b16 %v3187, %v3185
        %v5746 = vpack.c.b16 %v3190, %v3188
        %v5747 = vpack.c.b16 %v3191, %v3189
        %v5748 = vpack.c.b16 %v3194, %v3192
        %v5749 = vpack.c.b16 %v3195, %v3193
        %v5750 = vpack.c.b16 %v3198, %v3196
        %v5751 = vpack.c.b16 %v3199, %v3197
        %v5752 = vpack.c.b16 %v3202, %v3200
        %v5753 = vpack.c.b16 %v3203, %v3201
        %v5754 = vpack.c.b16 %v3206, %v3204
        %v5755 = vpack.c.b16 %v3207, %v3205
        %v5756 = vpack.c.b16 %v3210, %v3208
        %v5757 = vpack.c.b16 %v3211, %v3209
        %v5758 = vpack.c.b16 %v3214, %v3212
        %v5759 = vpack.c.b16 %v3215, %v3213
        %v5760 = vpack.c.b16 %v3218, %v3216
        %v5761 = vpack.c.b16 %v3219, %v3217
        %v5762 = vpack.c.b16 %v3222, %v3220
        %v5763 = vpack.c.b16 %v3223, %v3221
        %v5764 = vpack.c.b16 %v3226, %v3224
        %v5765 = vpack.c.b16 %v3227, %v3225
        %v5766 = vpack.c.b16 %v3230, %v3228
        %v5767 = vpack.c.b16 %v3231, %v3229
        %v5768 = vpack.c.b16 %v3234, %v3232
        %v5769 = vpack.c.b16 %v3235, %v3233
        %v5770 = vpack.c.b16 %v3238, %v3236
        %v5771 = vpack.c.b16 %v3239, %v3237
        %v5772 = vpack.c.b16 %v3242, %v3240
        %v5773 = vpack.c.b16 %v3243, %v3241
        %v5774 = vpack.c.b16 %v3246, %v3244
        %v5775 = vpack.c.b16 %v3247, %v3245
        %v5776 = vpack.c.b16 %v3250, %v3248
        %v5777 = vpack.c.b16 %v3251, %v3249
        %v5778 = vpack.c.b16 %v3254, %v3252
        %v5779 = vpack.c.b16 %v3255, %v3253
        %v5780 = vpack.c.b16 %v3258, %v3256
        %v5781 = vpack.c.b16 %v3259, %v3257
        %v5782 = vpack.c.b16 %v3262, %v3260
        %v5783 = vpack.c.b16 %v3263, %v3261
        %v5784 = vpack.c.b16 %v3266, %v3264
        %v5785 = vpack.c.b16 %v3267, %v3265
        %v5786 = vpack.c.b16 %v3270, %v3268
        %v5787 = vpack.c.b16 %v3271, %v3269
        %v5788 = vpack.c.b16 %v3274, %v3272
        %v5789 = vpack.c.b16 %v3275, %v3273
        %v5790 = vpack.c.b16 %v3278, %v3276
        %v5791 = vpack.c.b16 %v3279, %v3277
        %v5792 = vpack.c.b16 %v3282, %v3280
        %v5793 = vpack.c.b16 %v3283, %v3281
        %v5794 = vpack.c.b16 %v3286, %v3284
        %v5795 = vpack.c.b16 %v3287, %v3285
        %v5796 = vpack.c.b16 %v3290, %v3288
        %v5797 = vpack.c.b16 %v3291, %v3289
        %v5798 = vpack.c.b16 %v3294, %v3292
        %v5799 = vpack.c.b16 %v3295, %v3293
        %v5800 = vpack.c.b16 %v3298, %v3296
        %v5801 = vpack.c.b16 %v3299, %v3297
        %v5802 = vpack.c.b16 %v3302, %v3300
        %v5803 = vpack.c.b16 %v3303, %v3301
        %v5804 = vpack.c.b16 %v3306, %v3304
        %v5805 = vpack.c.b16 %v3307, %v3305
        %v5806 = vpack.c.b16 %v3310, %v3308
        %v5807 = vpack.c.b16 %v3311, %v3309
        %v5808 = vpack.c.b16 %v3314, %v3312
        %v5809 = vpack.c.b16 %v3315, %v3313
        %v5810 = vpack.c.b16 %v3318, %v3316
        %v5811 = vpack.c.b16 %v3319, %v3317
        %v5812 = vpack.c.b16 %v3322, %v3320
        %v5813 = vpack.c.b16 %v3323, %v3321
        %v5814 = vpack.c.b16 %v3326, %v3324
        %v5815 = vpack.c.b16 %v3327, %v3325
        %v5816 = vpack.c.b16 %v3330, %v3328
        %v5817 = vpack.c.b16 %v3331, %v3329
        %v5818 = vpack.c.b16 %v3334, %v3332
        %v5819 = vpack.c.b16 %v3335, %v3333
        %v5820 = vpack.c.b16 %v3338, %v3336
        %v5821 = vpack.c.b16 %v3339, %v3337
        %v5822 = vpack.c.b16 %v3342, %v3340
        %v5823 = vpack.c.b16 %v3343, %v3341
        %v5824 = vpack.c.b16 %v3346, %v3344
        %v5825 = vpack.c.b16 %v3347, %v3345
        %v5826 = vpack.c.b16 %v3350, %v3348
        %v5827 = vpack.c.b16 %v3351, %v3349
        %v5828 = vpack.c.b16 %v3354, %v3352
        %v5829 = vpack.c.b16 %v3355, %v3353
        %v5830 = vpack.c.b16 %v3358, %v3356
        %v5831 = vpack.c.b16 %v3359, %v3357
        %v5832 = vpack.c.b16 %v3362, %v3360
        %v5833 = vpack.c.b16 %v3363, %v3361
        %v5834 = vpack.c.b16 %v3366, %v3364
        %v5835 = vpack.c.b16 %v3367, %v3365
        %v5836 = vpack.c.b16 %v3370, %v3368
        %v5837 = vpack.c.b16 %v3371, %v3369
        %v5838 = vpack.c.b16 %v3374, %v3372
        %v5839 = vpack.c.b16 %v3375, %v3373
        %v5840 = vpack.c.b16 %v3378, %v3376
        %v5841 = vpack.c.b16 %v3379, %v3377
        %v5842 = vpack.c.b16 %v3382, %v3380
        %v5843 = vpack.c.b16 %v3383, %v3381
        %v5844 = vpack.c.b16 %v3386, %v3384
        %v5845 = vpack.c.b16 %v3387, %v3385
        %v5846 = vpack.c.b16 %v3390, %v3388
        %v5847 = vpack.c.b16 %v3391, %v3389
        %v5848 = vpack.c.b16 %v3394, %v3392
        %v5849 = vpack.c.b16 %v3395, %v3393
        %v5850 = vpack.c.b16 %v3398, %v3396
        %v5851 = vpack.c.b16 %v3399, %v3397
        %v5852 = vpack.c.b16 %v3402, %v3400
        %v5853 = vpack.c.b16 %v3403, %v3401
        %v5854 = vpack.c.b16 %v3406, %v3404
        %v5855 = vpack.c.b16 %v3407, %v3405
        %v5856 = vpack.c.b16 %v3410, %v3408
        %v5857 = vpack.c.b16 %v3411, %v3409
        %v5858 = vpack.c.b16 %v3414, %v3412
        %v5859 = vpack.c.b16 %v3415, %v3413
        %v5860 = vpack.c.b16 %v3418, %v3416
        %v5861 = vpack.c.b16 %v3419, %v3417
        %v5862 = vpack.c.b16 %v3422, %v3420
        %v5863 = vpack.c.b16 %v3423, %v3421
        %v5864 = vpack.c.b16 %v3426, %v3424
        %v5865 = vpack.c.b16 %v3427, %v3425
        %v5866 = vpack.c.b16 %v3430, %v3428
        %v5867 = vpack.c.b16 %v3431, %v3429
        %v5868 = vpack.c.b16 %v3434, %v3432
        %v5869 = vpack.c.b16 %v3435, %v3433
        %v5870 = vpack.c.b16 %v3438, %v3436
        %v5871 = vpack.c.b16 %v3439, %v3437
        %v5872 = vpack.c.b16 %v3442, %v3440
        %v5873 = vpack.c.b16 %v3443, %v3441
        %v5874 = vpack.c.b16 %v3446, %v3444
        %v5875 = vpack.c.b16 %v3447, %v3445
        %v5876 = vpack.c.b16 %v3450, %v3448
        %v5877 = vpack.c.b16 %v3451, %v3449
        %v5878 = vpack.c.b16 %v3454, %v3452
        %v5879 = vpack.c.b16 %v3455, %v3453
        %v5880 = vpack.c.b16 %v3458, %v3456
        %v5881 = vpack.c.b16 %v3459, %v3457
        %v5882 = vpack.c.b16 %v3462, %v3460
        %v5883 = vpack.c.b16 %v3463, %v3461
        %v5884 = vpack.c.b16 %v3466, %v3464
        %v5885 = vpack.c.b16 %v3467, %v3465
        %v5886 = vpack.c.b16 %v3470, %v3468
        %v5887 = vpack.c.b16 %v3471, %v3469
        %v5888 = vpack.c.b16 %v3474, %v3472
        %v5889 = vpack.c.b16 %v3475, %v3473
        %v5890 = vpack.c.b16 %v3478, %v3476
        %v5891 = vpack.c.b16 %v3479, %v3477
        %v5892 = vpack.c.b16 %v3482, %v3480
        %v5893 = vpack.c.b16 %v3483, %v3481
        %v5894 = vpack.c.b16 %v3486, %v3484
        %v5895 = vpack.c.b16 %v3487, %v3485
        %v5896 = vpack.c.b16 %v3490, %v3488
        %v5897 = vpack.c.b16 %v3491, %v3489
        %v5898 = vpack.c.b16 %v3494, %v3492
        %v5899 = vpack.c.b16 %v3495, %v3493
        %v5900 = vpack.c.b16 %v3498, %v3496
        %v5901 = vpack.c.b16 %v3499, %v3497
        %v5902 = vpack.c.b16 %v3502, %v3500
        %v5903 = vpack.c.b16 %v3503, %v3501
        %v5904 = vpack.c.b16 %v3506, %v3504
        %v5905 = vpack.c.b16 %v3507, %v3505
        %v5906 = vpack.c.b16 %v3510, %v3508
        %v5907 = vpack.c.b16 %v3511, %v3509
        %v5908 = vpack.c.b16 %v3514, %v3512
        %v5909 = vpack.c.b16 %v3515, %v3513
        %v5910 = vpack.c.b16 %v3518, %v3516
        %v5911 = vpack.c.b16 %v3519, %v3517
        %v5912 = vpack.c.b16 %v3522, %v3520
        %v5913 = vpack.c.b16 %v3523, %v3521
        %v5914 = vpack.c.b16 %v3526, %v3524
        %v5915 = vpack.c.b16 %v3527, %v3525
        %v5916 = vpack.c.b16 %v3530, %v3528
        %v5917 = vpack.c.b16 %v3531, %v3529
        %v5918 = vpack.c.b16 %v3534, %v3532
        %v5919 = vpack.c.b16 %v3535, %v3533
        %v5920 = vpack.c.b16 %v3538, %v3536
        %v5921 = vpack.c.b16 %v3539, %v3537
        %v5922 = vpack.c.b16 %v3542, %v3540
        %v5923 = vpack.c.b16 %v3543, %v3541
        %v5924 = vpack.c.b16 %v3546, %v3544
        %v5925 = vpack.c.b16 %v3547, %v3545
        %v5926 = vpack.c.b16 %v3550, %v3548
        %v5927 = vpack.c.b16 %v3551, %v3549
        %v5928 = vpack.c.b16 %v3554, %v3552
        %v5929 = vpack.c.b16 %v3555, %v3553
        %v5930 = vpack.c.b16 %v3558, %v3556
        %v5931 = vpack.c.b16 %v3559, %v3557
        %v5932 = vpack.c.b16 %v3562, %v3560
        %v5933 = vpack.c.b16 %v3563, %v3561
        %v5934 = vpack.c.b16 %v3566, %v3564
        %v5935 = vpack.c.b16 %v3567, %v3565
        %v5936 = vpack.c.b16 %v3570, %v3568
        %v5937 = vpack.c.b16 %v3571, %v3569
        %v5938 = vpack.c.b16 %v3574, %v3572
        %v5939 = vpack.c.b16 %v3575, %v3573
        %v5940 = vpack.c.b16 %v3578, %v3576
        %v5941 = vpack.c.b16 %v3579, %v3577
        %v5942 = vpack.c.b16 %v3582, %v3580
        %v5943 = vpack.c.b16 %v3583, %v3581
        %v5944 = vpack.c.b16 %v3586, %v3584
        %v5945 = vpack.c.b16 %v3587, %v3585
        %v5946 = vpack.c.b16 %v3590, %v3588
        %v5947 = vpack.c.b16 %v3591, %v3589
        %v5948 = vpack.c.b16 %v3594, %v3592
        %v5949 = vpack.c.b16 %v3595, %v3593
        %v5950 = vpack.c.b16 %v3598, %v3596
        %v5951 = vpack.c.b16 %v3599, %v3597
        %v5952 = vpack.c.b16 %v3602, %v3600
        %v5953 = vpack.c.b16 %v3603, %v3601
        %v5954 = vpack.c.b16 %v3606, %v3604
        %v5955 = vpack.c.b16 %v3607, %v3605
        %v5956 = vpack.c.b16 %v3610, %v3608
        %v5957 = vpack.c.b16 %v3611, %v3609
        %v5958 = vpack.c.b16 %v3614, %v3612
        %v5959 = vpack.c.b16 %v3615, %v3613
        %v5960 = vpack.c.b16 %v3618, %v3616
        %v5961 = vpack.c.b16 %v3619, %v3617
        %v5962 = vpack.c.b16 %v3622, %v3620
        %v5963 = vpack.c.b16 %v3623, %v3621
        %v5964 = vpack.c.b16 %v3626, %v3624
        %v5965 = vpack.c.b16 %v3627, %v3625
        %v5966 = vpack.c.b16 %v3630, %v3628
        %v5967 = vpack.c.b16 %v3631, %v3629
        %v5968 = vpack.c.b16 %v3634, %v3632
        %v5969 = vpack.c.b16 %v3635, %v3633
        %v5970 = vpack.c.b16 %v3638, %v3636
        %v5971 = vpack.c.b16 %v3639, %v3637
        %v5972 = vpack.c.b16 %v3642, %v3640
        %v5973 = vpack.c.b16 %v3643, %v3641
        %v5974 = vpack.c.b16 %v3646, %v3644
        %v5975 = vpack.c.b16 %v3647, %v3645
        %v5976 = vpack.c.b16 %v3650, %v3648
        %v5977 = vpack.c.b16 %v3651, %v3649
        %v5978 = vpack.c.b16 %v3654, %v3652
        %v5979 = vpack.c.b16 %v3655, %v3653
        %v5980 = vpack.c.b16 %v3658, %v3656
        %v5981 = vpack.c.b16 %v3659, %v3657
        %v5982 = vpack.c.b16 %v3662, %v3660
        %v5983 = vpack.c.b16 %v3663, %v3661
        %v5984 = vpack.c.b16 %v3666, %v3664
        %v5985 = vpack.c.b16 %v3667, %v3665
        %v5986 = vpack.c.b16 %v3670, %v3668
        %v5987 = vpack.c.b16 %v3671, %v3669
        %v5988 = vpack.c.b16 %v3674, %v3672
        %v5989 = vpack.c.b16 %v3675, %v3673
        %v5990 = vpack.c.b16 %v3678, %v3676
        %v5991 = vpack.c.b16 %v3679, %v3677
        %v5992 = vpack.c.b16 %v3682, %v3680
        %v5993 = vpack.c.b16 %v3683, %v3681
        %v5994 = vpack.c.b16 %v3686, %v3684
        %v5995 = vpack.c.b16 %v3687, %v3685
        %v5996 = vpack.c.b16 %v3690, %v3688
        %v5997 = vpack.c.b16 %v3691, %v3689
        %v5998 = vpack.c.b16 %v3694, %v3692
        %v5999 = vpack.c.b16 %v3695, %v3693
        %v6000 = vpack.c.b16 %v3698, %v3696
        %v6001 = vpack.c.b16 %v3699, %v3697
        %v6002 = vpack.c.b16 %v3702, %v3700
        %v6003 = vpack.c.b16 %v3703, %v3701
        %v6004 = vpack.c.b16 %v3706, %v3704
        %v6005 = vpack.c.b16 %v3707, %v3705
        %v6006 = vpack.c.b16 %v3710, %v3708
        %v6007 = vpack.c.b16 %v3711, %v3709
        %v6008 = vpack.c.b16 %v3714, %v3712
        %v6009 = vpack.c.b16 %v3715, %v3713
        %v6010 = vpack.c.b16 %v3718, %v3716
        %v6011 = vpack.c.b16 %v3719, %v3717
        %v6012 = vpack.c.b16 %v3722, %v3720
        %v6013 = vpack.c.b16 %v3723, %v3721
        %v6014 = vpack.c.b16 %v3726, %v3724
        %v6015 = vpack.c.b16 %v3727, %v3725
        %v6016 = vpack.c.b16 %v3730, %v3728
        %v6017 = vpack.c.b16 %v3731, %v3729
        %v6018 = vpack.c.b16 %v3734, %v3732
        %v6019 = vpack.c.b16 %v3735, %v3733
        %v6020 = vpack.c.b16 %v3738, %v3736
        %v6021 = vpack.c.b16 %v3739, %v3737
        %v6022 = vpack.c.b16 %v3742, %v3740
        %v6023 = vpack.c.b16 %v3743, %v3741
        %v6024 = vpack.c.b16 %v3746, %v3744
        %v6025 = vpack.c.b16 %v3747, %v3745
        %v6026 = vpack.c.b16 %v3750, %v3748
        %v6027 = vpack.c.b16 %v3751, %v3749
        %v6028 = vpack.c.b16 %v3754, %v3752
        %v6029 = vpack.c.b16 %v3755, %v3753
        %v6030 = vpack.c.b16 %v3758, %v3756
        %v6031 = vpack.c.b16 %v3759, %v3757
        %v6032 = vpack.c.b16 %v3762, %v3760
        %v6033 = vpack.c.b16 %v3763, %v3761
        %v6034 = vpack.c.b16 %v3766, %v3764
        %v6035 = vpack.c.b16 %v3767, %v3765
        %v6036 = vpack.c.b16 %v3770, %v3768
        %v6037 = vpack.c.b16 %v3771, %v3769
        %v6038 = vpack.c.b16 %v3774, %v3772
        %v6039 = vpack.c.b16 %v3775, %v3773
        %v6040 = vpack.c.b16 %v3778, %v3776
        %v6041 = vpack.c.b16 %v3779, %v3777
        %v6042 = vpack.c.b16 %v3782, %v3780
        %v6043 = vpack.c.b16 %v3783, %v3781
        %v6044 = vpack.c.b16 %v3786, %v3784
        %v6045 = vpack.c.b16 %v3787, %v3785
        %v6046 = vpack.c.b16 %v3790, %v3788
        %v6047 = vpack.c.b16 %v3791, %v3789
        %v6048 = vpack.c.b16 %v3794, %v3792
        %v6049 = vpack.c.b16 %v3795, %v3793
        %v6050 = vpack.c.b16 %v3798, %v3796
        %v6051 = vpack.c.b16 %v3799, %v3797
        %v6052 = vpack.c.b16 %v3802, %v3800
        %v6053 = vpack.c.b16 %v3803, %v3801
        %v6054 = vpack.c.b16 %v3806, %v3804
        %v6055 = vpack.c.b16 %v3807, %v3805
        %v6056 = vpack.c.b16 %v3810, %v3808
        %v6057 = vpack.c.b16 %v3811, %v3809
        %v6058 = vpack.c.b16 %v3814, %v3812
        %v6059 = vpack.c.b16 %v3815, %v3813
        %v6060 = vpack.c.b16 %v3818, %v3816
        %v6061 = vpack.c.b16 %v3819, %v3817
        %v6062 = vpack.c.b16 %v3822, %v3820
        %v6063 = vpack.c.b16 %v3823, %v3821
        %v6064 = vpack.c.b16 %v3826, %v3824
        %v6065 = vpack.c.b16 %v3827, %v3825
        %v6066 = vpack.c.b16 %v3830, %v3828
        %v6067 = vpack.c.b16 %v3831, %v3829
        %v6068 = vpack.c.b16 %v3834, %v3832
        %v6069 = vpack.c.b16 %v3835, %v3833
        %v6070 = vpack.c.b16 %v3838, %v3836
        %v6071 = vpack.c.b16 %v3839, %v3837
        %v6072 = vpack.c.b16 %v3842, %v3840
        %v6073 = vpack.c.b16 %v3843, %v3841
        %v6074 = vpack.c.b16 %v3846, %v3844
        %v6075 = vpack.c.b16 %v3847, %v3845
        %v6076 = vpack.c.b16 %v3850, %v3848
        %v6077 = vpack.c.b16 %v3851, %v3849
        %v6078 = vpack.c.b16 %v3854, %v3852
        %v6079 = vpack.c.b16 %v3855, %v3853
        %v6080 = vpack.c.b16 %v3858, %v3856
        %v6081 = vpack.c.b16 %v3859, %v3857
        %v6082 = vpack.c.b16 %v3862, %v3860
        %v6083 = vpack.c.b16 %v3863, %v3861
        %v6084 = vpack.c.b16 %v3866, %v3864
        %v6085 = vpack.c.b16 %v3867, %v3865
        %v6086 = vpack.c.b16 %v3870, %v3868
        %v6087 = vpack.c.b16 %v3871, %v3869
        %v6088 = vpack.c.b16 %v3874, %v3872
        %v6089 = vpack.c.b16 %v3875, %v3873
        %v6090 = vpack.c.b16 %v3878, %v3876
        %v6091 = vpack.c.b16 %v3879, %v3877
        %v6092 = vpack.c.b16 %v3882, %v3880
        %v6093 = vpack.c.b16 %v3883, %v3881
        %v6094 = vpack.c.b16 %v3886, %v3884
        %v6095 = vpack.c.b16 %v3887, %v3885
        %v6096 = vpack.c.b16 %v3890, %v3888
        %v6097 = vpack.c.b16 %v3891, %v3889
        %v6098 = vpack.c.b16 %v3894, %v3892
        %v6099 = vpack.c.b16 %v3895, %v3893
        %v6100 = vpack.c.b16 %v3898, %v3896
        %v6101 = vpack.c.b16 %v3899, %v3897
        %v6102 = vpack.c.b16 %v3902, %v3900
        %v6103 = vpack.c.b16 %v3903, %v3901
        %v6104 = vpack.c.b16 %v3906, %v3904
        %v6105 = vpack.c.b16 %v3907, %v3905
        %v6106 = vpack.c.b16 %v3910, %v3908
        %v6107 = vpack.c.b16 %v3911, %v3909
        %v6108 = vpack.c.b16 %v3914, %v3912
        %v6109 = vpack.c.b16 %v3915, %v3913
        %v6110 = vpack.c.b16 %v3918, %v3916
        %v6111 = vpack.c.b16 %v3919, %v3917
        %v6112 = vpack.c.b16 %v3922, %v3920
        %v6113 = vpack.c.b16 %v3923, %v3921
        %v6114 = vpack.c.b16 %v3926, %v3924
        %v6115 = vpack.c.b16 %v3927, %v3925
        %v6116 = vpack.c.b16 %v3930, %v3928
        %v6117 = vpack.c.b16 %v3931, %v3929
        %v6118 = vpack.c.b16 %v3934, %v3932
        %v6119 = vpack.c.b16 %v3935, %v3933
        %v6120 = vpack.c.b16 %v3938, %v3936
        %v6121 = vpack.c.b16 %v3939, %v3937
        %v6122 = vpack.c.b16 %v3942, %v3940
        %v6123 = vpack.c.b16 %v3943, %v3941
        %v6124 = vpack.c.b16 %v3946, %v3944
        %v6125 = vpack.c.b16 %v3947, %v3945
        %v6126 = vpack.c.b16 %v3950, %v3948
        %v6127 = vpack.c.b16 %v3951, %v3949
        %v6128 = vpack.c.b16 %v3954, %v3952
        %v6129 = vpack.c.b16 %v3955, %v3953
        %v6130 = vpack.c.b16 %v3958, %v3956
        %v6131 = vpack.c.b16 %v3959, %v3957
        %v6132 = vpack.c.b16 %v3962, %v3960
        %v6133 = vpack.c.b16 %v3963, %v3961
        %v6134 = vpack.c.b16 %v3966, %v3964
        %v6135 = vpack.c.b16 %v3967, %v3965
        %v6136 = vpack.c.b16 %v3970, %v3968
        %v6137 = vpack.c.b16 %v3971, %v3969
        %v6138 = vpack.c.b16 %v3974, %v3972
        %v6139 = vpack.c.b16 %v3975, %v3973
        %v6140 = vpack.c.b16 %v3978, %v3976
        %v6141 = vpack.c.b16 %v3979, %v3977
        %v6142 = vpack.c.b16 %v3982, %v3980
        %v6143 = vpack.c.b16 %v3983, %v3981
        %v6144 = vpack.c.b16 %v3986, %v3984
        %v6145 = vpack.c.b16 %v3987, %v3985
        %v6146 = vpack.c.b16 %v3990, %v3988
        %v6147 = vpack.c.b16 %v3991, %v3989
        %v6148 = vpack.c.b16 %v3994, %v3992
        %v6149 = vpack.c.b16 %v3995, %v3993
        %v6150 = vpack.c.b16 %v3998, %v3996
        %v6151 = vpack.c.b16 %v3999, %v3997
        %v6152 = vpack.c.b16 %v4002, %v4000
        %v6153 = vpack.c.b16 %v4003, %v4001
        %v6154 = vpack.c.b16 %v4006, %v4004
        %v6155 = vpack.c.b16 %v4007, %v4005
        %v6156 = vpack.c.b16 %v4010, %v4008
        %v6157 = vpack.c.b16 %v4011, %v4009
        %v6158 = vpack.c.b16 %v4014, %v4012
        %v6159 = vpack.c.b16 %v4015, %v4013
        %v6160 = vpack.c.b16 %v4018, %v4016
        %v6161 = vpack.c.b16 %v4019, %v4017
        %v6162 = vpack.c.b16 %v4022, %v4020
        %v6163 = vpack.c.b16 %v4023, %v4021
        %v6164 = vpack.c.b16 %v4026, %v4024
        %v6165 = vpack.c.b16 %v4027, %v4025
        %v6166 = vpack.c.b16 %v4030, %v4028
        %v6167 = vpack.c.b16 %v4031, %v4029
        %v6168 = vpack.c.b16 %v4034, %v4032
        %v6169 = vpack.c.b16 %v4035, %v4033
        %v6170 = vpack.c.b16 %v4038, %v4036
        %v6171 = vpack.c.b16 %v4039, %v4037
        %v6172 = vpack.c.b16 %v4042, %v4040
        %v6173 = vpack.c.b16 %v4043, %v4041
        %v6174 = vpack.c.b16 %v4046, %v4044
        %v6175 = vpack.c.b16 %v4047, %v4045
        %v6176 = vpack.c.b16 %v4050, %v4048
        %v6177 = vpack.c.b16 %v4051, %v4049
        %v6178 = vpack.c.b16 %v4054, %v4052
        %v6179 = vpack.c.b16 %v4055, %v4053
        %v6180 = vpack.c.b16 %v4058, %v4056
        %v6181 = vpack.c.b16 %v4059, %v4057
        %v6182 = vpack.c.b16 %v4062, %v4060
        %v6183 = vpack.c.b16 %v4063, %v4061
        %v6184 = vpack.c.b16 %v4066, %v4064
        %v6185 = vpack.c.b16 %v4067, %v4065
        %v6186 = vpack.c.b16 %v4070, %v4068
        %v6187 = vpack.c.b16 %v4071, %v4069
        %v6188 = vpack.c.b16 %v4074, %v4072
        %v6189 = vpack.c.b16 %v4075, %v4073
        %v6190 = vpack.c.b16 %v4078, %v4076
        %v6191 = vpack.c.b16 %v4079, %v4077
        %v6192 = vpack.c.b16 %v4082, %v4080
        %v6193 = vpack.c.b16 %v4083, %v4081
        %v6194 = vpack.c.b16 %v4086, %v4084
        %v6195 = vpack.c.b16 %v4087, %v4085
        %v6196 = vpack.c.b16 %v4090, %v4088
        %v6197 = vpack.c.b16 %v4091, %v4089
        %v6198 = vpack.c.b16 %v4094, %v4092
        %v6199 = vpack.c.b16 %v4095, %v4093
        %v6200 = vpack.c.b16 %v4098, %v4096
        %v6201 = vpack.c.b16 %v4099, %v4097
        %v6202 = vpack.c.b16 %v4102, %v4100
        %v6203 = vpack.c.b16 %v4103, %v4101
        %v6204 = vpack.c.b16 %v4106, %v4104
        %v6205 = vpack.c.b16 %v4107, %v4105
        %v6206 = vpack.c.b16 %v4110, %v4108
        %v6207 = vpack.c.b16 %v4111, %v4109
        %v6208 = vpack.c.b16 %v4114, %v4112
        %v6209 = vpack.c.b16 %v4115, %v4113
        %v6210 = vpack.c.b16 %v4118, %v4116
        %v6211 = vpack.c.b16 %v4119, %v4117
        %v6212 = vpack.c.b16 %v4122, %v4120
        %v6213 = vpack.c.b16 %v4123, %v4121
        %v6214 = vpack.c.b16 %v4126, %v4124
        %v6215 = vpack.c.b16 %v4127, %v4125
        %v6216 = vpack.c.b16 %v4130, %v4128
        %v6217 = vpack.c.b16 %v4131, %v4129
        %v6218 = vpack.c.b16 %v4134, %v4132
        %v6219 = vpack.c.b16 %v4135, %v4133
        %v6220 = vpack.c.b16 %v4138, %v4136
        %v6221 = vpack.c.b16 %v4139, %v4137
        %v6222 = vpack.c.b16 %v4142, %v4140
        %v6223 = vpack.c.b16 %v4143, %v4141
        %v6224 = vpack.c.b16 %v4146, %v4144
        %v6225 = vpack.c.b16 %v4147, %v4145
        %v6226 = vpack.c.b16 %v4150, %v4148
        %v6227 = vpack.c.b16 %v4151, %v4149
        %v6228 = vpack.c.b16 %v4154, %v4152
        %v6229 = vpack.c.b16 %v4155, %v4153
        %v6230 = vpack.c.b16 %v4158, %v4156
        %v6231 = vpack.c.b16 %v4159, %v4157
        %v6232 = vpack.c.b16 %v4162, %v4160
        %v6233 = vpack.c.b16 %v4163, %v4161
        %v6234 = vpack.c.b16 %v4166, %v4164
        %v6235 = vpack.c.b16 %v4167, %v4165
        %v6236 = vpack.c.b16 %v4170, %v4168
        %v6237 = vpack.c.b16 %v4171, %v4169
        %v6238 = vpack.c.b16 %v4174, %v4172
        %v6239 = vpack.c.b16 %v4175, %v4173
        %v6240 = vpack.c.b16 %v4178, %v4176
        %v6241 = vpack.c.b16 %v4179, %v4177
        %v6242 = vpack.c.b16 %v4182, %v4180
        %v6243 = vpack.c.b16 %v4183, %v4181
        %v6244 = vpack.c.b16 %v4186, %v4184
        %v6245 = vpack.c.b16 %v4187, %v4185
        %v6246 = vpack.c.b16 %v4190, %v4188
        %v6247 = vpack.c.b16 %v4191, %v4189
        %v6248 = vpack.c.b16 %v4194, %v4192
        %v6249 = vpack.c.b16 %v4195, %v4193
        %v6250 = vpack.c.b16 %v4198, %v4196
        %v6251 = vpack.c.b16 %v4199, %v4197
        %v6252 = vpack.c.b16 %v4202, %v4200
        %v6253 = vpack.c.b16 %v4203, %v4201
        %v6254 = vpack.c.b16 %v4206, %v4204
        %v6255 = vpack.c.b16 %v4207, %v4205
        %v6256 = vpack.c.b16 %v4210, %v4208
        %v6257 = vpack.c.b16 %v4211, %v4209
        %v6258 = vpack.c.b16 %v4214, %v4212
        %v6259 = vpack.c.b16 %v4215, %v4213
        %v6260 = vpack.c.b16 %v4218, %v4216
        %v6261 = vpack.c.b16 %v4219, %v4217
        %v6262 = vpack.c.b16 %v4222, %v4220
        %v6263 = vpack.c.b16 %v4223, %v4221
        %v6264 = vpack.c.b16 %v4226, %v4224
        %v6265 = vpack.c.b16 %v4227, %v4225
        %v6266 = vpack.c.b16 %v4230, %v4228
        %v6267 = vpack.c.b16 %v4231, %v4229
        %v6268 = vpack.c.b16 %v4234, %v4232
        %v6269 = vpack.c.b16 %v4235, %v4233
        %v6270 = vpack.c.b16 %v4238, %v4236
        %v6271 = vpack.c.b16 %v4239, %v4237
        %v6272 = vpack.c.b16 %v4242, %v4240
        %v6273 = vpack.c.b16 %v4243, %v4241
        %v6274 = vpack.c.b16 %v4246, %v4244
        %v6275 = vpack.c.b16 %v4247, %v4245
        %v6276 = vpack.c.b16 %v4250, %v4248
        %v6277 = vpack.c.b16 %v4251, %v4249
        %v6278 = vpack.c.b16 %v4254, %v4252
        %v6279 = vpack.c.b16 %v4255, %v4253
        %v6280 = vpack.c.b16 %v4258, %v4256
        %v6281 = vpack.c.b16 %v4259, %v4257
        %v6282 = vpack.c.b16 %v4262, %v4260
        %v6283 = vpack.c.b16 %v4263, %v4261
        %v6284 = vpack.c.b16 %v4266, %v4264
        %v6285 = vpack.c.b16 %v4267, %v4265
        %v6286 = vpack.c.b16 %v4270, %v4268
        %v6287 = vpack.c.b16 %v4271, %v4269
        %v6288 = vpack.c.b16 %v4274, %v4272
        %v6289 = vpack.c.b16 %v4275, %v4273
        %v6290 = vpack.c.b16 %v4278, %v4276
        %v6291 = vpack.c.b16 %v4279, %v4277
        %v6292 = vpack.c.b16 %v4282, %v4280
        %v6293 = vpack.c.b16 %v4283, %v4281
        %v6294 = vpack.c.b16 %v4286, %v4284
        %v6295 = vpack.c.b16 %v4287, %v4285
        %v6296 = vpack.c.b16 %v4290, %v4288
        %v6297 = vpack.c.b16 %v4291, %v4289
        %v6298 = vpack.c.b16 %v4294, %v4292
        %v6299 = vpack.c.b16 %v4295, %v4293
        %v6300 = vpack.c.b16 %v4298, %v4296
        %v6301 = vpack.c.b16 %v4299, %v4297
        %v6302 = vpack.c.b16 %v4302, %v4300
        %v6303 = vpack.c.b16 %v4303, %v4301
        %v6304 = vpack.c.b16 %v4306, %v4304
        %v6305 = vpack.c.b16 %v4307, %v4305
        %v6306 = vpack.c.b16 %v4310, %v4308
        %v6307 = vpack.c.b16 %v4311, %v4309
        %v6308 = vpack.c.b16 %v4314, %v4312
        %v6309 = vpack.c.b16 %v4315, %v4313
        %v6310 = vpack.c.b16 %v4318, %v4316
        %v6311 = vpack.c.b16 %v4319, %v4317
        %v6312 = vpack.c.b16 %v4322, %v4320
        %v6313 = vpack.c.b16 %v4323, %v4321
        %v6314 = vpack.c.b16 %v4326, %v4324
        %v6315 = vpack.c.b16 %v4327, %v4325
        %v6316 = vpack.c.b16 %v4330, %v4328
        %v6317 = vpack.c.b16 %v4331, %v4329
        %v6318 = vpack.c.b16 %v4334, %v4332
        %v6319 = vpack.c.b16 %v4335, %v4333
        %v6320 = vpack.c.b16 %v4338, %v4336
        %v6321 = vpack.c.b16 %v4339, %v4337
        %v6322 = vpack.c.b16 %v4342, %v4340
        %v6323 = vpack.c.b16 %v4343, %v4341
        %v6324 = vpack.c.b16 %v4346, %v4344
        %v6325 = vpack.c.b16 %v4347, %v4345
        %v6326 = vpack.c.b16 %v4350, %v4348
        %v6327 = vpack.c.b16 %v4351, %v4349
        %v6328 = vpack.c.b16 %v4354, %v4352
        %v6329 = vpack.c.b16 %v4355, %v4353
        %v6330 = vpack.c.b16 %v4358, %v4356
        %v6331 = vpack.c.b16 %v4359, %v4357
        %v6332 = vpack.c.b16 %v4362, %v4360
        %v6333 = vpack.c.b16 %v4363, %v4361
        %v6334 = vpack.c.b16 %v4366, %v4364
        %v6335 = vpack.c.b16 %v4367, %v4365
        %v6336 = vpack.c.b16 %v4370, %v4368
        %v6337 = vpack.c.b16 %v4371, %v4369
        %v6338 = vpack.c.b16 %v4374, %v4372
        %v6339 = vpack.c.b16 %v4375, %v4373
        %v6340 = vpack.c.b16 %v4378, %v4376
        %v6341 = vpack.c.b16 %v4379, %v4377
        %v6342 = vpack.c.b16 %v4382, %v4380
        %v6343 = vpack.c.b16 %v4383, %v4381
        %v6344 = vpack.c.b16 %v4386, %v4384
        %v6345 = vpack.c.b16 %v4387, %v4385
        %v6346 = vpack.c.b16 %v4390, %v4388
        %v6347 = vpack.c.b16 %v4391, %v4389
        %v6348 = vpack.c.b16 %v4394, %v4392
        %v6349 = vpack.c.b16 %v4395, %v4393
        %v6350 = vpack.c.b16 %v4398, %v4396
        %v6351 = vpack.c.b16 %v4399, %v4397
        %v6352 = vpack.c.b16 %v4402, %v4400
        %v6353 = vpack.c.b16 %v4403, %v4401
        %v6354 = vpack.c.b16 %v4406, %v4404
        %v6355 = vpack.c.b16 %v4407, %v4405
        %v6356 = vpack.c.b16 %v4410, %v4408
        %v6357 = vpack.c.b16 %v4411, %v4409
        %v6358 = vpack.c.b16 %v4414, %v4412
        %v6359 = vpack.c.b16 %v4415, %v4413
        %v6360 = vpack.c.b16 %v4418, %v4416
        %v6361 = vpack.c.b16 %v4419, %v4417
        %v6362 = vpack.c.b16 %v4422, %v4420
        %v6363 = vpack.c.b16 %v4423, %v4421
        %v6364 = vpack.c.b16 %v4426, %v4424
        %v6365 = vpack.c.b16 %v4427, %v4425
        %v6366 = vpack.c.b16 %v4430, %v4428
        %v6367 = vpack.c.b16 %v4431, %v4429
        %v6368 = vpack.c.b16 %v4434, %v4432
        %v6369 = vpack.c.b16 %v4435, %v4433
        %v6370 = vpack.c.b16 %v4438, %v4436
        %v6371 = vpack.c.b16 %v4439, %v4437
        %v6372 = vpack.c.b16 %v4442, %v4440
        %v6373 = vpack.c.b16 %v4443, %v4441
        %v6374 = vpack.c.b16 %v4446, %v4444
        %v6375 = vpack.c.b16 %v4447, %v4445
        %v6376 = vpack.c.b16 %v4450, %v4448
        %v6377 = vpack.c.b16 %v4451, %v4449
        %v6378 = vpack.c.b16 %v4454, %v4452
        %v6379 = vpack.c.b16 %v4455, %v4453
        %v6380 = vpack.c.b16 %v4458, %v4456
        %v6381 = vpack.c.b16 %v4459, %v4457
        %v6382 = vpack.c.b16 %v4462, %v4460
        %v6383 = vpack.c.b16 %v4463, %v4461
        %v6384 = vpack.c.b16 %v4466, %v4464
        %v6385 = vpack.c.b16 %v4467, %v4465
        %v6386 = vpack.c.b16 %v4470, %v4468
        %v6387 = vpack.c.b16 %v4471, %v4469
        %v6388 = vpack.c.b16 %v4474, %v4472
        %v6389 = vpack.c.b16 %v4475, %v4473
        %v6390 = vpack.c.b16 %v4478, %v4476
        %v6391 = vpack.c.b16 %v4479, %v4477
        %v6392 = vpack.c.b16 %v4482, %v4480
        %v6393 = vpack.c.b16 %v4483, %v4481
        %v6394 = vpack.c.b16 %v4486, %v4484
        %v6395 = vpack.c.b16 %v4487, %v4485
        %v6396 = vpack.c.b16 %v4490, %v4488
        %v6397 = vpack.c.b16 %v4491, %v4489
        %v6398 = vpack.c.b16 %v4494, %v4492
        %v6399 = vpack.c.b16 %v4495, %v4493
        %v6400 = vpack.c.b16 %v4498, %v4496
        %v6401 = vpack.c.b16 %v4499, %v4497
        %v6402 = vpack.c.b16 %v4502, %v4500
        %v6403 = vpack.c.b16 %v4503, %v4501
        %v6404 = vpack.c.b16 %v4506, %v4504
        %v6405 = vpack.c.b16 %v4507, %v4505
        %v6406 = vpack.c.b16 %v4510, %v4508
        %v6407 = vpack.c.b16 %v4511, %v4509
        %v6408 = vpack.c.b16 %v4514, %v4512
        %v6409 = vpack.c.b16 %v4515, %v4513
        %v6410 = vpack.c.b16 %v4518, %v4516
        %v6411 = vpack.c.b16 %v4519, %v4517
        %v6412 = vpack.c.b16 %v4522, %v4520
        %v6413 = vpack.c.b16 %v4523, %v4521
        %v6414 = vpack.c.b16 %v4526, %v4524
        %v6415 = vpack.c.b16 %v4527, %v4525
        %v6416 = vpack.c.b16 %v4530, %v4528
        %v6417 = vpack.c.b16 %v4531, %v4529
        %v6418 = vpack.c.b16 %v4534, %v4532
        %v6419 = vpack.c.b16 %v4535, %v4533
        %v6420 = vpack.c.b16 %v4538, %v4536
        %v6421 = vpack.c.b16 %v4539, %v4537
        %v6422 = vpack.c.b16 %v4542, %v4540
        %v6423 = vpack.c.b16 %v4543, %v4541
        %v6424 = vpack.c.b16 %v4546, %v4544
        %v6425 = vpack.c.b16 %v4547, %v4545
        %v6426 = vpack.c.b16 %v4550, %v4548
        %v6427 = vpack.c.b16 %v4551, %v4549
        %v6428 = vpack.c.b16 %v4554, %v4552
        %v6429 = vpack.c.b16 %v4555, %v4553
        %v6430 = vpack.c.b16 %v4558, %v4556
        %v6431 = vpack.c.b16 %v4559, %v4557
        %v6432 = vpack.c.b16 %v4562, %v4560
        %v6433 = vpack.c.b16 %v4563, %v4561
        %v6434 = vpack.c.b16 %v4566, %v4564
        %v6435 = vpack.c.b16 %v4567, %v4565
        %v6436 = vpack.c.b16 %v4570, %v4568
        %v6437 = vpack.c.b16 %v4571, %v4569
        %v6438 = vpack.c.b16 %v4574, %v4572
        %v6439 = vpack.c.b16 %v4575, %v4573
        %v6440 = vpack.c.b16 %v4578, %v4576
        %v6441 = vpack.c.b16 %v4579, %v4577
        %v6442 = vpack.c.b16 %v4582, %v4580
        %v6443 = vpack.c.b16 %v4583, %v4581
        %v6444 = vpack.c.b16 %v4586, %v4584
        %v6445 = vpack.c.b16 %v4587, %v4585
        %v6446 = vpack.c.b16 %v4590, %v4588
        %v6447 = vpack.c.b16 %v4591, %v4589
        %v6448 = vpack.c.b16 %v4594, %v4592
        %v6449 = vpack.c.b16 %v4595, %v4593
        %v6450 = vpack.c.b16 %v4598, %v4596
        %v6451 = vpack.c.b16 %v4599, %v4597
        %v6452 = vpack.c.b16 %v4602, %v4600
        %v6453 = vpack.c.b16 %v4603, %v4601
        %v6454 = vpack.c.b16 %v4606, %v4604
        %v6455 = vpack.c.b16 %v4607, %v4605
        %v6456 = vpack.c.b16 %v4610, %v4608
        %v6457 = vpack.c.b16 %v4611, %v4609
        %v6458 = vpack.c.b16 %v4614, %v4612
        %v6459 = vpack.c.b16 %v4615, %v4613
        %v6460 = vpack.c.b16 %v4618, %v4616
        %v6461 = vpack.c.b16 %v4619, %v4617
        %v6462 = vpack.c.b16 %v4622, %v4620
        %v6463 = vpack.c.b16 %v4623, %v4621
        %v6464 = vpack.c.b16 %v4626, %v4624
        %v6465 = vpack.c.b16 %v4627, %v4625
        %v6466 = vpack.c.b16 %v4630, %v4628
        %v6467 = vpack.c.b16 %v4631, %v4629
        %v6468 = vpack.c.b16 %v4634, %v4632
        %v6469 = vpack.c.b16 %v4635, %v4633
        %v6470 = vpack.c.b16 %v4638, %v4636
        %v6471 = vpack.c.b16 %v4639, %v4637
        %v6472 = vpack.c.b16 %v4642, %v4640
        %v6473 = vpack.c.b16 %v4643, %v4641
        %v6474 = vpack.c.b16 %v4646, %v4644
        %v6475 = vpack.c.b16 %v4647, %v4645
        %v6476 = vpack.c.b16 %v4650, %v4648
        %v6477 = vpack.c.b16 %v4651, %v4649
        %v6478 = vpack.c.b16 %v4654, %v4652
        %v6479 = vpack.c.b16 %v4655, %v4653
        %v6480 = vpack.c.b16 %v4658, %v4656
        %v6481 = vpack.c.b16 %v4659, %v4657
        %v6482 = vpack.c.b16 %v4662, %v4660
        %v6483 = vpack.c.b16 %v4663, %v4661
        %v6484 = vpack.c.b16 %v4666, %v4664
        %v6485 = vpack.c.b16 %v4667, %v4665
        %v6486 = vpack.c.b16 %v4670, %v4668
        %v6487 = vpack.c.b16 %v4671, %v4669
        %v6488 = vpack.c.b16 %v4674, %v4672
        %v6489 = vpack.c.b16 %v4675, %v4673
        %v6490 = vpack.c.b16 %v4678, %v4676
        %v6491 = vpack.c.b16 %v4679, %v4677
        %v6492 = vpack.c.b16 %v4682, %v4680
        %v6493 = vpack.c.b16 %v4683, %v4681
        %v6494 = vpack.c.b16 %v4686, %v4684
        %v6495 = vpack.c.b16 %v4687, %v4685
        %v6496 = vpack.c.b16 %v4690, %v4688
        %v6497 = vpack.c.b16 %v4691, %v4689
        %v6498 = vpack.c.b16 %v4694, %v4692
        %v6499 = vpack.c.b16 %v4695, %v4693
        %v6500 = vpack.c.b16 %v4698, %v4696
        %v6501 = vpack.c.b16 %v4699, %v4697
        %v6502 = vpack.c.b16 %v4702, %v4700
        %v6503 = vpack.c.b16 %v4703, %v4701
        %v6504 = vpack.c.b16 %v4706, %v4704
        %v6505 = vpack.c.b16 %v4707, %v4705
        %v6506 = vpack.c.b16 %v4710, %v4708
        %v6507 = vpack.c.b16 %v4711, %v4709
        %v6508 = vpack.c.b16 %v4714, %v4712
        %v6509 = vpack.c.b16 %v4715, %v4713
        %v6510 = vpack.c.b16 %v4718, %v4716
        %v6511 = vpack.c.b16 %v4719, %v4717
        %v6512 = vpack.c.b16 %v4722, %v4720
        %v6513 = vpack.c.b16 %v4723, %v4721
        %v6514 = vpack.c.b16 %v4726, %v4724
        %v6515 = vpack.c.b16 %v4727, %v4725
        %v6516 = vpack.c.b16 %v4730, %v4728
        %v6517 = vpack.c.b16 %v4731, %v4729
        %v6518 = vpack.c.b16 %v4734, %v4732
        %v6519 = vpack.c.b16 %v4735, %v4733
        %v6520 = vpack.c.b16 %v4738, %v4736
        %v6521 = vpack.c.b16 %v4739, %v4737
        %v6522 = vpack.c.b16 %v4742, %v4740
        %v6523 = vpack.c.b16 %v4743, %v4741
        %v6524 = vpack.c.b16 %v4746, %v4744
        %v6525 = vpack.c.b16 %v4747, %v4745
        %v6526 = vpack.c.b16 %v4750, %v4748
        %v6527 = vpack.c.b16 %v4751, %v4749
        %v6528 = vpack.c.b16 %v4754, %v4752
        %v6529 = vpack.c.b16 %v4755, %v4753
        %v6530 = vpack.c.b16 %v4758, %v4756
        %v6531 = vpack.c.b16 %v4759, %v4757
        %v6532 = vpack.c.b16 %v4762, %v4760
        %v6533 = vpack.c.b16 %v4763, %v4761
        %v6534 = vpack.c.b16 %v4766, %v4764
        %v6535 = vpack.c.b16 %v4767, %v4765
        %v6536 = vpack.c.b16 %v4770, %v4768
        %v6537 = vpack.c.b16 %v4771, %v4769
        %v6538 = vpack.c.b16 %v4774, %v4772
        %v6539 = vpack.c.b16 %v4775, %v4773
        %v6540 = vpack.c.b16 %v4778, %v4776
        %v6541 = vpack.c.b16 %v4779, %v4777
        %v6542 = vpack.c.b16 %v4782, %v4780
        %v6543 = vpack.c.b16 %v4783, %v4781
        %v6544 = vpack.c.b16 %v4786, %v4784
        %v6545 = vpack.c.b16 %v4787, %v4785
        %v6546 = vpack.c.b16 %v4790, %v4788
        %v6547 = vpack.c.b16 %v4791, %v4789
        %v6548 = vpack.c.b16 %v4794, %v4792
        %v6549 = vpack.c.b16 %v4795, %v4793
        %v6550 = vpack.c.b16 %v4798, %v4796
        %v6551 = vpack.c.b16 %v4799, %v4797
        %v6552 = vpack.c.b16 %v4802, %v4800
        %v6553 = vpack.c.b16 %v4803, %v4801
        %v6554 = vpack.c.b16 %v4806, %v4804
        %v6555 = vpack.c.b16 %v4807, %v4805
        %v6556 = vpack.c.b16 %v4810, %v4808
        %v6557 = vpack.c.b16 %v4811, %v4809
        %v6558 = vpack.c.b16 %v4814, %v4812
        %v6559 = vpack.c.b16 %v4815, %v4813
        %v6560 = vpack.c.b16 %v4818, %v4816
        %v6561 = vpack.c.b16 %v4819, %v4817
        %v6562 = vpack.c.b16 %v4822, %v4820
        %v6563 = vpack.c.b16 %v4823, %v4821
        %v6564 = vpack.c.b16 %v4826, %v4824
        %v6565 = vpack.c.b16 %v4827, %v4825
        %v6566 = vpack.c.b16 %v4830, %v4828
        %v6567 = vpack.c.b16 %v4831, %v4829
        %v6568 = vpack.c.b16 %v4834, %v4832
        %v6569 = vpack.c.b16 %v4835, %v4833
        %v6570 = vpack.c.b16 %v4838, %v4836
        %v6571 = vpack.c.b16 %v4839, %v4837
        %v6572 = vpack.c.b16 %v4842, %v4840
        %v6573 = vpack.c.b16 %v4843, %v4841
        %v6574 = vpack.c.b16 %v4846, %v4844
        %v6575 = vpack.c.b16 %v4847, %v4845
        %v6576 = vpack.c.b16 %v4850, %v4848
        %v6577 = vpack.c.b16 %v4851, %v4849
        %v6578 = vpack.c.b16 %v4854, %v4852
        %v6579 = vpack.c.b16 %v4855, %v4853
        %v6580 = vpack.c.b16 %v4858, %v4856
        %v6581 = vpack.c.b16 %v4859, %v4857
        %v6582 = vpack.c.b16 %v4862, %v4860
        %v6583 = vpack.c.b16 %v4863, %v4861
        %v6584 = vpack.c.b16 %v4866, %v4864
        %v6585 = vpack.c.b16 %v4867, %v4865
        %v6586 = vpack.c.b16 %v4870, %v4868
        %v6587 = vpack.c.b16 %v4871, %v4869
        %v6588 = vpack.c.b16 %v4874, %v4872
        %v6589 = vpack.c.b16 %v4875, %v4873
        %v6590 = vpack.c.b16 %v4878, %v4876
        %v6591 = vpack.c.b16 %v4879, %v4877
        %v6592 = vpack.c.b16 %v4882, %v4880
        %v6593 = vpack.c.b16 %v4883, %v4881
        %v6594 = vpack.c.b16 %v4886, %v4884
        %v6595 = vpack.c.b16 %v4887, %v4885
        %v6596 = vpack.c.b16 %v4890, %v4888
        %v6597 = vpack.c.b16 %v4891, %v4889
        %v6598 = vpack.c.b16 %v4894, %v4892
        %v6599 = vpack.c.b16 %v4895, %v4893
        %v6600 = vpack.c.b16 %v4898, %v4896
        %v6601 = vpack.c.b16 %v4899, %v4897
        %v6602 = vpack.c.b16 %v4902, %v4900
        %v6603 = vpack.c.b16 %v4903, %v4901
        %v6604 = vpack.c.b16 %v4906, %v4904
        %v6605 = vpack.c.b16 %v4907, %v4905
        %v6606 = vpack.c.b16 %v4910, %v4908
        %v6607 = vpack.c.b16 %v4911, %v4909
        %v6608 = vpack.c.b16 %v4914, %v4912
        %v6609 = vpack.c.b16 %v4915, %v4913
        %v6610 = vpack.c.b16 %v4918, %v4916
        %v6611 = vpack.c.b16 %v4919, %v4917
        %v6612 = vpack.c.b16 %v4922, %v4920
        %v6613 = vpack.c.b16 %v4923, %v4921
        %v6614 = vpack.c.b16 %v4926, %v4924
        %v6615 = vpack.c.b16 %v4927, %v4925
        %v6616 = vpack.c.b16 %v4930, %v4928
        %v6617 = vpack.c.b16 %v4931, %v4929
        %v6618 = vpack.c.b16 %v4934, %v4932
        %v6619 = vpack.c.b16 %v4935, %v4933
        %v6620 = vpack.c.b16 %v4938, %v4936
        %v6621 = vpack.c.b16 %v4939, %v4937
        %v6622 = vpack.c.b16 %v4942, %v4940
        %v6623 = vpack.c.b16 %v4943, %v4941
        %v6624 = vpack.c.b16 %v4946, %v4944
        %v6625 = vpack.c.b16 %v4947, %v4945
        %v6626 = vpack.c.b16 %v4950, %v4948
        %v6627 = vpack.c.b16 %v4951, %v4949
        %v6628 = vpack.c.b16 %v4954, %v4952
        %v6629 = vpack.c.b16 %v4955, %v4953
        %v6630 = vpack.c.b16 %v4958, %v4956
        %v6631 = vpack.c.b16 %v4959, %v4957
        %v6632 = vpack.c.b16 %v4962, %v4960
        %v6633 = vpack.c.b16 %v4963, %v4961
        %v6634 = vpack.c.b16 %v4966, %v4964
        %v6635 = vpack.c.b16 %v4967, %v4965
        %v6636 = vpack.c.b16 %v4970, %v4968
        %v6637 = vpack.c.b16 %v4971, %v4969
        %v6638 = vpack.c.b16 %v4974, %v4972
        %v6639 = vpack.c.b16 %v4975, %v4973
        %v6640 = vpack.c.b16 %v4978, %v4976
        %v6641 = vpack.c.b16 %v4979, %v4977
        %v6642 = vpack.c.b16 %v4982, %v4980
        %v6643 = vpack.c.b16 %v4983, %v4981
        %v6644 = vpack.c.b16 %v4986, %v4984
        %v6645 = vpack.c.b16 %v4987, %v4985
        %v6646 = vpack.c.b16 %v4990, %v4988
        %v6647 = vpack.c.b16 %v4991, %v4989
        %v6648 = vpack.c.b16 %v4994, %v4992
        %v6649 = vpack.c.b16 %v4995, %v4993
        %v6650 = vpack.c.b16 %v4998, %v4996
        %v6651 = vpack.c.b16 %v4999, %v4997
        %v6652 = vpack.c.b16 %v5002, %v5000
        %v6653 = vpack.c.b16 %v5003, %v5001
        %v6654 = vpack.c.b16 %v5006, %v5004
        %v6655 = vpack.c.b16 %v5007, %v5005
        %v6656 = vpack.c.b16 %v5010, %v5008
        %v6657 = vpack.c.b16 %v5011, %v5009
        %v6658 = vpack.c.b16 %v5014, %v5012
        %v6659 = vpack.c.b16 %v5015, %v5013
        %v6660 = vpack.c.b16 %v5018, %v5016
        %v6661 = vpack.c.b16 %v5019, %v5017
        %v6662 = vpack.c.b16 %v5022, %v5020
        %v6663 = vpack.c.b16 %v5023, %v5021
        %v6664 = vpack.c.b16 %v5026, %v5024
        %v6665 = vpack.c.b16 %v5027, %v5025
        %v6666 = vpack.c.b16 %v5030, %v5028
        %v6667 = vpack.c.b16 %v5031, %v5029
        %v6668 = vpack.c.b16 %v5034, %v5032
        %v6669 = vpack.c.b16 %v5035, %v5033
        %v6670 = vpack.c.b16 %v5038, %v5036
        %v6671 = vpack.c.b16 %v5039, %v5037
        %v6672 = vpack.c.b16 %v5042, %v5040
        %v6673 = vpack.c.b16 %v5043, %v5041
        %v6674 = vpack.c.b16 %v5046, %v5044
        %v6675 = vpack.c.b16 %v5047, %v5045
        %v6676 = vpack.c.b16 %v5050, %v5048
        %v6677 = vpack.c.b16 %v5051, %v5049
        %v6678 = vpack.c.b16 %v5054, %v5052
        %v6679 = vpack.c.b16 %v5055, %v5053
        %v6680 = vpack.c.b16 %v5058, %v5056
        %v6681 = vpack.c.b16 %v5059, %v5057
        %v6682 = vpack.c.b16 %v5062, %v5060
        %v6683 = vpack.c.b16 %v5063, %v5061
        %v6684 = vpack.c.b16 %v5066, %v5064
        %v6685 = vpack.c.b16 %v5067, %v5065
        %v6686 = vpack.c.b16 %v5070, %v5068
        %v6687 = vpack.c.b16 %v5071, %v5069
        %v6688 = vpack.c.b16 %v5074, %v5072
        %v6689 = vpack.c.b16 %v5075, %v5073
        %v6690 = vpack.c.b16 %v5078, %v5076
        %v6691 = vpack.c.b16 %v5079, %v5077
        %v6692 = vpack.c.b16 %v5082, %v5080
        %v6693 = vpack.c.b16 %v5083, %v5081
        %v6694 = vpack.c.b16 %v5086, %v5084
        %v6695 = vpack.c.b16 %v5087, %v5085
        %v6696 = vpack.c.b16 %v5090, %v5088
        %v6697 = vpack.c.b16 %v5091, %v5089
        %v6698 = vpack.c.b16 %v5094, %v5092
        %v6699 = vpack.c.b16 %v5095, %v5093
        %v6700 = vpack.c.b16 %v5098, %v5096
        %v6701 = vpack.c.b16 %v5099, %v5097
        %v6702 = vpack.c.b16 %v5102, %v5100
        %v6703 = vpack.c.b16 %v5103, %v5101
        %v6704 = vpack.c.b16 %v5106, %v5104
        %v6705 = vpack.c.b16 %v5107, %v5105
        %v6706 = vpack.c.b16 %v5110, %v5108
        %v6707 = vpack.c.b16 %v5111, %v5109
        %v6708 = vpack.c.b16 %v5114, %v5112
        %v6709 = vpack.c.b16 %v5115, %v5113
        %v6710 = vpack.c.b16 %v5118, %v5116
        %v6711 = vpack.c.b16 %v5119, %v5117
        %v6712 = vpack.c.b16 %v5122, %v5120
        %v6713 = vpack.c.b16 %v5123, %v5121
        %v6714 = vpack.c.b16 %v5126, %v5124
        %v6715 = vpack.c.b16 %v5127, %v5125
        %v6716 = vpack.c.b16 %v5130, %v5128
        %v6717 = vpack.c.b16 %v5131, %v5129
        %v6718 = vpack.c.b16 %v5134, %v5132
        %v6719 = vpack.c.b16 %v5135, %v5133
        %v6720 = vpack.c.b16 %v5138, %v5136
        %v6721 = vpack.c.b16 %v5139, %v5137
        %v6722 = vpack.c.b16 %v5142, %v5140
        %v6723 = vpack.c.b16 %v5143, %v5141
        %v6724 = vpack.c.b16 %v5146, %v5144
        %v6725 = vpack.c.b16 %v5147, %v5145
        %v6726 = vpack.c.b16 %v5150, %v5148
        %v6727 = vpack.c.b16 %v5151, %v5149
        %v6728 = vpack.c.b16 %v5154, %v5152
        %v6729 = vpack.c.b16 %v5155, %v5153
        %v6730 = vpack.c.b16 %v5158, %v5156
        %v6731 = vpack.c.b16 %v5159, %v5157
        %v6732 = vpack.c.b16 %v5162, %v5160
        %v6733 = vpack.c.b16 %v5163, %v5161
        %v6734 = vpack.c.b16 %v5166, %v5164
        %v6735 = vpack.c.b16 %v5167, %v5165
        %v6736 = vpack.c.b16 %v5170, %v5168
        %v6737 = vpack.c.b16 %v5171, %v5169
        %v6738 = vpack.c.b16 %v5174, %v5172
        %v6739 = vpack.c.b16 %v5175, %v5173
        %v6740 = vpack.c.b16 %v5178, %v5176
        %v6741 = vpack.c.b16 %v5179, %v5177
        %v6742 = vpack.c.b16 %v5182, %v5180
        %v6743 = vpack.c.b16 %v5183, %v5181
        %v6744 = vpack.c.b16 %v5186, %v5184
        %v6745 = vpack.c.b16 %v5187, %v5185
        %v6746 = vpack.c.b16 %v5190, %v5188
        %v6747 = vpack.c.b16 %v5191, %v5189
        %v6748 = vpack.c.b16 %v5194, %v5192
        %v6749 = vpack.c.b16 %v5195, %v5193
        %v6750 = vpack.c.b16 %v5198, %v5196
        %v6751 = vpack.c.b16 %v5199, %v5197
        %v6752 = vpack.c.b16 %v5202, %v5200
        %v6753 = vpack.c.b16 %v5203, %v5201
        %v6754 = vpack.c.b16 %v5206, %v5204
        %v6755 = vpack.c.b16 %v5207, %v5205
        %v6756 = vpack.c.b16 %v5210, %v5208
        %v6757 = vpack.c.b16 %v5211, %v5209
        %v6758 = vpack.c.b16 %v5214, %v5212
        %v6759 = vpack.c.b16 %v5215, %v5213
        %v6760 = vpack.c.b16 %v5218, %v5216
        %v6761 = vpack.c.b16 %v5219, %v5217
        %v6762 = vpack.c.b16 %v5222, %v5220
        %v6763 = vpack.c.b16 %v5223, %v5221
        %v6764 = vpack.c.b16 %v5226, %v5224
        %v6765 = vpack.c.b16 %v5227, %v5225
        %v6766 = vpack.c.b16 %v5230, %v5228
        %v6767 = vpack.c.b16 %v5231, %v5229
        %v6768 = vpack.c.b16 %v5234, %v5232
        %v6769 = vpack.c.b16 %v5235, %v5233
        %v6770 = vpack.c.b16 %v5238, %v5236
        %v6771 = vpack.c.b16 %v5239, %v5237
        %v6772 = vpack.c.b16 %v5242, %v5240
        %v6773 = vpack.c.b16 %v5243, %v5241
        %v6774 = vpack.c.b16 %v5246, %v5244
        %v6775 = vpack.c.b16 %v5247, %v5245
        %v6776 = vpack.c.b16 %v5250, %v5248
        %v6777 = vpack.c.b16 %v5251, %v5249
        %v6778 = vpack.c.b16 %v5254, %v5252
        %v6779 = vpack.c.b16 %v5255, %v5253
        %v6780 = vpack.c.b16 %v5258, %v5256
        %v6781 = vpack.c.b16 %v5259, %v5257
        %v6782 = vpack.c.b16 %v5262, %v5260
        %v6783 = vpack.c.b16 %v5263, %v5261
        %v6784 = vpack.c.b16 %v5266, %v5264
        %v6785 = vpack.c.b16 %v5267, %v5265
        %v6786 = vpack.c.b16 %v5270, %v5268
        %v6787 = vpack.c.b16 %v5271, %v5269
        %v6788 = vpack.c.b16 %v5274, %v5272
        %v6789 = vpack.c.b16 %v5275, %v5273
        %v6790 = vpack.c.b16 %v5278, %v5276
        %v6791 = vpack.c.b16 %v5279, %v5277
        %v6792 = vpack.c.b16 %v5282, %v5280
        %v6793 = vpack.c.b16 %v5283, %v5281
        %v6794 = vpack.c.b16 %v5286, %v5284
        %v6795 = vpack.c.b16 %v5287, %v5285
        %v6796 = vpack.c.b16 %v5290, %v5288
        %v6797 = vpack.c.b16 %v5291, %v5289
        %v6798 = vpack.c.b16 %v5294, %v5292
        %v6799 = vpack.c.b16 %v5295, %v5293
        %v6800 = vpack.c.b16 %v5298, %v5296
        %v6801 = vpack.c.b16 %v5299, %v5297
        %v6802 = vpack.c.b16 %v5302, %v5300
        %v6803 = vpack.c.b16 %v5303, %v5301
        %v6804 = vpack.c.b16 %v5306, %v5304
        %v6805 = vpack.c.b16 %v5307, %v5305
        %v6806 = vpack.c.b16 %v5310, %v5308
        %v6807 = vpack.c.b16 %v5311, %v5309
        %v6808 = vpack.c.b16 %v5314, %v5312
        %v6809 = vpack.c.b16 %v5315, %v5313
        %v6810 = vpack.c.b16 %v5318, %v5316
        %v6811 = vpack.c.b16 %v5319, %v5317
        %v6812 = vpack.c.b16 %v5322, %v5320
        %v6813 = vpack.c.b16 %v5323, %v5321
        %v6814 = vpack.c.b16 %v5326, %v5324
        %v6815 = vpack.c.b16 %v5327, %v5325
        %v6816 = vpack.c.b16 %v5330, %v5328
        %v6817 = vpack.c.b16 %v5331, %v5329
        %v6818 = vpack.c.b16 %v5334, %v5332
        %v6819 = vpack.c.b16 %v5335, %v5333
        %v6820 = vpack.c.b16 %v5338, %v5336
        %v6821 = vpack.c.b16 %v5339, %v5337
        %v6822 = vpack.c.b16 %v5342, %v5340
        %v6823 = vpack.c.b16 %v5343, %v5341
        %v6824 = vpack.c.b16 %v5346, %v5344
        %v6825 = vpack.c.b16 %v5347, %v5345
        %v6826 = vpack.c.b16 %v5350, %v5348
        %v6827 = vpack.c.b16 %v5351, %v5349
        %v6828 = vpack.c.b16 %v5354, %v5352
        %v6829 = vpack.c.b16 %v5355, %v5353
        %v6830 = vpack.c.b16 %v5358, %v5356
        %v6831 = vpack.c.b16 %v5359, %v5357
        %v6832 = vpack.c.b16 %v5362, %v5360
        %v6833 = vpack.c.b16 %v5363, %v5361
        %v6834 = vpack.c.b16 %v5366, %v5364
        %v6835 = vpack.c.b16 %v5367, %v5365
        %v6836 = vpack.c.b16 %v5370, %v5368
        %v6837 = vpack.c.b16 %v5371, %v5369
        %v6838 = vpack.c.b16 %v5374, %v5372
        %v6839 = vpack.c.b16 %v5375, %v5373
        %v6840 = vpack.c.b16 %v5378, %v5376
        %v6841 = vpack.c.b16 %v5379, %v5377
        %v6842 = vpack.c.b16 %v5382, %v5380
        %v6843 = vpack.c.b16 %v5383, %v5381
        %v6844 = vpack.c.b16 %v5386, %v5384
        %v6845 = vpack.c.b16 %v5387, %v5385
        %v6846 = vpack.c.b16 %v5390, %v5388
        %v6847 = vpack.c.b16 %v5391, %v5389
        %v6848 = vpack.c.b16 %v5394, %v5392
        %v6849 = vpack.c.b16 %v5395, %v5393
        %v6850 = vpack.c.b16 %v5398, %v5396
        %v6851 = vpack.c.b16 %v5399, %v5397
        %v6852 = vpack.c.b16 %v5402, %v5400
        %v6853 = vpack.c.b16 %v5403, %v5401
        %v6854 = vpack.c.b16 %v5406, %v5404
        %v6855 = vpack.c.b16 %v5407, %v5405
        %v6856 = vpack.c.b16 %v5410, %v5408
        %v6857 = vpack.c.b16 %v5411, %v5409
        %v6858 = vpack.c.b16 %v5414, %v5412
        %v6859 = vpack.c.b16 %v5415, %v5413
        %v6860 = vpack.c.b16 %v5418, %v5416
        %v6861 = vpack.c.b16 %v5419, %v5417
        %v6862 = vpack.c.b16 %v5422, %v5420
        %v6863 = vpack.c.b16 %v5423, %v5421
        %v6864 = vpack.c.b16 %v5426, %v5424
        %v6865 = vpack.c.b16 %v5427, %v5425
        %v6866 = vpack.c.b16 %v5430, %v5428
        %v6867 = vpack.c.b16 %v5431, %v5429
        %v6868 = vpack.c.b16 %v5434, %v5432
        %v6869 = vpack.c.b16 %v5435, %v5433
        %v6870 = vpack.c.b16 %v5438, %v5436
        %v6871 = vpack.c.b16 %v5439, %v5437
        %v6872 = vpack.c.b16 %v5442, %v5440
        %v6873 = vpack.c.b16 %v5443, %v5441
        %v6874 = vpack.c.b16 %v5446, %v5444
        %v6875 = vpack.c.b16 %v5447, %v5445
        %v6876 = vpack.c.b16 %v5450, %v5448
        %v6877 = vpack.c.b16 %v5451, %v5449
        %v6878 = vpack.c.b16 %v5454, %v5452
        %v6879 = vpack.c.b16 %v5455, %v5453
        %v6880 = vpack.c.b16 %v5458, %v5456
        %v6881 = vpack.c.b16 %v5459, %v5457
        %v6882 = vpack.c.b16 %v5462, %v5460
        %v6883 = vpack.c.b16 %v5463, %v5461
        %v6884 = vpack.c.b16 %v5466, %v5464
        %v6885 = vpack.c.b16 %v5467, %v5465
        %v6886 = vpack.c.b16 %v5470, %v5468
        %v6887 = vpack.c.b16 %v5471, %v5469
        %v6888 = vpack.c.b16 %v5474, %v5472
        %v6889 = vpack.c.b16 %v5475, %v5473
        %v6890 = vpack.c.b16 %v5478, %v5476
        %v6891 = vpack.c.b16 %v5479, %v5477
        %v6892 = vpack.c.b16 %v5482, %v5480
        %v6893 = vpack.c.b16 %v5483, %v5481
        %v6894 = vpack.c.b16 %v5486, %v5484
        %v6895 = vpack.c.b16 %v5487, %v5485
        %v6896 = vpack.c.b16 %v5490, %v5488
        %v6897 = vpack.c.b16 %v5491, %v5489
        %v6898 = vpack.c.b16 %v5494, %v5492
        %v6899 = vpack.c.b16 %v5495, %v5493
        %v6900 = vpack.c.b16 %v5498, %v5496
        %v6901 = vpack.c.b16 %v5499, %v5497
        %v6902 = vpack.c.b16 %v5502, %v5500
        %v6903 = vpack.c.b16 %v5503, %v5501
        %v6904 = vpack.c.b16 %v5506, %v5504
        %v6905 = vpack.c.b16 %v5507, %v5505
        %v6906 = vpack.c.b16 %v5510, %v5508
        %v6907 = vpack.c.b16 %v5511, %v5509
        %v6908 = vpack.c.b16 %v5514, %v5512
        %v6909 = vpack.c.b16 %v5515, %v5513
        %v6910 = vpack.c.b16 %v5518, %v5516
        %v6911 = vpack.c.b16 %v5519, %v5517
        %v6912 = vpack.c.b16 %v5522, %v5520
        %v6913 = vpack.c.b16 %v5523, %v5521
        %v6914 = vpack.c.b16 %v5526, %v5524
        %v6915 = vpack.c.b16 %v5527, %v5525
        %v6916 = vpack.c.b16 %v5530, %v5528
        %v6917 = vpack.c.b16 %v5531, %v5529
        %v6918 = vpack.c.b16 %v5534, %v5532
        %v6919 = vpack.c.b16 %v5535, %v5533
        %v6920 = vpack.c.b16 %v5538, %v5536
        %v6921 = vpack.c.b16 %v5539, %v5537
        %v6922 = vpack.c.b16 %v5542, %v5540
        %v6923 = vpack.c.b16 %v5543, %v5541
        %v6924 = vpack.c.b16 %v5546, %v5544
        %v6925 = vpack.c.b16 %v5547, %v5545
        %v6926 = vpack.c.b16 %v5550, %v5548
        %v6927 = vpack.c.b16 %v5551, %v5549
        %v6928 = vpack.c.b16 %v5554, %v5552
        %v6929 = vpack.c.b16 %v5555, %v5553
        %v6930 = vpack.c.b16 %v5558, %v5556
        %v6931 = vpack.c.b16 %v5559, %v5557
        %v6932 = vpack.c.b16 %v5562, %v5560
        %v6933 = vpack.c.b16 %v5563, %v5561
        %v6934 = vpack.c.b16 %v5566, %v5564
        %v6935 = vpack.c.b16 %v5567, %v5565
        %v6936 = vpack.c.b16 %v5570, %v5568
        %v6937 = vpack.c.b16 %v5571, %v5569
        %v6938 = vpack.c.b16 %v5574, %v5572
        %v6939 = vpack.c.b16 %v5575, %v5573
        %v6940 = vpack.c.b16 %v5578, %v5576
        %v6941 = vpack.c.b16 %v5579, %v5577
        %v6942 = vpack.c.b16 %v5582, %v5580
        %v6943 = vpack.c.b16 %v5583, %v5581
        %v6944 = vpack.c.b16 %v5586, %v5584
        %v6945 = vpack.c.b16 %v5587, %v5585
        %v6946 = vpack.c.b16 %v5590, %v5588
        %v6947 = vpack.c.b16 %v5591, %v5589
        %v6948 = vpack.c.b16 %v5594, %v5592
        %v6949 = vpack.c.b16 %v5595, %v5593
        %v6950 = vpack.c.b16 %v5598, %v5596
        %v6951 = vpack.c.b16 %v5599, %v5597
        %v6952 = vpack.c.b16 %v5602, %v5600
        %v6953 = vpack.c.b16 %v5603, %v5601
        %v6954 = vpack.c.b16 %v5606, %v5604
        %v6955 = vpack.c.b16 %v5607, %v5605
        %v6956 = vpack.c.b16 %v5610, %v5608
        %v6957 = vpack.c.b16 %v5611, %v5609
        %v6958 = vpack.c.b16 %v5614, %v5612
        %v6959 = vpack.c.b16 %v5615, %v5613
        %v6960 = vpack.c.b16 %v5618, %v5616
        %v6961 = vpack.c.b16 %v5619, %v5617
        %v6962 = vpack.c.b16 %v5622, %v5620
        %v6963 = vpack.c.b16 %v5623, %v5621
        %v6964 = vpack.c.b16 %v5626, %v5624
        %v6965 = vpack.c.b16 %v5627, %v5625
        %v6966 = vpack.c.b16 %v5630, %v5628
        %v6967 = vpack.c.b16 %v5631, %v5629
        %v6968 = vpack.c.b16 %v5634, %v5632
        %v6969 = vpack.c.b16 %v5635, %v5633
        %v6970 = vpack.c.b16 %v5638, %v5636
        %v6971 = vpack.c.b16 %v5639, %v5637
        %v6972 = vpack.c.b16 %v5642, %v5640
        %v6973 = vpack.c.b16 %v5643, %v5641
        %v6974 = vpack.c.b16 %v5646, %v5644
        %v6975 = vpack.c.b16 %v5647, %v5645
        %v6976 = vpack.c.b16 %v5650, %v5648
        %v6977 = vpack.c.b16 %v5651, %v5649
        %v6978 = vpack.c.b16 %v5654, %v5652
        %v6979 = vpack.c.b16 %v5655, %v5653
        %v6980 = vpack.c.b16 %v5658, %v5656
        %v6981 = vpack.c.b16 %v5659, %v5657
        %v6982 = vpack.c.b16 %v5662, %v5660
        %v6983 = vpack.c.b16 %v5663, %v5661
        %v6984 = vpack.c.b16 %v5666, %v5664
        %v6985 = vpack.c.b16 %v5667, %v5665
        %v6986 = vpack.c.b16 %v5670, %v5668
        %v6987 = vpack.c.b16 %v5671, %v5669
        %v6988 = vpack.c.b16 %v5674, %v5672
        %v6989 = vpack.c.b16 %v5675, %v5673
        %v6990 = vpack.c.b16 %v5678, %v5676
        %v6991 = vpack.c.b16 %v5679, %v5677
        %v6992 = vpack.c.b16 %v5682, %v5680
        %v6993 = vpack.c.b16 %v5683, %v5681
        %v6994 = vpack.c.b16 %v5686, %v5684
        %v6995 = vpack.c.b16 %v5687, %v5685
        %v6996 = vpack.c.b16 %v5690, %v5688
        %v6997 = vpack.c.b16 %v5691, %v5689
        %v6998 = vpack.c.b16 %v5694, %v5692
        %v6999 = vpack.c.b16 %v5695, %v5693
        %v7000 = vpack.c.b16 %v5698, %v5696
        %v7001 = vpack.c.b16 %v5699, %v5697
        %v7002 = vpack.c.b16 %v5702, %v5700
        %v7003 = vpack.c.b16 %v5703, %v5701
        %v7004 = vpack.c.b16 %v5706, %v5704
        %v7005 = vpack.c.b16 %v5707, %v5705
        %v7006 = vpack.c.b16 %v5710, %v5708
        %v7007 = vpack.c.b16 %v5711, %v5709
        %v7008 = vpack.c.b16 %v5714, %v5712
        %v7009 = vpack.c.b16 %v5715, %v5713
        %v7010 = vpack.c.b16 %v5718, %v5716
        %v7011 = vpack.c.b16 %v5719, %v5717
        %v7012 = vpack.c.b16 %v5722, %v5720
        %v7013 = vpack.c.b16 %v5723, %v5721
        %v7014 = vpack.c.b16 %v5726, %v5724
        %v7015 = vpack.c.b16 %v5727, %v5725
        %v7016 = vpack.c.b16 %v5730, %v5728
        %v7017 = vpack.c.b16 %v5731, %v5729
        %v7018 = vpack.c.b16 %v5734, %v5732
        %v7019 = vpack.c.b16 %v5735, %v5733
        %v7020 = vpack.c.b16 %v5738, %v5736
        %v7021 = vpack.c.b16 %v5739, %v5737
        %v7022 = vpack.c.b16 %v5742, %v5740
        %v7023 = vpack.c.b16 %v5743, %v5741
        %8304 = vmatprep.subr.bf16.mxu0 %v5745
        %8305 = vmatpush1.bf16.msra.mxu0 %v5744
        %8306 = vmatprep.subr.bf16.mxu0 %v5747
        %8307 = vmatpush1.bf16.msra.mxu0 %v5746
        %8308 = vmatprep.subr.bf16.mxu0 %v5749
        %8309 = vmatpush1.bf16.msra.mxu0 %v5748
        %8310 = vmatprep.subr.bf16.mxu0 %v5751
        %8311 = vmatpush1.bf16.msra.mxu0 %v5750
        %8312 = vmatprep.subr.bf16.mxu0 %v5753
        %8313 = vmatpush1.bf16.msra.mxu0 %v5752
        %8314 = vmatprep.subr.bf16.mxu0 %v5755
        %8315 = vmatpush1.bf16.msra.mxu0 %v5754
        %8316 = vmatprep.subr.bf16.mxu0 %v5757
        %8317 = vmatpush1.bf16.msra.mxu0 %v5756
        %8318 = vmatprep.subr.bf16.mxu0 %v5759
        %8319 = vmatpush1.bf16.msra.mxu0 %v5758
        %8320 = vmatprep.subr.bf16.mxu0 %v5761
        %8321 = vmatpush1.bf16.msra.mxu0 %v5760
        %8322 = vmatprep.subr.bf16.mxu0 %v5763
        %8323 = vmatpush1.bf16.msra.mxu0 %v5762
        %8324 = vmatprep.subr.bf16.mxu0 %v5765
        %8325 = vmatpush1.bf16.msra.mxu0 %v5764
        %8326 = vmatprep.subr.bf16.mxu0 %v5767
        %8327 = vmatpush1.bf16.msra.mxu0 %v5766
        %8328 = vmatprep.subr.bf16.mxu0 %v5769
        %8329 = vmatpush1.bf16.msra.mxu0 %v5768
        %8330 = vmatprep.subr.bf16.mxu0 %v5771
        %8331 = vmatpush1.bf16.msra.mxu0 %v5770
        %8332 = vmatprep.subr.bf16.mxu0 %v5773
        %8333 = vmatpush1.bf16.msra.mxu0 %v5772
        %8334 = vmatprep.subr.bf16.mxu0 %v5775
        %8335 = vmatpush1.bf16.msra.mxu0 %v5774
        %8336 = vmatprep.mubr.bf16.mxu0 %v1745
        %8337 = vmatmul.mubr.bf16.gmra.mrb[0].mxu0 %v1744
        %v8338 = vpop.f32.mrb[0].mxu0
        %v8339 = vadd.f32 0.0, %v8338
        %v8340 = vpop.f32.mrb[0].mxu0
        %v8341 = vadd.f32 0.0, %v8340
        %v8342 = vpop.f32.mrb[0].mxu0
        %v8343 = vpop.f32.mrb[0].mxu0
        %8344 = vdwg.mxu0
        %8345 = vmatprep.subr.bf16.mxu0 %v5777
        %8346 = vmatpush1.bf16.msra.mxu0 %v5776
        %8347 = vmatprep.subr.bf16.mxu0 %v5779
        %8348 = vmatpush1.bf16.msra.mxu0 %v5778
        %8349 = vmatprep.subr.bf16.mxu0 %v5781
        %8350 = vmatpush1.bf16.msra.mxu0 %v5780
        %8351 = vmatprep.subr.bf16.mxu0 %v5783
        %8352 = vmatpush1.bf16.msra.mxu0 %v5782
        %8353 = vmatprep.subr.bf16.mxu0 %v5785
        %8354 = vmatpush1.bf16.msra.mxu0 %v5784
        %8355 = vmatprep.subr.bf16.mxu0 %v5787
        %8356 = vmatpush1.bf16.msra.mxu0 %v5786
        %8357 = vmatprep.subr.bf16.mxu0 %v5789
        %8358 = vmatpush1.bf16.msra.mxu0 %v5788
        %8359 = vmatprep.subr.bf16.mxu0 %v5791
        %8360 = vmatpush1.bf16.msra.mxu0 %v5790
        %8361 = vmatprep.subr.bf16.mxu0 %v5793
        %8362 = vmatpush1.bf16.msra.mxu0 %v5792
        %8363 = vmatprep.subr.bf16.mxu0 %v5795
        %8364 = vmatpush1.bf16.msra.mxu0 %v5794
        %8365 = vmatprep.subr.bf16.mxu0 %v5797
        %8366 = vmatpush1.bf16.msra.mxu0 %v5796
        %8367 = vmatprep.subr.bf16.mxu0 %v5799
        %8368 = vmatpush1.bf16.msra.mxu0 %v5798
        %8369 = vmatprep.subr.bf16.mxu0 %v5801
        %8370 = vmatpush1.bf16.msra.mxu0 %v5800
        %8371 = vmatprep.subr.bf16.mxu0 %v5803
        %8372 = vmatpush1.bf16.msra.mxu0 %v5802
        %8373 = vmatprep.subr.bf16.mxu0 %v5805
        %8374 = vmatpush1.bf16.msra.mxu0 %v5804
        %8375 = vmatprep.subr.bf16.mxu0 %v5807
        %8376 = vmatpush1.bf16.msra.mxu0 %v5806
        %8377 = vmatprep.mubr.bf16.mxu0 %v1747
        %8378 = vmatmul.mubr.bf16.gmra.mrb[0].mxu0 %v1746
        %v8379 = vpop.f32.mrb[0].mxu0
        %v8380 = vadd.f32 %v8339, %v8379
        %v8381 = vpop.f32.mrb[0].mxu0
        %v8382 = vadd.f32 %v8341, %v8381
        %v8383 = vpop.f32.mrb[0].mxu0
        %v8384 = vpop.f32.mrb[0].mxu0
        %8385 = vdwg.mxu0
        %8386 = vmatprep.subr.bf16.mxu0 %v5809
        %8387 = vmatpush1.bf16.msra.mxu0 %v5808
        %8388 = vmatprep.subr.bf16.mxu0 %v5811
        %8389 = vmatpush1.bf16.msra.mxu0 %v5810
        %8390 = vmatprep.subr.bf16.mxu0 %v5813
        %8391 = vmatpush1.bf16.msra.mxu0 %v5812
        %8392 = vmatprep.subr.bf16.mxu0 %v5815
        %8393 = vmatpush1.bf16.msra.mxu0 %v5814
        %8394 = vmatprep.subr.bf16.mxu0 %v5817
        %8395 = vmatpush1.bf16.msra.mxu0 %v5816
        %8396 = vmatprep.subr.bf16.mxu0 %v5819
        %8397 = vmatpush1.bf16.msra.mxu0 %v5818
        %8398 = vmatprep.subr.bf16.mxu0 %v5821
        %8399 = vmatpush1.bf16.msra.mxu0 %v5820
        %8400 = vmatprep.subr.bf16.mxu0 %v5823
        %8401 = vmatpush1.bf16.msra.mxu0 %v5822
        %8402 = vmatprep.subr.bf16.mxu0 %v5825
        %8403 = vmatpush1.bf16.msra.mxu0 %v5824
        %8404 = vmatprep.subr.bf16.mxu0 %v5827
        %8405 = vmatpush1.bf16.msra.mxu0 %v5826
        %8406 = vmatprep.subr.bf16.mxu0 %v5829
        %8407 = vmatpush1.bf16.msra.mxu0 %v5828
        %8408 = vmatprep.subr.bf16.mxu0 %v5831
        %8409 = vmatpush1.bf16.msra.mxu0 %v5830
        %8410 = vmatprep.subr.bf16.mxu0 %v5833
        %8411 = vmatpush1.bf16.msra.mxu0 %v5832
        %8412 = vmatprep.subr.bf16.mxu0 %v5835
        %8413 = vmatpush1.bf16.msra.mxu0 %v5834
        %8414 = vmatprep.subr.bf16.mxu0 %v5837
        %8415 = vmatpush1.bf16.msra.mxu0 %v5836
        %8416 = vmatprep.subr.bf16.mxu0 %v5839
        %8417 = vmatpush1.bf16.msra.mxu0 %v5838
        %8418 = vmatprep.mubr.bf16.mxu0 %v1749
        %8419 = vmatmul.mubr.bf16.gmra.mrb[0].mxu0 %v1748
        %v8420 = vpop.f32.mrb[0].mxu0
        %v8421 = vadd.f32 %v8380, %v8420
        %v8422 = vpop.f32.mrb[0].mxu0
        %v8423 = vadd.f32 %v8382, %v8422
        %v8424 = vpop.f32.mrb[0].mxu0
        %v8425 = vpop.f32.mrb[0].mxu0
        %8426 = vdwg.mxu0
        %8427 = vmatprep.subr.bf16.mxu0 %v5841
        %8428 = vmatpush1.bf16.msra.mxu0 %v5840
        %8429 = vmatprep.subr.bf16.mxu0 %v5843
        %8430 = vmatpush1.bf16.msra.mxu0 %v5842
        %8431 = vmatprep.subr.bf16.mxu0 %v5845
        %8432 = vmatpush1.bf16.msra.mxu0 %v5844
        %8433 = vmatprep.subr.bf16.mxu0 %v5847
        %8434 = vmatpush1.bf16.msra.mxu0 %v5846
        %8435 = vmatprep.subr.bf16.mxu0 %v5849
        %8436 = vmatpush1.bf16.msra.mxu0 %v5848
        %8437 = vmatprep.subr.bf16.mxu0 %v5851
        %8438 = vmatpush1.bf16.msra.mxu0 %v5850
        %8439 = vmatprep.subr.bf16.mxu0 %v5853
        %8440 = vmatpush1.bf16.msra.mxu0 %v5852
        %8441 = vmatprep.subr.bf16.mxu0 %v5855
        %8442 = vmatpush1.bf16.msra.mxu0 %v5854
        %8443 = vmatprep.subr.bf16.mxu0 %v5857
        %8444 = vmatpush1.bf16.msra.mxu0 %v5856
        %8445 = vmatprep.subr.bf16.mxu0 %v5859
        %8446 = vmatpush1.bf16.msra.mxu0 %v5858
        %8447 = vmatprep.subr.bf16.mxu0 %v5861
        %8448 = vmatpush1.bf16.msra.mxu0 %v5860
        %8449 = vmatprep.subr.bf16.mxu0 %v5863
        %8450 = vmatpush1.bf16.msra.mxu0 %v5862
        %8451 = vmatprep.subr.bf16.mxu0 %v5865
        %8452 = vmatpush1.bf16.msra.mxu0 %v5864
        %8453 = vmatprep.subr.bf16.mxu0 %v5867
        %8454 = vmatpush1.bf16.msra.mxu0 %v5866
        %8455 = vmatprep.subr.bf16.mxu0 %v5869
        %8456 = vmatpush1.bf16.msra.mxu0 %v5868
        %8457 = vmatprep.subr.bf16.mxu0 %v5871
        %8458 = vmatpush1.bf16.msra.mxu0 %v5870
        %8459 = vmatprep.mubr.bf16.mxu0 %v1751
        %8460 = vmatmul.mubr.bf16.gmra.mrb[0].mxu0 %v1750
        %v8461 = vpop.f32.mrb[0].mxu0
        %v8462 = vadd.f32 %v8421, %v8461
        %v8463 = vpop.f32.mrb[0].mxu0
        %v8464 = vadd.f32 %v8423, %v8463
        %v8465 = vpop.f32.mrb[0].mxu0
        %v8466 = vpop.f32.mrb[0].mxu0
        %8467 = vdwg.mxu0
        %8468 = vmatprep.subr.bf16.mxu0 %v5873
        %8469 = vmatpush1.bf16.msra.mxu0 %v5872
        %8470 = vmatprep.subr.bf16.mxu0 %v5875
        %8471 = vmatpush1.bf16.msra.mxu0 %v5874
        %8472 = vmatprep.subr.bf16.mxu0 %v5877
        %8473 = vmatpush1.bf16.msra.mxu0 %v5876
        %8474 = vmatprep.subr.bf16.mxu0 %v5879
        %8475 = vmatpush1.bf16.msra.mxu0 %v5878
        %8476 = vmatprep.subr.bf16.mxu0 %v5881
        %8477 = vmatpush1.bf16.msra.mxu0 %v5880
        %8478 = vmatprep.subr.bf16.mxu0 %v5883
        %8479 = vmatpush1.bf16.msra.mxu0 %v5882
        %8480 = vmatprep.subr.bf16.mxu0 %v5885
        %8481 = vmatpush1.bf16.msra.mxu0 %v5884
        %8482 = vmatprep.subr.bf16.mxu0 %v5887
        %8483 = vmatpush1.bf16.msra.mxu0 %v5886
        %8484 = vmatprep.subr.bf16.mxu0 %v5889
        %8485 = vmatpush1.bf16.msra.mxu0 %v5888
        %8486 = vmatprep.subr.bf16.mxu0 %v5891
        %8487 = vmatpush1.bf16.msra.mxu0 %v5890
        %8488 = vmatprep.subr.bf16.mxu0 %v5893
        %8489 = vmatpush1.bf16.msra.mxu0 %v5892
        %8490 = vmatprep.subr.bf16.mxu0 %v5895
        %8491 = vmatpush1.bf16.msra.mxu0 %v5894
        %8492 = vmatprep.subr.bf16.mxu0 %v5897
        %8493 = vmatpush1.bf16.msra.mxu0 %v5896
        %8494 = vmatprep.subr.bf16.mxu0 %v5899
        %8495 = vmatpush1.bf16.msra.mxu0 %v5898
        %8496 = vmatprep.subr.bf16.mxu0 %v5901
        %8497 = vmatpush1.bf16.msra.mxu0 %v5900
        %8498 = vmatprep.subr.bf16.mxu0 %v5903
        %8499 = vmatpush1.bf16.msra.mxu0 %v5902
        %8500 = vmatprep.mubr.bf16.mxu0 %v1753
        %8501 = vmatmul.mubr.bf16.gmra.mrb[0].mxu0 %v1752
        %v8502 = vpop.f32.mrb[0].mxu0
        %v8503 = vadd.f32 %v8462, %v8502
        %v8504 = vpop.f32.mrb[0].mxu0
        %v8505 = vadd.f32 %v8464, %v8504
        %v8506 = vpop.f32.mrb[0].mxu0
        %v8507 = vpop.f32.mrb[0].mxu0
        %8508 = vdwg.mxu0
        %8509 = vmatprep.subr.bf16.mxu0 %v5905
        %8510 = vmatpush1.bf16.msra.mxu0 %v5904
        %8511 = vmatprep.subr.bf16.mxu0 %v5907
        %8512 = vmatpush1.bf16.msra.mxu0 %v5906
        %8513 = vmatprep.subr.bf16.mxu0 %v5909
        %8514 = vmatpush1.bf16.msra.mxu0 %v5908
        %8515 = vmatprep.subr.bf16.mxu0 %v5911
        %8516 = vmatpush1.bf16.msra.mxu0 %v5910
        %8517 = vmatprep.subr.bf16.mxu0 %v5913
        %8518 = vmatpush1.bf16.msra.mxu0 %v5912
        %8519 = vmatprep.subr.bf16.mxu0 %v5915
        %8520 = vmatpush1.bf16.msra.mxu0 %v5914
        %8521 = vmatprep.subr.bf16.mxu0 %v5917
        %8522 = vmatpush1.bf16.msra.mxu0 %v5916
        %8523 = vmatprep.subr.bf16.mxu0 %v5919
        %8524 = vmatpush1.bf16.msra.mxu0 %v5918
        %8525 = vmatprep.subr.bf16.mxu0 %v5921
        %8526 = vmatpush1.bf16.msra.mxu0 %v5920
        %8527 = vmatprep.subr.bf16.mxu0 %v5923
        %8528 = vmatpush1.bf16.msra.mxu0 %v5922
        %8529 = vmatprep.subr.bf16.mxu0 %v5925
        %8530 = vmatpush1.bf16.msra.mxu0 %v5924
        %8531 = vmatprep.subr.bf16.mxu0 %v5927
        %8532 = vmatpush1.bf16.msra.mxu0 %v5926
        %8533 = vmatprep.subr.bf16.mxu0 %v5929
        %8534 = vmatpush1.bf16.msra.mxu0 %v5928
        %8535 = vmatprep.subr.bf16.mxu0 %v5931
        %8536 = vmatpush1.bf16.msra.mxu0 %v5930
        %8537 = vmatprep.subr.bf16.mxu0 %v5933
        %8538 = vmatpush1.bf16.msra.mxu0 %v5932
        %8539 = vmatprep.subr.bf16.mxu0 %v5935
        %8540 = vmatpush1.bf16.msra.mxu0 %v5934
        %8541 = vmatprep.mubr.bf16.mxu0 %v1755
        %8542 = vmatmul.mubr.bf16.gmra.mrb[0].mxu0 %v1754
        %v8543 = vpop.f32.mrb[0].mxu0
        %v8544 = vadd.f32 %v8503, %v8543
        %v8545 = vpop.f32.mrb[0].mxu0
        %v8546 = vadd.f32 %v8505, %v8545
        %v8547 = vpop.f32.mrb[0].mxu0
        %v8548 = vpop.f32.mrb[0].mxu0
        %8549 = vdwg.mxu0
        %8550 = vmatprep.subr.bf16.mxu0 %v5937
        %8551 = vmatpush1.bf16.msra.mxu0 %v5936
        %8552 = vmatprep.subr.bf16.mxu0 %v5939
        %8553 = vmatpush1.bf16.msra.mxu0 %v5938
        %8554 = vmatprep.subr.bf16.mxu0 %v5941
        %8555 = vmatpush1.bf16.msra.mxu0 %v5940
        %8556 = vmatprep.subr.bf16.mxu0 %v5943
        %8557 = vmatpush1.bf16.msra.mxu0 %v5942
        %8558 = vmatprep.subr.bf16.mxu0 %v5945
        %8559 = vmatpush1.bf16.msra.mxu0 %v5944
        %8560 = vmatprep.subr.bf16.mxu0 %v5947
        %8561 = vmatpush1.bf16.msra.mxu0 %v5946
        %8562 = vmatprep.subr.bf16.mxu0 %v5949
        %8563 = vmatpush1.bf16.msra.mxu0 %v5948
        %8564 = vmatprep.subr.bf16.mxu0 %v5951
        %8565 = vmatpush1.bf16.msra.mxu0 %v5950
        %8566 = vmatprep.subr.bf16.mxu0 %v5953
        %8567 = vmatpush1.bf16.msra.mxu0 %v5952
        %8568 = vmatprep.subr.bf16.mxu0 %v5955
        %8569 = vmatpush1.bf16.msra.mxu0 %v5954
        %8570 = vmatprep.subr.bf16.mxu0 %v5957
        %8571 = vmatpush1.bf16.msra.mxu0 %v5956
        %8572 = vmatprep.subr.bf16.mxu0 %v5959
        %8573 = vmatpush1.bf16.msra.mxu0 %v5958
        %8574 = vmatprep.subr.bf16.mxu0 %v5961
        %8575 = vmatpush1.bf16.msra.mxu0 %v5960
        %8576 = vmatprep.subr.bf16.mxu0 %v5963
        %8577 = vmatpush1.bf16.msra.mxu0 %v5962
        %8578 = vmatprep.subr.bf16.mxu0 %v5965
        %8579 = vmatpush1.bf16.msra.mxu0 %v5964
        %8580 = vmatprep.subr.bf16.mxu0 %v5967
        %8581 = vmatpush1.bf16.msra.mxu0 %v5966
        %8582 = vmatprep.mubr.bf16.mxu0 %v1757
        %8583 = vmatmul.mubr.bf16.gmra.mrb[0].mxu0 %v1756
        %v8584 = vpop.f32.mrb[0].mxu0
        %v8585 = vadd.f32 %v8544, %v8584
        %v8586 = vpop.f32.mrb[0].mxu0
        %v8587 = vadd.f32 %v8546, %v8586
        %v8588 = vpop.f32.mrb[0].mxu0
        %v8589 = vpop.f32.mrb[0].mxu0
        %8590 = vdwg.mxu0
        %8591 = vmatprep.subr.bf16.mxu0 %v5969
        %8592 = vmatpush1.bf16.msra.mxu0 %v5968
        %8593 = vmatprep.subr.bf16.mxu0 %v5971
        %8594 = vmatpush1.bf16.msra.mxu0 %v5970
        %8595 = vmatprep.subr.bf16.mxu0 %v5973
        %8596 = vmatpush1.bf16.msra.mxu0 %v5972
        %8597 = vmatprep.subr.bf16.mxu0 %v5975
        %8598 = vmatpush1.bf16.msra.mxu0 %v5974
        %8599 = vmatprep.subr.bf16.mxu0 %v5977
        %8600 = vmatpush1.bf16.msra.mxu0 %v5976
        %8601 = vmatprep.subr.bf16.mxu0 %v5979
        %8602 = vmatpush1.bf16.msra.mxu0 %v5978
        %8603 = vmatprep.subr.bf16.mxu0 %v5981
        %8604 = vmatpush1.bf16.msra.mxu0 %v5980
        %8605 = vmatprep.subr.bf16.mxu0 %v5983
        %8606 = vmatpush1.bf16.msra.mxu0 %v5982
        %8607 = vmatprep.subr.bf16.mxu0 %v5985
        %8608 = vmatpush1.bf16.msra.mxu0 %v5984
        %8609 = vmatprep.subr.bf16.mxu0 %v5987
        %8610 = vmatpush1.bf16.msra.mxu0 %v5986
        %8611 = vmatprep.subr.bf16.mxu0 %v5989
        %8612 = vmatpush1.bf16.msra.mxu0 %v5988
        %8613 = vmatprep.subr.bf16.mxu0 %v5991
        %8614 = vmatpush1.bf16.msra.mxu0 %v5990
        %8615 = vmatprep.subr.bf16.mxu0 %v5993
        %8616 = vmatpush1.bf16.msra.mxu0 %v5992
        %8617 = vmatprep.subr.bf16.mxu0 %v5995
        %8618 = vmatpush1.bf16.msra.mxu0 %v5994
        %8619 = vmatprep.subr.bf16.mxu0 %v5997
        %8620 = vmatpush1.bf16.msra.mxu0 %v5996
        %8621 = vmatprep.subr.bf16.mxu0 %v5999
        %8622 = vmatpush1.bf16.msra.mxu0 %v5998
        %8623 = vmatprep.mubr.bf16.mxu0 %v1759
        %8624 = vmatmul.mubr.bf16.gmra.mrb[0].mxu0 %v1758
        %v8625 = vpop.f32.mrb[0].mxu0
        %v8626 = vadd.f32 %v8585, %v8625
        %v8627 = vpop.f32.mrb[0].mxu0
        %v8628 = vadd.f32 %v8587, %v8627
        %v8629 = vpop.f32.mrb[0].mxu0
        %v8630 = vpop.f32.mrb[0].mxu0
        %8631 = vdwg.mxu0
        %8632 = vmatprep.subr.bf16.mxu0 %v6001
        %8633 = vmatpush1.bf16.msra.mxu0 %v6000
        %8634 = vmatprep.subr.bf16.mxu0 %v6003
        %8635 = vmatpush1.bf16.msra.mxu0 %v6002
        %8636 = vmatprep.subr.bf16.mxu0 %v6005
        %8637 = vmatpush1.bf16.msra.mxu0 %v6004
        %8638 = vmatprep.subr.bf16.mxu0 %v6007
        %8639 = vmatpush1.bf16.msra.mxu0 %v6006
        %8640 = vmatprep.subr.bf16.mxu0 %v6009
        %8641 = vmatpush1.bf16.msra.mxu0 %v6008
        %8642 = vmatprep.subr.bf16.mxu0 %v6011
        %8643 = vmatpush1.bf16.msra.mxu0 %v6010
        %8644 = vmatprep.subr.bf16.mxu0 %v6013
        %8645 = vmatpush1.bf16.msra.mxu0 %v6012
        %8646 = vmatprep.subr.bf16.mxu0 %v6015
        %8647 = vmatpush1.bf16.msra.mxu0 %v6014
        %8648 = vmatprep.subr.bf16.mxu0 %v6017
        %8649 = vmatpush1.bf16.msra.mxu0 %v6016
        %8650 = vmatprep.subr.bf16.mxu0 %v6019
        %8651 = vmatpush1.bf16.msra.mxu0 %v6018
        %8652 = vmatprep.subr.bf16.mxu0 %v6021
        %8653 = vmatpush1.bf16.msra.mxu0 %v6020
        %8654 = vmatprep.subr.bf16.mxu0 %v6023
        %8655 = vmatpush1.bf16.msra.mxu0 %v6022
        %8656 = vmatprep.subr.bf16.mxu0 %v6025
        %8657 = vmatpush1.bf16.msra.mxu0 %v6024
        %8658 = vmatprep.subr.bf16.mxu0 %v6027
        %8659 = vmatpush1.bf16.msra.mxu0 %v6026
        %8660 = vmatprep.subr.bf16.mxu0 %v6029
        %8661 = vmatpush1.bf16.msra.mxu0 %v6028
        %8662 = vmatprep.subr.bf16.mxu0 %v6031
        %8663 = vmatpush1.bf16.msra.mxu0 %v6030
        %8664 = vmatprep.mubr.bf16.mxu0 %v1761
        %8665 = vmatmul.mubr.bf16.gmra.mrb[0].mxu0 %v1760
        %v8666 = vpop.f32.mrb[0].mxu0
        %v8667 = vadd.f32 %v8626, %v8666
        %v8668 = vpop.f32.mrb[0].mxu0
        %v8669 = vadd.f32 %v8628, %v8668
        %v8670 = vpop.f32.mrb[0].mxu0
        %v8671 = vpop.f32.mrb[0].mxu0
        %8672 = vdwg.mxu0
        %8673 = vmatprep.subr.bf16.mxu0 %v6033
        %8674 = vmatpush1.bf16.msra.mxu0 %v6032
        %8675 = vmatprep.subr.bf16.mxu0 %v6035
        %8676 = vmatpush1.bf16.msra.mxu0 %v6034
        %8677 = vmatprep.subr.bf16.mxu0 %v6037
        %8678 = vmatpush1.bf16.msra.mxu0 %v6036
        %8679 = vmatprep.subr.bf16.mxu0 %v6039
        %8680 = vmatpush1.bf16.msra.mxu0 %v6038
        %8681 = vmatprep.subr.bf16.mxu0 %v6041
        %8682 = vmatpush1.bf16.msra.mxu0 %v6040
        %8683 = vmatprep.subr.bf16.mxu0 %v6043
        %8684 = vmatpush1.bf16.msra.mxu0 %v6042
        %8685 = vmatprep.subr.bf16.mxu0 %v6045
        %8686 = vmatpush1.bf16.msra.mxu0 %v6044
        %8687 = vmatprep.subr.bf16.mxu0 %v6047
        %8688 = vmatpush1.bf16.msra.mxu0 %v6046
        %8689 = vmatprep.subr.bf16.mxu0 %v6049
        %8690 = vmatpush1.bf16.msra.mxu0 %v6048
        %8691 = vmatprep.subr.bf16.mxu0 %v6051
        %8692 = vmatpush1.bf16.msra.mxu0 %v6050
        %8693 = vmatprep.subr.bf16.mxu0 %v6053
        %8694 = vmatpush1.bf16.msra.mxu0 %v6052
        %8695 = vmatprep.subr.bf16.mxu0 %v6055
        %8696 = vmatpush1.bf16.msra.mxu0 %v6054
        %8697 = vmatprep.subr.bf16.mxu0 %v6057
        %8698 = vmatpush1.bf16.msra.mxu0 %v6056
        %8699 = vmatprep.subr.bf16.mxu0 %v6059
        %8700 = vmatpush1.bf16.msra.mxu0 %v6058
        %8701 = vmatprep.subr.bf16.mxu0 %v6061
        %8702 = vmatpush1.bf16.msra.mxu0 %v6060
        %8703 = vmatprep.subr.bf16.mxu0 %v6063
        %8704 = vmatpush1.bf16.msra.mxu0 %v6062
        %8705 = vmatprep.mubr.bf16.mxu0 %v1763
        %8706 = vmatmul.mubr.bf16.gmra.mrb[0].mxu0 %v1762
        %v8707 = vpop.f32.mrb[0].mxu0
        %v8708 = vadd.f32 %v8667, %v8707
        %v8709 = vpop.f32.mrb[0].mxu0
        %v8710 = vadd.f32 %v8669, %v8709
        %v8711 = vpop.f32.mrb[0].mxu0
        %v8712 = vpop.f32.mrb[0].mxu0
        %8713 = vdwg.mxu0
        %8714 = vmatprep.subr.bf16.mxu0 %v6065
        %8715 = vmatpush1.bf16.msra.mxu0 %v6064
        %8716 = vmatprep.subr.bf16.mxu0 %v6067
        %8717 = vmatpush1.bf16.msra.mxu0 %v6066
        %8718 = vmatprep.subr.bf16.mxu0 %v6069
        %8719 = vmatpush1.bf16.msra.mxu0 %v6068
        %8720 = vmatprep.subr.bf16.mxu0 %v6071
        %8721 = vmatpush1.bf16.msra.mxu0 %v6070
        %8722 = vmatprep.subr.bf16.mxu0 %v6073
        %8723 = vmatpush1.bf16.msra.mxu0 %v6072
        %8724 = vmatprep.subr.bf16.mxu0 %v6075
        %8725 = vmatpush1.bf16.msra.mxu0 %v6074
        %8726 = vmatprep.subr.bf16.mxu0 %v6077
        %8727 = vmatpush1.bf16.msra.mxu0 %v6076
        %8728 = vmatprep.subr.bf16.mxu0 %v6079
        %8729 = vmatpush1.bf16.msra.mxu0 %v6078
        %8730 = vmatprep.subr.bf16.mxu0 %v6081
        %8731 = vmatpush1.bf16.msra.mxu0 %v6080
        %8732 = vmatprep.subr.bf16.mxu0 %v6083
        %8733 = vmatpush1.bf16.msra.mxu0 %v6082
        %8734 = vmatprep.subr.bf16.mxu0 %v6085
        %8735 = vmatpush1.bf16.msra.mxu0 %v6084
        %8736 = vmatprep.subr.bf16.mxu0 %v6087
        %8737 = vmatpush1.bf16.msra.mxu0 %v6086
        %8738 = vmatprep.subr.bf16.mxu0 %v6089
        %8739 = vmatpush1.bf16.msra.mxu0 %v6088
        %8740 = vmatprep.subr.bf16.mxu0 %v6091
        %8741 = vmatpush1.bf16.msra.mxu0 %v6090
        %8742 = vmatprep.subr.bf16.mxu0 %v6093
        %8743 = vmatpush1.bf16.msra.mxu0 %v6092
        %8744 = vmatprep.subr.bf16.mxu0 %v6095
        %8745 = vmatpush1.bf16.msra.mxu0 %v6094
        %8746 = vmatprep.mubr.bf16.mxu0 %v1765
        %8747 = vmatmul.mubr.bf16.gmra.mrb[0].mxu0 %v1764
        %v8748 = vpop.f32.mrb[0].mxu0
        %v8749 = vadd.f32 %v8708, %v8748
        %v8750 = vpop.f32.mrb[0].mxu0
        %v8751 = vadd.f32 %v8710, %v8750
        %v8752 = vpop.f32.mrb[0].mxu0
        %v8753 = vpop.f32.mrb[0].mxu0
        %8754 = vdwg.mxu0
        %8755 = vmatprep.subr.bf16.mxu0 %v6097
        %8756 = vmatpush1.bf16.msra.mxu0 %v6096
        %8757 = vmatprep.subr.bf16.mxu0 %v6099
        %8758 = vmatpush1.bf16.msra.mxu0 %v6098
        %8759 = vmatprep.subr.bf16.mxu0 %v6101
        %8760 = vmatpush1.bf16.msra.mxu0 %v6100
        %8761 = vmatprep.subr.bf16.mxu0 %v6103
        %8762 = vmatpush1.bf16.msra.mxu0 %v6102
        %8763 = vmatprep.subr.bf16.mxu0 %v6105
        %8764 = vmatpush1.bf16.msra.mxu0 %v6104
        %8765 = vmatprep.subr.bf16.mxu0 %v6107
        %8766 = vmatpush1.bf16.msra.mxu0 %v6106
        %8767 = vmatprep.subr.bf16.mxu0 %v6109
        %8768 = vmatpush1.bf16.msra.mxu0 %v6108
        %8769 = vmatprep.subr.bf16.mxu0 %v6111
        %8770 = vmatpush1.bf16.msra.mxu0 %v6110
        %8771 = vmatprep.subr.bf16.mxu0 %v6113
        %8772 = vmatpush1.bf16.msra.mxu0 %v6112
        %8773 = vmatprep.subr.bf16.mxu0 %v6115
        %8774 = vmatpush1.bf16.msra.mxu0 %v6114
        %8775 = vmatprep.subr.bf16.mxu0 %v6117
        %8776 = vmatpush1.bf16.msra.mxu0 %v6116
        %8777 = vmatprep.subr.bf16.mxu0 %v6119
        %8778 = vmatpush1.bf16.msra.mxu0 %v6118
        %8779 = vmatprep.subr.bf16.mxu0 %v6121
        %8780 = vmatpush1.bf16.msra.mxu0 %v6120
        %8781 = vmatprep.subr.bf16.mxu0 %v6123
        %8782 = vmatpush1.bf16.msra.mxu0 %v6122
        %8783 = vmatprep.subr.bf16.mxu0 %v6125
        %8784 = vmatpush1.bf16.msra.mxu0 %v6124
        %8785 = vmatprep.subr.bf16.mxu0 %v6127
        %8786 = vmatpush1.bf16.msra.mxu0 %v6126
        %8787 = vmatprep.mubr.bf16.mxu0 %v1767
        %8788 = vmatmul.mubr.bf16.gmra.mrb[0].mxu0 %v1766
        %v8789 = vpop.f32.mrb[0].mxu0
        %v8790 = vadd.f32 %v8749, %v8789
        %v8791 = vpop.f32.mrb[0].mxu0
        %v8792 = vadd.f32 %v8751, %v8791
        %v8793 = vpop.f32.mrb[0].mxu0
        %v8794 = vpop.f32.mrb[0].mxu0
        %8795 = vdwg.mxu0
        %8796 = vmatprep.subr.bf16.mxu0 %v6129
        %8797 = vmatpush1.bf16.msra.mxu0 %v6128
        %8798 = vmatprep.subr.bf16.mxu0 %v6131
        %8799 = vmatpush1.bf16.msra.mxu0 %v6130
        %8800 = vmatprep.subr.bf16.mxu0 %v6133
        %8801 = vmatpush1.bf16.msra.mxu0 %v6132
        %8802 = vmatprep.subr.bf16.mxu0 %v6135
        %8803 = vmatpush1.bf16.msra.mxu0 %v6134
        %8804 = vmatprep.subr.bf16.mxu0 %v6137
        %8805 = vmatpush1.bf16.msra.mxu0 %v6136
        %8806 = vmatprep.subr.bf16.mxu0 %v6139
        %8807 = vmatpush1.bf16.msra.mxu0 %v6138
        %8808 = vmatprep.subr.bf16.mxu0 %v6141
        %8809 = vmatpush1.bf16.msra.mxu0 %v6140
        %8810 = vmatprep.subr.bf16.mxu0 %v6143
        %8811 = vmatpush1.bf16.msra.mxu0 %v6142
        %8812 = vmatprep.subr.bf16.mxu0 %v6145
        %8813 = vmatpush1.bf16.msra.mxu0 %v6144
        %8814 = vmatprep.subr.bf16.mxu0 %v6147
        %8815 = vmatpush1.bf16.msra.mxu0 %v6146
        %8816 = vmatprep.subr.bf16.mxu0 %v6149
        %8817 = vmatpush1.bf16.msra.mxu0 %v6148
        %8818 = vmatprep.subr.bf16.mxu0 %v6151
        %8819 = vmatpush1.bf16.msra.mxu0 %v6150
        %8820 = vmatprep.subr.bf16.mxu0 %v6153
        %8821 = vmatpush1.bf16.msra.mxu0 %v6152
        %8822 = vmatprep.subr.bf16.mxu0 %v6155
        %8823 = vmatpush1.bf16.msra.mxu0 %v6154
        %8824 = vmatprep.subr.bf16.mxu0 %v6157
        %8825 = vmatpush1.bf16.msra.mxu0 %v6156
        %8826 = vmatprep.subr.bf16.mxu0 %v6159
        %8827 = vmatpush1.bf16.msra.mxu0 %v6158
        %8828 = vmatprep.mubr.bf16.mxu0 %v1769
        %8829 = vmatmul.mubr.bf16.gmra.mrb[0].mxu0 %v1768
        %v8830 = vpop.f32.mrb[0].mxu0
        %v8831 = vadd.f32 %v8790, %v8830
        %v8832 = vpop.f32.mrb[0].mxu0
        %v8833 = vadd.f32 %v8792, %v8832
        %v8834 = vpop.f32.mrb[0].mxu0
        %v8835 = vpop.f32.mrb[0].mxu0
        %8836 = vdwg.mxu0
        %8837 = vmatprep.subr.bf16.mxu0 %v6161
        %8838 = vmatpush1.bf16.msra.mxu0 %v6160
        %8839 = vmatprep.subr.bf16.mxu0 %v6163
        %8840 = vmatpush1.bf16.msra.mxu0 %v6162
        %8841 = vmatprep.subr.bf16.mxu0 %v6165
        %8842 = vmatpush1.bf16.msra.mxu0 %v6164
        %8843 = vmatprep.subr.bf16.mxu0 %v6167
        %8844 = vmatpush1.bf16.msra.mxu0 %v6166
        %8845 = vmatprep.subr.bf16.mxu0 %v6169
        %8846 = vmatpush1.bf16.msra.mxu0 %v6168
        %8847 = vmatprep.subr.bf16.mxu0 %v6171
        %8848 = vmatpush1.bf16.msra.mxu0 %v6170
        %8849 = vmatprep.subr.bf16.mxu0 %v6173
        %8850 = vmatpush1.bf16.msra.mxu0 %v6172
        %8851 = vmatprep.subr.bf16.mxu0 %v6175
        %8852 = vmatpush1.bf16.msra.mxu0 %v6174
        %8853 = vmatprep.subr.bf16.mxu0 %v6177
        %8854 = vmatpush1.bf16.msra.mxu0 %v6176
        %8855 = vmatprep.subr.bf16.mxu0 %v6179
        %8856 = vmatpush1.bf16.msra.mxu0 %v6178
        %8857 = vmatprep.subr.bf16.mxu0 %v6181
        %8858 = vmatpush1.bf16.msra.mxu0 %v6180
        %8859 = vmatprep.subr.bf16.mxu0 %v6183
        %8860 = vmatpush1.bf16.msra.mxu0 %v6182
        %8861 = vmatprep.subr.bf16.mxu0 %v6185
        %8862 = vmatpush1.bf16.msra.mxu0 %v6184
        %8863 = vmatprep.subr.bf16.mxu0 %v6187
        %8864 = vmatpush1.bf16.msra.mxu0 %v6186
        %8865 = vmatprep.subr.bf16.mxu0 %v6189
        %8866 = vmatpush1.bf16.msra.mxu0 %v6188
        %8867 = vmatprep.subr.bf16.mxu0 %v6191
        %8868 = vmatpush1.bf16.msra.mxu0 %v6190
        %8869 = vmatprep.mubr.bf16.mxu0 %v1771
        %8870 = vmatmul.mubr.bf16.gmra.mrb[0].mxu0 %v1770
        %v8871 = vpop.f32.mrb[0].mxu0
        %v8872 = vadd.f32 %v8831, %v8871
        %v8873 = vpop.f32.mrb[0].mxu0
        %v8874 = vadd.f32 %v8833, %v8873
        %v8875 = vpop.f32.mrb[0].mxu0
        %v8876 = vpop.f32.mrb[0].mxu0
        %8877 = vdwg.mxu0
        %8878 = vmatprep.subr.bf16.mxu0 %v6193
        %8879 = vmatpush1.bf16.msra.mxu0 %v6192
        %8880 = vmatprep.subr.bf16.mxu0 %v6195
        %8881 = vmatpush1.bf16.msra.mxu0 %v6194
        %8882 = vmatprep.subr.bf16.mxu0 %v6197
        %8883 = vmatpush1.bf16.msra.mxu0 %v6196
        %8884 = vmatprep.subr.bf16.mxu0 %v6199
        %8885 = vmatpush1.bf16.msra.mxu0 %v6198
        %8886 = vmatprep.subr.bf16.mxu0 %v6201
        %8887 = vmatpush1.bf16.msra.mxu0 %v6200
        %8888 = vmatprep.subr.bf16.mxu0 %v6203
        %8889 = vmatpush1.bf16.msra.mxu0 %v6202
        %8890 = vmatprep.subr.bf16.mxu0 %v6205
        %8891 = vmatpush1.bf16.msra.mxu0 %v6204
        %8892 = vmatprep.subr.bf16.mxu0 %v6207
        %8893 = vmatpush1.bf16.msra.mxu0 %v6206
        %8894 = vmatprep.subr.bf16.mxu0 %v6209
        %8895 = vmatpush1.bf16.msra.mxu0 %v6208
        %8896 = vmatprep.subr.bf16.mxu0 %v6211
        %8897 = vmatpush1.bf16.msra.mxu0 %v6210
        %8898 = vmatprep.subr.bf16.mxu0 %v6213
        %8899 = vmatpush1.bf16.msra.mxu0 %v6212
        %8900 = vmatprep.subr.bf16.mxu0 %v6215
        %8901 = vmatpush1.bf16.msra.mxu0 %v6214
        %8902 = vmatprep.subr.bf16.mxu0 %v6217
        %8903 = vmatpush1.bf16.msra.mxu0 %v6216
        %8904 = vmatprep.subr.bf16.mxu0 %v6219
        %8905 = vmatpush1.bf16.msra.mxu0 %v6218
        %8906 = vmatprep.subr.bf16.mxu0 %v6221
        %8907 = vmatpush1.bf16.msra.mxu0 %v6220
        %8908 = vmatprep.subr.bf16.mxu0 %v6223
        %8909 = vmatpush1.bf16.msra.mxu0 %v6222
        %8910 = vmatprep.mubr.bf16.mxu0 %v1773
        %8911 = vmatmul.mubr.bf16.gmra.mrb[0].mxu0 %v1772
        %v8912 = vpop.f32.mrb[0].mxu0
        %v8913 = vadd.f32 %v8872, %v8912
        %v8914 = vpop.f32.mrb[0].mxu0
        %v8915 = vadd.f32 %v8874, %v8914
        %v8916 = vpop.f32.mrb[0].mxu0
        %v8917 = vpop.f32.mrb[0].mxu0
        %8918 = vdwg.mxu0
        %8919 = vmatprep.subr.bf16.mxu0 %v6225
        %8920 = vmatpush1.bf16.msra.mxu0 %v6224
        %8921 = vmatprep.subr.bf16.mxu0 %v6227
        %8922 = vmatpush1.bf16.msra.mxu0 %v6226
        %8923 = vmatprep.subr.bf16.mxu0 %v6229
        %8924 = vmatpush1.bf16.msra.mxu0 %v6228
        %8925 = vmatprep.subr.bf16.mxu0 %v6231
        %8926 = vmatpush1.bf16.msra.mxu0 %v6230
        %8927 = vmatprep.subr.bf16.mxu0 %v6233
        %8928 = vmatpush1.bf16.msra.mxu0 %v6232
        %8929 = vmatprep.subr.bf16.mxu0 %v6235
        %8930 = vmatpush1.bf16.msra.mxu0 %v6234
        %8931 = vmatprep.subr.bf16.mxu0 %v6237
        %8932 = vmatpush1.bf16.msra.mxu0 %v6236
        %8933 = vmatprep.subr.bf16.mxu0 %v6239
        %8934 = vmatpush1.bf16.msra.mxu0 %v6238
        %8935 = vmatprep.subr.bf16.mxu0 %v6241
        %8936 = vmatpush1.bf16.msra.mxu0 %v6240
        %8937 = vmatprep.subr.bf16.mxu0 %v6243
        %8938 = vmatpush1.bf16.msra.mxu0 %v6242
        %8939 = vmatprep.subr.bf16.mxu0 %v6245
        %8940 = vmatpush1.bf16.msra.mxu0 %v6244
        %8941 = vmatprep.subr.bf16.mxu0 %v6247
        %8942 = vmatpush1.bf16.msra.mxu0 %v6246
        %8943 = vmatprep.subr.bf16.mxu0 %v6249
        %8944 = vmatpush1.bf16.msra.mxu0 %v6248
        %8945 = vmatprep.subr.bf16.mxu0 %v6251
        %8946 = vmatpush1.bf16.msra.mxu0 %v6250
        %8947 = vmatprep.subr.bf16.mxu0 %v6253
        %8948 = vmatpush1.bf16.msra.mxu0 %v6252
        %8949 = vmatprep.subr.bf16.mxu0 %v6255
        %8950 = vmatpush1.bf16.msra.mxu0 %v6254
        %8951 = vmatprep.mubr.bf16.mxu0 %v1775
        %8952 = vmatmul.mubr.bf16.gmra.mrb[0].mxu0 %v1774
        %v8953 = vpop.f32.mrb[0].mxu0
        %v8954 = vadd.f32 %v8913, %v8953
        %v8955 = vpop.f32.mrb[0].mxu0
        %v8956 = vadd.f32 %v8915, %v8955
        %v8957 = vpop.f32.mrb[0].mxu0
        %v8958 = vpop.f32.mrb[0].mxu0
        %8959 = vdwg.mxu0
        %8960 = vmatprep.subr.bf16.mxu0 %v6257
        %8961 = vmatpush1.bf16.msra.mxu0 %v6256
        %8962 = vmatprep.subr.bf16.mxu0 %v6259
        %8963 = vmatpush1.bf16.msra.mxu0 %v6258
        %8964 = vmatprep.subr.bf16.mxu0 %v6261
        %8965 = vmatpush1.bf16.msra.mxu0 %v6260
        %8966 = vmatprep.subr.bf16.mxu0 %v6263
        %8967 = vmatpush1.bf16.msra.mxu0 %v6262
        %8968 = vmatprep.subr.bf16.mxu0 %v6265
        %8969 = vmatpush1.bf16.msra.mxu0 %v6264
        %8970 = vmatprep.subr.bf16.mxu0 %v6267
        %8971 = vmatpush1.bf16.msra.mxu0 %v6266
        %8972 = vmatprep.subr.bf16.mxu0 %v6269
        %8973 = vmatpush1.bf16.msra.mxu0 %v6268
        %8974 = vmatprep.subr.bf16.mxu0 %v6271
        %8975 = vmatpush1.bf16.msra.mxu0 %v6270
        %8976 = vmatprep.subr.bf16.mxu0 %v6273
        %8977 = vmatpush1.bf16.msra.mxu0 %v6272
        %8978 = vmatprep.subr.bf16.mxu0 %v6275
        %8979 = vmatpush1.bf16.msra.mxu0 %v6274
        %8980 = vmatprep.subr.bf16.mxu0 %v6277
        %8981 = vmatpush1.bf16.msra.mxu0 %v6276
        %8982 = vmatprep.subr.bf16.mxu0 %v6279
        %8983 = vmatpush1.bf16.msra.mxu0 %v6278
        %8984 = vmatprep.subr.bf16.mxu0 %v6281
        %8985 = vmatpush1.bf16.msra.mxu0 %v6280
        %8986 = vmatprep.subr.bf16.mxu0 %v6283
        %8987 = vmatpush1.bf16.msra.mxu0 %v6282
        %8988 = vmatprep.subr.bf16.mxu0 %v6285
        %8989 = vmatpush1.bf16.msra.mxu0 %v6284
        %8990 = vmatprep.subr.bf16.mxu0 %v6287
        %8991 = vmatpush1.bf16.msra.mxu0 %v6286
        %8992 = vmatprep.mubr.bf16.mxu0 %v1777
        %8993 = vmatmul.mubr.bf16.gmra.mrb[0].mxu0 %v1776
        %v8994 = vpop.f32.mrb[0].mxu0
        %v8995 = vadd.f32 %v8954, %v8994
        %v8996 = vpop.f32.mrb[0].mxu0
        %v8997 = vadd.f32 %v8956, %v8996
        %v8998 = vpop.f32.mrb[0].mxu0
        %v8999 = vpop.f32.mrb[0].mxu0
        %9000 = vdwg.mxu0
        %9001 = vmatprep.subr.bf16.mxu0 %v6289
        %9002 = vmatpush1.bf16.msra.mxu0 %v6288
        %9003 = vmatprep.subr.bf16.mxu0 %v6291
        %9004 = vmatpush1.bf16.msra.mxu0 %v6290
        %9005 = vmatprep.subr.bf16.mxu0 %v6293
        %9006 = vmatpush1.bf16.msra.mxu0 %v6292
        %9007 = vmatprep.subr.bf16.mxu0 %v6295
        %9008 = vmatpush1.bf16.msra.mxu0 %v6294
        %9009 = vmatprep.subr.bf16.mxu0 %v6297
        %9010 = vmatpush1.bf16.msra.mxu0 %v6296
        %9011 = vmatprep.subr.bf16.mxu0 %v6299
        %9012 = vmatpush1.bf16.msra.mxu0 %v6298
        %9013 = vmatprep.subr.bf16.mxu0 %v6301
        %9014 = vmatpush1.bf16.msra.mxu0 %v6300
        %9015 = vmatprep.subr.bf16.mxu0 %v6303
        %9016 = vmatpush1.bf16.msra.mxu0 %v6302
        %9017 = vmatprep.subr.bf16.mxu0 %v6305
        %9018 = vmatpush1.bf16.msra.mxu0 %v6304
        %9019 = vmatprep.subr.bf16.mxu0 %v6307
        %9020 = vmatpush1.bf16.msra.mxu0 %v6306
        %9021 = vmatprep.subr.bf16.mxu0 %v6309
        %9022 = vmatpush1.bf16.msra.mxu0 %v6308
        %9023 = vmatprep.subr.bf16.mxu0 %v6311
        %9024 = vmatpush1.bf16.msra.mxu0 %v6310
        %9025 = vmatprep.subr.bf16.mxu0 %v6313
        %9026 = vmatpush1.bf16.msra.mxu0 %v6312
        %9027 = vmatprep.subr.bf16.mxu0 %v6315
        %9028 = vmatpush1.bf16.msra.mxu0 %v6314
        %9029 = vmatprep.subr.bf16.mxu0 %v6317
        %9030 = vmatpush1.bf16.msra.mxu0 %v6316
        %9031 = vmatprep.subr.bf16.mxu0 %v6319
        %9032 = vmatpush1.bf16.msra.mxu0 %v6318
        %9033 = vmatprep.mubr.bf16.mxu0 %v1779
        %9034 = vmatmul.mubr.bf16.gmra.mrb[0].mxu0 %v1778
        %v9035 = vpop.f32.mrb[0].mxu0
        %v9036 = vadd.f32 %v8995, %v9035
        %v9037 = vpop.f32.mrb[0].mxu0
        %v9038 = vadd.f32 %v8997, %v9037
        %v9039 = vpop.f32.mrb[0].mxu0
        %v9040 = vpop.f32.mrb[0].mxu0
        %9041 = vdwg.mxu0
        %9042 = vmatprep.subr.bf16.mxu0 %v6321
        %9043 = vmatpush1.bf16.msra.mxu0 %v6320
        %9044 = vmatprep.subr.bf16.mxu0 %v6323
        %9045 = vmatpush1.bf16.msra.mxu0 %v6322
        %9046 = vmatprep.subr.bf16.mxu0 %v6325
        %9047 = vmatpush1.bf16.msra.mxu0 %v6324
        %9048 = vmatprep.subr.bf16.mxu0 %v6327
        %9049 = vmatpush1.bf16.msra.mxu0 %v6326
        %9050 = vmatprep.subr.bf16.mxu0 %v6329
        %9051 = vmatpush1.bf16.msra.mxu0 %v6328
        %9052 = vmatprep.subr.bf16.mxu0 %v6331
        %9053 = vmatpush1.bf16.msra.mxu0 %v6330
        %9054 = vmatprep.subr.bf16.mxu0 %v6333
        %9055 = vmatpush1.bf16.msra.mxu0 %v6332
        %9056 = vmatprep.subr.bf16.mxu0 %v6335
        %9057 = vmatpush1.bf16.msra.mxu0 %v6334
        %9058 = vmatprep.subr.bf16.mxu0 %v6337
        %9059 = vmatpush1.bf16.msra.mxu0 %v6336
        %9060 = vmatprep.subr.bf16.mxu0 %v6339
        %9061 = vmatpush1.bf16.msra.mxu0 %v6338
        %9062 = vmatprep.subr.bf16.mxu0 %v6341
        %9063 = vmatpush1.bf16.msra.mxu0 %v6340
        %9064 = vmatprep.subr.bf16.mxu0 %v6343
        %9065 = vmatpush1.bf16.msra.mxu0 %v6342
        %9066 = vmatprep.subr.bf16.mxu0 %v6345
        %9067 = vmatpush1.bf16.msra.mxu0 %v6344
        %9068 = vmatprep.subr.bf16.mxu0 %v6347
        %9069 = vmatpush1.bf16.msra.mxu0 %v6346
        %9070 = vmatprep.subr.bf16.mxu0 %v6349
        %9071 = vmatpush1.bf16.msra.mxu0 %v6348
        %9072 = vmatprep.subr.bf16.mxu0 %v6351
        %9073 = vmatpush1.bf16.msra.mxu0 %v6350
        %9074 = vmatprep.mubr.bf16.mxu0 %v1781
        %9075 = vmatmul.mubr.bf16.gmra.mrb[0].mxu0 %v1780
        %v9076 = vpop.f32.mrb[0].mxu0
        %v9077 = vadd.f32 %v9036, %v9076
        %v9078 = vpop.f32.mrb[0].mxu0
        %v9079 = vadd.f32 %v9038, %v9078
        %v9080 = vpop.f32.mrb[0].mxu0
        %v9081 = vpop.f32.mrb[0].mxu0
        %9082 = vdwg.mxu0
        %9083 = vmatprep.subr.bf16.mxu0 %v6353
        %9084 = vmatpush1.bf16.msra.mxu0 %v6352
        %9085 = vmatprep.subr.bf16.mxu0 %v6355
        %9086 = vmatpush1.bf16.msra.mxu0 %v6354
        %9087 = vmatprep.subr.bf16.mxu0 %v6357
        %9088 = vmatpush1.bf16.msra.mxu0 %v6356
        %9089 = vmatprep.subr.bf16.mxu0 %v6359
        %9090 = vmatpush1.bf16.msra.mxu0 %v6358
        %9091 = vmatprep.subr.bf16.mxu0 %v6361
        %9092 = vmatpush1.bf16.msra.mxu0 %v6360
        %9093 = vmatprep.subr.bf16.mxu0 %v6363
        %9094 = vmatpush1.bf16.msra.mxu0 %v6362
        %9095 = vmatprep.subr.bf16.mxu0 %v6365
        %9096 = vmatpush1.bf16.msra.mxu0 %v6364
        %9097 = vmatprep.subr.bf16.mxu0 %v6367
        %9098 = vmatpush1.bf16.msra.mxu0 %v6366
        %9099 = vmatprep.subr.bf16.mxu0 %v6369
        %9100 = vmatpush1.bf16.msra.mxu0 %v6368
        %9101 = vmatprep.subr.bf16.mxu0 %v6371
        %9102 = vmatpush1.bf16.msra.mxu0 %v6370
        %9103 = vmatprep.subr.bf16.mxu0 %v6373
        %9104 = vmatpush1.bf16.msra.mxu0 %v6372
        %9105 = vmatprep.subr.bf16.mxu0 %v6375
        %9106 = vmatpush1.bf16.msra.mxu0 %v6374
        %9107 = vmatprep.subr.bf16.mxu0 %v6377
        %9108 = vmatpush1.bf16.msra.mxu0 %v6376
        %9109 = vmatprep.subr.bf16.mxu0 %v6379
        %9110 = vmatpush1.bf16.msra.mxu0 %v6378
        %9111 = vmatprep.subr.bf16.mxu0 %v6381
        %9112 = vmatpush1.bf16.msra.mxu0 %v6380
        %9113 = vmatprep.subr.bf16.mxu0 %v6383
        %9114 = vmatpush1.bf16.msra.mxu0 %v6382
        %9115 = vmatprep.mubr.bf16.mxu0 %v1783
        %9116 = vmatmul.mubr.bf16.gmra.mrb[0].mxu0 %v1782
        %v9117 = vpop.f32.mrb[0].mxu0
        %v9118 = vadd.f32 %v9077, %v9117
        %v9119 = vpop.f32.mrb[0].mxu0
        %v9120 = vadd.f32 %v9079, %v9119
        %v9121 = vpop.f32.mrb[0].mxu0
        %v9122 = vpop.f32.mrb[0].mxu0
        %9123 = vdwg.mxu0
        %9124 = vmatprep.subr.bf16.mxu0 %v6385
        %9125 = vmatpush1.bf16.msra.mxu0 %v6384
        %9126 = vmatprep.subr.bf16.mxu0 %v6387
        %9127 = vmatpush1.bf16.msra.mxu0 %v6386
        %9128 = vmatprep.subr.bf16.mxu0 %v6389
        %9129 = vmatpush1.bf16.msra.mxu0 %v6388
        %9130 = vmatprep.subr.bf16.mxu0 %v6391
        %9131 = vmatpush1.bf16.msra.mxu0 %v6390
        %9132 = vmatprep.subr.bf16.mxu0 %v6393
        %9133 = vmatpush1.bf16.msra.mxu0 %v6392
        %9134 = vmatprep.subr.bf16.mxu0 %v6395
        %9135 = vmatpush1.bf16.msra.mxu0 %v6394
        %9136 = vmatprep.subr.bf16.mxu0 %v6397
        %9137 = vmatpush1.bf16.msra.mxu0 %v6396
        %9138 = vmatprep.subr.bf16.mxu0 %v6399
        %9139 = vmatpush1.bf16.msra.mxu0 %v6398
        %9140 = vmatprep.subr.bf16.mxu0 %v6401
        %9141 = vmatpush1.bf16.msra.mxu0 %v6400
        %9142 = vmatprep.subr.bf16.mxu0 %v6403
        %9143 = vmatpush1.bf16.msra.mxu0 %v6402
        %9144 = vmatprep.subr.bf16.mxu0 %v6405
        %9145 = vmatpush1.bf16.msra.mxu0 %v6404
        %9146 = vmatprep.subr.bf16.mxu0 %v6407
        %9147 = vmatpush1.bf16.msra.mxu0 %v6406
        %9148 = vmatprep.subr.bf16.mxu0 %v6409
        %9149 = vmatpush1.bf16.msra.mxu0 %v6408
        %9150 = vmatprep.subr.bf16.mxu0 %v6411
        %9151 = vmatpush1.bf16.msra.mxu0 %v6410
        %9152 = vmatprep.subr.bf16.mxu0 %v6413
        %9153 = vmatpush1.bf16.msra.mxu0 %v6412
        %9154 = vmatprep.subr.bf16.mxu0 %v6415
        %9155 = vmatpush1.bf16.msra.mxu0 %v6414
        %9156 = vmatprep.mubr.bf16.mxu0 %v1785
        %9157 = vmatmul.mubr.bf16.gmra.mrb[0].mxu0 %v1784
        %v9158 = vpop.f32.mrb[0].mxu0
        %v9159 = vadd.f32 %v9118, %v9158
        %v9160 = vpop.f32.mrb[0].mxu0
        %v9161 = vadd.f32 %v9120, %v9160
        %v9162 = vpop.f32.mrb[0].mxu0
        %v9163 = vpop.f32.mrb[0].mxu0
        %9164 = vdwg.mxu0
        %9165 = vmatprep.subr.bf16.mxu0 %v6417
        %9166 = vmatpush1.bf16.msra.mxu0 %v6416
        %9167 = vmatprep.subr.bf16.mxu0 %v6419
        %9168 = vmatpush1.bf16.msra.mxu0 %v6418
        %9169 = vmatprep.subr.bf16.mxu0 %v6421
        %9170 = vmatpush1.bf16.msra.mxu0 %v6420
        %9171 = vmatprep.subr.bf16.mxu0 %v6423
        %9172 = vmatpush1.bf16.msra.mxu0 %v6422
        %9173 = vmatprep.subr.bf16.mxu0 %v6425
        %9174 = vmatpush1.bf16.msra.mxu0 %v6424
        %9175 = vmatprep.subr.bf16.mxu0 %v6427
        %9176 = vmatpush1.bf16.msra.mxu0 %v6426
        %9177 = vmatprep.subr.bf16.mxu0 %v6429
        %9178 = vmatpush1.bf16.msra.mxu0 %v6428
        %9179 = vmatprep.subr.bf16.mxu0 %v6431
        %9180 = vmatpush1.bf16.msra.mxu0 %v6430
        %9181 = vmatprep.subr.bf16.mxu0 %v6433
        %9182 = vmatpush1.bf16.msra.mxu0 %v6432
        %9183 = vmatprep.subr.bf16.mxu0 %v6435
        %9184 = vmatpush1.bf16.msra.mxu0 %v6434
        %9185 = vmatprep.subr.bf16.mxu0 %v6437
        %9186 = vmatpush1.bf16.msra.mxu0 %v6436
        %9187 = vmatprep.subr.bf16.mxu0 %v6439
        %9188 = vmatpush1.bf16.msra.mxu0 %v6438
        %9189 = vmatprep.subr.bf16.mxu0 %v6441
        %9190 = vmatpush1.bf16.msra.mxu0 %v6440
        %9191 = vmatprep.subr.bf16.mxu0 %v6443
        %9192 = vmatpush1.bf16.msra.mxu0 %v6442
        %9193 = vmatprep.subr.bf16.mxu0 %v6445
        %9194 = vmatpush1.bf16.msra.mxu0 %v6444
        %9195 = vmatprep.subr.bf16.mxu0 %v6447
        %9196 = vmatpush1.bf16.msra.mxu0 %v6446
        %9197 = vmatprep.mubr.bf16.mxu0 %v1787
        %9198 = vmatmul.mubr.bf16.gmra.mrb[0].mxu0 %v1786
        %v9199 = vpop.f32.mrb[0].mxu0
        %v9200 = vadd.f32 %v9159, %v9199
        %v9201 = vpop.f32.mrb[0].mxu0
        %v9202 = vadd.f32 %v9161, %v9201
        %v9203 = vpop.f32.mrb[0].mxu0
        %v9204 = vpop.f32.mrb[0].mxu0
        %9205 = vdwg.mxu0
        %9206 = vmatprep.subr.bf16.mxu0 %v6449
        %9207 = vmatpush1.bf16.msra.mxu0 %v6448
        %9208 = vmatprep.subr.bf16.mxu0 %v6451
        %9209 = vmatpush1.bf16.msra.mxu0 %v6450
        %9210 = vmatprep.subr.bf16.mxu0 %v6453
        %9211 = vmatpush1.bf16.msra.mxu0 %v6452
        %9212 = vmatprep.subr.bf16.mxu0 %v6455
        %9213 = vmatpush1.bf16.msra.mxu0 %v6454
        %9214 = vmatprep.subr.bf16.mxu0 %v6457
        %9215 = vmatpush1.bf16.msra.mxu0 %v6456
        %9216 = vmatprep.subr.bf16.mxu0 %v6459
        %9217 = vmatpush1.bf16.msra.mxu0 %v6458
        %9218 = vmatprep.subr.bf16.mxu0 %v6461
        %9219 = vmatpush1.bf16.msra.mxu0 %v6460
        %9220 = vmatprep.subr.bf16.mxu0 %v6463
        %9221 = vmatpush1.bf16.msra.mxu0 %v6462
        %9222 = vmatprep.subr.bf16.mxu0 %v6465
        %9223 = vmatpush1.bf16.msra.mxu0 %v6464
        %9224 = vmatprep.subr.bf16.mxu0 %v6467
        %9225 = vmatpush1.bf16.msra.mxu0 %v6466
        %9226 = vmatprep.subr.bf16.mxu0 %v6469
        %9227 = vmatpush1.bf16.msra.mxu0 %v6468
        %9228 = vmatprep.subr.bf16.mxu0 %v6471
        %9229 = vmatpush1.bf16.msra.mxu0 %v6470
        %9230 = vmatprep.subr.bf16.mxu0 %v6473
        %9231 = vmatpush1.bf16.msra.mxu0 %v6472
        %9232 = vmatprep.subr.bf16.mxu0 %v6475
        %9233 = vmatpush1.bf16.msra.mxu0 %v6474
        %9234 = vmatprep.subr.bf16.mxu0 %v6477
        %9235 = vmatpush1.bf16.msra.mxu0 %v6476
        %9236 = vmatprep.subr.bf16.mxu0 %v6479
        %9237 = vmatpush1.bf16.msra.mxu0 %v6478
        %9238 = vmatprep.mubr.bf16.mxu0 %v1789
        %9239 = vmatmul.mubr.bf16.gmra.mrb[0].mxu0 %v1788
        %v9240 = vpop.f32.mrb[0].mxu0
        %v9241 = vadd.f32 %v9200, %v9240
        %v9242 = vpop.f32.mrb[0].mxu0
        %v9243 = vadd.f32 %v9202, %v9242
        %v9244 = vpop.f32.mrb[0].mxu0
        %v9245 = vpop.f32.mrb[0].mxu0
        %9246 = vdwg.mxu0
        %9247 = vmatprep.subr.bf16.mxu0 %v6481
        %9248 = vmatpush1.bf16.msra.mxu0 %v6480
        %9249 = vmatprep.subr.bf16.mxu0 %v6483
        %9250 = vmatpush1.bf16.msra.mxu0 %v6482
        %9251 = vmatprep.subr.bf16.mxu0 %v6485
        %9252 = vmatpush1.bf16.msra.mxu0 %v6484
        %9253 = vmatprep.subr.bf16.mxu0 %v6487
        %9254 = vmatpush1.bf16.msra.mxu0 %v6486
        %9255 = vmatprep.subr.bf16.mxu0 %v6489
        %9256 = vmatpush1.bf16.msra.mxu0 %v6488
        %9257 = vmatprep.subr.bf16.mxu0 %v6491
        %9258 = vmatpush1.bf16.msra.mxu0 %v6490
        %9259 = vmatprep.subr.bf16.mxu0 %v6493
        %9260 = vmatpush1.bf16.msra.mxu0 %v6492
        %9261 = vmatprep.subr.bf16.mxu0 %v6495
        %9262 = vmatpush1.bf16.msra.mxu0 %v6494
        %9263 = vmatprep.subr.bf16.mxu0 %v6497
        %9264 = vmatpush1.bf16.msra.mxu0 %v6496
        %9265 = vmatprep.subr.bf16.mxu0 %v6499
        %9266 = vmatpush1.bf16.msra.mxu0 %v6498
        %9267 = vmatprep.subr.bf16.mxu0 %v6501
        %9268 = vmatpush1.bf16.msra.mxu0 %v6500
        %9269 = vmatprep.subr.bf16.mxu0 %v6503
        %9270 = vmatpush1.bf16.msra.mxu0 %v6502
        %9271 = vmatprep.subr.bf16.mxu0 %v6505
        %9272 = vmatpush1.bf16.msra.mxu0 %v6504
        %9273 = vmatprep.subr.bf16.mxu0 %v6507
        %9274 = vmatpush1.bf16.msra.mxu0 %v6506
        %9275 = vmatprep.subr.bf16.mxu0 %v6509
        %9276 = vmatpush1.bf16.msra.mxu0 %v6508
        %9277 = vmatprep.subr.bf16.mxu0 %v6511
        %9278 = vmatpush1.bf16.msra.mxu0 %v6510
        %9279 = vmatprep.mubr.bf16.mxu0 %v1791
        %9280 = vmatmul.mubr.bf16.gmra.mrb[0].mxu0 %v1790
        %v9281 = vpop.f32.mrb[0].mxu0
        %v9282 = vadd.f32 %v9241, %v9281
        %v9283 = vpop.f32.mrb[0].mxu0
        %v9284 = vadd.f32 %v9243, %v9283
        %v9285 = vpop.f32.mrb[0].mxu0
        %v9286 = vpop.f32.mrb[0].mxu0
        %9287 = vdwg.mxu0
        %9288 = vmatprep.subr.bf16.mxu0 %v6513
        %9289 = vmatpush1.bf16.msra.mxu0 %v6512
        %9290 = vmatprep.subr.bf16.mxu0 %v6515
        %9291 = vmatpush1.bf16.msra.mxu0 %v6514
        %9292 = vmatprep.subr.bf16.mxu0 %v6517
        %9293 = vmatpush1.bf16.msra.mxu0 %v6516
        %9294 = vmatprep.subr.bf16.mxu0 %v6519
        %9295 = vmatpush1.bf16.msra.mxu0 %v6518
        %9296 = vmatprep.subr.bf16.mxu0 %v6521
        %9297 = vmatpush1.bf16.msra.mxu0 %v6520
        %9298 = vmatprep.subr.bf16.mxu0 %v6523
        %9299 = vmatpush1.bf16.msra.mxu0 %v6522
        %9300 = vmatprep.subr.bf16.mxu0 %v6525
        %9301 = vmatpush1.bf16.msra.mxu0 %v6524
        %9302 = vmatprep.subr.bf16.mxu0 %v6527
        %9303 = vmatpush1.bf16.msra.mxu0 %v6526
        %9304 = vmatprep.subr.bf16.mxu0 %v6529
        %9305 = vmatpush1.bf16.msra.mxu0 %v6528
        %9306 = vmatprep.subr.bf16.mxu0 %v6531
        %9307 = vmatpush1.bf16.msra.mxu0 %v6530
        %9308 = vmatprep.subr.bf16.mxu0 %v6533
        %9309 = vmatpush1.bf16.msra.mxu0 %v6532
        %9310 = vmatprep.subr.bf16.mxu0 %v6535
        %9311 = vmatpush1.bf16.msra.mxu0 %v6534
        %9312 = vmatprep.subr.bf16.mxu0 %v6537
        %9313 = vmatpush1.bf16.msra.mxu0 %v6536
        %9314 = vmatprep.subr.bf16.mxu0 %v6539
        %9315 = vmatpush1.bf16.msra.mxu0 %v6538
        %9316 = vmatprep.subr.bf16.mxu0 %v6541
        %9317 = vmatpush1.bf16.msra.mxu0 %v6540
        %9318 = vmatprep.subr.bf16.mxu0 %v6543
        %9319 = vmatpush1.bf16.msra.mxu0 %v6542
        %9320 = vmatprep.mubr.bf16.mxu0 %v1793
        %9321 = vmatmul.mubr.bf16.gmra.mrb[0].mxu0 %v1792
        %v9322 = vpop.f32.mrb[0].mxu0
        %v9323 = vadd.f32 %v9282, %v9322
        %v9324 = vpop.f32.mrb[0].mxu0
        %v9325 = vadd.f32 %v9284, %v9324
        %v9326 = vpop.f32.mrb[0].mxu0
        %v9327 = vpop.f32.mrb[0].mxu0
        %9328 = vdwg.mxu0
        %9329 = vmatprep.subr.bf16.mxu0 %v6545
        %9330 = vmatpush1.bf16.msra.mxu0 %v6544
        %9331 = vmatprep.subr.bf16.mxu0 %v6547
        %9332 = vmatpush1.bf16.msra.mxu0 %v6546
        %9333 = vmatprep.subr.bf16.mxu0 %v6549
        %9334 = vmatpush1.bf16.msra.mxu0 %v6548
        %9335 = vmatprep.subr.bf16.mxu0 %v6551
        %9336 = vmatpush1.bf16.msra.mxu0 %v6550
        %9337 = vmatprep.subr.bf16.mxu0 %v6553
        %9338 = vmatpush1.bf16.msra.mxu0 %v6552
        %9339 = vmatprep.subr.bf16.mxu0 %v6555
        %9340 = vmatpush1.bf16.msra.mxu0 %v6554
        %9341 = vmatprep.subr.bf16.mxu0 %v6557
        %9342 = vmatpush1.bf16.msra.mxu0 %v6556
        %9343 = vmatprep.subr.bf16.mxu0 %v6559
        %9344 = vmatpush1.bf16.msra.mxu0 %v6558
        %9345 = vmatprep.subr.bf16.mxu0 %v6561
        %9346 = vmatpush1.bf16.msra.mxu0 %v6560
        %9347 = vmatprep.subr.bf16.mxu0 %v6563
        %9348 = vmatpush1.bf16.msra.mxu0 %v6562
        %9349 = vmatprep.subr.bf16.mxu0 %v6565
        %9350 = vmatpush1.bf16.msra.mxu0 %v6564
        %9351 = vmatprep.subr.bf16.mxu0 %v6567
        %9352 = vmatpush1.bf16.msra.mxu0 %v6566
        %9353 = vmatprep.subr.bf16.mxu0 %v6569
        %9354 = vmatpush1.bf16.msra.mxu0 %v6568
        %9355 = vmatprep.subr.bf16.mxu0 %v6571
        %9356 = vmatpush1.bf16.msra.mxu0 %v6570
        %9357 = vmatprep.subr.bf16.mxu0 %v6573
        %9358 = vmatpush1.bf16.msra.mxu0 %v6572
        %9359 = vmatprep.subr.bf16.mxu0 %v6575
        %9360 = vmatpush1.bf16.msra.mxu0 %v6574
        %9361 = vmatprep.mubr.bf16.mxu0 %v1795
        %9362 = vmatmul.mubr.bf16.gmra.mrb[0].mxu0 %v1794
        %v9363 = vpop.f32.mrb[0].mxu0
        %v9364 = vadd.f32 %v9323, %v9363
        %v9365 = vpop.f32.mrb[0].mxu0
        %v9366 = vadd.f32 %v9325, %v9365
        %v9367 = vpop.f32.mrb[0].mxu0
        %v9368 = vpop.f32.mrb[0].mxu0
        %9369 = vdwg.mxu0
        %9370 = vmatprep.subr.bf16.mxu0 %v6577
        %9371 = vmatpush1.bf16.msra.mxu0 %v6576
        %9372 = vmatprep.subr.bf16.mxu0 %v6579
        %9373 = vmatpush1.bf16.msra.mxu0 %v6578
        %9374 = vmatprep.subr.bf16.mxu0 %v6581
        %9375 = vmatpush1.bf16.msra.mxu0 %v6580
        %9376 = vmatprep.subr.bf16.mxu0 %v6583
        %9377 = vmatpush1.bf16.msra.mxu0 %v6582
        %9378 = vmatprep.subr.bf16.mxu0 %v6585
        %9379 = vmatpush1.bf16.msra.mxu0 %v6584
        %9380 = vmatprep.subr.bf16.mxu0 %v6587
        %9381 = vmatpush1.bf16.msra.mxu0 %v6586
        %9382 = vmatprep.subr.bf16.mxu0 %v6589
        %9383 = vmatpush1.bf16.msra.mxu0 %v6588
        %9384 = vmatprep.subr.bf16.mxu0 %v6591
        %9385 = vmatpush1.bf16.msra.mxu0 %v6590
        %9386 = vmatprep.subr.bf16.mxu0 %v6593
        %9387 = vmatpush1.bf16.msra.mxu0 %v6592
        %9388 = vmatprep.subr.bf16.mxu0 %v6595
        %9389 = vmatpush1.bf16.msra.mxu0 %v6594
        %9390 = vmatprep.subr.bf16.mxu0 %v6597
        %9391 = vmatpush1.bf16.msra.mxu0 %v6596
        %9392 = vmatprep.subr.bf16.mxu0 %v6599
        %9393 = vmatpush1.bf16.msra.mxu0 %v6598
        %9394 = vmatprep.subr.bf16.mxu0 %v6601
        %9395 = vmatpush1.bf16.msra.mxu0 %v6600
        %9396 = vmatprep.subr.bf16.mxu0 %v6603
        %9397 = vmatpush1.bf16.msra.mxu0 %v6602
        %9398 = vmatprep.subr.bf16.mxu0 %v6605
        %9399 = vmatpush1.bf16.msra.mxu0 %v6604
        %9400 = vmatprep.subr.bf16.mxu0 %v6607
        %9401 = vmatpush1.bf16.msra.mxu0 %v6606
        %9402 = vmatprep.mubr.bf16.mxu0 %v1797
        %9403 = vmatmul.mubr.bf16.gmra.mrb[0].mxu0 %v1796
        %v9404 = vpop.f32.mrb[0].mxu0
        %v9405 = vadd.f32 %v9364, %v9404
        %v9406 = vpop.f32.mrb[0].mxu0
        %v9407 = vadd.f32 %v9366, %v9406
        %v9408 = vpop.f32.mrb[0].mxu0
        %v9409 = vpop.f32.mrb[0].mxu0
        %9410 = vdwg.mxu0
        %9411 = vmatprep.subr.bf16.mxu0 %v6609
        %9412 = vmatpush1.bf16.msra.mxu0 %v6608
        %9413 = vmatprep.subr.bf16.mxu0 %v6611
        %9414 = vmatpush1.bf16.msra.mxu0 %v6610
        %9415 = vmatprep.subr.bf16.mxu0 %v6613
        %9416 = vmatpush1.bf16.msra.mxu0 %v6612
        %9417 = vmatprep.subr.bf16.mxu0 %v6615
        %9418 = vmatpush1.bf16.msra.mxu0 %v6614
        %9419 = vmatprep.subr.bf16.mxu0 %v6617
        %9420 = vmatpush1.bf16.msra.mxu0 %v6616
        %9421 = vmatprep.subr.bf16.mxu0 %v6619
        %9422 = vmatpush1.bf16.msra.mxu0 %v6618
        %9423 = vmatprep.subr.bf16.mxu0 %v6621
        %9424 = vmatpush1.bf16.msra.mxu0 %v6620
        %9425 = vmatprep.subr.bf16.mxu0 %v6623
        %9426 = vmatpush1.bf16.msra.mxu0 %v6622
        %9427 = vmatprep.subr.bf16.mxu0 %v6625
        %9428 = vmatpush1.bf16.msra.mxu0 %v6624
        %9429 = vmatprep.subr.bf16.mxu0 %v6627
        %9430 = vmatpush1.bf16.msra.mxu0 %v6626
        %9431 = vmatprep.subr.bf16.mxu0 %v6629
        %9432 = vmatpush1.bf16.msra.mxu0 %v6628
        %9433 = vmatprep.subr.bf16.mxu0 %v6631
        %9434 = vmatpush1.bf16.msra.mxu0 %v6630
        %9435 = vmatprep.subr.bf16.mxu0 %v6633
        %9436 = vmatpush1.bf16.msra.mxu0 %v6632
        %9437 = vmatprep.subr.bf16.mxu0 %v6635
        %9438 = vmatpush1.bf16.msra.mxu0 %v6634
        %9439 = vmatprep.subr.bf16.mxu0 %v6637
        %9440 = vmatpush1.bf16.msra.mxu0 %v6636
        %9441 = vmatprep.subr.bf16.mxu0 %v6639
        %9442 = vmatpush1.bf16.msra.mxu0 %v6638
        %9443 = vmatprep.mubr.bf16.mxu0 %v1799
        %9444 = vmatmul.mubr.bf16.gmra.mrb[0].mxu0 %v1798
        %v9445 = vpop.f32.mrb[0].mxu0
        %v9446 = vadd.f32 %v9405, %v9445
        %v9447 = vpop.f32.mrb[0].mxu0
        %v9448 = vadd.f32 %v9407, %v9447
        %v9449 = vpop.f32.mrb[0].mxu0
        %v9450 = vpop.f32.mrb[0].mxu0
        %9451 = vdwg.mxu0
        %9452 = vmatprep.subr.bf16.mxu0 %v6641
        %9453 = vmatpush1.bf16.msra.mxu0 %v6640
        %9454 = vmatprep.subr.bf16.mxu0 %v6643
        %9455 = vmatpush1.bf16.msra.mxu0 %v6642
        %9456 = vmatprep.subr.bf16.mxu0 %v6645
        %9457 = vmatpush1.bf16.msra.mxu0 %v6644
        %9458 = vmatprep.subr.bf16.mxu0 %v6647
        %9459 = vmatpush1.bf16.msra.mxu0 %v6646
        %9460 = vmatprep.subr.bf16.mxu0 %v6649
        %9461 = vmatpush1.bf16.msra.mxu0 %v6648
        %9462 = vmatprep.subr.bf16.mxu0 %v6651
        %9463 = vmatpush1.bf16.msra.mxu0 %v6650
        %9464 = vmatprep.subr.bf16.mxu0 %v6653
        %9465 = vmatpush1.bf16.msra.mxu0 %v6652
        %9466 = vmatprep.subr.bf16.mxu0 %v6655
        %9467 = vmatpush1.bf16.msra.mxu0 %v6654
        %9468 = vmatprep.subr.bf16.mxu0 %v6657
        %9469 = vmatpush1.bf16.msra.mxu0 %v6656
        %9470 = vmatprep.subr.bf16.mxu0 %v6659
        %9471 = vmatpush1.bf16.msra.mxu0 %v6658
        %9472 = vmatprep.subr.bf16.mxu0 %v6661
        %9473 = vmatpush1.bf16.msra.mxu0 %v6660
        %9474 = vmatprep.subr.bf16.mxu0 %v6663
        %9475 = vmatpush1.bf16.msra.mxu0 %v6662
        %9476 = vmatprep.subr.bf16.mxu0 %v6665
        %9477 = vmatpush1.bf16.msra.mxu0 %v6664
        %9478 = vmatprep.subr.bf16.mxu0 %v6667
        %9479 = vmatpush1.bf16.msra.mxu0 %v6666
        %9480 = vmatprep.subr.bf16.mxu0 %v6669
        %9481 = vmatpush1.bf16.msra.mxu0 %v6668
        %9482 = vmatprep.subr.bf16.mxu0 %v6671
        %9483 = vmatpush1.bf16.msra.mxu0 %v6670
        %9484 = vmatprep.mubr.bf16.mxu0 %v1801
        %9485 = vmatmul.mubr.bf16.gmra.mrb[0].mxu0 %v1800
        %v9486 = vpop.f32.mrb[0].mxu0
        %v9487 = vadd.f32 %v9446, %v9486
        %v9488 = vpop.f32.mrb[0].mxu0
        %v9489 = vadd.f32 %v9448, %v9488
        %v9490 = vpop.f32.mrb[0].mxu0
        %v9491 = vpop.f32.mrb[0].mxu0
        %9492 = vdwg.mxu0
        %9493 = vmatprep.subr.bf16.mxu0 %v6673
        %9494 = vmatpush1.bf16.msra.mxu0 %v6672
        %9495 = vmatprep.subr.bf16.mxu0 %v6675
        %9496 = vmatpush1.bf16.msra.mxu0 %v6674
        %9497 = vmatprep.subr.bf16.mxu0 %v6677
        %9498 = vmatpush1.bf16.msra.mxu0 %v6676
        %9499 = vmatprep.subr.bf16.mxu0 %v6679
        %9500 = vmatpush1.bf16.msra.mxu0 %v6678
        %9501 = vmatprep.subr.bf16.mxu0 %v6681
        %9502 = vmatpush1.bf16.msra.mxu0 %v6680
        %9503 = vmatprep.subr.bf16.mxu0 %v6683
        %9504 = vmatpush1.bf16.msra.mxu0 %v6682
        %9505 = vmatprep.subr.bf16.mxu0 %v6685
        %9506 = vmatpush1.bf16.msra.mxu0 %v6684
        %9507 = vmatprep.subr.bf16.mxu0 %v6687
        %9508 = vmatpush1.bf16.msra.mxu0 %v6686
        %9509 = vmatprep.subr.bf16.mxu0 %v6689
        %9510 = vmatpush1.bf16.msra.mxu0 %v6688
        %9511 = vmatprep.subr.bf16.mxu0 %v6691
        %9512 = vmatpush1.bf16.msra.mxu0 %v6690
        %9513 = vmatprep.subr.bf16.mxu0 %v6693
        %9514 = vmatpush1.bf16.msra.mxu0 %v6692
        %9515 = vmatprep.subr.bf16.mxu0 %v6695
        %9516 = vmatpush1.bf16.msra.mxu0 %v6694
        %9517 = vmatprep.subr.bf16.mxu0 %v6697
        %9518 = vmatpush1.bf16.msra.mxu0 %v6696
        %9519 = vmatprep.subr.bf16.mxu0 %v6699
        %9520 = vmatpush1.bf16.msra.mxu0 %v6698
        %9521 = vmatprep.subr.bf16.mxu0 %v6701
        %9522 = vmatpush1.bf16.msra.mxu0 %v6700
        %9523 = vmatprep.subr.bf16.mxu0 %v6703
        %9524 = vmatpush1.bf16.msra.mxu0 %v6702
        %9525 = vmatprep.mubr.bf16.mxu0 %v1803
        %9526 = vmatmul.mubr.bf16.gmra.mrb[0].mxu0 %v1802
        %v9527 = vpop.f32.mrb[0].mxu0
        %v9528 = vadd.f32 %v9487, %v9527
        %v9529 = vpop.f32.mrb[0].mxu0
        %v9530 = vadd.f32 %v9489, %v9529
        %v9531 = vpop.f32.mrb[0].mxu0
        %v9532 = vpop.f32.mrb[0].mxu0
        %9533 = vdwg.mxu0
        %9534 = vmatprep.subr.bf16.mxu0 %v6705
        %9535 = vmatpush1.bf16.msra.mxu0 %v6704
        %9536 = vmatprep.subr.bf16.mxu0 %v6707
        %9537 = vmatpush1.bf16.msra.mxu0 %v6706
        %9538 = vmatprep.subr.bf16.mxu0 %v6709
        %9539 = vmatpush1.bf16.msra.mxu0 %v6708
        %9540 = vmatprep.subr.bf16.mxu0 %v6711
        %9541 = vmatpush1.bf16.msra.mxu0 %v6710
        %9542 = vmatprep.subr.bf16.mxu0 %v6713
        %9543 = vmatpush1.bf16.msra.mxu0 %v6712
        %9544 = vmatprep.subr.bf16.mxu0 %v6715
        %9545 = vmatpush1.bf16.msra.mxu0 %v6714
        %9546 = vmatprep.subr.bf16.mxu0 %v6717
        %9547 = vmatpush1.bf16.msra.mxu0 %v6716
        %9548 = vmatprep.subr.bf16.mxu0 %v6719
        %9549 = vmatpush1.bf16.msra.mxu0 %v6718
        %9550 = vmatprep.subr.bf16.mxu0 %v6721
        %9551 = vmatpush1.bf16.msra.mxu0 %v6720
        %9552 = vmatprep.subr.bf16.mxu0 %v6723
        %9553 = vmatpush1.bf16.msra.mxu0 %v6722
        %9554 = vmatprep.subr.bf16.mxu0 %v6725
        %9555 = vmatpush1.bf16.msra.mxu0 %v6724
        %9556 = vmatprep.subr.bf16.mxu0 %v6727
        %9557 = vmatpush1.bf16.msra.mxu0 %v6726
        %9558 = vmatprep.subr.bf16.mxu0 %v6729
        %9559 = vmatpush1.bf16.msra.mxu0 %v6728
        %9560 = vmatprep.subr.bf16.mxu0 %v6731
        %9561 = vmatpush1.bf16.msra.mxu0 %v6730
        %9562 = vmatprep.subr.bf16.mxu0 %v6733
        %9563 = vmatpush1.bf16.msra.mxu0 %v6732
        %9564 = vmatprep.subr.bf16.mxu0 %v6735
        %9565 = vmatpush1.bf16.msra.mxu0 %v6734
        %9566 = vmatprep.mubr.bf16.mxu0 %v1805
        %9567 = vmatmul.mubr.bf16.gmra.mrb[0].mxu0 %v1804
        %v9568 = vpop.f32.mrb[0].mxu0
        %v9569 = vadd.f32 %v9528, %v9568
        %v9570 = vpop.f32.mrb[0].mxu0
        %v9571 = vadd.f32 %v9530, %v9570
        %v9572 = vpop.f32.mrb[0].mxu0
        %v9573 = vpop.f32.mrb[0].mxu0
        %9574 = vdwg.mxu0
        %9575 = vmatprep.subr.bf16.mxu0 %v6737
        %9576 = vmatpush1.bf16.msra.mxu0 %v6736
        %9577 = vmatprep.subr.bf16.mxu0 %v6739
        %9578 = vmatpush1.bf16.msra.mxu0 %v6738
        %9579 = vmatprep.subr.bf16.mxu0 %v6741
        %9580 = vmatpush1.bf16.msra.mxu0 %v6740
        %9581 = vmatprep.subr.bf16.mxu0 %v6743
        %9582 = vmatpush1.bf16.msra.mxu0 %v6742
        %9583 = vmatprep.subr.bf16.mxu0 %v6745
        %9584 = vmatpush1.bf16.msra.mxu0 %v6744
        %9585 = vmatprep.subr.bf16.mxu0 %v6747
        %9586 = vmatpush1.bf16.msra.mxu0 %v6746
        %9587 = vmatprep.subr.bf16.mxu0 %v6749
        %9588 = vmatpush1.bf16.msra.mxu0 %v6748
        %9589 = vmatprep.subr.bf16.mxu0 %v6751
        %9590 = vmatpush1.bf16.msra.mxu0 %v6750
        %9591 = vmatprep.subr.bf16.mxu0 %v6753
        %9592 = vmatpush1.bf16.msra.mxu0 %v6752
        %9593 = vmatprep.subr.bf16.mxu0 %v6755
        %9594 = vmatpush1.bf16.msra.mxu0 %v6754
        %9595 = vmatprep.subr.bf16.mxu0 %v6757
        %9596 = vmatpush1.bf16.msra.mxu0 %v6756
        %9597 = vmatprep.subr.bf16.mxu0 %v6759
        %9598 = vmatpush1.bf16.msra.mxu0 %v6758
        %9599 = vmatprep.subr.bf16.mxu0 %v6761
        %9600 = vmatpush1.bf16.msra.mxu0 %v6760
        %9601 = vmatprep.subr.bf16.mxu0 %v6763
        %9602 = vmatpush1.bf16.msra.mxu0 %v6762
        %9603 = vmatprep.subr.bf16.mxu0 %v6765
        %9604 = vmatpush1.bf16.msra.mxu0 %v6764
        %9605 = vmatprep.subr.bf16.mxu0 %v6767
        %9606 = vmatpush1.bf16.msra.mxu0 %v6766
        %9607 = vmatprep.mubr.bf16.mxu0 %v1807
        %9608 = vmatmul.mubr.bf16.gmra.mrb[0].mxu0 %v1806
        %v9609 = vpop.f32.mrb[0].mxu0
        %v9610 = vadd.f32 %v9569, %v9609
        %v9611 = vpop.f32.mrb[0].mxu0
        %v9612 = vadd.f32 %v9571, %v9611
        %v9613 = vpop.f32.mrb[0].mxu0
        %v9614 = vpop.f32.mrb[0].mxu0
        %9615 = vdwg.mxu0
        %9616 = vmatprep.subr.bf16.mxu0 %v6769
        %9617 = vmatpush1.bf16.msra.mxu0 %v6768
        %9618 = vmatprep.subr.bf16.mxu0 %v6771
        %9619 = vmatpush1.bf16.msra.mxu0 %v6770
        %9620 = vmatprep.subr.bf16.mxu0 %v6773
        %9621 = vmatpush1.bf16.msra.mxu0 %v6772
        %9622 = vmatprep.subr.bf16.mxu0 %v6775
        %9623 = vmatpush1.bf16.msra.mxu0 %v6774
        %9624 = vmatprep.subr.bf16.mxu0 %v6777
        %9625 = vmatpush1.bf16.msra.mxu0 %v6776
        %9626 = vmatprep.subr.bf16.mxu0 %v6779
        %9627 = vmatpush1.bf16.msra.mxu0 %v6778
        %9628 = vmatprep.subr.bf16.mxu0 %v6781
        %9629 = vmatpush1.bf16.msra.mxu0 %v6780
        %9630 = vmatprep.subr.bf16.mxu0 %v6783
        %9631 = vmatpush1.bf16.msra.mxu0 %v6782
        %9632 = vmatprep.subr.bf16.mxu0 %v6785
        %9633 = vmatpush1.bf16.msra.mxu0 %v6784
        %9634 = vmatprep.subr.bf16.mxu0 %v6787
        %9635 = vmatpush1.bf16.msra.mxu0 %v6786
        %9636 = vmatprep.subr.bf16.mxu0 %v6789
        %9637 = vmatpush1.bf16.msra.mxu0 %v6788
        %9638 = vmatprep.subr.bf16.mxu0 %v6791
        %9639 = vmatpush1.bf16.msra.mxu0 %v6790
        %9640 = vmatprep.subr.bf16.mxu0 %v6793
        %9641 = vmatpush1.bf16.msra.mxu0 %v6792
        %9642 = vmatprep.subr.bf16.mxu0 %v6795
        %9643 = vmatpush1.bf16.msra.mxu0 %v6794
        %9644 = vmatprep.subr.bf16.mxu0 %v6797
        %9645 = vmatpush1.bf16.msra.mxu0 %v6796
        %9646 = vmatprep.subr.bf16.mxu0 %v6799
        %9647 = vmatpush1.bf16.msra.mxu0 %v6798
        %9648 = vmatprep.mubr.bf16.mxu0 %v1809
        %9649 = vmatmul.mubr.bf16.gmra.mrb[0].mxu0 %v1808
        %v9650 = vpop.f32.mrb[0].mxu0
        %v9651 = vadd.f32 %v9610, %v9650
        %v9652 = vpop.f32.mrb[0].mxu0
        %v9653 = vadd.f32 %v9612, %v9652
        %v9654 = vpop.f32.mrb[0].mxu0
        %v9655 = vpop.f32.mrb[0].mxu0
        %9656 = vdwg.mxu0
        %9657 = vmatprep.subr.bf16.mxu0 %v6801
        %9658 = vmatpush1.bf16.msra.mxu0 %v6800
        %9659 = vmatprep.subr.bf16.mxu0 %v6803
        %9660 = vmatpush1.bf16.msra.mxu0 %v6802
        %9661 = vmatprep.subr.bf16.mxu0 %v6805
        %9662 = vmatpush1.bf16.msra.mxu0 %v6804
        %9663 = vmatprep.subr.bf16.mxu0 %v6807
        %9664 = vmatpush1.bf16.msra.mxu0 %v6806
        %9665 = vmatprep.subr.bf16.mxu0 %v6809
        %9666 = vmatpush1.bf16.msra.mxu0 %v6808
        %9667 = vmatprep.subr.bf16.mxu0 %v6811
        %9668 = vmatpush1.bf16.msra.mxu0 %v6810
        %9669 = vmatprep.subr.bf16.mxu0 %v6813
        %9670 = vmatpush1.bf16.msra.mxu0 %v6812
        %9671 = vmatprep.subr.bf16.mxu0 %v6815
        %9672 = vmatpush1.bf16.msra.mxu0 %v6814
        %9673 = vmatprep.subr.bf16.mxu0 %v6817
        %9674 = vmatpush1.bf16.msra.mxu0 %v6816
        %9675 = vmatprep.subr.bf16.mxu0 %v6819
        %9676 = vmatpush1.bf16.msra.mxu0 %v6818
        %9677 = vmatprep.subr.bf16.mxu0 %v6821
        %9678 = vmatpush1.bf16.msra.mxu0 %v6820
        %9679 = vmatprep.subr.bf16.mxu0 %v6823
        %9680 = vmatpush1.bf16.msra.mxu0 %v6822
        %9681 = vmatprep.subr.bf16.mxu0 %v6825
        %9682 = vmatpush1.bf16.msra.mxu0 %v6824
        %9683 = vmatprep.subr.bf16.mxu0 %v6827
        %9684 = vmatpush1.bf16.msra.mxu0 %v6826
        %9685 = vmatprep.subr.bf16.mxu0 %v6829
        %9686 = vmatpush1.bf16.msra.mxu0 %v6828
        %9687 = vmatprep.subr.bf16.mxu0 %v6831
        %9688 = vmatpush1.bf16.msra.mxu0 %v6830
        %9689 = vmatprep.mubr.bf16.mxu0 %v1811
        %9690 = vmatmul.mubr.bf16.gmra.mrb[0].mxu0 %v1810
        %v9691 = vpop.f32.mrb[0].mxu0
        %v9692 = vadd.f32 %v9651, %v9691
        %v9693 = vpop.f32.mrb[0].mxu0
        %v9694 = vadd.f32 %v9653, %v9693
        %v9695 = vpop.f32.mrb[0].mxu0
        %v9696 = vpop.f32.mrb[0].mxu0
        %9697 = vdwg.mxu0
        %9698 = vmatprep.subr.bf16.mxu0 %v6833
        %9699 = vmatpush1.bf16.msra.mxu0 %v6832
        %9700 = vmatprep.subr.bf16.mxu0 %v6835
        %9701 = vmatpush1.bf16.msra.mxu0 %v6834
        %9702 = vmatprep.subr.bf16.mxu0 %v6837
        %9703 = vmatpush1.bf16.msra.mxu0 %v6836
        %9704 = vmatprep.subr.bf16.mxu0 %v6839
        %9705 = vmatpush1.bf16.msra.mxu0 %v6838
        %9706 = vmatprep.subr.bf16.mxu0 %v6841
        %9707 = vmatpush1.bf16.msra.mxu0 %v6840
        %9708 = vmatprep.subr.bf16.mxu0 %v6843
        %9709 = vmatpush1.bf16.msra.mxu0 %v6842
        %9710 = vmatprep.subr.bf16.mxu0 %v6845
        %9711 = vmatpush1.bf16.msra.mxu0 %v6844
        %9712 = vmatprep.subr.bf16.mxu0 %v6847
        %9713 = vmatpush1.bf16.msra.mxu0 %v6846
        %9714 = vmatprep.subr.bf16.mxu0 %v6849
        %9715 = vmatpush1.bf16.msra.mxu0 %v6848
        %9716 = vmatprep.subr.bf16.mxu0 %v6851
        %9717 = vmatpush1.bf16.msra.mxu0 %v6850
        %9718 = vmatprep.subr.bf16.mxu0 %v6853
        %9719 = vmatpush1.bf16.msra.mxu0 %v6852
        %9720 = vmatprep.subr.bf16.mxu0 %v6855
        %9721 = vmatpush1.bf16.msra.mxu0 %v6854
        %9722 = vmatprep.subr.bf16.mxu0 %v6857
        %9723 = vmatpush1.bf16.msra.mxu0 %v6856
        %9724 = vmatprep.subr.bf16.mxu0 %v6859
        %9725 = vmatpush1.bf16.msra.mxu0 %v6858
        %9726 = vmatprep.subr.bf16.mxu0 %v6861
        %9727 = vmatpush1.bf16.msra.mxu0 %v6860
        %9728 = vmatprep.subr.bf16.mxu0 %v6863
        %9729 = vmatpush1.bf16.msra.mxu0 %v6862
        %9730 = vmatprep.mubr.bf16.mxu0 %v1813
        %9731 = vmatmul.mubr.bf16.gmra.mrb[0].mxu0 %v1812
        %v9732 = vpop.f32.mrb[0].mxu0
        %v9733 = vadd.f32 %v9692, %v9732
        %v9734 = vpop.f32.mrb[0].mxu0
        %v9735 = vadd.f32 %v9694, %v9734
        %v9736 = vpop.f32.mrb[0].mxu0
        %v9737 = vpop.f32.mrb[0].mxu0
        %9738 = vdwg.mxu0
        %9739 = vmatprep.subr.bf16.mxu0 %v6865
        %9740 = vmatpush1.bf16.msra.mxu0 %v6864
        %9741 = vmatprep.subr.bf16.mxu0 %v6867
        %9742 = vmatpush1.bf16.msra.mxu0 %v6866
        %9743 = vmatprep.subr.bf16.mxu0 %v6869
        %9744 = vmatpush1.bf16.msra.mxu0 %v6868
        %9745 = vmatprep.subr.bf16.mxu0 %v6871
        %9746 = vmatpush1.bf16.msra.mxu0 %v6870
        %9747 = vmatprep.subr.bf16.mxu0 %v6873
        %9748 = vmatpush1.bf16.msra.mxu0 %v6872
        %9749 = vmatprep.subr.bf16.mxu0 %v6875
        %9750 = vmatpush1.bf16.msra.mxu0 %v6874
        %9751 = vmatprep.subr.bf16.mxu0 %v6877
        %9752 = vmatpush1.bf16.msra.mxu0 %v6876
        %9753 = vmatprep.subr.bf16.mxu0 %v6879
        %9754 = vmatpush1.bf16.msra.mxu0 %v6878
        %9755 = vmatprep.subr.bf16.mxu0 %v6881
        %9756 = vmatpush1.bf16.msra.mxu0 %v6880
        %9757 = vmatprep.subr.bf16.mxu0 %v6883
        %9758 = vmatpush1.bf16.msra.mxu0 %v6882
        %9759 = vmatprep.subr.bf16.mxu0 %v6885
        %9760 = vmatpush1.bf16.msra.mxu0 %v6884
        %9761 = vmatprep.subr.bf16.mxu0 %v6887
        %9762 = vmatpush1.bf16.msra.mxu0 %v6886
        %9763 = vmatprep.subr.bf16.mxu0 %v6889
        %9764 = vmatpush1.bf16.msra.mxu0 %v6888
        %9765 = vmatprep.subr.bf16.mxu0 %v6891
        %9766 = vmatpush1.bf16.msra.mxu0 %v6890
        %9767 = vmatprep.subr.bf16.mxu0 %v6893
        %9768 = vmatpush1.bf16.msra.mxu0 %v6892
        %9769 = vmatprep.subr.bf16.mxu0 %v6895
        %9770 = vmatpush1.bf16.msra.mxu0 %v6894
        %9771 = vmatprep.mubr.bf16.mxu0 %v1815
        %9772 = vmatmul.mubr.bf16.gmra.mrb[0].mxu0 %v1814
        %v9773 = vpop.f32.mrb[0].mxu0
        %v9774 = vadd.f32 %v9733, %v9773
        %v9775 = vpop.f32.mrb[0].mxu0
        %v9776 = vadd.f32 %v9735, %v9775
        %v9777 = vpop.f32.mrb[0].mxu0
        %v9778 = vpop.f32.mrb[0].mxu0
        %9779 = vdwg.mxu0
        %9780 = vmatprep.subr.bf16.mxu0 %v6897
        %9781 = vmatpush1.bf16.msra.mxu0 %v6896
        %9782 = vmatprep.subr.bf16.mxu0 %v6899
        %9783 = vmatpush1.bf16.msra.mxu0 %v6898
        %9784 = vmatprep.subr.bf16.mxu0 %v6901
        %9785 = vmatpush1.bf16.msra.mxu0 %v6900
        %9786 = vmatprep.subr.bf16.mxu0 %v6903
        %9787 = vmatpush1.bf16.msra.mxu0 %v6902
        %9788 = vmatprep.subr.bf16.mxu0 %v6905
        %9789 = vmatpush1.bf16.msra.mxu0 %v6904
        %9790 = vmatprep.subr.bf16.mxu0 %v6907
        %9791 = vmatpush1.bf16.msra.mxu0 %v6906
        %9792 = vmatprep.subr.bf16.mxu0 %v6909
        %9793 = vmatpush1.bf16.msra.mxu0 %v6908
        %9794 = vmatprep.subr.bf16.mxu0 %v6911
        %9795 = vmatpush1.bf16.msra.mxu0 %v6910
        %9796 = vmatprep.subr.bf16.mxu0 %v6913
        %9797 = vmatpush1.bf16.msra.mxu0 %v6912
        %9798 = vmatprep.subr.bf16.mxu0 %v6915
        %9799 = vmatpush1.bf16.msra.mxu0 %v6914
        %9800 = vmatprep.subr.bf16.mxu0 %v6917
        %9801 = vmatpush1.bf16.msra.mxu0 %v6916
        %9802 = vmatprep.subr.bf16.mxu0 %v6919
        %9803 = vmatpush1.bf16.msra.mxu0 %v6918
        %9804 = vmatprep.subr.bf16.mxu0 %v6921
        %9805 = vmatpush1.bf16.msra.mxu0 %v6920
        %9806 = vmatprep.subr.bf16.mxu0 %v6923
        %9807 = vmatpush1.bf16.msra.mxu0 %v6922
        %9808 = vmatprep.subr.bf16.mxu0 %v6925
        %9809 = vmatpush1.bf16.msra.mxu0 %v6924
        %9810 = vmatprep.subr.bf16.mxu0 %v6927
        %9811 = vmatpush1.bf16.msra.mxu0 %v6926
        %9812 = vmatprep.mubr.bf16.mxu0 %v1817
        %9813 = vmatmul.mubr.bf16.gmra.mrb[0].mxu0 %v1816
        %v9814 = vpop.f32.mrb[0].mxu0
        %v9815 = vadd.f32 %v9774, %v9814
        %v9816 = vpop.f32.mrb[0].mxu0
        %v9817 = vadd.f32 %v9776, %v9816
        %v9818 = vpop.f32.mrb[0].mxu0
        %v9819 = vpop.f32.mrb[0].mxu0
        %9820 = vdwg.mxu0
        %9821 = vmatprep.subr.bf16.mxu0 %v6929
        %9822 = vmatpush1.bf16.msra.mxu0 %v6928
        %9823 = vmatprep.subr.bf16.mxu0 %v6931
        %9824 = vmatpush1.bf16.msra.mxu0 %v6930
        %9825 = vmatprep.subr.bf16.mxu0 %v6933
        %9826 = vmatpush1.bf16.msra.mxu0 %v6932
        %9827 = vmatprep.subr.bf16.mxu0 %v6935
        %9828 = vmatpush1.bf16.msra.mxu0 %v6934
        %9829 = vmatprep.subr.bf16.mxu0 %v6937
        %9830 = vmatpush1.bf16.msra.mxu0 %v6936
        %9831 = vmatprep.subr.bf16.mxu0 %v6939
        %9832 = vmatpush1.bf16.msra.mxu0 %v6938
        %9833 = vmatprep.subr.bf16.mxu0 %v6941
        %9834 = vmatpush1.bf16.msra.mxu0 %v6940
        %9835 = vmatprep.subr.bf16.mxu0 %v6943
        %9836 = vmatpush1.bf16.msra.mxu0 %v6942
        %9837 = vmatprep.subr.bf16.mxu0 %v6945
        %9838 = vmatpush1.bf16.msra.mxu0 %v6944
        %9839 = vmatprep.subr.bf16.mxu0 %v6947
        %9840 = vmatpush1.bf16.msra.mxu0 %v6946
        %9841 = vmatprep.subr.bf16.mxu0 %v6949
        %9842 = vmatpush1.bf16.msra.mxu0 %v6948
        %9843 = vmatprep.subr.bf16.mxu0 %v6951
        %9844 = vmatpush1.bf16.msra.mxu0 %v6950
        %9845 = vmatprep.subr.bf16.mxu0 %v6953
        %9846 = vmatpush1.bf16.msra.mxu0 %v6952
        %9847 = vmatprep.subr.bf16.mxu0 %v6955
        %9848 = vmatpush1.bf16.msra.mxu0 %v6954
        %9849 = vmatprep.subr.bf16.mxu0 %v6957
        %9850 = vmatpush1.bf16.msra.mxu0 %v6956
        %9851 = vmatprep.subr.bf16.mxu0 %v6959
        %9852 = vmatpush1.bf16.msra.mxu0 %v6958
        %9853 = vmatprep.mubr.bf16.mxu0 %v1819
        %9854 = vmatmul.mubr.bf16.gmra.mrb[0].mxu0 %v1818
        %v9855 = vpop.f32.mrb[0].mxu0
        %v9856 = vadd.f32 %v9815, %v9855
        %v9857 = vpop.f32.mrb[0].mxu0
        %v9858 = vadd.f32 %v9817, %v9857
        %v9859 = vpop.f32.mrb[0].mxu0
        %v9860 = vpop.f32.mrb[0].mxu0
        %9861 = vdwg.mxu0
        %9862 = vmatprep.subr.bf16.mxu0 %v6961
        %9863 = vmatpush1.bf16.msra.mxu0 %v6960
        %9864 = vmatprep.subr.bf16.mxu0 %v6963
        %9865 = vmatpush1.bf16.msra.mxu0 %v6962
        %9866 = vmatprep.subr.bf16.mxu0 %v6965
        %9867 = vmatpush1.bf16.msra.mxu0 %v6964
        %9868 = vmatprep.subr.bf16.mxu0 %v6967
        %9869 = vmatpush1.bf16.msra.mxu0 %v6966
        %9870 = vmatprep.subr.bf16.mxu0 %v6969
        %9871 = vmatpush1.bf16.msra.mxu0 %v6968
        %9872 = vmatprep.subr.bf16.mxu0 %v6971
        %9873 = vmatpush1.bf16.msra.mxu0 %v6970
        %9874 = vmatprep.subr.bf16.mxu0 %v6973
        %9875 = vmatpush1.bf16.msra.mxu0 %v6972
        %9876 = vmatprep.subr.bf16.mxu0 %v6975
        %9877 = vmatpush1.bf16.msra.mxu0 %v6974
        %9878 = vmatprep.subr.bf16.mxu0 %v6977
        %9879 = vmatpush1.bf16.msra.mxu0 %v6976
        %9880 = vmatprep.subr.bf16.mxu0 %v6979
        %9881 = vmatpush1.bf16.msra.mxu0 %v6978
        %9882 = vmatprep.subr.bf16.mxu0 %v6981
        %9883 = vmatpush1.bf16.msra.mxu0 %v6980
        %9884 = vmatprep.subr.bf16.mxu0 %v6983
        %9885 = vmatpush1.bf16.msra.mxu0 %v6982
        %9886 = vmatprep.subr.bf16.mxu0 %v6985
        %9887 = vmatpush1.bf16.msra.mxu0 %v6984
        %9888 = vmatprep.subr.bf16.mxu0 %v6987
        %9889 = vmatpush1.bf16.msra.mxu0 %v6986
        %9890 = vmatprep.subr.bf16.mxu0 %v6989
        %9891 = vmatpush1.bf16.msra.mxu0 %v6988
        %9892 = vmatprep.subr.bf16.mxu0 %v6991
        %9893 = vmatpush1.bf16.msra.mxu0 %v6990
        %9894 = vmatprep.mubr.bf16.mxu0 %v1821
        %9895 = vmatmul.mubr.bf16.gmra.mrb[0].mxu0 %v1820
        %v9896 = vpop.f32.mrb[0].mxu0
        %v9897 = vadd.f32 %v9856, %v9896
        %v9898 = vpop.f32.mrb[0].mxu0
        %v9899 = vadd.f32 %v9858, %v9898
        %v9900 = vpop.f32.mrb[0].mxu0
        %v9901 = vpop.f32.mrb[0].mxu0
        %9902 = vdwg.mxu0
        %9903 = vmatprep.subr.bf16.mxu0 %v6993
        %9904 = vmatpush1.bf16.msra.mxu0 %v6992
        %9905 = vmatprep.subr.bf16.mxu0 %v6995
        %9906 = vmatpush1.bf16.msra.mxu0 %v6994
        %9907 = vmatprep.subr.bf16.mxu0 %v6997
        %9908 = vmatpush1.bf16.msra.mxu0 %v6996
        %9909 = vmatprep.subr.bf16.mxu0 %v6999
        %9910 = vmatpush1.bf16.msra.mxu0 %v6998
        %9911 = vmatprep.subr.bf16.mxu0 %v7001
        %9912 = vmatpush1.bf16.msra.mxu0 %v7000
        %9913 = vmatprep.subr.bf16.mxu0 %v7003
        %9914 = vmatpush1.bf16.msra.mxu0 %v7002
        %9915 = vmatprep.subr.bf16.mxu0 %v7005
        %9916 = vmatpush1.bf16.msra.mxu0 %v7004
        %9917 = vmatprep.subr.bf16.mxu0 %v7007
        %9918 = vmatpush1.bf16.msra.mxu0 %v7006
        %9919 = vmatprep.subr.bf16.mxu0 %v7009
        %9920 = vmatpush1.bf16.msra.mxu0 %v7008
        %9921 = vmatprep.subr.bf16.mxu0 %v7011
        %9922 = vmatpush1.bf16.msra.mxu0 %v7010
        %9923 = vmatprep.subr.bf16.mxu0 %v7013
        %9924 = vmatpush1.bf16.msra.mxu0 %v7012
        %9925 = vmatprep.subr.bf16.mxu0 %v7015
        %9926 = vmatpush1.bf16.msra.mxu0 %v7014
        %9927 = vmatprep.subr.bf16.mxu0 %v7017
        %9928 = vmatpush1.bf16.msra.mxu0 %v7016
        %9929 = vmatprep.subr.bf16.mxu0 %v7019
        %9930 = vmatpush1.bf16.msra.mxu0 %v7018
        %9931 = vmatprep.subr.bf16.mxu0 %v7021
        %9932 = vmatpush1.bf16.msra.mxu0 %v7020
        %9933 = vmatprep.subr.bf16.mxu0 %v7023
        %9934 = vmatpush1.bf16.msra.mxu0 %v7022
        %9935 = vmatprep.mubr.bf16.mxu0 %v1823
        %9936 = vmatmul.mubr.bf16.gmra.mrb[0].mxu0 %v1822
        %v9937 = vpop.f32.mrb[0].mxu0
        %v9938 = vadd.f32 %v9897, %v9937
        %v9939 = vpop.f32.mrb[0].mxu0
        %v9940 = vadd.f32 %v9899, %v9939
        %v9941 = vpop.f32.mrb[0].mxu0
        %v9942 = vpop.f32.mrb[0].mxu0
        %9943 = vdwg.mxu0
        %v9944 = vld [vmem:[%s2] sm:$0xff]
        %v9945 = vld [vmem:[%s2 + $0x8] sm:$0xff]
        %v9946 = vld [vmem:[%s2 + $0x10] sm:$0xff]
        %v9947 = vld [vmem:[%s2 + $0x18] sm:$0xff]
        %v9948 = vld [vmem:[%s2 + $0x20] sm:$0xff]
        %v9949 = vld [vmem:[%s2 + $0x28] sm:$0xff]
        %v9950 = vld [vmem:[%s2 + $0x30] sm:$0xff]
        %v9951 = vld [vmem:[%s2 + $0x38] sm:$0xff]
        %v9952 = vld [vmem:[%s2 + $0x40] sm:$0xff]
        %v9953 = vld [vmem:[%s2 + $0x48] sm:$0xff]
        %v9954 = vld [vmem:[%s2 + $0x50] sm:$0xff]
        %v9955 = vld [vmem:[%s2 + $0x58] sm:$0xff]
        %v9956 = vld [vmem:[%s2 + $0x60] sm:$0xff]
        %v9957 = vld [vmem:[%s2 + $0x68] sm:$0xff]
        %v9958 = vld [vmem:[%s2 + $0x70] sm:$0xff]
        %v9959 = vld [vmem:[%s2 + $0x78] sm:$0xff]
        %v9960 = vld [vmem:[%s2 + $0x80] sm:$0xff]
        %v9961 = vld [vmem:[%s2 + $0x88] sm:$0xff]
        %v9962 = vld [vmem:[%s2 + $0x90] sm:$0xff]
        %v9963 = vld [vmem:[%s2 + $0x98] sm:$0xff]
        %v9964 = vld [vmem:[%s3] sm:$0x1]
        %v9966 = vlaneseq
        %v9967 = vshrl.u32 %v9966, 7
        %v9968 = vsub.s32 0, %v9967
        %v9969 = vrot.slane %v9964, %v9968
        %vm9971 = vcmask 261120
        %v9973 = vsel %vm9971, %v9940, 0
        %9975 = vmatprep.subr.mxu0 0.0
        %9976 = vmatpush1.msra.mxu0 %v9944
        %9977 = vmatprep.subr.mxu0 0.0
        %9978 = vmatpush1.msra.mxu0 %v9945
        %9979 = vmatprep.subr.mxu0 0.0
        %9980 = vmatpush1.msra.mxu0 %v9946
        %9981 = vmatprep.subr.mxu0 0.0
        %9982 = vmatpush1.msra.mxu0 %v9947
        %9983 = vmatprep.subr.mxu0 0.0
        %9984 = vmatpush1.msra.mxu0 %v9948
        %9985 = vmatprep.subr.mxu0 0.0
        %9986 = vmatpush1.msra.mxu0 %v9949
        %9987 = vmatprep.subr.mxu0 0.0
        %9988 = vmatpush1.msra.mxu0 %v9950
        %9989 = vmatprep.subr.mxu0 0.0
        %9990 = vmatpush1.msra.mxu0 %v9951
        %9991 = vmatprep.subr.mxu0 0.0
        %9992 = vmatpush1.msra.mxu0 %v9952
        %9993 = vmatprep.subr.mxu0 0.0
        %9994 = vmatpush1.msra.mxu0 %v9953
        %9995 = vmatprep.subr.mxu0 0.0
        %9996 = vmatpush1.msra.mxu0 %v9954
        %9997 = vmatprep.subr.mxu0 0.0
        %9998 = vmatpush1.msra.mxu0 %v9955
        %9999 = vmatprep.subr.mxu0 0.0
        %10000 = vmatpush1.msra.mxu0 %v9956
        %10001 = vmatprep.subr.mxu0 0.0
        %10002 = vmatpush1.msra.mxu0 %v9957
        %10003 = vmatprep.subr.mxu0 0.0
        %10004 = vmatpush1.msra.mxu0 %v9958
        %10005 = vmatprep.subr.mxu0 0.0
        %10006 = vmatpush1.msra.mxu0 %v9959
        %10007 = vmatprep.subr.mxu0 0.0
        %10008 = vmatpush1.msra.mxu0 %v9960
        %10009 = vmatprep.subr.mxu0 0.0
        %10010 = vmatpush1.msra.mxu0 %v9961
        %10011 = vmatprep.subr.mxu0 0.0
        %10012 = vmatpush1.msra.mxu0 %v9962
        %10013 = vmatprep.subr.mxu0 0.0
        %10014 = vmatpush1.msra.mxu0 %v9963
        %10015 = vmatprep.subr.mxu0 0.0
        %10016 = vmatpush1.msra.mxu0 0.0
        %10017 = vmatprep.subr.mxu0 0.0
        %10018 = vmatpush1.msra.mxu0 0.0
        %10019 = vmatprep.subr.mxu0 0.0
        %10020 = vmatpush1.msra.mxu0 0.0
        %10021 = vmatprep.subr.mxu0 0.0
        %10022 = vmatpush1.msra.mxu0 0.0
        %10023 = vmatprep.subr.mxu0 0.0
        %10024 = vmatpush1.msra.mxu0 0.0
        %10025 = vmatprep.subr.mxu0 0.0
        %10026 = vmatpush1.msra.mxu0 0.0
        %10027 = vmatprep.subr.mxu0 0.0
        %10028 = vmatpush1.msra.mxu0 0.0
        %10029 = vmatprep.subr.mxu0 0.0
        %10030 = vmatpush1.msra.mxu0 0.0
        %10031 = vmatprep.subr.mxu0 0.0
        %10032 = vmatpush1.msra.mxu0 0.0
        %10033 = vmatprep.subr.mxu0 0.0
        %10034 = vmatpush1.msra.mxu0 0.0
        %10035 = vmatprep.subr.mxu0 0.0
        %10036 = vmatpush1.msra.mxu0 0.0
        %10037 = vmatprep.subr.mxu0 0.0
        %10038 = vmatpush1.msra.mxu0 0.0
        %10039 = vmatprep.mubr.f32.mxu0 %v9973
        %10040 = vmatmul.mubr.f32.gmra.mrb[0].mxu0 %v9938
        %v10041 = vpop.f32.mrb[0].mxu0
        %v10042 = vadd.f32 %v9969, %v10041
        %v10043 = vpop.f32.mrb[0].mxu0
        %10044 = vdwg.mxu0
        %v10045 = vmax.f32 %v10042, 0.0
        %v10046 = vld [vmem:[%s4] sm:$0xff]
        %v10047 = vld [vmem:[%s4 + $0x8] sm:$0xff]
        %v10048 = vld [vmem:[%s4 + $0x10] sm:$0x3]
        %v10049 = vld [vmem:[%s4 + $0x18] sm:$0x3]
        %v10050 = vld [vmem:[%s5] sm:$0x3]
        %v10052 = vlaneseq
        %v10053 = vshrl.u32 %v10052, 7
        %v10054 = vsub.s32 0, %v10053
        %v10055 = vrot.slane %v10050, %v10054
        %v10056 = vlaneseq
        %v10057 = vshrl.u32 %v10056, 7
        %v10058 = vsub.s32 1, %v10057
        %v10059 = vrot.slane %v10050, %v10058
        %vm10062 = vcmask 80896
        %v10064 = vsel %vm10062, %v10045, 0
        %vm10066 = vcmask 1041408
        %v10068 = vsel %vm10066, %v10048, 0
        %v10071 = vsel %vm10066, %v10049, 0
        %10073 = vmatprep.subr.mxu0 %v10047
        %10074 = vmatpush1.msra.mxu0 %v10046
        %10075 = vmatprep.subr.mxu0 %v10071
        %10076 = vmatpush1.msra.mxu0 %v10068
        %10077 = vmatprep.subr.mxu0 0.0
        %10078 = vmatpush1.msra.mxu0 0.0
        %10079 = vmatprep.subr.mxu0 0.0
        %10080 = vmatpush1.msra.mxu0 0.0
        %10081 = vmatprep.subr.mxu0 0.0
        %10082 = vmatpush1.msra.mxu0 0.0
        %10083 = vmatprep.subr.mxu0 0.0
        %10084 = vmatpush1.msra.mxu0 0.0
        %10085 = vmatprep.subr.mxu0 0.0
        %10086 = vmatpush1.msra.mxu0 0.0
        %10087 = vmatprep.subr.mxu0 0.0
        %10088 = vmatpush1.msra.mxu0 0.0
        %10089 = vmatprep.subr.mxu0 0.0
        %10090 = vmatpush1.msra.mxu0 0.0
        %10091 = vmatprep.subr.mxu0 0.0
        %10092 = vmatpush1.msra.mxu0 0.0
        %10093 = vmatprep.subr.mxu0 0.0
        %10094 = vmatpush1.msra.mxu0 0.0
        %10095 = vmatprep.subr.mxu0 0.0
        %10096 = vmatpush1.msra.mxu0 0.0
        %10097 = vmatprep.subr.mxu0 0.0
        %10098 = vmatpush1.msra.mxu0 0.0
        %10099 = vmatprep.subr.mxu0 0.0
        %10100 = vmatpush1.msra.mxu0 0.0
        %10101 = vmatprep.subr.mxu0 0.0
        %10102 = vmatpush1.msra.mxu0 0.0
        %10103 = vmatprep.subr.mxu0 0.0
        %10104 = vmatpush1.msra.mxu0 0.0
        %10105 = vmatprep.subr.mxu0 0.0
        %10106 = vmatpush1.msra.mxu0 0.0
        %10107 = vmatprep.subr.mxu0 0.0
        %10108 = vmatpush1.msra.mxu0 0.0
        %10109 = vmatprep.subr.mxu0 0.0
        %10110 = vmatpush1.msra.mxu0 0.0
        %10111 = vmatprep.subr.mxu0 0.0
        %10112 = vmatpush1.msra.mxu0 0.0
        %10113 = vmatprep.subr.mxu0 0.0
        %10114 = vmatpush1.msra.mxu0 0.0
        %10115 = vmatprep.subr.mxu0 0.0
        %10116 = vmatpush1.msra.mxu0 0.0
        %10117 = vmatprep.subr.mxu0 0.0
        %10118 = vmatpush1.msra.mxu0 0.0
        %10119 = vmatprep.subr.mxu0 0.0
        %10120 = vmatpush1.msra.mxu0 0.0
        %10121 = vmatprep.subr.mxu0 0.0
        %10122 = vmatpush1.msra.mxu0 0.0
        %10123 = vmatprep.subr.mxu0 0.0
        %10124 = vmatpush1.msra.mxu0 0.0
        %10125 = vmatprep.subr.mxu0 0.0
        %10126 = vmatpush1.msra.mxu0 0.0
        %10127 = vmatprep.subr.mxu0 0.0
        %10128 = vmatpush1.msra.mxu0 0.0
        %10129 = vmatprep.subr.mxu0 0.0
        %10130 = vmatpush1.msra.mxu0 0.0
        %10131 = vmatprep.subr.mxu0 0.0
        %10132 = vmatpush1.msra.mxu0 0.0
        %10133 = vmatprep.subr.mxu0 0.0
        %10134 = vmatpush1.msra.mxu0 0.0
        %10135 = vmatprep.subr.mxu0 0.0
        %10136 = vmatpush1.msra.mxu0 0.0
        %10137 = vmatprep.mubr.f32.mxu0 0.0
        %10138 = vmatmul.mubr.f32.gmra.mrb[0].mxu0 %v10064
        %v10139 = vpop.f32.mrb[0].mxu0
        %v10140 = vadd.f32 %v10055, %v10139
        %v10141 = vpop.f32.mrb[0].mxu0
        %v10142 = vadd.f32 %v10059, %v10141
        %10143 = vdwg.mxu0
        %v10144 = vxor.u32 %v10140, 2147483648
        %v10145 = vxor.u32 %v10142, 2147483648
        %v10146 = vmul.f32 %v10144, 1.442695
        %v10147 = vpow.pop %v10146
        %v10148 = vmul.f32 %v10145, 1.442695
        %v10149 = vpow.pop %v10148
        %v10150 = vadd.f32 %v10147, 1.0
        %v10151 = vadd.f32 %v10149, 1.0
        %v10152 = vrcp.pop %v10150
        %v10153 = vmul.f32 1.0, %v10152
        %v10154 = vrcp.pop %v10151
        %v10155 = vmul.f32 1.0, %v10154
        %v10156 = vmul.f32 %v9938, %v10153
        %v10157 = vmul.f32 %v9940, %v10155
        %v10158 = vld [vmem:[%s6] sm:$0xff]
        %v10159 = vld [vmem:[%s6 + $0x8] sm:$0xff]
        %v10160 = vld [vmem:[%s6 + $0x10] sm:$0xff]
        %v10161 = vld [vmem:[%s6 + $0x18] sm:$0xff]
        %v10162 = vld [vmem:[%s6 + $0x20] sm:$0xff]
        %v10163 = vld [vmem:[%s6 + $0x28] sm:$0xff]
        %v10164 = vld [vmem:[%s6 + $0x30] sm:$0xff]
        %v10165 = vld [vmem:[%s6 + $0x38] sm:$0xff]
        %v10166 = vld [vmem:[%s6 + $0x40] sm:$0xff]
        %v10167 = vld [vmem:[%s6 + $0x48] sm:$0xff]
        %v10168 = vld [vmem:[%s6 + $0x50] sm:$0xff]
        %v10169 = vld [vmem:[%s6 + $0x58] sm:$0xff]
        %v10170 = vld [vmem:[%s6 + $0x60] sm:$0xff]
        %v10171 = vld [vmem:[%s6 + $0x68] sm:$0xff]
        %v10172 = vld [vmem:[%s6 + $0x70] sm:$0xff]
        %v10173 = vld [vmem:[%s6 + $0x78] sm:$0xff]
        %v10174 = vld [vmem:[%s6 + $0x80] sm:$0xff]
        %v10175 = vld [vmem:[%s6 + $0x88] sm:$0xff]
        %v10176 = vld [vmem:[%s6 + $0x90] sm:$0xff]
        %v10177 = vld [vmem:[%s6 + $0x98] sm:$0xff]
        %v10178 = vld [vmem:[%s7] sm:$0x1]
        %v10180 = vlaneseq
        %v10181 = vshrl.u32 %v10180, 7
        %v10182 = vsub.s32 0, %v10181
        %v10183 = vrot.slane %v10178, %v10182
        %v10186 = vsel %vm9971, %v10157, 0
        %10188 = vmatprep.subr.mxu0 0.0
        %10189 = vmatpush1.msra.mxu0 %v10158
        %10190 = vmatprep.subr.mxu0 0.0
        %10191 = vmatpush1.msra.mxu0 %v10159
        %10192 = vmatprep.subr.mxu0 0.0
        %10193 = vmatpush1.msra.mxu0 %v10160
        %10194 = vmatprep.subr.mxu0 0.0
        %10195 = vmatpush1.msra.mxu0 %v10161
        %10196 = vmatprep.subr.mxu0 0.0
        %10197 = vmatpush1.msra.mxu0 %v10162
        %10198 = vmatprep.subr.mxu0 0.0
        %10199 = vmatpush1.msra.mxu0 %v10163
        %10200 = vmatprep.subr.mxu0 0.0
        %10201 = vmatpush1.msra.mxu0 %v10164
        %10202 = vmatprep.subr.mxu0 0.0
        %10203 = vmatpush1.msra.mxu0 %v10165
        %10204 = vmatprep.subr.mxu0 0.0
        %10205 = vmatpush1.msra.mxu0 %v10166
        %10206 = vmatprep.subr.mxu0 0.0
        %10207 = vmatpush1.msra.mxu0 %v10167
        %10208 = vmatprep.subr.mxu0 0.0
        %10209 = vmatpush1.msra.mxu0 %v10168
        %10210 = vmatprep.subr.mxu0 0.0
        %10211 = vmatpush1.msra.mxu0 %v10169
        %10212 = vmatprep.subr.mxu0 0.0
        %10213 = vmatpush1.msra.mxu0 %v10170
        %10214 = vmatprep.subr.mxu0 0.0
        %10215 = vmatpush1.msra.mxu0 %v10171
        %10216 = vmatprep.subr.mxu0 0.0
        %10217 = vmatpush1.msra.mxu0 %v10172
        %10218 = vmatprep.subr.mxu0 0.0
        %10219 = vmatpush1.msra.mxu0 %v10173
        %10220 = vmatprep.subr.mxu0 0.0
        %10221 = vmatpush1.msra.mxu0 %v10174
        %10222 = vmatprep.subr.mxu0 0.0
        %10223 = vmatpush1.msra.mxu0 %v10175
        %10224 = vmatprep.subr.mxu0 0.0
        %10225 = vmatpush1.msra.mxu0 %v10176
        %10226 = vmatprep.subr.mxu0 0.0
        %10227 = vmatpush1.msra.mxu0 %v10177
        %10228 = vmatprep.subr.mxu0 0.0
        %10229 = vmatpush1.msra.mxu0 0.0
        %10230 = vmatprep.subr.mxu0 0.0
        %10231 = vmatpush1.msra.mxu0 0.0
        %10232 = vmatprep.subr.mxu0 0.0
        %10233 = vmatpush1.msra.mxu0 0.0
        %10234 = vmatprep.subr.mxu0 0.0
        %10235 = vmatpush1.msra.mxu0 0.0
        %10236 = vmatprep.subr.mxu0 0.0
        %10237 = vmatpush1.msra.mxu0 0.0
        %10238 = vmatprep.subr.mxu0 0.0
        %10239 = vmatpush1.msra.mxu0 0.0
        %10240 = vmatprep.subr.mxu0 0.0
        %10241 = vmatpush1.msra.mxu0 0.0
        %10242 = vmatprep.subr.mxu0 0.0
        %10243 = vmatpush1.msra.mxu0 0.0
        %10244 = vmatprep.subr.mxu0 0.0
        %10245 = vmatpush1.msra.mxu0 0.0
        %10246 = vmatprep.subr.mxu0 0.0
        %10247 = vmatpush1.msra.mxu0 0.0
        %10248 = vmatprep.subr.mxu0 0.0
        %10249 = vmatpush1.msra.mxu0 0.0
        %10250 = vmatprep.subr.mxu0 0.0
        %10251 = vmatpush1.msra.mxu0 0.0
        %10252 = vmatprep.mubr.f32.mxu0 %v10186
        %10253 = vmatmul.mubr.f32.gmra.mrb[0].mxu0 %v10156
        %v10254 = vpop.f32.mrb[0].mxu0
        %v10255 = vadd.f32 %v10183, %v10254
        %v10256 = vpop.f32.mrb[0].mxu0
        %10257 = vdwg.mxu0
        %10258 = vst [vmem:[%s298] sm:$0xff] %v10255
        %s10259 = sand.u32 %s203, 1
        %s10260 = scalar_lea.sflag [#allocation3], %s10259
        %s10261 = sand.u32 %s203, 1
        %s10262 = smul.addr %s10261, 8
        %s10263 = scalar_lea.vmem [#allocation2], %s10262
        // Predicated region
        $region53: #{tpu_custom_call.1} parent=51 // pred_check
          %p10264 = pneg %p213
        $region54: #{tpu_custom_call.1} parent=51 // pred_check_branch
          %10266 = sbr.rel (%p10264) target = $region56
        $region55: #{tpu_custom_call.1} parent=51 // pred_region
          %s10268 = ssub.s32 128, 128
          %10269 = vsyncadd %s10260, %s10268
          %s10270 = smul.addr %s22, 128
          %s10271 = scalar_lea.hbm %s8, %s10270
          %s10273 = sshll.u32 %s10263, 4
          %s10274 = int_to_ptr.vmem [resolvable:$true] %s10273
          %10276 = dma.vmem_to_hbm [thread:$0]  %s10274, 128, %s10271, %s10260
        $region56: #{tpu_custom_call.1} parent=51 // pred_fallthru
          _
      $region52: #{tpu_custom_call.1} parent=5 // pred_fallthru
        _
      %p10277 = scmp.le.s32.totalorder 2, %s17
      // Predicated region
      $region57: #{tpu_custom_call.1} parent=5 // pred_check
        %p10278 = pneg %p10277
      $region58: #{tpu_custom_call.1} parent=5 // pred_check_branch
        %10280 = sbr.rel (%p10278) target = $region60
      $region59: #{tpu_custom_call.1} parent=5 // pred_region
        %s10281 = ssub.s32 %s17, 2
        // Predicated region
        $region61: #{tpu_custom_call.1} parent=59 // pred_check
          %p10282 = pneg %p219
        $region62: #{tpu_custom_call.1} parent=59 // pred_check_branch
          %10284 = sbr.rel (%p10282) target = $region64
        $region63: #{tpu_custom_call.1} parent=59 // pred_region
          %s10285 = sand.u32 %s204, 1
          %s10286 = scalar_lea.sflag [#allocation3], %s10285
          %s10287 = sand.u32 %s204, 1
          %s10288 = smul.addr %s10287, 8
          %s10289 = scalar_lea.vmem [#allocation2], %s10288
          %10290 = dma.done %s10286, 128
        $region64: #{tpu_custom_call.1} parent=59 // pred_fallthru
          _
      $region60: #{tpu_custom_call.1} parent=5 // pred_fallthru
        _
    $region6: #{tpu_custom_call.1} parent=1 // loop_footer
      %s21 = sadd.s32 1, %s17
    $region7: #{tpu_custom_call.1} parent=1 // loop_footer_branch
      %16 = sbr.rel target = $region3
    $region8: #{tpu_custom_call.1} parent=1 // loop_exit
      _
    %10291 = vsyncpa [#allocation3], 1
    %s10292 = scalar_lea.sflag [#allocation3], 1
    %10293 = vsyncpa %s10292, 1

</llo_original>
